<compile_context>
chip_gen: v5e
topology: v5e:2x2
jax: 0.10.0
libtpu: 0.0.40
codegen_flags: <defaults>
</compile_context>

<pallas_src>
import functools

import jax
import jax.numpy as jnp
from jax import lax
from jax.experimental import pallas as pl
from jax.experimental.pallas import tpu as pltpu


# ---------------------------------------------------------------------------
# VMEM budget helpers
# ---------------------------------------------------------------------------

def _vmem_capacity_bytes():
    try:
        return int(pltpu.get_tpu_info().vmem_capacity_bytes)
    except Exception:
        return 64 * 1024 * 1024                       # conservative (v7x per-core)


_VMEM_CAP = _vmem_capacity_bytes()
_TILE_BUDGET = int(0.42 * _VMEM_CAP)                  # per-step working set
_VMEM_LIMIT = min(int(0.78 * _VMEM_CAP), 100 * 2**20)  # ~50 MiB on 64 MiB parts


def _tile_bytes(TH, W, p, K, Cin, Ct, out_bytes):
    """VMEM working set of one grid step, f32 accumulator chain included."""
    THp, Wp = TH + 2 * p, W + 2 * p
    rows_p = TH * Wp
    b = 2 * THp * Wp * Cin * 2            # input tile, bf16, double buffered
    b += 2 * K * K * Ct * Cin * 2         # packed weights, bf16, double buffered
    b += 2 * Ct * TH * W * out_bytes      # output block, double buffered
    b += Ct * rows_p * 4                  # f32 accumulator
    b += K * Ct * rows_p * 4              # per-kernel-row MXU result (f32)
    b += 2 * Ct * rows_p * 4              # roll / add temporaries
    b += rows_p * Cin * 2                 # flattened input view (bf16)
    b += Ct * TH * Wp * 4                 # epilogue temporary
    return b


def _pick_row_tile(H, W, p, K, Cin, Ct, out_bytes, budget, max_rows=None):
    """Pick the output-row tile TH.  TH == H means whole-image-per-step."""
    if (max_rows is None or H <= max_rows) and \
            _tile_bytes(H, W, p, K, Cin, Ct, out_bytes) <= budget:
        return H
    best = None
    for th in range(8, H, 8):             # (8,128) rule: second-minor out dim % 8
        if H % th:
            continue
        if max_rows is not None and th > max_rows:
            continue
        if _tile_bytes(th, W, p, K, Cin, Ct, out_bytes) <= budget:
            best = th                      # keep the largest fitting divisor
    if best is not None:
        return best
    return 8 if H % 8 == 0 else H          # last resort; vmem_limit still guards


# ---------------------------------------------------------------------------
# Fused ConvBlock kernel body (conv + bias + InstanceNorm + PReLU/LeakyReLU)
# ---------------------------------------------------------------------------

def _conv_body(x_ref, w_ref, b_ref, gam_ref, beta_ref, alp_ref, o_ref, *,
               K, Cin, Ct, TH, W, p, use_norm, act):
    """One row tile of the fused ConvBlock.

    x_ref : (TH + 2p, W + 2p, Cin) bf16 VMEM tile (spatially pre-padded).
    w_ref : (K, K, Ct, Cin)        bf16 packed weights, w[ki, kj, co, ci].
    o_ref : (Ct, TH, W)            output block, stored directly in NCHW order.
    """
    Wp = W + 2 * p
    rows_p = TH * Wp

    # Transposed GEMM: one dot per kernel row ki (contraction over Cin); the
    # (K*Ct, rows_p) result is lane-dense along the flattened (row, padded-col)
    # axis.  The kj tap shift is folded in with a static roll of the lane axis,
    # so the only input slicing is a cheap leading-dim slice per ki.
    acc = jnp.zeros((Ct, rows_p), jnp.float32)
    for ki in range(K):
        x_ki = x_ref[ki:ki + TH].reshape(rows_p, Cin)              # bf16
        w_ki = w_ref[ki].reshape(K * Ct, Cin)                      # bf16
        g = lax.dot_general(w_ki, x_ki,
                            dimension_numbers=(((1,), (1,)), ((), ())),
                            preferred_element_type=jnp.float32)    # (K*Ct, rows_p)
        for kj in range(K):
            z = g[kj * Ct:(kj + 1) * Ct, :]
            if kj:
                # TODO(synk): swap jnp.roll -> pltpu.roll (XLU slot) once the
                # rotate direction is verified on-device; jnp.roll is safe.
                z = jnp.roll(z, -kj, axis=1)
            acc = acc + z

    # f32 epilogue: drop the padded columns, add bias, norm, activation.
    y = acc.reshape(Ct, TH, Wp)[:, :, :W]
    y = y + b_ref[...].reshape(Ct, 1, 1)

    if use_norm:                                   # InstanceNorm2d(affine=True)
        cnt = jnp.float32(TH * W)
        mean = jnp.sum(jnp.sum(y, axis=2, keepdims=True), axis=1,
                       keepdims=True) / cnt
        d = y - mean
        var = jnp.sum(jnp.sum(d * d, axis=2, keepdims=True), axis=1,
                      keepdims=True) / cnt
        y = d * lax.rsqrt(var + 1e-5)
        y = y * gam_ref[...].reshape(Ct, 1, 1) + beta_ref[...].reshape(Ct, 1, 1)

    if act == "prelu":                             # nn.PReLU(num_parameters=Cout)
        alpha = alp_ref[...].reshape(Ct, 1, 1)
        y = jnp.where(y > 0, y, alpha * y)
    elif act == "lrelu":                           # nn.LeakyReLU(0.2)
        y = jnp.where(y > 0, y, jnp.float32(0.2) * y)

    o_ref[...] = y.astype(o_ref.dtype)


def _conv_block_kernel_tiled(x_hbm, w_ref, b_ref, gam_ref, beta_ref, alp_ref,
                             o_ref, xbuf, sem, *, nT, TH, p, **kw):
    """Row-tiled path: activation stays in HBM, halo window DMA'd in-kernel."""
    t = pl.program_id(0)
    n = t // nT
    r = t % nT
    THp = TH + 2 * p
    # Per-step self-contained DMA (no cross-step state) keeps the grid axis
    # megacore-safe under "parallel" semantics.
    cp = pltpu.make_async_copy(x_hbm.at[n, pl.ds(r * TH, THp)], xbuf, sem)
    cp.start()
    cp.wait()
    # TODO(synk): cross-step double-buffering of this halo DMA (requires
    # "arbitrary" semantics on the row axis) to hide the fetch behind compute.
    _conv_body(xbuf, w_ref, b_ref, gam_ref, beta_ref, alp_ref, o_ref,
               TH=TH, p=p, **kw)


# ---------------------------------------------------------------------------
# Wrapper
# ---------------------------------------------------------------------------

def conv_block_forward(x_nchw, packed, *, kernel_size, padding, use_act=False,
                       use_norm=False, discriminator=False,
                       out_dtype=jnp.float32, max_rows=None, cout_tiles=None):
    """ConvBlock.forward on NCHW input; output is NCHW (PyTorch layout).

    Supports the stride-1 'same' convolutions used by SRGAN's generator
    ConvBlocks (kernel_size == 2*padding + 1).
    """
    N, Cin, H, W = x_nchw.shape
    K, p = kernel_size, padding
    assert K == 2 * p + 1, "only stride-1 'same' convs supported"
    # TODO(synk): strided / non-'same' Conv2d variants (discriminator blocks).
    wpk = packed["w"]
    assert wpk.shape[0] == K and wpk.shape[1] == K and wpk.shape[3] == Cin
    Cout = wpk.shape[2]

    act = "none"
    if use_act:
        act = "lrelu" if discriminator else "prelu"

    # Host layout glue: NCHW -> NHWC, bf16, one spatial zero-pad (single pass;
    # no overlapping-tile stack).
    xh = jnp.transpose(x_nchw, (0, 2, 3, 1)).astype(jnp.bfloat16)
    xp = jnp.pad(xh, ((0, 0), (p, p), (p, p), (0, 0)))
    Hp, Wp = H + 2 * p, W + 2 * p

    # Cout tiling: second "parallel" grid axis (keeps >= 2 steps on v7x even
    # for batch-1 whole-image calls).
    if cout_tiles is None:
        cout_tiles = 2 if (N == 1 and Cout % 16 == 0) else 1
    assert Cout % cout_tiles == 0
    Ct = Cout // cout_tiles
    assert Ct == Cout or Ct % 8 == 0

    out_bytes = jnp.dtype(out_dtype).itemsize
    TH = _pick_row_tile(H, W, p, K, Cin, Ct, out_bytes, _TILE_BUDGET,
                        max_rows=max_rows)
    if use_norm:
        TH = H       # InstanceNorm needs the full spatial extent in one step

    static = dict(K=K, Cin=Cin, Ct=Ct, W=W, use_norm=use_norm, act=act)
    w_spec = pl.BlockSpec((K, K, Ct, Cin), lambda i, j: (0, 0, j, 0))
    vec_spec = pl.BlockSpec((Ct, 1), lambda i, j: (j, 0))

    if TH == H:
        # Whole padded image per grid step: plain BlockSpec auto-pipelining,
        # no overlapping tiles.  Grid = (batch, Cout tiles).
        grid = (N, cout_tiles)
        x_spec = pl.BlockSpec((None, Hp, Wp, Cin), lambda i, j: (i, 0, 0, 0))
        out_spec = pl.BlockSpec((None, Ct, H, W), lambda i, j: (i, j, 0, 0))
        kernel = functools.partial(_conv_body, TH=H, p=p, **static)
        scratch = []
    else:
        # Large images: padded activation stays as ONE HBM array (pl.ANY);
        # the halo'd row window is DMA'd inside the kernel.
        nT = H // TH
        grid = (N * nT, cout_tiles)
        x_spec = pl.BlockSpec(memory_space=pl.ANY)
        out_spec = pl.BlockSpec((None, Ct, TH, W),
                                lambda i, j: (i // nT, j, i % nT, 0))
        kernel = functools.partial(_conv_block_kernel_tiled,
                                   nT=nT, TH=TH, p=p, **static)
        scratch = [pltpu.VMEM((TH + 2 * p, Wp, Cin), jnp.bfloat16),
                   pltpu.SemaphoreType.DMA]

    return pl.pallas_call(
        kernel,
        out_shape=jax.ShapeDtypeStruct((N, Cout, H, W), out_dtype),
        grid=grid,
        in_specs=[x_spec, w_spec, vec_spec, vec_spec, vec_spec, vec_spec],
        out_specs=out_spec,
        scratch_shapes=scratch,
        compiler_params=pltpu.CompilerParams(
            dimension_semantics=("parallel", "parallel"),
            vmem_limit_bytes=_VMEM_LIMIT),
    )(xp, wpk, packed["b"], packed["gamma"], packed["beta"], packed["alpha"])


# ---------------------------------------------------------------------------
# Parameters (PyTorch layouts) + one-time packing, pure-JAX reference
# ---------------------------------------------------------------------------

def init_convblock_params(key, in_channels, out_channels, kernel_size, use_norm):
    kw, kb, kg, kbe, ka = jax.random.split(key, 5)
    fan_in = in_channels * kernel_size * kernel_size
    w = jax.random.normal(
        kw, (out_channels, in_channels, kernel_size, kernel_size),
        jnp.float32) / jnp.sqrt(jnp.float32(fan_in))
    b = (jnp.zeros((out_channels,), jnp.float32) if use_norm
         else 0.1 * jax.random.normal(kb, (out_channels,), jnp.float32))
    gamma = 1.0 + 0.1 * jax.random.normal(kg, (out_channels,), jnp.float32)
    beta = 0.1 * jax.random.normal(kbe, (out_channels,), jnp.float32)
    alpha = 0.25 + 0.05 * jax.random.normal(ka, (out_channels,), jnp.float32)
    return dict(w=w, b=b, gamma=gamma, beta=beta, alpha=alpha)


def pack_convblock_params(raw):
    """One-time packing at load time (not per call): OIHW -> (K,K,Cout,Cin)
    bf16 weights; per-channel vectors -> (Cout, 1) f32 columns."""
    wpk = jnp.transpose(raw["w"], (2, 3, 0, 1)).astype(jnp.bfloat16)
    col = lambda v: v.reshape(-1, 1).astype(jnp.float32)
    return dict(w=wpk, b=col(raw["b"]), gamma=col(raw["gamma"]),
                beta=col(raw["beta"]), alpha=col(raw["alpha"]))


def conv_block_ref(x, raw, *, padding, use_act, use_norm, discriminator):
    """Pure-JAX f32 reference of ConvBlock.forward (parity check)."""
    y = lax.conv_general_dilated(
        x, raw["w"], window_strides=(1, 1),
        padding=[(padding, padding), (padding, padding)],
        dimension_numbers=("NCHW", "OIHW", "NCHW"))
    if use_norm:
        mean = jnp.mean(y, axis=(2, 3), keepdims=True)
        var = jnp.var(y, axis=(2, 3), keepdims=True)
        y = (y - mean) / jnp.sqrt(var + 1e-5)
        y = y * raw["gamma"][None, :, None, None] + raw["beta"][None, :, None, None]
    else:
        y = y + raw["b"][None, :, None, None]
    if use_act:
        if discriminator:
            y = jnp.where(y > 0, y, 0.2 * y)
        else:
            y = jnp.where(y > 0, y, raw["alpha"][None, :, None, None] * y)
    return y


# ---------------------------------------------------------------------------
# Demo / self-test
# ---------------------------------------------------------------------------

if __name__ == "__main__":
    key = jax.random.PRNGKey(0)
    kx, k1, k2, k3 = jax.random.split(key, 4)

    N, H, W = 2, 16, 16
    x = jax.random.normal(kx, (N, 3, H, W), jnp.float32)

    # (name, Cin, Cout, K, pad, use_act, use_norm, discriminator, max_rows, cout_tiles)
    configs = [
        # SRGAN "initial" block style: 9x9 conv, ConvBlock defaults (conv+bias only)
        ("k9_conv",          3, 32, 9, 4, False, False, False, None, None),
        # generator-style 3x3 conv + PReLU; forces the row-tiled manual-DMA path
        # and the Cout-split grid axis so both code paths are exercised.
        ("k3_prelu_tiled",  32, 32, 3, 1, True,  False, False, 8,    2),
        # discriminator-style block: InstanceNorm(affine) + LeakyReLU(0.2)
        ("k3_inorm_lrelu",  32, 32, 3, 1, True,  True,  True,  None, None),
    ]

    cur = x
    for (name, ci, co, ks, pd, ua, un, disc, mr, nct), kk in zip(
            configs, (k1, k2, k3)):
        assert cur.shape[1] == ci
        raw = init_convblock_params(kk, ci, co, ks, un)
        packed = pack_convblock_params(raw)
        out = conv_block_forward(cur, packed, kernel_size=ks, padding=pd,
                                 use_act=ua, use_norm=un, discriminator=disc,
                                 max_rows=mr, cout_tiles=nct)
        out = jax.block_until_ready(out)
        ref = conv_block_ref(cur, raw, padding=pd, use_act=ua, use_norm=un,
                             discriminator=disc)
        assert out.shape == ref.shape == (N, co, H, W), (name, out.shape)
        assert bool(jnp.all(jnp.isfinite(out))), name
        err = float(jnp.max(jnp.abs(out - ref)))
        tol = 5e-2 * max(float(jnp.max(jnp.abs(ref))), 1.0)
        assert err <= tol, (name, err, tol)
        cur = ref            # chain on the exact f32 reference (no compounding)

    print("KERNEL_OK")
</pallas_src>

<mosaic_0001>
module attributes {stable_mosaic.version = 11 : i64} {
  func.func @_conv_body(%arg0: i32, %arg1: i32, %arg2: memref<1x24x24x3xbf16, #tpu.memory_space<vmem>>, %arg3: memref<9x9x32x3xbf16, #tpu.memory_space<vmem>>, %arg4: memref<32x1xf32, #tpu.memory_space<vmem>>, %arg5: memref<32x1xf32, #tpu.memory_space<vmem>>, %arg6: memref<32x1xf32, #tpu.memory_space<vmem>>, %arg7: memref<32x1xf32, #tpu.memory_space<vmem>>, %arg8: memref<1x32x16x16xf32, #tpu.memory_space<vmem>>) attributes {dimension_semantics = [#tpu.dimension_semantics<parallel>, #tpu.dimension_semantics<parallel>], iteration_bounds = array<i64: 2, 1>, scalar_prefetch = 0 : i64, scratch_operands = 0 : i64, tpu.core_type = #tpu.core_type<tc>, window_params = [{transform_indices = @transform_0, window_bounds = array<i64: 1, 24, 24, 3>}, {transform_indices = @transform_1, window_bounds = array<i64: 9, 9, 32, 3>}, {transform_indices = @transform_2, window_bounds = array<i64: 32, 1>}, {transform_indices = @transform_3, window_bounds = array<i64: 32, 1>}, {transform_indices = @transform_4, window_bounds = array<i64: 32, 1>}, {transform_indices = @transform_5, window_bounds = array<i64: 32, 1>}, {transform_indices = @transform_6, window_bounds = array<i64: 1, 32, 16, 16>}]} {
    %cst = arith.constant 0.000000e+00 : f32
    %0 = vector.broadcast %cst : f32 to vector<32x384xf32>
    %c0 = arith.constant 0 : index
    %c0_0 = arith.constant 0 : index
    %c0_1 = arith.constant 0 : index
    %c0_2 = arith.constant 0 : index
    %1 = vector.load %arg2[%c0, %c0_0, %c0_1, %c0_2] : memref<1x24x24x3xbf16, #tpu.memory_space<vmem>>, vector<1x16x24x3xbf16>
    %2 = vector.shape_cast %1 : vector<1x16x24x3xbf16> to vector<16x24x3xbf16>
    %3 = vector.shape_cast %2 : vector<16x24x3xbf16> to vector<384x3xbf16>
    %c0_3 = arith.constant 0 : index
    %c0_4 = arith.constant 0 : index
    %c0_5 = arith.constant 0 : index
    %c0_6 = arith.constant 0 : index
    %4 = vector.load %arg3[%c0_3, %c0_4, %c0_5, %c0_6] : memref<9x9x32x3xbf16, #tpu.memory_space<vmem>>, vector<1x9x32x3xbf16>
    %5 = vector.shape_cast %4 : vector<1x9x32x3xbf16> to vector<9x32x3xbf16>
    %6 = vector.shape_cast %5 : vector<9x32x3xbf16> to vector<288x3xbf16>
    %cst_7 = arith.constant dense<0.000000e+00> : vector<288x384xf32>
    %7 = tpu.matmul %6, %3, %cst_7 {dimension_numbers = #tpu.dot_dimension_numbers<[1], [1], [0], [0], [0, 0, 1, 0], [], []>} : vector<288x3xbf16>, vector<384x3xbf16>, vector<288x384xf32> -> vector<288x384xf32>
    %8 = vector.extract_strided_slice %7 {offsets = [0, 0], sizes = [32, 384], strides = [1, 1]} : vector<288x384xf32> to vector<32x384xf32>
    %9 = arith.addf %0, %8 : vector<32x384xf32>
    %10 = vector.extract_strided_slice %7 {offsets = [32, 0], sizes = [32, 384], strides = [1, 1]} : vector<288x384xf32> to vector<32x384xf32>
    %11 = vector.extract_strided_slice %10 {offsets = [0, 1], sizes = [32, 383], strides = [1, 1]} : vector<32x384xf32> to vector<32x383xf32>
    %12 = vector.extract_strided_slice %10 {offsets = [0, 0], sizes = [32, 1], strides = [1, 1]} : vector<32x384xf32> to vector<32x1xf32>
    %13 = tpu.concatenate %11, %12 in 1 : vector<32x383xf32>, vector<32x1xf32> -> vector<32x384xf32>
    %14 = arith.addf %9, %13 : vector<32x384xf32>
    %15 = vector.extract_strided_slice %7 {offsets = [64, 0], sizes = [32, 384], strides = [1, 1]} : vector<288x384xf32> to vector<32x384xf32>
    %16 = vector.extract_strided_slice %15 {offsets = [0, 2], sizes = [32, 382], strides = [1, 1]} : vector<32x384xf32> to vector<32x382xf32>
    %17 = vector.extract_strided_slice %15 {offsets = [0, 0], sizes = [32, 2], strides = [1, 1]} : vector<32x384xf32> to vector<32x2xf32>
    %18 = tpu.concatenate %16, %17 in 1 : vector<32x382xf32>, vector<32x2xf32> -> vector<32x384xf32>
    %19 = arith.addf %14, %18 : vector<32x384xf32>
    %20 = vector.extract_strided_slice %7 {offsets = [96, 0], sizes = [32, 384], strides = [1, 1]} : vector<288x384xf32> to vector<32x384xf32>
    %21 = vector.extract_strided_slice %20 {offsets = [0, 3], sizes = [32, 381], strides = [1, 1]} : vector<32x384xf32> to vector<32x381xf32>
    %22 = vector.extract_strided_slice %20 {offsets = [0, 0], sizes = [32, 3], strides = [1, 1]} : vector<32x384xf32> to vector<32x3xf32>
    %23 = tpu.concatenate %21, %22 in 1 : vector<32x381xf32>, vector<32x3xf32> -> vector<32x384xf32>
    %24 = arith.addf %19, %23 : vector<32x384xf32>
    %25 = vector.extract_strided_slice %7 {offsets = [128, 0], sizes = [32, 384], strides = [1, 1]} : vector<288x384xf32> to vector<32x384xf32>
    %26 = vector.extract_strided_slice %25 {offsets = [0, 4], sizes = [32, 380], strides = [1, 1]} : vector<32x384xf32> to vector<32x380xf32>
    %27 = vector.extract_strided_slice %25 {offsets = [0, 0], sizes = [32, 4], strides = [1, 1]} : vector<32x384xf32> to vector<32x4xf32>
    %28 = tpu.concatenate %26, %27 in 1 : vector<32x380xf32>, vector<32x4xf32> -> vector<32x384xf32>
    %29 = arith.addf %24, %28 : vector<32x384xf32>
    %30 = vector.extract_strided_slice %7 {offsets = [160, 0], sizes = [32, 384], strides = [1, 1]} : vector<288x384xf32> to vector<32x384xf32>
    %31 = vector.extract_strided_slice %30 {offsets = [0, 5], sizes = [32, 379], strides = [1, 1]} : vector<32x384xf32> to vector<32x379xf32>
    %32 = vector.extract_strided_slice %30 {offsets = [0, 0], sizes = [32, 5], strides = [1, 1]} : vector<32x384xf32> to vector<32x5xf32>
    %33 = tpu.concatenate %31, %32 in 1 : vector<32x379xf32>, vector<32x5xf32> -> vector<32x384xf32>
    %34 = arith.addf %29, %33 : vector<32x384xf32>
    %35 = vector.extract_strided_slice %7 {offsets = [192, 0], sizes = [32, 384], strides = [1, 1]} : vector<288x384xf32> to vector<32x384xf32>
    %36 = vector.extract_strided_slice %35 {offsets = [0, 6], sizes = [32, 378], strides = [1, 1]} : vector<32x384xf32> to vector<32x378xf32>
    %37 = vector.extract_strided_slice %35 {offsets = [0, 0], sizes = [32, 6], strides = [1, 1]} : vector<32x384xf32> to vector<32x6xf32>
    %38 = tpu.concatenate %36, %37 in 1 : vector<32x378xf32>, vector<32x6xf32> -> vector<32x384xf32>
    %39 = arith.addf %34, %38 : vector<32x384xf32>
    %40 = vector.extract_strided_slice %7 {offsets = [224, 0], sizes = [32, 384], strides = [1, 1]} : vector<288x384xf32> to vector<32x384xf32>
    %41 = vector.extract_strided_slice %40 {offsets = [0, 7], sizes = [32, 377], strides = [1, 1]} : vector<32x384xf32> to vector<32x377xf32>
    %42 = vector.extract_strided_slice %40 {offsets = [0, 0], sizes = [32, 7], strides = [1, 1]} : vector<32x384xf32> to vector<32x7xf32>
    %43 = tpu.concatenate %41, %42 in 1 : vector<32x377xf32>, vector<32x7xf32> -> vector<32x384xf32>
    %44 = arith.addf %39, %43 : vector<32x384xf32>
    %45 = vector.extract_strided_slice %7 {offsets = [256, 0], sizes = [32, 384], strides = [1, 1]} : vector<288x384xf32> to vector<32x384xf32>
    %46 = vector.extract_strided_slice %45 {offsets = [0, 8], sizes = [32, 376], strides = [1, 1]} : vector<32x384xf32> to vector<32x376xf32>
    %47 = vector.extract_strided_slice %45 {offsets = [0, 0], sizes = [32, 8], strides = [1, 1]} : vector<32x384xf32> to vector<32x8xf32>
    %48 = tpu.concatenate %46, %47 in 1 : vector<32x376xf32>, vector<32x8xf32> -> vector<32x384xf32>
    %49 = arith.addf %44, %48 : vector<32x384xf32>
    %c0_8 = arith.constant 0 : index
    %c1 = arith.constant 1 : index
    %c0_9 = arith.constant 0 : index
    %c0_10 = arith.constant 0 : index
    %50 = vector.load %arg2[%c0_8, %c1, %c0_9, %c0_10] : memref<1x24x24x3xbf16, #tpu.memory_space<vmem>>, vector<1x16x24x3xbf16>
    %51 = vector.shape_cast %50 : vector<1x16x24x3xbf16> to vector<16x24x3xbf16>
    %52 = vector.shape_cast %51 : vector<16x24x3xbf16> to vector<384x3xbf16>
    %c1_11 = arith.constant 1 : index
    %c0_12 = arith.constant 0 : index
    %c0_13 = arith.constant 0 : index
    %c0_14 = arith.constant 0 : index
    %53 = vector.load %arg3[%c1_11, %c0_12, %c0_13, %c0_14] : memref<9x9x32x3xbf16, #tpu.memory_space<vmem>>, vector<1x9x32x3xbf16>
    %54 = vector.shape_cast %53 : vector<1x9x32x3xbf16> to vector<9x32x3xbf16>
    %55 = vector.shape_cast %54 : vector<9x32x3xbf16> to vector<288x3xbf16>
    %cst_15 = arith.constant dense<0.000000e+00> : vector<288x384xf32>
    %56 = tpu.matmul %55, %52, %cst_15 {dimension_numbers = #tpu.dot_dimension_numbers<[1], [1], [0], [0], [0, 0, 1, 0], [], []>} : vector<288x3xbf16>, vector<384x3xbf16>, vector<288x384xf32> -> vector<288x384xf32>
    %57 = vector.extract_strided_slice %56 {offsets = [0, 0], sizes = [32, 384], strides = [1, 1]} : vector<288x384xf32> to vector<32x384xf32>
    %58 = arith.addf %49, %57 : vector<32x384xf32>
    %59 = vector.extract_strided_slice %56 {offsets = [32, 0], sizes = [32, 384], strides = [1, 1]} : vector<288x384xf32> to vector<32x384xf32>
    %60 = vector.extract_strided_slice %59 {offsets = [0, 1], sizes = [32, 383], strides = [1, 1]} : vector<32x384xf32> to vector<32x383xf32>
    %61 = vector.extract_strided_slice %59 {offsets = [0, 0], sizes = [32, 1], strides = [1, 1]} : vector<32x384xf32> to vector<32x1xf32>
    %62 = tpu.concatenate %60, %61 in 1 : vector<32x383xf32>, vector<32x1xf32> -> vector<32x384xf32>
    %63 = arith.addf %58, %62 : vector<32x384xf32>
    %64 = vector.extract_strided_slice %56 {offsets = [64, 0], sizes = [32, 384], strides = [1, 1]} : vector<288x384xf32> to vector<32x384xf32>
    %65 = vector.extract_strided_slice %64 {offsets = [0, 2], sizes = [32, 382], strides = [1, 1]} : vector<32x384xf32> to vector<32x382xf32>
    %66 = vector.extract_strided_slice %64 {offsets = [0, 0], sizes = [32, 2], strides = [1, 1]} : vector<32x384xf32> to vector<32x2xf32>
    %67 = tpu.concatenate %65, %66 in 1 : vector<32x382xf32>, vector<32x2xf32> -> vector<32x384xf32>
    %68 = arith.addf %63, %67 : vector<32x384xf32>
    %69 = vector.extract_strided_slice %56 {offsets = [96, 0], sizes = [32, 384], strides = [1, 1]} : vector<288x384xf32> to vector<32x384xf32>
    %70 = vector.extract_strided_slice %69 {offsets = [0, 3], sizes = [32, 381], strides = [1, 1]} : vector<32x384xf32> to vector<32x381xf32>
    %71 = vector.extract_strided_slice %69 {offsets = [0, 0], sizes = [32, 3], strides = [1, 1]} : vector<32x384xf32> to vector<32x3xf32>
    %72 = tpu.concatenate %70, %71 in 1 : vector<32x381xf32>, vector<32x3xf32> -> vector<32x384xf32>
    %73 = arith.addf %68, %72 : vector<32x384xf32>
    %74 = vector.extract_strided_slice %56 {offsets = [128, 0], sizes = [32, 384], strides = [1, 1]} : vector<288x384xf32> to vector<32x384xf32>
    %75 = vector.extract_strided_slice %74 {offsets = [0, 4], sizes = [32, 380], strides = [1, 1]} : vector<32x384xf32> to vector<32x380xf32>
    %76 = vector.extract_strided_slice %74 {offsets = [0, 0], sizes = [32, 4], strides = [1, 1]} : vector<32x384xf32> to vector<32x4xf32>
    %77 = tpu.concatenate %75, %76 in 1 : vector<32x380xf32>, vector<32x4xf32> -> vector<32x384xf32>
    %78 = arith.addf %73, %77 : vector<32x384xf32>
    %79 = vector.extract_strided_slice %56 {offsets = [160, 0], sizes = [32, 384], strides = [1, 1]} : vector<288x384xf32> to vector<32x384xf32>
    %80 = vector.extract_strided_slice %79 {offsets = [0, 5], sizes = [32, 379], strides = [1, 1]} : vector<32x384xf32> to vector<32x379xf32>
    %81 = vector.extract_strided_slice %79 {offsets = [0, 0], sizes = [32, 5], strides = [1, 1]} : vector<32x384xf32> to vector<32x5xf32>
    %82 = tpu.concatenate %80, %81 in 1 : vector<32x379xf32>, vector<32x5xf32> -> vector<32x384xf32>
    %83 = arith.addf %78, %82 : vector<32x384xf32>
    %84 = vector.extract_strided_slice %56 {offsets = [192, 0], sizes = [32, 384], strides = [1, 1]} : vector<288x384xf32> to vector<32x384xf32>
    %85 = vector.extract_strided_slice %84 {offsets = [0, 6], sizes = [32, 378], strides = [1, 1]} : vector<32x384xf32> to vector<32x378xf32>
    %86 = vector.extract_strided_slice %84 {offsets = [0, 0], sizes = [32, 6], strides = [1, 1]} : vector<32x384xf32> to vector<32x6xf32>
    %87 = tpu.concatenate %85, %86 in 1 : vector<32x378xf32>, vector<32x6xf32> -> vector<32x384xf32>
    %88 = arith.addf %83, %87 : vector<32x384xf32>
    %89 = vector.extract_strided_slice %56 {offsets = [224, 0], sizes = [32, 384], strides = [1, 1]} : vector<288x384xf32> to vector<32x384xf32>
    %90 = vector.extract_strided_slice %89 {offsets = [0, 7], sizes = [32, 377], strides = [1, 1]} : vector<32x384xf32> to vector<32x377xf32>
    %91 = vector.extract_strided_slice %89 {offsets = [0, 0], sizes = [32, 7], strides = [1, 1]} : vector<32x384xf32> to vector<32x7xf32>
    %92 = tpu.concatenate %90, %91 in 1 : vector<32x377xf32>, vector<32x7xf32> -> vector<32x384xf32>
    %93 = arith.addf %88, %92 : vector<32x384xf32>
    %94 = vector.extract_strided_slice %56 {offsets = [256, 0], sizes = [32, 384], strides = [1, 1]} : vector<288x384xf32> to vector<32x384xf32>
    %95 = vector.extract_strided_slice %94 {offsets = [0, 8], sizes = [32, 376], strides = [1, 1]} : vector<32x384xf32> to vector<32x376xf32>
    %96 = vector.extract_strided_slice %94 {offsets = [0, 0], sizes = [32, 8], strides = [1, 1]} : vector<32x384xf32> to vector<32x8xf32>
    %97 = tpu.concatenate %95, %96 in 1 : vector<32x376xf32>, vector<32x8xf32> -> vector<32x384xf32>
    %98 = arith.addf %93, %97 : vector<32x384xf32>
    %c0_16 = arith.constant 0 : index
    %c2 = arith.constant 2 : index
    %c0_17 = arith.constant 0 : index
    %c0_18 = arith.constant 0 : index
    %99 = vector.load %arg2[%c0_16, %c2, %c0_17, %c0_18] : memref<1x24x24x3xbf16, #tpu.memory_space<vmem>>, vector<1x16x24x3xbf16>
    %100 = vector.shape_cast %99 : vector<1x16x24x3xbf16> to vector<16x24x3xbf16>
    %101 = vector.shape_cast %100 : vector<16x24x3xbf16> to vector<384x3xbf16>
    %c2_19 = arith.constant 2 : index
    %c0_20 = arith.constant 0 : index
    %c0_21 = arith.constant 0 : index
    %c0_22 = arith.constant 0 : index
    %102 = vector.load %arg3[%c2_19, %c0_20, %c0_21, %c0_22] : memref<9x9x32x3xbf16, #tpu.memory_space<vmem>>, vector<1x9x32x3xbf16>
    %103 = vector.shape_cast %102 : vector<1x9x32x3xbf16> to vector<9x32x3xbf16>
    %104 = vector.shape_cast %103 : vector<9x32x3xbf16> to vector<288x3xbf16>
    %cst_23 = arith.constant dense<0.000000e+00> : vector<288x384xf32>
    %105 = tpu.matmul %104, %101, %cst_23 {dimension_numbers = #tpu.dot_dimension_numbers<[1], [1], [0], [0], [0, 0, 1, 0], [], []>} : vector<288x3xbf16>, vector<384x3xbf16>, vector<288x384xf32> -> vector<288x384xf32>
    %106 = vector.extract_strided_slice %105 {offsets = [0, 0], sizes = [32, 384], strides = [1, 1]} : vector<288x384xf32> to vector<32x384xf32>
    %107 = arith.addf %98, %106 : vector<32x384xf32>
    %108 = vector.extract_strided_slice %105 {offsets = [32, 0], sizes = [32, 384], strides = [1, 1]} : vector<288x384xf32> to vector<32x384xf32>
    %109 = vector.extract_strided_slice %108 {offsets = [0, 1], sizes = [32, 383], strides = [1, 1]} : vector<32x384xf32> to vector<32x383xf32>
    %110 = vector.extract_strided_slice %108 {offsets = [0, 0], sizes = [32, 1], strides = [1, 1]} : vector<32x384xf32> to vector<32x1xf32>
    %111 = tpu.concatenate %109, %110 in 1 : vector<32x383xf32>, vector<32x1xf32> -> vector<32x384xf32>
    %112 = arith.addf %107, %111 : vector<32x384xf32>
    %113 = vector.extract_strided_slice %105 {offsets = [64, 0], sizes = [32, 384], strides = [1, 1]} : vector<288x384xf32> to vector<32x384xf32>
    %114 = vector.extract_strided_slice %113 {offsets = [0, 2], sizes = [32, 382], strides = [1, 1]} : vector<32x384xf32> to vector<32x382xf32>
    %115 = vector.extract_strided_slice %113 {offsets = [0, 0], sizes = [32, 2], strides = [1, 1]} : vector<32x384xf32> to vector<32x2xf32>
    %116 = tpu.concatenate %114, %115 in 1 : vector<32x382xf32>, vector<32x2xf32> -> vector<32x384xf32>
    %117 = arith.addf %112, %116 : vector<32x384xf32>
    %118 = vector.extract_strided_slice %105 {offsets = [96, 0], sizes = [32, 384], strides = [1, 1]} : vector<288x384xf32> to vector<32x384xf32>
    %119 = vector.extract_strided_slice %118 {offsets = [0, 3], sizes = [32, 381], strides = [1, 1]} : vector<32x384xf32> to vector<32x381xf32>
    %120 = vector.extract_strided_slice %118 {offsets = [0, 0], sizes = [32, 3], strides = [1, 1]} : vector<32x384xf32> to vector<32x3xf32>
    %121 = tpu.concatenate %119, %120 in 1 : vector<32x381xf32>, vector<32x3xf32> -> vector<32x384xf32>
    %122 = arith.addf %117, %121 : vector<32x384xf32>
    %123 = vector.extract_strided_slice %105 {offsets = [128, 0], sizes = [32, 384], strides = [1, 1]} : vector<288x384xf32> to vector<32x384xf32>
    %124 = vector.extract_strided_slice %123 {offsets = [0, 4], sizes = [32, 380], strides = [1, 1]} : vector<32x384xf32> to vector<32x380xf32>
    %125 = vector.extract_strided_slice %123 {offsets = [0, 0], sizes = [32, 4], strides = [1, 1]} : vector<32x384xf32> to vector<32x4xf32>
    %126 = tpu.concatenate %124, %125 in 1 : vector<32x380xf32>, vector<32x4xf32> -> vector<32x384xf32>
    %127 = arith.addf %122, %126 : vector<32x384xf32>
    %128 = vector.extract_strided_slice %105 {offsets = [160, 0], sizes = [32, 384], strides = [1, 1]} : vector<288x384xf32> to vector<32x384xf32>
    %129 = vector.extract_strided_slice %128 {offsets = [0, 5], sizes = [32, 379], strides = [1, 1]} : vector<32x384xf32> to vector<32x379xf32>
    %130 = vector.extract_strided_slice %128 {offsets = [0, 0], sizes = [32, 5], strides = [1, 1]} : vector<32x384xf32> to vector<32x5xf32>
    %131 = tpu.concatenate %129, %130 in 1 : vector<32x379xf32>, vector<32x5xf32> -> vector<32x384xf32>
    %132 = arith.addf %127, %131 : vector<32x384xf32>
    %133 = vector.extract_strided_slice %105 {offsets = [192, 0], sizes = [32, 384], strides = [1, 1]} : vector<288x384xf32> to vector<32x384xf32>
    %134 = vector.extract_strided_slice %133 {offsets = [0, 6], sizes = [32, 378], strides = [1, 1]} : vector<32x384xf32> to vector<32x378xf32>
    %135 = vector.extract_strided_slice %133 {offsets = [0, 0], sizes = [32, 6], strides = [1, 1]} : vector<32x384xf32> to vector<32x6xf32>
    %136 = tpu.concatenate %134, %135 in 1 : vector<32x378xf32>, vector<32x6xf32> -> vector<32x384xf32>
    %137 = arith.addf %132, %136 : vector<32x384xf32>
    %138 = vector.extract_strided_slice %105 {offsets = [224, 0], sizes = [32, 384], strides = [1, 1]} : vector<288x384xf32> to vector<32x384xf32>
    %139 = vector.extract_strided_slice %138 {offsets = [0, 7], sizes = [32, 377], strides = [1, 1]} : vector<32x384xf32> to vector<32x377xf32>
    %140 = vector.extract_strided_slice %138 {offsets = [0, 0], sizes = [32, 7], strides = [1, 1]} : vector<32x384xf32> to vector<32x7xf32>
    %141 = tpu.concatenate %139, %140 in 1 : vector<32x377xf32>, vector<32x7xf32> -> vector<32x384xf32>
    %142 = arith.addf %137, %141 : vector<32x384xf32>
    %143 = vector.extract_strided_slice %105 {offsets = [256, 0], sizes = [32, 384], strides = [1, 1]} : vector<288x384xf32> to vector<32x384xf32>
    %144 = vector.extract_strided_slice %143 {offsets = [0, 8], sizes = [32, 376], strides = [1, 1]} : vector<32x384xf32> to vector<32x376xf32>
    %145 = vector.extract_strided_slice %143 {offsets = [0, 0], sizes = [32, 8], strides = [1, 1]} : vector<32x384xf32> to vector<32x8xf32>
    %146 = tpu.concatenate %144, %145 in 1 : vector<32x376xf32>, vector<32x8xf32> -> vector<32x384xf32>
    %147 = arith.addf %142, %146 : vector<32x384xf32>
    %c0_24 = arith.constant 0 : index
    %c3 = arith.constant 3 : index
    %c0_25 = arith.constant 0 : index
    %c0_26 = arith.constant 0 : index
    %148 = vector.load %arg2[%c0_24, %c3, %c0_25, %c0_26] : memref<1x24x24x3xbf16, #tpu.memory_space<vmem>>, vector<1x16x24x3xbf16>
    %149 = vector.shape_cast %148 : vector<1x16x24x3xbf16> to vector<16x24x3xbf16>
    %150 = vector.shape_cast %149 : vector<16x24x3xbf16> to vector<384x3xbf16>
    %c3_27 = arith.constant 3 : index
    %c0_28 = arith.constant 0 : index
    %c0_29 = arith.constant 0 : index
    %c0_30 = arith.constant 0 : index
    %151 = vector.load %arg3[%c3_27, %c0_28, %c0_29, %c0_30] : memref<9x9x32x3xbf16, #tpu.memory_space<vmem>>, vector<1x9x32x3xbf16>
    %152 = vector.shape_cast %151 : vector<1x9x32x3xbf16> to vector<9x32x3xbf16>
    %153 = vector.shape_cast %152 : vector<9x32x3xbf16> to vector<288x3xbf16>
    %cst_31 = arith.constant dense<0.000000e+00> : vector<288x384xf32>
    %154 = tpu.matmul %153, %150, %cst_31 {dimension_numbers = #tpu.dot_dimension_numbers<[1], [1], [0], [0], [0, 0, 1, 0], [], []>} : vector<288x3xbf16>, vector<384x3xbf16>, vector<288x384xf32> -> vector<288x384xf32>
    %155 = vector.extract_strided_slice %154 {offsets = [0, 0], sizes = [32, 384], strides = [1, 1]} : vector<288x384xf32> to vector<32x384xf32>
    %156 = arith.addf %147, %155 : vector<32x384xf32>
    %157 = vector.extract_strided_slice %154 {offsets = [32, 0], sizes = [32, 384], strides = [1, 1]} : vector<288x384xf32> to vector<32x384xf32>
    %158 = vector.extract_strided_slice %157 {offsets = [0, 1], sizes = [32, 383], strides = [1, 1]} : vector<32x384xf32> to vector<32x383xf32>
    %159 = vector.extract_strided_slice %157 {offsets = [0, 0], sizes = [32, 1], strides = [1, 1]} : vector<32x384xf32> to vector<32x1xf32>
    %160 = tpu.concatenate %158, %159 in 1 : vector<32x383xf32>, vector<32x1xf32> -> vector<32x384xf32>
    %161 = arith.addf %156, %160 : vector<32x384xf32>
    %162 = vector.extract_strided_slice %154 {offsets = [64, 0], sizes = [32, 384], strides = [1, 1]} : vector<288x384xf32> to vector<32x384xf32>
    %163 = vector.extract_strided_slice %162 {offsets = [0, 2], sizes = [32, 382], strides = [1, 1]} : vector<32x384xf32> to vector<32x382xf32>
    %164 = vector.extract_strided_slice %162 {offsets = [0, 0], sizes = [32, 2], strides = [1, 1]} : vector<32x384xf32> to vector<32x2xf32>
    %165 = tpu.concatenate %163, %164 in 1 : vector<32x382xf32>, vector<32x2xf32> -> vector<32x384xf32>
    %166 = arith.addf %161, %165 : vector<32x384xf32>
    %167 = vector.extract_strided_slice %154 {offsets = [96, 0], sizes = [32, 384], strides = [1, 1]} : vector<288x384xf32> to vector<32x384xf32>
    %168 = vector.extract_strided_slice %167 {offsets = [0, 3], sizes = [32, 381], strides = [1, 1]} : vector<32x384xf32> to vector<32x381xf32>
    %169 = vector.extract_strided_slice %167 {offsets = [0, 0], sizes = [32, 3], strides = [1, 1]} : vector<32x384xf32> to vector<32x3xf32>
    %170 = tpu.concatenate %168, %169 in 1 : vector<32x381xf32>, vector<32x3xf32> -> vector<32x384xf32>
    %171 = arith.addf %166, %170 : vector<32x384xf32>
    %172 = vector.extract_strided_slice %154 {offsets = [128, 0], sizes = [32, 384], strides = [1, 1]} : vector<288x384xf32> to vector<32x384xf32>
    %173 = vector.extract_strided_slice %172 {offsets = [0, 4], sizes = [32, 380], strides = [1, 1]} : vector<32x384xf32> to vector<32x380xf32>
    %174 = vector.extract_strided_slice %172 {offsets = [0, 0], sizes = [32, 4], strides = [1, 1]} : vector<32x384xf32> to vector<32x4xf32>
    %175 = tpu.concatenate %173, %174 in 1 : vector<32x380xf32>, vector<32x4xf32> -> vector<32x384xf32>
    %176 = arith.addf %171, %175 : vector<32x384xf32>
    %177 = vector.extract_strided_slice %154 {offsets = [160, 0], sizes = [32, 384], strides = [1, 1]} : vector<288x384xf32> to vector<32x384xf32>
    %178 = vector.extract_strided_slice %177 {offsets = [0, 5], sizes = [32, 379], strides = [1, 1]} : vector<32x384xf32> to vector<32x379xf32>
    %179 = vector.extract_strided_slice %177 {offsets = [0, 0], sizes = [32, 5], strides = [1, 1]} : vector<32x384xf32> to vector<32x5xf32>
    %180 = tpu.concatenate %178, %179 in 1 : vector<32x379xf32>, vector<32x5xf32> -> vector<32x384xf32>
    %181 = arith.addf %176, %180 : vector<32x384xf32>
    %182 = vector.extract_strided_slice %154 {offsets = [192, 0], sizes = [32, 384], strides = [1, 1]} : vector<288x384xf32> to vector<32x384xf32>
    %183 = vector.extract_strided_slice %182 {offsets = [0, 6], sizes = [32, 378], strides = [1, 1]} : vector<32x384xf32> to vector<32x378xf32>
    %184 = vector.extract_strided_slice %182 {offsets = [0, 0], sizes = [32, 6], strides = [1, 1]} : vector<32x384xf32> to vector<32x6xf32>
    %185 = tpu.concatenate %183, %184 in 1 : vector<32x378xf32>, vector<32x6xf32> -> vector<32x384xf32>
    %186 = arith.addf %181, %185 : vector<32x384xf32>
    %187 = vector.extract_strided_slice %154 {offsets = [224, 0], sizes = [32, 384], strides = [1, 1]} : vector<288x384xf32> to vector<32x384xf32>
    %188 = vector.extract_strided_slice %187 {offsets = [0, 7], sizes = [32, 377], strides = [1, 1]} : vector<32x384xf32> to vector<32x377xf32>
    %189 = vector.extract_strided_slice %187 {offsets = [0, 0], sizes = [32, 7], strides = [1, 1]} : vector<32x384xf32> to vector<32x7xf32>
    %190 = tpu.concatenate %188, %189 in 1 : vector<32x377xf32>, vector<32x7xf32> -> vector<32x384xf32>
    %191 = arith.addf %186, %190 : vector<32x384xf32>
    %192 = vector.extract_strided_slice %154 {offsets = [256, 0], sizes = [32, 384], strides = [1, 1]} : vector<288x384xf32> to vector<32x384xf32>
    %193 = vector.extract_strided_slice %192 {offsets = [0, 8], sizes = [32, 376], strides = [1, 1]} : vector<32x384xf32> to vector<32x376xf32>
    %194 = vector.extract_strided_slice %192 {offsets = [0, 0], sizes = [32, 8], strides = [1, 1]} : vector<32x384xf32> to vector<32x8xf32>
    %195 = tpu.concatenate %193, %194 in 1 : vector<32x376xf32>, vector<32x8xf32> -> vector<32x384xf32>
    %196 = arith.addf %191, %195 : vector<32x384xf32>
    %c0_32 = arith.constant 0 : index
    %c4 = arith.constant 4 : index
    %c0_33 = arith.constant 0 : index
    %c0_34 = arith.constant 0 : index
    %197 = vector.load %arg2[%c0_32, %c4, %c0_33, %c0_34] : memref<1x24x24x3xbf16, #tpu.memory_space<vmem>>, vector<1x16x24x3xbf16>
    %198 = vector.shape_cast %197 : vector<1x16x24x3xbf16> to vector<16x24x3xbf16>
    %199 = vector.shape_cast %198 : vector<16x24x3xbf16> to vector<384x3xbf16>
    %c4_35 = arith.constant 4 : index
    %c0_36 = arith.constant 0 : index
    %c0_37 = arith.constant 0 : index
    %c0_38 = arith.constant 0 : index
    %200 = vector.load %arg3[%c4_35, %c0_36, %c0_37, %c0_38] : memref<9x9x32x3xbf16, #tpu.memory_space<vmem>>, vector<1x9x32x3xbf16>
    %201 = vector.shape_cast %200 : vector<1x9x32x3xbf16> to vector<9x32x3xbf16>
    %202 = vector.shape_cast %201 : vector<9x32x3xbf16> to vector<288x3xbf16>
    %cst_39 = arith.constant dense<0.000000e+00> : vector<288x384xf32>
    %203 = tpu.matmul %202, %199, %cst_39 {dimension_numbers = #tpu.dot_dimension_numbers<[1], [1], [0], [0], [0, 0, 1, 0], [], []>} : vector<288x3xbf16>, vector<384x3xbf16>, vector<288x384xf32> -> vector<288x384xf32>
    %204 = vector.extract_strided_slice %203 {offsets = [0, 0], sizes = [32, 384], strides = [1, 1]} : vector<288x384xf32> to vector<32x384xf32>
    %205 = arith.addf %196, %204 : vector<32x384xf32>
    %206 = vector.extract_strided_slice %203 {offsets = [32, 0], sizes = [32, 384], strides = [1, 1]} : vector<288x384xf32> to vector<32x384xf32>
    %207 = vector.extract_strided_slice %206 {offsets = [0, 1], sizes = [32, 383], strides = [1, 1]} : vector<32x384xf32> to vector<32x383xf32>
    %208 = vector.extract_strided_slice %206 {offsets = [0, 0], sizes = [32, 1], strides = [1, 1]} : vector<32x384xf32> to vector<32x1xf32>
    %209 = tpu.concatenate %207, %208 in 1 : vector<32x383xf32>, vector<32x1xf32> -> vector<32x384xf32>
    %210 = arith.addf %205, %209 : vector<32x384xf32>
    %211 = vector.extract_strided_slice %203 {offsets = [64, 0], sizes = [32, 384], strides = [1, 1]} : vector<288x384xf32> to vector<32x384xf32>
    %212 = vector.extract_strided_slice %211 {offsets = [0, 2], sizes = [32, 382], strides = [1, 1]} : vector<32x384xf32> to vector<32x382xf32>
    %213 = vector.extract_strided_slice %211 {offsets = [0, 0], sizes = [32, 2], strides = [1, 1]} : vector<32x384xf32> to vector<32x2xf32>
    %214 = tpu.concatenate %212, %213 in 1 : vector<32x382xf32>, vector<32x2xf32> -> vector<32x384xf32>
    %215 = arith.addf %210, %214 : vector<32x384xf32>
    %216 = vector.extract_strided_slice %203 {offsets = [96, 0], sizes = [32, 384], strides = [1, 1]} : vector<288x384xf32> to vector<32x384xf32>
    %217 = vector.extract_strided_slice %216 {offsets = [0, 3], sizes = [32, 381], strides = [1, 1]} : vector<32x384xf32> to vector<32x381xf32>
    %218 = vector.extract_strided_slice %216 {offsets = [0, 0], sizes = [32, 3], strides = [1, 1]} : vector<32x384xf32> to vector<32x3xf32>
    %219 = tpu.concatenate %217, %218 in 1 : vector<32x381xf32>, vector<32x3xf32> -> vector<32x384xf32>
    %220 = arith.addf %215, %219 : vector<32x384xf32>
    %221 = vector.extract_strided_slice %203 {offsets = [128, 0], sizes = [32, 384], strides = [1, 1]} : vector<288x384xf32> to vector<32x384xf32>
    %222 = vector.extract_strided_slice %221 {offsets = [0, 4], sizes = [32, 380], strides = [1, 1]} : vector<32x384xf32> to vector<32x380xf32>
    %223 = vector.extract_strided_slice %221 {offsets = [0, 0], sizes = [32, 4], strides = [1, 1]} : vector<32x384xf32> to vector<32x4xf32>
    %224 = tpu.concatenate %222, %223 in 1 : vector<32x380xf32>, vector<32x4xf32> -> vector<32x384xf32>
    %225 = arith.addf %220, %224 : vector<32x384xf32>
    %226 = vector.extract_strided_slice %203 {offsets = [160, 0], sizes = [32, 384], strides = [1, 1]} : vector<288x384xf32> to vector<32x384xf32>
    %227 = vector.extract_strided_slice %226 {offsets = [0, 5], sizes = [32, 379], strides = [1, 1]} : vector<32x384xf32> to vector<32x379xf32>
    %228 = vector.extract_strided_slice %226 {offsets = [0, 0], sizes = [32, 5], strides = [1, 1]} : vector<32x384xf32> to vector<32x5xf32>
    %229 = tpu.concatenate %227, %228 in 1 : vector<32x379xf32>, vector<32x5xf32> -> vector<32x384xf32>
    %230 = arith.addf %225, %229 : vector<32x384xf32>
    %231 = vector.extract_strided_slice %203 {offsets = [192, 0], sizes = [32, 384], strides = [1, 1]} : vector<288x384xf32> to vector<32x384xf32>
    %232 = vector.extract_strided_slice %231 {offsets = [0, 6], sizes = [32, 378], strides = [1, 1]} : vector<32x384xf32> to vector<32x378xf32>
    %233 = vector.extract_strided_slice %231 {offsets = [0, 0], sizes = [32, 6], strides = [1, 1]} : vector<32x384xf32> to vector<32x6xf32>
    %234 = tpu.concatenate %232, %233 in 1 : vector<32x378xf32>, vector<32x6xf32> -> vector<32x384xf32>
    %235 = arith.addf %230, %234 : vector<32x384xf32>
    %236 = vector.extract_strided_slice %203 {offsets = [224, 0], sizes = [32, 384], strides = [1, 1]} : vector<288x384xf32> to vector<32x384xf32>
    %237 = vector.extract_strided_slice %236 {offsets = [0, 7], sizes = [32, 377], strides = [1, 1]} : vector<32x384xf32> to vector<32x377xf32>
    %238 = vector.extract_strided_slice %236 {offsets = [0, 0], sizes = [32, 7], strides = [1, 1]} : vector<32x384xf32> to vector<32x7xf32>
    %239 = tpu.concatenate %237, %238 in 1 : vector<32x377xf32>, vector<32x7xf32> -> vector<32x384xf32>
    %240 = arith.addf %235, %239 : vector<32x384xf32>
    %241 = vector.extract_strided_slice %203 {offsets = [256, 0], sizes = [32, 384], strides = [1, 1]} : vector<288x384xf32> to vector<32x384xf32>
    %242 = vector.extract_strided_slice %241 {offsets = [0, 8], sizes = [32, 376], strides = [1, 1]} : vector<32x384xf32> to vector<32x376xf32>
    %243 = vector.extract_strided_slice %241 {offsets = [0, 0], sizes = [32, 8], strides = [1, 1]} : vector<32x384xf32> to vector<32x8xf32>
    %244 = tpu.concatenate %242, %243 in 1 : vector<32x376xf32>, vector<32x8xf32> -> vector<32x384xf32>
    %245 = arith.addf %240, %244 : vector<32x384xf32>
    %c0_40 = arith.constant 0 : index
    %c5 = arith.constant 5 : index
    %c0_41 = arith.constant 0 : index
    %c0_42 = arith.constant 0 : index
    %246 = vector.load %arg2[%c0_40, %c5, %c0_41, %c0_42] : memref<1x24x24x3xbf16, #tpu.memory_space<vmem>>, vector<1x16x24x3xbf16>
    %247 = vector.shape_cast %246 : vector<1x16x24x3xbf16> to vector<16x24x3xbf16>
    %248 = vector.shape_cast %247 : vector<16x24x3xbf16> to vector<384x3xbf16>
    %c5_43 = arith.constant 5 : index
    %c0_44 = arith.constant 0 : index
    %c0_45 = arith.constant 0 : index
    %c0_46 = arith.constant 0 : index
    %249 = vector.load %arg3[%c5_43, %c0_44, %c0_45, %c0_46] : memref<9x9x32x3xbf16, #tpu.memory_space<vmem>>, vector<1x9x32x3xbf16>
    %250 = vector.shape_cast %249 : vector<1x9x32x3xbf16> to vector<9x32x3xbf16>
    %251 = vector.shape_cast %250 : vector<9x32x3xbf16> to vector<288x3xbf16>
    %cst_47 = arith.constant dense<0.000000e+00> : vector<288x384xf32>
    %252 = tpu.matmul %251, %248, %cst_47 {dimension_numbers = #tpu.dot_dimension_numbers<[1], [1], [0], [0], [0, 0, 1, 0], [], []>} : vector<288x3xbf16>, vector<384x3xbf16>, vector<288x384xf32> -> vector<288x384xf32>
    %253 = vector.extract_strided_slice %252 {offsets = [0, 0], sizes = [32, 384], strides = [1, 1]} : vector<288x384xf32> to vector<32x384xf32>
    %254 = arith.addf %245, %253 : vector<32x384xf32>
    %255 = vector.extract_strided_slice %252 {offsets = [32, 0], sizes = [32, 384], strides = [1, 1]} : vector<288x384xf32> to vector<32x384xf32>
    %256 = vector.extract_strided_slice %255 {offsets = [0, 1], sizes = [32, 383], strides = [1, 1]} : vector<32x384xf32> to vector<32x383xf32>
    %257 = vector.extract_strided_slice %255 {offsets = [0, 0], sizes = [32, 1], strides = [1, 1]} : vector<32x384xf32> to vector<32x1xf32>
    %258 = tpu.concatenate %256, %257 in 1 : vector<32x383xf32>, vector<32x1xf32> -> vector<32x384xf32>
    %259 = arith.addf %254, %258 : vector<32x384xf32>
    %260 = vector.extract_strided_slice %252 {offsets = [64, 0], sizes = [32, 384], strides = [1, 1]} : vector<288x384xf32> to vector<32x384xf32>
    %261 = vector.extract_strided_slice %260 {offsets = [0, 2], sizes = [32, 382], strides = [1, 1]} : vector<32x384xf32> to vector<32x382xf32>
    %262 = vector.extract_strided_slice %260 {offsets = [0, 0], sizes = [32, 2], strides = [1, 1]} : vector<32x384xf32> to vector<32x2xf32>
    %263 = tpu.concatenate %261, %262 in 1 : vector<32x382xf32>, vector<32x2xf32> -> vector<32x384xf32>
    %264 = arith.addf %259, %263 : vector<32x384xf32>
    %265 = vector.extract_strided_slice %252 {offsets = [96, 0], sizes = [32, 384], strides = [1, 1]} : vector<288x384xf32> to vector<32x384xf32>
    %266 = vector.extract_strided_slice %265 {offsets = [0, 3], sizes = [32, 381], strides = [1, 1]} : vector<32x384xf32> to vector<32x381xf32>
    %267 = vector.extract_strided_slice %265 {offsets = [0, 0], sizes = [32, 3], strides = [1, 1]} : vector<32x384xf32> to vector<32x3xf32>
    %268 = tpu.concatenate %266, %267 in 1 : vector<32x381xf32>, vector<32x3xf32> -> vector<32x384xf32>
    %269 = arith.addf %264, %268 : vector<32x384xf32>
    %270 = vector.extract_strided_slice %252 {offsets = [128, 0], sizes = [32, 384], strides = [1, 1]} : vector<288x384xf32> to vector<32x384xf32>
    %271 = vector.extract_strided_slice %270 {offsets = [0, 4], sizes = [32, 380], strides = [1, 1]} : vector<32x384xf32> to vector<32x380xf32>
    %272 = vector.extract_strided_slice %270 {offsets = [0, 0], sizes = [32, 4], strides = [1, 1]} : vector<32x384xf32> to vector<32x4xf32>
    %273 = tpu.concatenate %271, %272 in 1 : vector<32x380xf32>, vector<32x4xf32> -> vector<32x384xf32>
    %274 = arith.addf %269, %273 : vector<32x384xf32>
    %275 = vector.extract_strided_slice %252 {offsets = [160, 0], sizes = [32, 384], strides = [1, 1]} : vector<288x384xf32> to vector<32x384xf32>
    %276 = vector.extract_strided_slice %275 {offsets = [0, 5], sizes = [32, 379], strides = [1, 1]} : vector<32x384xf32> to vector<32x379xf32>
    %277 = vector.extract_strided_slice %275 {offsets = [0, 0], sizes = [32, 5], strides = [1, 1]} : vector<32x384xf32> to vector<32x5xf32>
    %278 = tpu.concatenate %276, %277 in 1 : vector<32x379xf32>, vector<32x5xf32> -> vector<32x384xf32>
    %279 = arith.addf %274, %278 : vector<32x384xf32>
    %280 = vector.extract_strided_slice %252 {offsets = [192, 0], sizes = [32, 384], strides = [1, 1]} : vector<288x384xf32> to vector<32x384xf32>
    %281 = vector.extract_strided_slice %280 {offsets = [0, 6], sizes = [32, 378], strides = [1, 1]} : vector<32x384xf32> to vector<32x378xf32>
    %282 = vector.extract_strided_slice %280 {offsets = [0, 0], sizes = [32, 6], strides = [1, 1]} : vector<32x384xf32> to vector<32x6xf32>
    %283 = tpu.concatenate %281, %282 in 1 : vector<32x378xf32>, vector<32x6xf32> -> vector<32x384xf32>
    %284 = arith.addf %279, %283 : vector<32x384xf32>
    %285 = vector.extract_strided_slice %252 {offsets = [224, 0], sizes = [32, 384], strides = [1, 1]} : vector<288x384xf32> to vector<32x384xf32>
    %286 = vector.extract_strided_slice %285 {offsets = [0, 7], sizes = [32, 377], strides = [1, 1]} : vector<32x384xf32> to vector<32x377xf32>
    %287 = vector.extract_strided_slice %285 {offsets = [0, 0], sizes = [32, 7], strides = [1, 1]} : vector<32x384xf32> to vector<32x7xf32>
    %288 = tpu.concatenate %286, %287 in 1 : vector<32x377xf32>, vector<32x7xf32> -> vector<32x384xf32>
    %289 = arith.addf %284, %288 : vector<32x384xf32>
    %290 = vector.extract_strided_slice %252 {offsets = [256, 0], sizes = [32, 384], strides = [1, 1]} : vector<288x384xf32> to vector<32x384xf32>
    %291 = vector.extract_strided_slice %290 {offsets = [0, 8], sizes = [32, 376], strides = [1, 1]} : vector<32x384xf32> to vector<32x376xf32>
    %292 = vector.extract_strided_slice %290 {offsets = [0, 0], sizes = [32, 8], strides = [1, 1]} : vector<32x384xf32> to vector<32x8xf32>
    %293 = tpu.concatenate %291, %292 in 1 : vector<32x376xf32>, vector<32x8xf32> -> vector<32x384xf32>
    %294 = arith.addf %289, %293 : vector<32x384xf32>
    %c0_48 = arith.constant 0 : index
    %c6 = arith.constant 6 : index
    %c0_49 = arith.constant 0 : index
    %c0_50 = arith.constant 0 : index
    %295 = vector.load %arg2[%c0_48, %c6, %c0_49, %c0_50] : memref<1x24x24x3xbf16, #tpu.memory_space<vmem>>, vector<1x16x24x3xbf16>
    %296 = vector.shape_cast %295 : vector<1x16x24x3xbf16> to vector<16x24x3xbf16>
    %297 = vector.shape_cast %296 : vector<16x24x3xbf16> to vector<384x3xbf16>
    %c6_51 = arith.constant 6 : index
    %c0_52 = arith.constant 0 : index
    %c0_53 = arith.constant 0 : index
    %c0_54 = arith.constant 0 : index
    %298 = vector.load %arg3[%c6_51, %c0_52, %c0_53, %c0_54] : memref<9x9x32x3xbf16, #tpu.memory_space<vmem>>, vector<1x9x32x3xbf16>
    %299 = vector.shape_cast %298 : vector<1x9x32x3xbf16> to vector<9x32x3xbf16>
    %300 = vector.shape_cast %299 : vector<9x32x3xbf16> to vector<288x3xbf16>
    %cst_55 = arith.constant dense<0.000000e+00> : vector<288x384xf32>
    %301 = tpu.matmul %300, %297, %cst_55 {dimension_numbers = #tpu.dot_dimension_numbers<[1], [1], [0], [0], [0, 0, 1, 0], [], []>} : vector<288x3xbf16>, vector<384x3xbf16>, vector<288x384xf32> -> vector<288x384xf32>
    %302 = vector.extract_strided_slice %301 {offsets = [0, 0], sizes = [32, 384], strides = [1, 1]} : vector<288x384xf32> to vector<32x384xf32>
    %303 = arith.addf %294, %302 : vector<32x384xf32>
    %304 = vector.extract_strided_slice %301 {offsets = [32, 0], sizes = [32, 384], strides = [1, 1]} : vector<288x384xf32> to vector<32x384xf32>
    %305 = vector.extract_strided_slice %304 {offsets = [0, 1], sizes = [32, 383], strides = [1, 1]} : vector<32x384xf32> to vector<32x383xf32>
    %306 = vector.extract_strided_slice %304 {offsets = [0, 0], sizes = [32, 1], strides = [1, 1]} : vector<32x384xf32> to vector<32x1xf32>
    %307 = tpu.concatenate %305, %306 in 1 : vector<32x383xf32>, vector<32x1xf32> -> vector<32x384xf32>
    %308 = arith.addf %303, %307 : vector<32x384xf32>
    %309 = vector.extract_strided_slice %301 {offsets = [64, 0], sizes = [32, 384], strides = [1, 1]} : vector<288x384xf32> to vector<32x384xf32>
    %310 = vector.extract_strided_slice %309 {offsets = [0, 2], sizes = [32, 382], strides = [1, 1]} : vector<32x384xf32> to vector<32x382xf32>
    %311 = vector.extract_strided_slice %309 {offsets = [0, 0], sizes = [32, 2], strides = [1, 1]} : vector<32x384xf32> to vector<32x2xf32>
    %312 = tpu.concatenate %310, %311 in 1 : vector<32x382xf32>, vector<32x2xf32> -> vector<32x384xf32>
    %313 = arith.addf %308, %312 : vector<32x384xf32>
    %314 = vector.extract_strided_slice %301 {offsets = [96, 0], sizes = [32, 384], strides = [1, 1]} : vector<288x384xf32> to vector<32x384xf32>
    %315 = vector.extract_strided_slice %314 {offsets = [0, 3], sizes = [32, 381], strides = [1, 1]} : vector<32x384xf32> to vector<32x381xf32>
    %316 = vector.extract_strided_slice %314 {offsets = [0, 0], sizes = [32, 3], strides = [1, 1]} : vector<32x384xf32> to vector<32x3xf32>
    %317 = tpu.concatenate %315, %316 in 1 : vector<32x381xf32>, vector<32x3xf32> -> vector<32x384xf32>
    %318 = arith.addf %313, %317 : vector<32x384xf32>
    %319 = vector.extract_strided_slice %301 {offsets = [128, 0], sizes = [32, 384], strides = [1, 1]} : vector<288x384xf32> to vector<32x384xf32>
    %320 = vector.extract_strided_slice %319 {offsets = [0, 4], sizes = [32, 380], strides = [1, 1]} : vector<32x384xf32> to vector<32x380xf32>
    %321 = vector.extract_strided_slice %319 {offsets = [0, 0], sizes = [32, 4], strides = [1, 1]} : vector<32x384xf32> to vector<32x4xf32>
    %322 = tpu.concatenate %320, %321 in 1 : vector<32x380xf32>, vector<32x4xf32> -> vector<32x384xf32>
    %323 = arith.addf %318, %322 : vector<32x384xf32>
    %324 = vector.extract_strided_slice %301 {offsets = [160, 0], sizes = [32, 384], strides = [1, 1]} : vector<288x384xf32> to vector<32x384xf32>
    %325 = vector.extract_strided_slice %324 {offsets = [0, 5], sizes = [32, 379], strides = [1, 1]} : vector<32x384xf32> to vector<32x379xf32>
    %326 = vector.extract_strided_slice %324 {offsets = [0, 0], sizes = [32, 5], strides = [1, 1]} : vector<32x384xf32> to vector<32x5xf32>
    %327 = tpu.concatenate %325, %326 in 1 : vector<32x379xf32>, vector<32x5xf32> -> vector<32x384xf32>
    %328 = arith.addf %323, %327 : vector<32x384xf32>
    %329 = vector.extract_strided_slice %301 {offsets = [192, 0], sizes = [32, 384], strides = [1, 1]} : vector<288x384xf32> to vector<32x384xf32>
    %330 = vector.extract_strided_slice %329 {offsets = [0, 6], sizes = [32, 378], strides = [1, 1]} : vector<32x384xf32> to vector<32x378xf32>
    %331 = vector.extract_strided_slice %329 {offsets = [0, 0], sizes = [32, 6], strides = [1, 1]} : vector<32x384xf32> to vector<32x6xf32>
    %332 = tpu.concatenate %330, %331 in 1 : vector<32x378xf32>, vector<32x6xf32> -> vector<32x384xf32>
    %333 = arith.addf %328, %332 : vector<32x384xf32>
    %334 = vector.extract_strided_slice %301 {offsets = [224, 0], sizes = [32, 384], strides = [1, 1]} : vector<288x384xf32> to vector<32x384xf32>
    %335 = vector.extract_strided_slice %334 {offsets = [0, 7], sizes = [32, 377], strides = [1, 1]} : vector<32x384xf32> to vector<32x377xf32>
    %336 = vector.extract_strided_slice %334 {offsets = [0, 0], sizes = [32, 7], strides = [1, 1]} : vector<32x384xf32> to vector<32x7xf32>
    %337 = tpu.concatenate %335, %336 in 1 : vector<32x377xf32>, vector<32x7xf32> -> vector<32x384xf32>
    %338 = arith.addf %333, %337 : vector<32x384xf32>
    %339 = vector.extract_strided_slice %301 {offsets = [256, 0], sizes = [32, 384], strides = [1, 1]} : vector<288x384xf32> to vector<32x384xf32>
    %340 = vector.extract_strided_slice %339 {offsets = [0, 8], sizes = [32, 376], strides = [1, 1]} : vector<32x384xf32> to vector<32x376xf32>
    %341 = vector.extract_strided_slice %339 {offsets = [0, 0], sizes = [32, 8], strides = [1, 1]} : vector<32x384xf32> to vector<32x8xf32>
    %342 = tpu.concatenate %340, %341 in 1 : vector<32x376xf32>, vector<32x8xf32> -> vector<32x384xf32>
    %343 = arith.addf %338, %342 : vector<32x384xf32>
    %c0_56 = arith.constant 0 : index
    %c7 = arith.constant 7 : index
    %c0_57 = arith.constant 0 : index
    %c0_58 = arith.constant 0 : index
    %344 = vector.load %arg2[%c0_56, %c7, %c0_57, %c0_58] : memref<1x24x24x3xbf16, #tpu.memory_space<vmem>>, vector<1x16x24x3xbf16>
    %345 = vector.shape_cast %344 : vector<1x16x24x3xbf16> to vector<16x24x3xbf16>
    %346 = vector.shape_cast %345 : vector<16x24x3xbf16> to vector<384x3xbf16>
    %c7_59 = arith.constant 7 : index
    %c0_60 = arith.constant 0 : index
    %c0_61 = arith.constant 0 : index
    %c0_62 = arith.constant 0 : index
    %347 = vector.load %arg3[%c7_59, %c0_60, %c0_61, %c0_62] : memref<9x9x32x3xbf16, #tpu.memory_space<vmem>>, vector<1x9x32x3xbf16>
    %348 = vector.shape_cast %347 : vector<1x9x32x3xbf16> to vector<9x32x3xbf16>
    %349 = vector.shape_cast %348 : vector<9x32x3xbf16> to vector<288x3xbf16>
    %cst_63 = arith.constant dense<0.000000e+00> : vector<288x384xf32>
    %350 = tpu.matmul %349, %346, %cst_63 {dimension_numbers = #tpu.dot_dimension_numbers<[1], [1], [0], [0], [0, 0, 1, 0], [], []>} : vector<288x3xbf16>, vector<384x3xbf16>, vector<288x384xf32> -> vector<288x384xf32>
    %351 = vector.extract_strided_slice %350 {offsets = [0, 0], sizes = [32, 384], strides = [1, 1]} : vector<288x384xf32> to vector<32x384xf32>
    %352 = arith.addf %343, %351 : vector<32x384xf32>
    %353 = vector.extract_strided_slice %350 {offsets = [32, 0], sizes = [32, 384], strides = [1, 1]} : vector<288x384xf32> to vector<32x384xf32>
    %354 = vector.extract_strided_slice %353 {offsets = [0, 1], sizes = [32, 383], strides = [1, 1]} : vector<32x384xf32> to vector<32x383xf32>
    %355 = vector.extract_strided_slice %353 {offsets = [0, 0], sizes = [32, 1], strides = [1, 1]} : vector<32x384xf32> to vector<32x1xf32>
    %356 = tpu.concatenate %354, %355 in 1 : vector<32x383xf32>, vector<32x1xf32> -> vector<32x384xf32>
    %357 = arith.addf %352, %356 : vector<32x384xf32>
    %358 = vector.extract_strided_slice %350 {offsets = [64, 0], sizes = [32, 384], strides = [1, 1]} : vector<288x384xf32> to vector<32x384xf32>
    %359 = vector.extract_strided_slice %358 {offsets = [0, 2], sizes = [32, 382], strides = [1, 1]} : vector<32x384xf32> to vector<32x382xf32>
    %360 = vector.extract_strided_slice %358 {offsets = [0, 0], sizes = [32, 2], strides = [1, 1]} : vector<32x384xf32> to vector<32x2xf32>
    %361 = tpu.concatenate %359, %360 in 1 : vector<32x382xf32>, vector<32x2xf32> -> vector<32x384xf32>
    %362 = arith.addf %357, %361 : vector<32x384xf32>
    %363 = vector.extract_strided_slice %350 {offsets = [96, 0], sizes = [32, 384], strides = [1, 1]} : vector<288x384xf32> to vector<32x384xf32>
    %364 = vector.extract_strided_slice %363 {offsets = [0, 3], sizes = [32, 381], strides = [1, 1]} : vector<32x384xf32> to vector<32x381xf32>
    %365 = vector.extract_strided_slice %363 {offsets = [0, 0], sizes = [32, 3], strides = [1, 1]} : vector<32x384xf32> to vector<32x3xf32>
    %366 = tpu.concatenate %364, %365 in 1 : vector<32x381xf32>, vector<32x3xf32> -> vector<32x384xf32>
    %367 = arith.addf %362, %366 : vector<32x384xf32>
    %368 = vector.extract_strided_slice %350 {offsets = [128, 0], sizes = [32, 384], strides = [1, 1]} : vector<288x384xf32> to vector<32x384xf32>
    %369 = vector.extract_strided_slice %368 {offsets = [0, 4], sizes = [32, 380], strides = [1, 1]} : vector<32x384xf32> to vector<32x380xf32>
    %370 = vector.extract_strided_slice %368 {offsets = [0, 0], sizes = [32, 4], strides = [1, 1]} : vector<32x384xf32> to vector<32x4xf32>
    %371 = tpu.concatenate %369, %370 in 1 : vector<32x380xf32>, vector<32x4xf32> -> vector<32x384xf32>
    %372 = arith.addf %367, %371 : vector<32x384xf32>
    %373 = vector.extract_strided_slice %350 {offsets = [160, 0], sizes = [32, 384], strides = [1, 1]} : vector<288x384xf32> to vector<32x384xf32>
    %374 = vector.extract_strided_slice %373 {offsets = [0, 5], sizes = [32, 379], strides = [1, 1]} : vector<32x384xf32> to vector<32x379xf32>
    %375 = vector.extract_strided_slice %373 {offsets = [0, 0], sizes = [32, 5], strides = [1, 1]} : vector<32x384xf32> to vector<32x5xf32>
    %376 = tpu.concatenate %374, %375 in 1 : vector<32x379xf32>, vector<32x5xf32> -> vector<32x384xf32>
    %377 = arith.addf %372, %376 : vector<32x384xf32>
    %378 = vector.extract_strided_slice %350 {offsets = [192, 0], sizes = [32, 384], strides = [1, 1]} : vector<288x384xf32> to vector<32x384xf32>
    %379 = vector.extract_strided_slice %378 {offsets = [0, 6], sizes = [32, 378], strides = [1, 1]} : vector<32x384xf32> to vector<32x378xf32>
    %380 = vector.extract_strided_slice %378 {offsets = [0, 0], sizes = [32, 6], strides = [1, 1]} : vector<32x384xf32> to vector<32x6xf32>
    %381 = tpu.concatenate %379, %380 in 1 : vector<32x378xf32>, vector<32x6xf32> -> vector<32x384xf32>
    %382 = arith.addf %377, %381 : vector<32x384xf32>
    %383 = vector.extract_strided_slice %350 {offsets = [224, 0], sizes = [32, 384], strides = [1, 1]} : vector<288x384xf32> to vector<32x384xf32>
    %384 = vector.extract_strided_slice %383 {offsets = [0, 7], sizes = [32, 377], strides = [1, 1]} : vector<32x384xf32> to vector<32x377xf32>
    %385 = vector.extract_strided_slice %383 {offsets = [0, 0], sizes = [32, 7], strides = [1, 1]} : vector<32x384xf32> to vector<32x7xf32>
    %386 = tpu.concatenate %384, %385 in 1 : vector<32x377xf32>, vector<32x7xf32> -> vector<32x384xf32>
    %387 = arith.addf %382, %386 : vector<32x384xf32>
    %388 = vector.extract_strided_slice %350 {offsets = [256, 0], sizes = [32, 384], strides = [1, 1]} : vector<288x384xf32> to vector<32x384xf32>
    %389 = vector.extract_strided_slice %388 {offsets = [0, 8], sizes = [32, 376], strides = [1, 1]} : vector<32x384xf32> to vector<32x376xf32>
    %390 = vector.extract_strided_slice %388 {offsets = [0, 0], sizes = [32, 8], strides = [1, 1]} : vector<32x384xf32> to vector<32x8xf32>
    %391 = tpu.concatenate %389, %390 in 1 : vector<32x376xf32>, vector<32x8xf32> -> vector<32x384xf32>
    %392 = arith.addf %387, %391 : vector<32x384xf32>
    %c0_64 = arith.constant 0 : index
    %c8 = arith.constant 8 : index
    %c0_65 = arith.constant 0 : index
    %c0_66 = arith.constant 0 : index
    %393 = vector.load %arg2[%c0_64, %c8, %c0_65, %c0_66] : memref<1x24x24x3xbf16, #tpu.memory_space<vmem>>, vector<1x16x24x3xbf16>
    %394 = vector.shape_cast %393 : vector<1x16x24x3xbf16> to vector<16x24x3xbf16>
    %395 = vector.shape_cast %394 : vector<16x24x3xbf16> to vector<384x3xbf16>
    %c8_67 = arith.constant 8 : index
    %c0_68 = arith.constant 0 : index
    %c0_69 = arith.constant 0 : index
    %c0_70 = arith.constant 0 : index
    %396 = vector.load %arg3[%c8_67, %c0_68, %c0_69, %c0_70] : memref<9x9x32x3xbf16, #tpu.memory_space<vmem>>, vector<1x9x32x3xbf16>
    %397 = vector.shape_cast %396 : vector<1x9x32x3xbf16> to vector<9x32x3xbf16>
    %398 = vector.shape_cast %397 : vector<9x32x3xbf16> to vector<288x3xbf16>
    %cst_71 = arith.constant dense<0.000000e+00> : vector<288x384xf32>
    %399 = tpu.matmul %398, %395, %cst_71 {dimension_numbers = #tpu.dot_dimension_numbers<[1], [1], [0], [0], [0, 0, 1, 0], [], []>} : vector<288x3xbf16>, vector<384x3xbf16>, vector<288x384xf32> -> vector<288x384xf32>
    %400 = vector.extract_strided_slice %399 {offsets = [0, 0], sizes = [32, 384], strides = [1, 1]} : vector<288x384xf32> to vector<32x384xf32>
    %401 = arith.addf %392, %400 : vector<32x384xf32>
    %402 = vector.extract_strided_slice %399 {offsets = [32, 0], sizes = [32, 384], strides = [1, 1]} : vector<288x384xf32> to vector<32x384xf32>
    %403 = vector.extract_strided_slice %402 {offsets = [0, 1], sizes = [32, 383], strides = [1, 1]} : vector<32x384xf32> to vector<32x383xf32>
    %404 = vector.extract_strided_slice %402 {offsets = [0, 0], sizes = [32, 1], strides = [1, 1]} : vector<32x384xf32> to vector<32x1xf32>
    %405 = tpu.concatenate %403, %404 in 1 : vector<32x383xf32>, vector<32x1xf32> -> vector<32x384xf32>
    %406 = arith.addf %401, %405 : vector<32x384xf32>
    %407 = vector.extract_strided_slice %399 {offsets = [64, 0], sizes = [32, 384], strides = [1, 1]} : vector<288x384xf32> to vector<32x384xf32>
    %408 = vector.extract_strided_slice %407 {offsets = [0, 2], sizes = [32, 382], strides = [1, 1]} : vector<32x384xf32> to vector<32x382xf32>
    %409 = vector.extract_strided_slice %407 {offsets = [0, 0], sizes = [32, 2], strides = [1, 1]} : vector<32x384xf32> to vector<32x2xf32>
    %410 = tpu.concatenate %408, %409 in 1 : vector<32x382xf32>, vector<32x2xf32> -> vector<32x384xf32>
    %411 = arith.addf %406, %410 : vector<32x384xf32>
    %412 = vector.extract_strided_slice %399 {offsets = [96, 0], sizes = [32, 384], strides = [1, 1]} : vector<288x384xf32> to vector<32x384xf32>
    %413 = vector.extract_strided_slice %412 {offsets = [0, 3], sizes = [32, 381], strides = [1, 1]} : vector<32x384xf32> to vector<32x381xf32>
    %414 = vector.extract_strided_slice %412 {offsets = [0, 0], sizes = [32, 3], strides = [1, 1]} : vector<32x384xf32> to vector<32x3xf32>
    %415 = tpu.concatenate %413, %414 in 1 : vector<32x381xf32>, vector<32x3xf32> -> vector<32x384xf32>
    %416 = arith.addf %411, %415 : vector<32x384xf32>
    %417 = vector.extract_strided_slice %399 {offsets = [128, 0], sizes = [32, 384], strides = [1, 1]} : vector<288x384xf32> to vector<32x384xf32>
    %418 = vector.extract_strided_slice %417 {offsets = [0, 4], sizes = [32, 380], strides = [1, 1]} : vector<32x384xf32> to vector<32x380xf32>
    %419 = vector.extract_strided_slice %417 {offsets = [0, 0], sizes = [32, 4], strides = [1, 1]} : vector<32x384xf32> to vector<32x4xf32>
    %420 = tpu.concatenate %418, %419 in 1 : vector<32x380xf32>, vector<32x4xf32> -> vector<32x384xf32>
    %421 = arith.addf %416, %420 : vector<32x384xf32>
    %422 = vector.extract_strided_slice %399 {offsets = [160, 0], sizes = [32, 384], strides = [1, 1]} : vector<288x384xf32> to vector<32x384xf32>
    %423 = vector.extract_strided_slice %422 {offsets = [0, 5], sizes = [32, 379], strides = [1, 1]} : vector<32x384xf32> to vector<32x379xf32>
    %424 = vector.extract_strided_slice %422 {offsets = [0, 0], sizes = [32, 5], strides = [1, 1]} : vector<32x384xf32> to vector<32x5xf32>
    %425 = tpu.concatenate %423, %424 in 1 : vector<32x379xf32>, vector<32x5xf32> -> vector<32x384xf32>
    %426 = arith.addf %421, %425 : vector<32x384xf32>
    %427 = vector.extract_strided_slice %399 {offsets = [192, 0], sizes = [32, 384], strides = [1, 1]} : vector<288x384xf32> to vector<32x384xf32>
    %428 = vector.extract_strided_slice %427 {offsets = [0, 6], sizes = [32, 378], strides = [1, 1]} : vector<32x384xf32> to vector<32x378xf32>
    %429 = vector.extract_strided_slice %427 {offsets = [0, 0], sizes = [32, 6], strides = [1, 1]} : vector<32x384xf32> to vector<32x6xf32>
    %430 = tpu.concatenate %428, %429 in 1 : vector<32x378xf32>, vector<32x6xf32> -> vector<32x384xf32>
    %431 = arith.addf %426, %430 : vector<32x384xf32>
    %432 = vector.extract_strided_slice %399 {offsets = [224, 0], sizes = [32, 384], strides = [1, 1]} : vector<288x384xf32> to vector<32x384xf32>
    %433 = vector.extract_strided_slice %432 {offsets = [0, 7], sizes = [32, 377], strides = [1, 1]} : vector<32x384xf32> to vector<32x377xf32>
    %434 = vector.extract_strided_slice %432 {offsets = [0, 0], sizes = [32, 7], strides = [1, 1]} : vector<32x384xf32> to vector<32x7xf32>
    %435 = tpu.concatenate %433, %434 in 1 : vector<32x377xf32>, vector<32x7xf32> -> vector<32x384xf32>
    %436 = arith.addf %431, %435 : vector<32x384xf32>
    %437 = vector.extract_strided_slice %399 {offsets = [256, 0], sizes = [32, 384], strides = [1, 1]} : vector<288x384xf32> to vector<32x384xf32>
    %438 = vector.extract_strided_slice %437 {offsets = [0, 8], sizes = [32, 376], strides = [1, 1]} : vector<32x384xf32> to vector<32x376xf32>
    %439 = vector.extract_strided_slice %437 {offsets = [0, 0], sizes = [32, 8], strides = [1, 1]} : vector<32x384xf32> to vector<32x8xf32>
    %440 = tpu.concatenate %438, %439 in 1 : vector<32x376xf32>, vector<32x8xf32> -> vector<32x384xf32>
    %441 = arith.addf %436, %440 : vector<32x384xf32>
    %442 = vector.shape_cast %441 : vector<32x384xf32> to vector<32x16x24xf32>
    %443 = vector.extract_strided_slice %442 {offsets = [0, 0, 0], sizes = [32, 16, 16], strides = [1, 1, 1]} : vector<32x16x24xf32> to vector<32x16x16xf32>
    %c0_72 = arith.constant 0 : index
    %c0_73 = arith.constant 0 : index
    %444 = vector.load %arg4[%c0_72, %c0_73] : memref<32x1xf32, #tpu.memory_space<vmem>>, vector<32x1xf32>
    %445 = vector.shape_cast %444 : vector<32x1xf32> to vector<32x1x1xf32>
    %446 = vector.broadcast %445 : vector<32x1x1xf32> to vector<32x16x16xf32>
    %447 = arith.addf %443, %446 : vector<32x16x16xf32>
    %c0_74 = arith.constant 0 : index
    %c0_75 = arith.constant 0 : index
    %c0_76 = arith.constant 0 : index
    %c0_77 = arith.constant 0 : index
    %448 = vector.load %arg8[%c0_74, %c0_75, %c0_76, %c0_77] : memref<1x32x16x16xf32, #tpu.memory_space<vmem>>, vector<1x32x16x16xf32>
    %449 = vector.shape_cast %448 : vector<1x32x16x16xf32> to vector<32x16x16xf32>
    %450 = vector.shape_cast %447 : vector<32x16x16xf32> to vector<1x32x16x16xf32>
    tpu.vector_store %arg8[%c0_74, %c0_75, %c0_76, %c0_77], %450 {strides = array<i32>} : memref<1x32x16x16xf32, #tpu.memory_space<vmem>>, vector<1x32x16x16xf32>,
    return
  }
  func.func @transform_0(%arg0: i32, %arg1: i32) -> (i32, i32, i32, i32) {
    %c0_i32 = arith.constant 0 : i32
    %c0_i32_0 = arith.constant 0 : i32
    %c0_i32_1 = arith.constant 0 : i32
    %c0_i32_2 = arith.constant 0 : i32
    return %arg0, %c0_i32, %c0_i32_0, %c0_i32_1 : i32, i32, i32, i32
  }
  func.func @transform_1(%arg0: i32, %arg1: i32) -> (i32, i32, i32, i32) {
    %c0_i32 = arith.constant 0 : i32
    %c0_i32_0 = arith.constant 0 : i32
    %c0_i32_1 = arith.constant 0 : i32
    %c0_i32_2 = arith.constant 0 : i32
    return %c0_i32, %c0_i32_0, %arg1, %c0_i32_1 : i32, i32, i32, i32
  }
  func.func @transform_2(%arg0: i32, %arg1: i32) -> (i32, i32) {
    %c0_i32 = arith.constant 0 : i32
    %c0_i32_0 = arith.constant 0 : i32
    return %arg1, %c0_i32 : i32, i32
  }
  func.func @transform_3(%arg0: i32, %arg1: i32) -> (i32, i32) {
    %c0_i32 = arith.constant 0 : i32
    %c0_i32_0 = arith.constant 0 : i32
    return %arg1, %c0_i32 : i32, i32
  }
  func.func @transform_4(%arg0: i32, %arg1: i32) -> (i32, i32) {
    %c0_i32 = arith.constant 0 : i32
    %c0_i32_0 = arith.constant 0 : i32
    return %arg1, %c0_i32 : i32, i32
  }
  func.func @transform_5(%arg0: i32, %arg1: i32) -> (i32, i32) {
    %c0_i32 = arith.constant 0 : i32
    %c0_i32_0 = arith.constant 0 : i32
    return %arg1, %c0_i32 : i32, i32
  }
  func.func @transform_6(%arg0: i32, %arg1: i32) -> (i32, i32, i32, i32) {
    %c0_i32 = arith.constant 0 : i32
    %c0_i32_0 = arith.constant 0 : i32
    %c0_i32_1 = arith.constant 0 : i32
    return %arg0, %arg1, %c0_i32, %c0_i32_0 : i32, i32, i32, i32
  }
}

</mosaic_0001>

<llo_original>
// kernel: tpu_custom_call.1
$region0: #{tpu_custom_call.1}
  #allocation0 [shape = 'u32[]', space=smem, size = 0x4, offset = 0x4, fixed_abs, tag = 'smem constant byte address 0x4 - core index']
  #allocation1 [shape = 'u32[72,128]{1,0:T(1,128)}', space=vmem, size = 0x9000, scoped, tag = 'internal scratch']
  %s0 = inlined_call_operand.vmem [shape: bf16[2,24,24,3], index: 0, kind: input, shape index: {}]
  %s1 = inlined_call_operand.vmem [shape: bf16[9,9,32,3], index: 1, kind: input, shape index: {}]
  %s2 = inlined_call_operand.vmem [shape: f32[32,1], index: 2, kind: input, shape index: {}]
  %s3 = inlined_call_operand.vmem [shape: f32[32,1], index: 3, kind: input, shape index: {}]
  %s4 = inlined_call_operand.vmem [shape: f32[32,1], index: 4, kind: input, shape index: {}]
  %s5 = inlined_call_operand.vmem [shape: f32[32,1], index: 5, kind: input, shape index: {}]
  %s6 = inlined_call_operand.vmem [shape: f32[2,32,16,16], index: 6, kind: output, shape index: {}]
  %s7 = sld [smem:[#allocation0]]
  $region57: #{tpu_custom_call.1} parent=0
    _
  %s9 = ssub.s32 1, %s7
  %s10 = scalar_select 0, %s9, %s7
  loop: start=0, step=1, limit=4
  $region2: #{tpu_custom_call.1} parent=0 // loop_pre_header
    _
  $region3: #{tpu_custom_call.1} parent=0 // loop_header
    %s12 = sphi 0, %s16
    %p13 = scmp.ge.s32.totalorder %s12, 4
    %s19 = sphi 0, %s31
    %s20 = sphi 0, %s27
    %s21 = sphi 0, %s19
    %s22 = sphi 0, %s20
    %s23 = sphi 0, %s21
    %s24 = sphi 0, %s22
    %s34 = sphi 0, %s36
    %s37 = sphi 0, %s34
    %s38 = sphi 0, %s37
    %s54 = sphi 0, %s38
    %s60 = sphi 0, %s62
    %s63 = sphi 0, %s60
    %s64 = sphi 0, %s63
    %s80 = sphi 0, %s64
    %s86 = sphi 0, %s88
    %s89 = sphi 0, %s86
    %s90 = sphi 0, %s89
    %s106 = sphi 0, %s90
    %s112 = sphi 0, %s114
    %s115 = sphi 0, %s112
    %s116 = sphi 0, %s115
    %s132 = sphi 0, %s116
    %s138 = sphi 0, %s140
    %s141 = sphi 0, %s138
    %s142 = sphi 0, %s141
    %s158 = sphi 0, %s142
    %s164 = sphi 0, %s166
    %s167 = sphi 0, %s164
    %s168 = sphi 0, %s167
    %s184 = sphi 0, %s168
    %s192 = sphi 0, %s194
    %s195 = sphi 0, %s192
    %s196 = sphi 0, %s195
    %s212 = sphi 0, %s196
  $region4: #{tpu_custom_call.1} parent=0 // loop_header_branch
    %15 = sbr.rel (%p13) target = $region8
  $region5: #{tpu_custom_call.1} parent=0 // loop_body
    %s17 = ssub.s32 %s12, 1
    %s18 = ssub.s32 %s12, 2
    %s25 = sadd.s32 1, %s20
    %p26 = scmp.ge.s32.totalorder %s25, 1
    %s27 = scalar_select %p26, 0, %s25
    %s28 = sadd.s32 1, %s19
    %s29 = scalar_select %p26, %s28, %s19
    %p30 = scmp.ge.s32.totalorder %s29, 2
    %s31 = scalar_select %p30, 0, %s29
    %s32 = ssub.s32 %s19, %s31
    %p33 = scmp.eq.s32.totalorder %s32, 0
    %s35 = sadd.s32 %s34, 1
    %s36 = scalar_select %p33, %s34, %s35
    %p39 = pneg %p33
    %p40 = scmp.eq.s32.totalorder %s12, 1
    %p41 = por %p39, %p40
    %p42 = scmp.ne.s32.totalorder %s34, %s37
    %p43 = scmp.eq.s32.totalorder %s12, 0
    %p44 = por %p42, %p43
    %p45 = scmp.ne.s32.totalorder %s34, %s37
    %p46 = scmp.eq.s32.totalorder %s17, 1
    %p47 = por %p45, %p46
    %p48 = scmp.ne.s32.totalorder %s37, %s38
    %p49 = scmp.eq.s32.totalorder %s17, 0
    %p50 = por %p48, %p49
    %p51 = scmp.ne.s32.totalorder %s37, %s38
    %p52 = scmp.eq.s32.totalorder %s18, 1
    %p53 = por %p51, %p52
    %p55 = scmp.ne.s32.totalorder %s38, %s54
    %p56 = scmp.eq.s32.totalorder %s18, 0
    %p57 = por %p55, %p56
    %s58 = ssub.s32 %s20, %s27
    %p59 = scmp.eq.s32.totalorder %s58, 0
    %s61 = sadd.s32 %s60, 1
    %s62 = scalar_select %p59, %s60, %s61
    %p65 = pneg %p59
    %p66 = scmp.eq.s32.totalorder %s12, 1
    %p67 = por %p65, %p66
    %p68 = scmp.ne.s32.totalorder %s60, %s63
    %p69 = scmp.eq.s32.totalorder %s12, 0
    %p70 = por %p68, %p69
    %p71 = scmp.ne.s32.totalorder %s60, %s63
    %p72 = scmp.eq.s32.totalorder %s17, 1
    %p73 = por %p71, %p72
    %p74 = scmp.ne.s32.totalorder %s63, %s64
    %p75 = scmp.eq.s32.totalorder %s17, 0
    %p76 = por %p74, %p75
    %p77 = scmp.ne.s32.totalorder %s63, %s64
    %p78 = scmp.eq.s32.totalorder %s18, 1
    %p79 = por %p77, %p78
    %p81 = scmp.ne.s32.totalorder %s64, %s80
    %p82 = scmp.eq.s32.totalorder %s18, 0
    %p83 = por %p81, %p82
    %s84 = ssub.s32 %s20, %s27
    %p85 = scmp.eq.s32.totalorder %s84, 0
    %s87 = sadd.s32 %s86, 1
    %s88 = scalar_select %p85, %s86, %s87
    %p91 = pneg %p85
    %p92 = scmp.eq.s32.totalorder %s12, 1
    %p93 = por %p91, %p92
    %p94 = scmp.ne.s32.totalorder %s86, %s89
    %p95 = scmp.eq.s32.totalorder %s12, 0
    %p96 = por %p94, %p95
    %p97 = scmp.ne.s32.totalorder %s86, %s89
    %p98 = scmp.eq.s32.totalorder %s17, 1
    %p99 = por %p97, %p98
    %p100 = scmp.ne.s32.totalorder %s89, %s90
    %p101 = scmp.eq.s32.totalorder %s17, 0
    %p102 = por %p100, %p101
    %p103 = scmp.ne.s32.totalorder %s89, %s90
    %p104 = scmp.eq.s32.totalorder %s18, 1
    %p105 = por %p103, %p104
    %p107 = scmp.ne.s32.totalorder %s90, %s106
    %p108 = scmp.eq.s32.totalorder %s18, 0
    %p109 = por %p107, %p108
    %s110 = ssub.s32 %s20, %s27
    %p111 = scmp.eq.s32.totalorder %s110, 0
    %s113 = sadd.s32 %s112, 1
    %s114 = scalar_select %p111, %s112, %s113
    %p117 = pneg %p111
    %p118 = scmp.eq.s32.totalorder %s12, 1
    %p119 = por %p117, %p118
    %p120 = scmp.ne.s32.totalorder %s112, %s115
    %p121 = scmp.eq.s32.totalorder %s12, 0
    %p122 = por %p120, %p121
    %p123 = scmp.ne.s32.totalorder %s112, %s115
    %p124 = scmp.eq.s32.totalorder %s17, 1
    %p125 = por %p123, %p124
    %p126 = scmp.ne.s32.totalorder %s115, %s116
    %p127 = scmp.eq.s32.totalorder %s17, 0
    %p128 = por %p126, %p127
    %p129 = scmp.ne.s32.totalorder %s115, %s116
    %p130 = scmp.eq.s32.totalorder %s18, 1
    %p131 = por %p129, %p130
    %p133 = scmp.ne.s32.totalorder %s116, %s132
    %p134 = scmp.eq.s32.totalorder %s18, 0
    %p135 = por %p133, %p134
    %s136 = ssub.s32 %s20, %s27
    %p137 = scmp.eq.s32.totalorder %s136, 0
    %s139 = sadd.s32 %s138, 1
    %s140 = scalar_select %p137, %s138, %s139
    %p143 = pneg %p137
    %p144 = scmp.eq.s32.totalorder %s12, 1
    %p145 = por %p143, %p144
    %p146 = scmp.ne.s32.totalorder %s138, %s141
    %p147 = scmp.eq.s32.totalorder %s12, 0
    %p148 = por %p146, %p147
    %p149 = scmp.ne.s32.totalorder %s138, %s141
    %p150 = scmp.eq.s32.totalorder %s17, 1
    %p151 = por %p149, %p150
    %p152 = scmp.ne.s32.totalorder %s141, %s142
    %p153 = scmp.eq.s32.totalorder %s17, 0
    %p154 = por %p152, %p153
    %p155 = scmp.ne.s32.totalorder %s141, %s142
    %p156 = scmp.eq.s32.totalorder %s18, 1
    %p157 = por %p155, %p156
    %p159 = scmp.ne.s32.totalorder %s142, %s158
    %p160 = scmp.eq.s32.totalorder %s18, 0
    %p161 = por %p159, %p160
    %s162 = ssub.s32 %s20, %s27
    %p163 = scmp.eq.s32.totalorder %s162, 0
    %s165 = sadd.s32 %s164, 1
    %s166 = scalar_select %p163, %s164, %s165
    %p169 = pneg %p163
    %p170 = scmp.eq.s32.totalorder %s12, 1
    %p171 = por %p169, %p170
    %p172 = scmp.ne.s32.totalorder %s164, %s167
    %p173 = scmp.eq.s32.totalorder %s12, 0
    %p174 = por %p172, %p173
    %p175 = scmp.ne.s32.totalorder %s164, %s167
    %p176 = scmp.eq.s32.totalorder %s17, 1
    %p177 = por %p175, %p176
    %p178 = scmp.ne.s32.totalorder %s167, %s168
    %p179 = scmp.eq.s32.totalorder %s17, 0
    %p180 = por %p178, %p179
    %p181 = scmp.ne.s32.totalorder %s167, %s168
    %p182 = scmp.eq.s32.totalorder %s18, 1
    %p183 = por %p181, %p182
    %p185 = scmp.ne.s32.totalorder %s168, %s184
    %p186 = scmp.eq.s32.totalorder %s18, 0
    %p187 = por %p185, %p186
    %s188 = ssub.s32 %s19, %s31
    %s189 = ssub.s32 %s20, %s27
    %s190 = sor.u32 %s188, %s189
    %p191 = scmp.eq.s32.totalorder %s190, 0
    %s193 = sadd.s32 %s192, 1
    %s194 = scalar_select %p191, %s192, %s193
    %p197 = pneg %p191
    %p198 = scmp.eq.s32.totalorder %s12, 1
    %p199 = por %p197, %p198
    %p200 = scmp.ne.s32.totalorder %s192, %s195
    %p201 = scmp.eq.s32.totalorder %s12, 0
    %p202 = por %p200, %p201
    %p203 = scmp.ne.s32.totalorder %s192, %s195
    %p204 = scmp.eq.s32.totalorder %s17, 1
    %p205 = por %p203, %p204
    %p206 = scmp.ne.s32.totalorder %s195, %s196
    %p207 = scmp.eq.s32.totalorder %s17, 0
    %p208 = por %p206, %p207
    %p209 = scmp.ne.s32.totalorder %s195, %s196
    %p210 = scmp.eq.s32.totalorder %s18, 1
    %p211 = por %p209, %p210
    %p213 = scmp.ne.s32.totalorder %s196, %s212
    %p214 = scmp.eq.s32.totalorder %s18, 0
    %p215 = por %p213, %p214
    %p216 = scmp.le.s32.totalorder 1, %s12
    %p217 = scmp.lt.s32.totalorder %s12, 3
    %p218 = pnand %p216, %p217
    %p219 = pneg %p218
    // Predicated region
    $region9: #{tpu_custom_call.1} parent=5 // pred_check
      _
    $region10: #{tpu_custom_call.1} parent=5 // pred_check_branch
      %221 = sbr.rel (%p218) target = $region12
    $region11: #{tpu_custom_call.1} parent=5 // pred_region
      %s222 = ssub.s32 %s12, 1
      // Predicated region
      $region13: #{tpu_custom_call.1} parent=11 // pred_check
        %p223 = pneg %p76
      $region14: #{tpu_custom_call.1} parent=11 // pred_check_branch
        %225 = sbr.rel (%p223) target = $region16
      $region15: #{tpu_custom_call.1} parent=11 // pred_region
        %s226 = smul.u32 4, %s22
        %p227 = scmp.lt.s32.totalorder %s226, 3
        %s228 = scalar_select %p227, %s226, 3
        %s229 = smul.addr %s228, 4
        %s230 = scalar_lea.vmem %s1, %s229
        %s231 = smul.u32 4, %s22
      $region16: #{tpu_custom_call.1} parent=11 // pred_fallthru
        _
      // Predicated region
      $region17: #{tpu_custom_call.1} parent=11 // pred_check
        %p232 = pneg %p102
      $region18: #{tpu_custom_call.1} parent=11 // pred_check_branch
        %234 = sbr.rel (%p232) target = $region20
      $region19: #{tpu_custom_call.1} parent=11 // pred_region
        %s235 = smul.u32 4, %s22
        %p236 = scmp.lt.s32.totalorder %s235, 3
        %s237 = scalar_select %p236, %s235, 3
        %s238 = smul.addr %s237, 8
        %s239 = scalar_lea.vmem %s2, %s238
        %s240 = smul.u32 4, %s22
      $region20: #{tpu_custom_call.1} parent=11 // pred_fallthru
        _
      // Predicated region
      $region21: #{tpu_custom_call.1} parent=11 // pred_check
        %p241 = pneg %p128
      $region22: #{tpu_custom_call.1} parent=11 // pred_check_branch
        %243 = sbr.rel (%p241) target = $region24
      $region23: #{tpu_custom_call.1} parent=11 // pred_region
        %s244 = smul.u32 4, %s22
        %p245 = scmp.lt.s32.totalorder %s244, 3
        %s246 = scalar_select %p245, %s244, 3
        %s247 = smul.addr %s246, 8
        %s248 = scalar_lea.vmem %s3, %s247
        %s249 = smul.u32 4, %s22
      $region24: #{tpu_custom_call.1} parent=11 // pred_fallthru
        _
      // Predicated region
      $region25: #{tpu_custom_call.1} parent=11 // pred_check
        %p250 = pneg %p154
      $region26: #{tpu_custom_call.1} parent=11 // pred_check_branch
        %252 = sbr.rel (%p250) target = $region28
      $region27: #{tpu_custom_call.1} parent=11 // pred_region
        %s253 = smul.u32 4, %s22
        %p254 = scmp.lt.s32.totalorder %s253, 3
        %s255 = scalar_select %p254, %s253, 3
        %s256 = smul.addr %s255, 8
        %s257 = scalar_lea.vmem %s4, %s256
        %s258 = smul.u32 4, %s22
      $region28: #{tpu_custom_call.1} parent=11 // pred_fallthru
        _
      // Predicated region
      $region29: #{tpu_custom_call.1} parent=11 // pred_check
        %p259 = pneg %p180
      $region30: #{tpu_custom_call.1} parent=11 // pred_check_branch
        %261 = sbr.rel (%p259) target = $region32
      $region31: #{tpu_custom_call.1} parent=11 // pred_region
        %s262 = smul.u32 4, %s22
        %p263 = scmp.lt.s32.totalorder %s262, 3
        %s264 = scalar_select %p263, %s262, 3
        %s265 = smul.addr %s264, 8
        %s266 = scalar_lea.vmem %s5, %s265
        %s267 = smul.u32 4, %s22
      $region32: #{tpu_custom_call.1} parent=11 // pred_fallthru
        _
    $region12: #{tpu_custom_call.1} parent=5 // pred_fallthru
      _
    %p268 = scmp.lt.s32.totalorder %s12, 2
    // Predicated region
    $region33: #{tpu_custom_call.1} parent=5 // pred_check
      %p269 = pneg %p268
    $region34: #{tpu_custom_call.1} parent=5 // pred_check_branch
      %271 = sbr.rel (%p269) target = $region36
    $region35: #{tpu_custom_call.1} parent=5 // pred_region
      // Predicated region
      $region37: #{tpu_custom_call.1} parent=35 // pred_check
        %p272 = pneg %p44
      $region38: #{tpu_custom_call.1} parent=35 // pred_check_branch
        %274 = sbr.rel (%p272) target = $region40
      $region39: #{tpu_custom_call.1} parent=35 // pred_region
        %p275 = scmp.lt.s32.totalorder %s19, 1
        %s276 = scalar_select %p275, %s19, 1
        %s277 = smul.addr %s276, 72
        %s278 = smul.addr %s277, 4
        %s279 = scalar_lea.vmem %s0, %s278
      $region40: #{tpu_custom_call.1} parent=35 // pred_fallthru
        _
    $region36: #{tpu_custom_call.1} parent=5 // pred_fallthru
      _
    %p280 = scmp.le.s32.totalorder 1, %s12
    %p281 = scmp.lt.s32.totalorder %s12, 3
    %p282 = pnand %p280, %p281
    %p283 = pneg %p282
    // Predicated region
    $region41: #{tpu_custom_call.1} parent=5 // pred_check
      _
    $region42: #{tpu_custom_call.1} parent=5 // pred_check_branch
      %285 = sbr.rel (%p282) target = $region44
    $region43: #{tpu_custom_call.1} parent=5 // pred_region
      %s286 = ssub.s32 %s12, 1
      %p287 = scmp.lt.s32.totalorder %s21, 1
      %s288 = scalar_select %p287, %s21, 1
      %s289 = smul.addr %s288, 72
      %s290 = smul.addr %s289, 4
      %s291 = scalar_lea.vmem %s0, %s290
      %p292 = pneg %p50
      %p293 = pneg %p47
      %s294 = smul.u32 4, %s22
      %p295 = scmp.lt.s32.totalorder %s294, 3
      %s296 = scalar_select %p295, %s294, 3
      %s297 = smul.addr %s296, 4
      %s298 = scalar_lea.vmem %s1, %s297
      %p299 = pneg %p76
      %p300 = pneg %p73
      %s301 = smul.u32 4, %s22
      %p302 = scmp.lt.s32.totalorder %s301, 3
      %s303 = scalar_select %p302, %s301, 3
      %s304 = smul.addr %s303, 8
      %s305 = scalar_lea.vmem %s2, %s304
      %p306 = pneg %p102
      %p307 = pneg %p99
      %s308 = smul.u32 4, %s22
      %p309 = scmp.lt.s32.totalorder %s308, 3
      %s310 = scalar_select %p309, %s308, 3
      %s311 = smul.addr %s310, 8
      %s312 = scalar_lea.vmem %s3, %s311
      %p313 = pneg %p128
      %p314 = pneg %p125
      %s315 = smul.u32 4, %s22
      %p316 = scmp.lt.s32.totalorder %s315, 3
      %s317 = scalar_select %p316, %s315, 3
      %s318 = smul.addr %s317, 8
      %s319 = scalar_lea.vmem %s4, %s318
      %p320 = pneg %p154
      %p321 = pneg %p151
      %s322 = smul.u32 4, %s22
      %p323 = scmp.lt.s32.totalorder %s322, 3
      %s324 = scalar_select %p323, %s322, 3
      %s325 = smul.addr %s324, 8
      %s326 = scalar_lea.vmem %s5, %s325
      %p327 = pneg %p180
      %p328 = pneg %p177
      %p329 = pneg %p208
      %p330 = pneg %p205
      %s331 = smul.u32 32, %s22
      %p332 = scmp.lt.s32.totalorder %s21, 1
      %s333 = scalar_select %p332, %s21, 1
      %p334 = scmp.lt.s32.totalorder %s331, 31
      %s335 = scalar_select %p334, %s331, 31
      %s336 = smul.addr %s335, 2
      %s337 = smul.addr %s333, 64
      %s338 = sadd.s32 %s336, %s337
      %s339 = smul.addr %s338, 8
      %s340 = scalar_lea.vmem %s6, %s339
      %p341 = scmp.lt.s32.totalorder %s21, 1
      %s342 = scalar_select %p341, %s21, 1
      %s343 = smul.addr %s342, 72
      %s344 = smul.addr %s343, 4
      %s345 = scalar_lea.vmem %s0, %s344
      %s346 = smul.u32 4, %s22
      %p347 = scmp.lt.s32.totalorder %s346, 3
      %s348 = scalar_select %p347, %s346, 3
      %s349 = smul.addr %s348, 4
      %s350 = scalar_lea.vmem %s1, %s349
      %s351 = smul.u32 4, %s22
      %s352 = smul.u32 4, %s22
      %p353 = scmp.lt.s32.totalorder %s352, 3
      %s354 = scalar_select %p353, %s352, 3
      %s355 = smul.addr %s354, 8
      %s356 = scalar_lea.vmem %s2, %s355
      %s357 = smul.u32 4, %s22
      %s358 = smul.u32 4, %s22
      %p359 = scmp.lt.s32.totalorder %s358, 3
      %s360 = scalar_select %p359, %s358, 3
      %s361 = smul.addr %s360, 8
      %s362 = scalar_lea.vmem %s3, %s361
      %s363 = smul.u32 4, %s22
      %s364 = smul.u32 4, %s22
      %p365 = scmp.lt.s32.totalorder %s364, 3
      %s366 = scalar_select %p365, %s364, 3
      %s367 = smul.addr %s366, 8
      %s368 = scalar_lea.vmem %s4, %s367
      %s369 = smul.u32 4, %s22
      %s370 = smul.u32 4, %s22
      %p371 = scmp.lt.s32.totalorder %s370, 3
      %s372 = scalar_select %p371, %s370, 3
      %s373 = smul.addr %s372, 8
      %s374 = scalar_lea.vmem %s5, %s373
      %s375 = smul.u32 4, %s22
      %s376 = smul.u32 32, %s22
      %p377 = scmp.lt.s32.totalorder %s21, 1
      %s378 = scalar_select %p377, %s21, 1
      %p379 = scmp.lt.s32.totalorder %s376, 31
      %s380 = scalar_select %p379, %s376, 31
      %s381 = smul.addr %s380, 2
      %s382 = smul.addr %s378, 64
      %s383 = sadd.s32 %s381, %s382
      %s384 = smul.addr %s383, 8
      %s385 = scalar_lea.vmem %s6, %s384
      %s386 = smul.u32 32, %s22
      %v387 = vld [vmem:[%s345] sm:$0xf]
      %v388 = vld [vmem:[%s345 + $0x4] sm:$0xf]
      %v389 = vld [vmem:[%s345 + $0x8] sm:$0xf]
      %v390 = vld [vmem:[%s345 + $0xc] sm:$0xf]
      %v391 = vld [vmem:[%s345 + $0x10] sm:$0xf]
      %v392 = vld [vmem:[%s345 + $0x14] sm:$0xf]
      %v393 = vld [vmem:[%s345 + $0x18] sm:$0xf]
      %v394 = vld [vmem:[%s345 + $0x1c] sm:$0xf]
      %v395 = vld [vmem:[%s345 + $0x20] sm:$0xf]
      %v396 = vld [vmem:[%s345 + $0x24] sm:$0xf]
      %v397 = vld [vmem:[%s345 + $0x28] sm:$0xf]
      %v398 = vld [vmem:[%s345 + $0x2c] sm:$0xf]
      %v399 = vld [vmem:[%s345 + $0x30] sm:$0xf]
      %v400 = vld [vmem:[%s345 + $0x34] sm:$0xf]
      %v401 = vld [vmem:[%s345 + $0x38] sm:$0xf]
      %v402 = vld [vmem:[%s345 + $0x3c] sm:$0xf]
      %v403 = vld [vmem:[%s345 + $0x40] sm:$0xf]
      %v404 = vld [vmem:[%s345 + $0x44] sm:$0xf]
      %v405 = vld [vmem:[%s345 + $0x48] sm:$0xf]
      %v406 = vld [vmem:[%s345 + $0x4c] sm:$0xf]
      %v407 = vld [vmem:[%s345 + $0x50] sm:$0xf]
      %v408 = vld [vmem:[%s345 + $0x54] sm:$0xf]
      %v409 = vld [vmem:[%s345 + $0x58] sm:$0xf]
      %v410 = vld [vmem:[%s345 + $0x5c] sm:$0xf]
      %v411 = vld [vmem:[%s345 + $0x60] sm:$0xf]
      %v412 = vld [vmem:[%s345 + $0x64] sm:$0xf]
      %v413 = vld [vmem:[%s345 + $0x68] sm:$0xf]
      %v414 = vld [vmem:[%s345 + $0x6c] sm:$0xf]
      %v415 = vld [vmem:[%s345 + $0x70] sm:$0xf]
      %v416 = vld [vmem:[%s345 + $0x74] sm:$0xf]
      %v417 = vld [vmem:[%s345 + $0x78] sm:$0xf]
      %v418 = vld [vmem:[%s345 + $0x7c] sm:$0xf]
      %v419 = vld [vmem:[%s345 + $0x80] sm:$0xf]
      %v420 = vld [vmem:[%s345 + $0x84] sm:$0xf]
      %v421 = vld [vmem:[%s345 + $0x88] sm:$0xf]
      %v422 = vld [vmem:[%s345 + $0x8c] sm:$0xf]
      %v423 = vld [vmem:[%s345 + $0x90] sm:$0xf]
      %v424 = vld [vmem:[%s345 + $0x94] sm:$0xf]
      %v425 = vld [vmem:[%s345 + $0x98] sm:$0xf]
      %v426 = vld [vmem:[%s345 + $0x9c] sm:$0xf]
      %v427 = vld [vmem:[%s345 + $0xa0] sm:$0xf]
      %v428 = vld [vmem:[%s345 + $0xa4] sm:$0xf]
      %v429 = vld [vmem:[%s345 + $0xa8] sm:$0xf]
      %v430 = vld [vmem:[%s345 + $0xac] sm:$0xf]
      %v431 = vld [vmem:[%s345 + $0xb0] sm:$0xf]
      %v432 = vld [vmem:[%s345 + $0xb4] sm:$0xf]
      %v433 = vld [vmem:[%s345 + $0xb8] sm:$0xf]
      %v434 = vld [vmem:[%s345 + $0xbc] sm:$0xf]
      %v435 = vld [vmem:[%s350] sm:$0xf]
      %v436 = vld [vmem:[%s350 + $0x4] sm:$0xf]
      %v437 = vld [vmem:[%s350 + $0x8] sm:$0xf]
      %v438 = vld [vmem:[%s350 + $0xc] sm:$0xf]
      %v439 = vld [vmem:[%s350 + $0x10] sm:$0xf]
      %v440 = vld [vmem:[%s350 + $0x14] sm:$0xf]
      %v441 = vld [vmem:[%s350 + $0x18] sm:$0xf]
      %v442 = vld [vmem:[%s350 + $0x1c] sm:$0xf]
      %v443 = vld [vmem:[%s350 + $0x20] sm:$0xf]
      %v444 = vld [vmem:[%s350 + $0x24] sm:$0xf]
      %v445 = vld [vmem:[%s350 + $0x28] sm:$0xf]
      %v446 = vld [vmem:[%s350 + $0x2c] sm:$0xf]
      %v447 = vld [vmem:[%s350 + $0x30] sm:$0xf]
      %v448 = vld [vmem:[%s350 + $0x34] sm:$0xf]
      %v449 = vld [vmem:[%s350 + $0x38] sm:$0xf]
      %v450 = vld [vmem:[%s350 + $0x3c] sm:$0xf]
      %v451 = vld [vmem:[%s350 + $0x40] sm:$0xf]
      %v452 = vld [vmem:[%s350 + $0x44] sm:$0xf]
      %v453 = vld [vmem:[%s350 + $0x48] sm:$0xf]
      %v454 = vld [vmem:[%s350 + $0x4c] sm:$0xf]
      %v455 = vld [vmem:[%s350 + $0x50] sm:$0xf]
      %v456 = vld [vmem:[%s350 + $0x54] sm:$0xf]
      %v457 = vld [vmem:[%s350 + $0x58] sm:$0xf]
      %v458 = vld [vmem:[%s350 + $0x5c] sm:$0xf]
      %v459 = vld [vmem:[%s350 + $0x60] sm:$0xf]
      %v460 = vld [vmem:[%s350 + $0x64] sm:$0xf]
      %v461 = vld [vmem:[%s350 + $0x68] sm:$0xf]
      %v462 = vld [vmem:[%s350 + $0x6c] sm:$0xf]
      %v463 = vld [vmem:[%s350 + $0x70] sm:$0xf]
      %v464 = vld [vmem:[%s350 + $0x74] sm:$0xf]
      %v465 = vld [vmem:[%s350 + $0x78] sm:$0xf]
      %v466 = vld [vmem:[%s350 + $0x7c] sm:$0xf]
      %v467 = vld [vmem:[%s350 + $0x80] sm:$0xf]
      %v468 = vld [vmem:[%s350 + $0x84] sm:$0xf]
      %v469 = vld [vmem:[%s350 + $0x88] sm:$0xf]
      %v470 = vld [vmem:[%s350 + $0x8c] sm:$0xf]
      %v507 = vunpack.c.l.b16 %v435
      %v508 = vunpack.c.l.b16 %v436
      %v509 = vunpack.c.l.b16 %v437
      %v510 = vunpack.c.l.b16 %v438
      %v511 = vunpack.c.l.b16 %v439
      %v512 = vunpack.c.l.b16 %v440
      %v513 = vunpack.c.l.b16 %v441
      %v514 = vunpack.c.l.b16 %v442
      %v515 = vunpack.c.l.b16 %v443
      %v516 = vunpack.c.l.b16 %v444
      %v517 = vunpack.c.l.b16 %v445
      %v518 = vunpack.c.l.b16 %v446
      %v519 = vunpack.c.l.b16 %v447
      %v520 = vunpack.c.l.b16 %v448
      %v521 = vunpack.c.l.b16 %v449
      %v522 = vunpack.c.l.b16 %v450
      %v523 = vunpack.c.l.b16 %v451
      %v524 = vunpack.c.l.b16 %v452
      %v525 = vunpack.c.l.b16 %v453
      %v526 = vunpack.c.l.b16 %v454
      %v527 = vunpack.c.l.b16 %v455
      %v528 = vunpack.c.l.b16 %v456
      %v529 = vunpack.c.l.b16 %v457
      %v530 = vunpack.c.l.b16 %v458
      %v531 = vunpack.c.l.b16 %v459
      %v532 = vunpack.c.l.b16 %v460
      %v533 = vunpack.c.l.b16 %v461
      %v534 = vunpack.c.l.b16 %v462
      %v535 = vunpack.c.l.b16 %v463
      %v536 = vunpack.c.l.b16 %v464
      %v537 = vunpack.c.l.b16 %v465
      %v538 = vunpack.c.l.b16 %v466
      %v539 = vunpack.c.l.b16 %v467
      %v540 = vunpack.c.l.b16 %v468
      %v541 = vunpack.c.l.b16 %v469
      %v542 = vunpack.c.l.b16 %v470
      %v543 = vpack.c.b16 %v508, %v507
      %v544 = vpack.c.b16 %v510, %v509
      %v545 = vpack.c.b16 %v512, %v511
      %v546 = vpack.c.b16 %v514, %v513
      %v547 = vpack.c.b16 %v516, %v515
      %v548 = vpack.c.b16 %v518, %v517
      %v549 = vpack.c.b16 %v520, %v519
      %v550 = vpack.c.b16 %v522, %v521
      %v551 = vpack.c.b16 %v524, %v523
      %v552 = vpack.c.b16 %v526, %v525
      %v553 = vpack.c.b16 %v528, %v527
      %v554 = vpack.c.b16 %v530, %v529
      %v555 = vpack.c.b16 %v532, %v531
      %v556 = vpack.c.b16 %v534, %v533
      %v557 = vpack.c.b16 %v536, %v535
      %v558 = vpack.c.b16 %v538, %v537
      %v559 = vpack.c.b16 %v540, %v539
      %v560 = vpack.c.b16 %v542, %v541
      %v609 = vunpack.c.l.b16 %v387
      %v610 = vunpack.c.l.b16 %v388
      %v611 = vunpack.c.l.b16 %v389
      %v612 = vunpack.c.l.b16 %v390
      %v613 = vunpack.c.l.b16 %v391
      %v614 = vunpack.c.l.b16 %v392
      %v615 = vunpack.c.l.b16 %v393
      %v616 = vunpack.c.l.b16 %v394
      %v617 = vunpack.c.l.b16 %v395
      %v618 = vunpack.c.l.b16 %v396
      %v619 = vunpack.c.l.b16 %v397
      %v620 = vunpack.c.l.b16 %v398
      %v621 = vunpack.c.l.b16 %v399
      %v622 = vunpack.c.l.b16 %v400
      %v623 = vunpack.c.l.b16 %v401
      %v624 = vunpack.c.l.b16 %v402
      %v625 = vunpack.c.l.b16 %v403
      %v626 = vunpack.c.l.b16 %v404
      %v627 = vunpack.c.l.b16 %v405
      %v628 = vunpack.c.l.b16 %v406
      %v629 = vunpack.c.l.b16 %v407
      %v630 = vunpack.c.l.b16 %v408
      %v631 = vunpack.c.l.b16 %v409
      %v632 = vunpack.c.l.b16 %v410
      %v633 = vunpack.c.l.b16 %v411
      %v634 = vunpack.c.l.b16 %v412
      %v635 = vunpack.c.l.b16 %v413
      %v636 = vunpack.c.l.b16 %v414
      %v637 = vunpack.c.l.b16 %v415
      %v638 = vunpack.c.l.b16 %v416
      %v639 = vunpack.c.l.b16 %v417
      %v640 = vunpack.c.l.b16 %v418
      %v641 = vunpack.c.l.b16 %v419
      %v642 = vunpack.c.l.b16 %v420
      %v643 = vunpack.c.l.b16 %v421
      %v644 = vunpack.c.l.b16 %v422
      %v645 = vunpack.c.l.b16 %v423
      %v646 = vunpack.c.l.b16 %v424
      %v647 = vunpack.c.l.b16 %v425
      %v648 = vunpack.c.l.b16 %v426
      %v649 = vunpack.c.l.b16 %v427
      %v650 = vunpack.c.l.b16 %v428
      %v651 = vunpack.c.l.b16 %v429
      %v652 = vunpack.c.l.b16 %v430
      %v653 = vunpack.c.l.b16 %v431
      %v654 = vunpack.c.l.b16 %v432
      %v655 = vunpack.c.l.b16 %v433
      %v656 = vunpack.c.l.b16 %v434
      %v657 = vpack.c.b16 %v610, %v609
      %v658 = vpack.c.b16 %v612, %v611
      %v659 = vpack.c.b16 %v614, %v613
      %v660 = vpack.c.b16 %v616, %v615
      %v661 = vpack.c.b16 %v618, %v617
      %v662 = vpack.c.b16 %v620, %v619
      %v663 = vpack.c.b16 %v622, %v621
      %v664 = vpack.c.b16 %v624, %v623
      %v665 = vpack.c.b16 %v626, %v625
      %v666 = vpack.c.b16 %v628, %v627
      %v667 = vpack.c.b16 %v630, %v629
      %v668 = vpack.c.b16 %v632, %v631
      %v669 = vpack.c.b16 %v634, %v633
      %v670 = vpack.c.b16 %v636, %v635
      %v671 = vpack.c.b16 %v638, %v637
      %v672 = vpack.c.b16 %v640, %v639
      %v673 = vpack.c.b16 %v642, %v641
      %v674 = vpack.c.b16 %v644, %v643
      %v675 = vpack.c.b16 %v646, %v645
      %v676 = vpack.c.b16 %v648, %v647
      %v677 = vpack.c.b16 %v650, %v649
      %v678 = vpack.c.b16 %v652, %v651
      %v679 = vpack.c.b16 %v654, %v653
      %v680 = vpack.c.b16 %v656, %v655
      %vm681 = vcmask 23552
      %v683 = vsel %vm681, %v543, 0
      %v686 = vsel %vm681, %v544, 0
      %v689 = vsel %vm681, %v545, 0
      %v692 = vsel %vm681, %v546, 0
      %v695 = vsel %vm681, %v547, 0
      %v698 = vsel %vm681, %v548, 0
      %v701 = vsel %vm681, %v549, 0
      %v704 = vsel %vm681, %v550, 0
      %v707 = vsel %vm681, %v551, 0
      %v710 = vsel %vm681, %v552, 0
      %v713 = vsel %vm681, %v553, 0
      %v716 = vsel %vm681, %v554, 0
      %v719 = vsel %vm681, %v555, 0
      %v722 = vsel %vm681, %v556, 0
      %v725 = vsel %vm681, %v557, 0
      %v728 = vsel %vm681, %v558, 0
      %v731 = vsel %vm681, %v559, 0
      %v734 = vsel %vm681, %v560, 0
      %v737 = vsel %vm681, %v657, 0
      %v740 = vsel %vm681, %v658, 0
      %v743 = vsel %vm681, %v659, 0
      %v746 = vsel %vm681, %v660, 0
      %v749 = vsel %vm681, %v661, 0
      %v752 = vsel %vm681, %v662, 0
      %v755 = vsel %vm681, %v663, 0
      %v758 = vsel %vm681, %v664, 0
      %v761 = vsel %vm681, %v665, 0
      %v764 = vsel %vm681, %v666, 0
      %v767 = vsel %vm681, %v667, 0
      %v770 = vsel %vm681, %v668, 0
      %v773 = vsel %vm681, %v669, 0
      %v776 = vsel %vm681, %v670, 0
      %v779 = vsel %vm681, %v671, 0
      %v782 = vsel %vm681, %v672, 0
      %v785 = vsel %vm681, %v673, 0
      %v788 = vsel %vm681, %v674, 0
      %v791 = vsel %vm681, %v675, 0
      %v794 = vsel %vm681, %v676, 0
      %v797 = vsel %vm681, %v677, 0
      %v800 = vsel %vm681, %v678, 0
      %v803 = vsel %vm681, %v679, 0
      %v806 = vsel %vm681, %v680, 0
      %808 = vmatpush.bf16.xpose.msra.mxu0 %v758
      %809 = vmatpush.bf16.xpose.msra.mxu0 %v755
      %810 = vmatpush.bf16.xpose.msra.mxu0 %v752
      %811 = vmatpush.bf16.xpose.msra.mxu0 %v749
      %812 = vmatpush.bf16.xpose.msra.mxu0 %v746
      %813 = vmatpush.bf16.xpose.msra.mxu0 %v743
      %814 = vmatpush.bf16.xpose.msra.mxu0 %v740
      %815 = vmatpush.bf16.xpose.msra.mxu0 %v737
      %816 = vmatmul.bf16.gmra.mxu0 %v683
      %v817 = vpop.f32.mrf.mxu0
      %v818 = vadd.f32 0.0, %v817
      %v819 = vpop.f32.mrf.mxu0
      %v820 = vadd.f32 0.0, %v819
      %821 = vmatmul.bf16.gmra.mxu0 %v686
      %v822 = vpop.f32.mrf.mxu0
      %v823 = vadd.f32 0.0, %v822
      %v824 = vpop.f32.mrf.mxu0
      %v825 = vadd.f32 0.0, %v824
      %826 = vmatmul.bf16.gmra.mxu0 %v689
      %v827 = vpop.f32.mrf.mxu0
      %v828 = vadd.f32 0.0, %v827
      %v829 = vpop.f32.mrf.mxu0
      %v830 = vadd.f32 0.0, %v829
      %831 = vmatmul.bf16.gmra.mxu0 %v692
      %v832 = vpop.f32.mrf.mxu0
      %v833 = vadd.f32 0.0, %v832
      %v834 = vpop.f32.mrf.mxu0
      %v835 = vadd.f32 0.0, %v834
      %836 = vmatmul.bf16.gmra.mxu0 %v695
      %v837 = vpop.f32.mrf.mxu0
      %v838 = vadd.f32 0.0, %v837
      %v839 = vpop.f32.mrf.mxu0
      %v840 = vadd.f32 0.0, %v839
      %841 = vmatmul.bf16.gmra.mxu0 %v698
      %v842 = vpop.f32.mrf.mxu0
      %v843 = vadd.f32 0.0, %v842
      %v844 = vpop.f32.mrf.mxu0
      %v845 = vadd.f32 0.0, %v844
      %846 = vmatmul.bf16.gmra.mxu0 %v701
      %v847 = vpop.f32.mrf.mxu0
      %v848 = vadd.f32 0.0, %v847
      %v849 = vpop.f32.mrf.mxu0
      %v850 = vadd.f32 0.0, %v849
      %851 = vmatmul.bf16.gmra.mxu0 %v704
      %v852 = vpop.f32.mrf.mxu0
      %v853 = vadd.f32 0.0, %v852
      %v854 = vpop.f32.mrf.mxu0
      %v855 = vadd.f32 0.0, %v854
      %856 = vmatmul.bf16.gmra.mxu0 %v707
      %v857 = vpop.f32.mrf.mxu0
      %v858 = vadd.f32 0.0, %v857
      %v859 = vpop.f32.mrf.mxu0
      %v860 = vadd.f32 0.0, %v859
      %861 = vmatmul.bf16.gmra.mxu0 %v710
      %v862 = vpop.f32.mrf.mxu0
      %v863 = vadd.f32 0.0, %v862
      %v864 = vpop.f32.mrf.mxu0
      %v865 = vadd.f32 0.0, %v864
      %866 = vmatmul.bf16.gmra.mxu0 %v713
      %v867 = vpop.f32.mrf.mxu0
      %v868 = vadd.f32 0.0, %v867
      %v869 = vpop.f32.mrf.mxu0
      %v870 = vadd.f32 0.0, %v869
      %871 = vmatmul.bf16.gmra.mxu0 %v716
      %v872 = vpop.f32.mrf.mxu0
      %v873 = vadd.f32 0.0, %v872
      %v874 = vpop.f32.mrf.mxu0
      %v875 = vadd.f32 0.0, %v874
      %876 = vmatmul.bf16.gmra.mxu0 %v719
      %v877 = vpop.f32.mrf.mxu0
      %v878 = vadd.f32 0.0, %v877
      %v879 = vpop.f32.mrf.mxu0
      %v880 = vadd.f32 0.0, %v879
      %881 = vmatmul.bf16.gmra.mxu0 %v722
      %v882 = vpop.f32.mrf.mxu0
      %v883 = vadd.f32 0.0, %v882
      %v884 = vpop.f32.mrf.mxu0
      %v885 = vadd.f32 0.0, %v884
      %886 = vmatmul.bf16.gmra.mxu0 %v725
      %v887 = vpop.f32.mrf.mxu0
      %v888 = vadd.f32 0.0, %v887
      %v889 = vpop.f32.mrf.mxu0
      %v890 = vadd.f32 0.0, %v889
      %891 = vmatmul.bf16.gmra.mxu0 %v728
      %v892 = vpop.f32.mrf.mxu0
      %v893 = vadd.f32 0.0, %v892
      %v894 = vpop.f32.mrf.mxu0
      %v895 = vadd.f32 0.0, %v894
      %896 = vmatmul.bf16.gmra.mxu0 %v731
      %v897 = vpop.f32.mrf.mxu0
      %v898 = vadd.f32 0.0, %v897
      %v899 = vpop.f32.mrf.mxu0
      %v900 = vadd.f32 0.0, %v899
      %901 = vmatmul.bf16.gmra.mxu0 %v734
      %v902 = vpop.f32.mrf.mxu0
      %v903 = vadd.f32 0.0, %v902
      %v904 = vpop.f32.mrf.mxu0
      %v905 = vadd.f32 0.0, %v904
      %906 = vdwg.mxu0
      %907 = vmatpush.bf16.xpose.msra.mxu0 %v782
      %908 = vmatpush.bf16.xpose.msra.mxu0 %v779
      %909 = vmatpush.bf16.xpose.msra.mxu0 %v776
      %910 = vmatpush.bf16.xpose.msra.mxu0 %v773
      %911 = vmatpush.bf16.xpose.msra.mxu0 %v770
      %912 = vmatpush.bf16.xpose.msra.mxu0 %v767
      %913 = vmatpush.bf16.xpose.msra.mxu0 %v764
      %914 = vmatpush.bf16.xpose.msra.mxu0 %v761
      %915 = vmatmul.bf16.gmra.mxu0 %v683
      %v916 = vpop.f32.mrf.mxu0
      %v917 = vadd.f32 0.0, %v916
      %v918 = vpop.f32.mrf.mxu0
      %v919 = vadd.f32 0.0, %v918
      %920 = vmatmul.bf16.gmra.mxu0 %v686
      %v921 = vpop.f32.mrf.mxu0
      %v922 = vadd.f32 0.0, %v921
      %v923 = vpop.f32.mrf.mxu0
      %v924 = vadd.f32 0.0, %v923
      %925 = vmatmul.bf16.gmra.mxu0 %v689
      %v926 = vpop.f32.mrf.mxu0
      %v927 = vadd.f32 0.0, %v926
      %v928 = vpop.f32.mrf.mxu0
      %v929 = vadd.f32 0.0, %v928
      %930 = vmatmul.bf16.gmra.mxu0 %v692
      %v931 = vpop.f32.mrf.mxu0
      %v932 = vadd.f32 0.0, %v931
      %v933 = vpop.f32.mrf.mxu0
      %v934 = vadd.f32 0.0, %v933
      %935 = vmatmul.bf16.gmra.mxu0 %v695
      %v936 = vpop.f32.mrf.mxu0
      %v937 = vadd.f32 0.0, %v936
      %v938 = vpop.f32.mrf.mxu0
      %v939 = vadd.f32 0.0, %v938
      %940 = vmatmul.bf16.gmra.mxu0 %v698
      %v941 = vpop.f32.mrf.mxu0
      %v942 = vadd.f32 0.0, %v941
      %v943 = vpop.f32.mrf.mxu0
      %v944 = vadd.f32 0.0, %v943
      %945 = vmatmul.bf16.gmra.mxu0 %v701
      %v946 = vpop.f32.mrf.mxu0
      %v947 = vadd.f32 0.0, %v946
      %v948 = vpop.f32.mrf.mxu0
      %v949 = vadd.f32 0.0, %v948
      %950 = vmatmul.bf16.gmra.mxu0 %v704
      %v951 = vpop.f32.mrf.mxu0
      %v952 = vadd.f32 0.0, %v951
      %v953 = vpop.f32.mrf.mxu0
      %v954 = vadd.f32 0.0, %v953
      %955 = vmatmul.bf16.gmra.mxu0 %v707
      %v956 = vpop.f32.mrf.mxu0
      %v957 = vadd.f32 0.0, %v956
      %v958 = vpop.f32.mrf.mxu0
      %v959 = vadd.f32 0.0, %v958
      %960 = vmatmul.bf16.gmra.mxu0 %v710
      %v961 = vpop.f32.mrf.mxu0
      %v962 = vadd.f32 0.0, %v961
      %v963 = vpop.f32.mrf.mxu0
      %v964 = vadd.f32 0.0, %v963
      %965 = vmatmul.bf16.gmra.mxu0 %v713
      %v966 = vpop.f32.mrf.mxu0
      %v967 = vadd.f32 0.0, %v966
      %v968 = vpop.f32.mrf.mxu0
      %v969 = vadd.f32 0.0, %v968
      %970 = vmatmul.bf16.gmra.mxu0 %v716
      %v971 = vpop.f32.mrf.mxu0
      %v972 = vadd.f32 0.0, %v971
      %v973 = vpop.f32.mrf.mxu0
      %v974 = vadd.f32 0.0, %v973
      %975 = vmatmul.bf16.gmra.mxu0 %v719
      %v976 = vpop.f32.mrf.mxu0
      %v977 = vadd.f32 0.0, %v976
      %v978 = vpop.f32.mrf.mxu0
      %v979 = vadd.f32 0.0, %v978
      %980 = vmatmul.bf16.gmra.mxu0 %v722
      %v981 = vpop.f32.mrf.mxu0
      %v982 = vadd.f32 0.0, %v981
      %v983 = vpop.f32.mrf.mxu0
      %v984 = vadd.f32 0.0, %v983
      %985 = vmatmul.bf16.gmra.mxu0 %v725
      %v986 = vpop.f32.mrf.mxu0
      %v987 = vadd.f32 0.0, %v986
      %v988 = vpop.f32.mrf.mxu0
      %v989 = vadd.f32 0.0, %v988
      %990 = vmatmul.bf16.gmra.mxu0 %v728
      %v991 = vpop.f32.mrf.mxu0
      %v992 = vadd.f32 0.0, %v991
      %v993 = vpop.f32.mrf.mxu0
      %v994 = vadd.f32 0.0, %v993
      %995 = vmatmul.bf16.gmra.mxu0 %v731
      %v996 = vpop.f32.mrf.mxu0
      %v997 = vadd.f32 0.0, %v996
      %v998 = vpop.f32.mrf.mxu0
      %v999 = vadd.f32 0.0, %v998
      %1000 = vmatmul.bf16.gmra.mxu0 %v734
      %v1001 = vpop.f32.mrf.mxu0
      %v1002 = vadd.f32 0.0, %v1001
      %v1003 = vpop.f32.mrf.mxu0
      %v1004 = vadd.f32 0.0, %v1003
      %1005 = vdwg.mxu0
      %1006 = vmatpush.bf16.xpose.msra.mxu0 %v806
      %1007 = vmatpush.bf16.xpose.msra.mxu0 %v803
      %1008 = vmatpush.bf16.xpose.msra.mxu0 %v800
      %1009 = vmatpush.bf16.xpose.msra.mxu0 %v797
      %1010 = vmatpush.bf16.xpose.msra.mxu0 %v794
      %1011 = vmatpush.bf16.xpose.msra.mxu0 %v791
      %1012 = vmatpush.bf16.xpose.msra.mxu0 %v788
      %1013 = vmatpush.bf16.xpose.msra.mxu0 %v785
      %1014 = vmatmul.bf16.gmra.mxu0 %v683
      %v1015 = vpop.f32.mrf.mxu0
      %v1016 = vadd.f32 0.0, %v1015
      %v1017 = vpop.f32.mrf.mxu0
      %v1018 = vadd.f32 0.0, %v1017
      %1019 = vmatmul.bf16.gmra.mxu0 %v686
      %v1020 = vpop.f32.mrf.mxu0
      %v1021 = vadd.f32 0.0, %v1020
      %v1022 = vpop.f32.mrf.mxu0
      %v1023 = vadd.f32 0.0, %v1022
      %1024 = vmatmul.bf16.gmra.mxu0 %v689
      %v1025 = vpop.f32.mrf.mxu0
      %v1026 = vadd.f32 0.0, %v1025
      %v1027 = vpop.f32.mrf.mxu0
      %v1028 = vadd.f32 0.0, %v1027
      %1029 = vmatmul.bf16.gmra.mxu0 %v692
      %v1030 = vpop.f32.mrf.mxu0
      %v1031 = vadd.f32 0.0, %v1030
      %v1032 = vpop.f32.mrf.mxu0
      %v1033 = vadd.f32 0.0, %v1032
      %1034 = vmatmul.bf16.gmra.mxu0 %v695
      %v1035 = vpop.f32.mrf.mxu0
      %v1036 = vadd.f32 0.0, %v1035
      %v1037 = vpop.f32.mrf.mxu0
      %v1038 = vadd.f32 0.0, %v1037
      %1039 = vmatmul.bf16.gmra.mxu0 %v698
      %v1040 = vpop.f32.mrf.mxu0
      %v1041 = vadd.f32 0.0, %v1040
      %v1042 = vpop.f32.mrf.mxu0
      %v1043 = vadd.f32 0.0, %v1042
      %1044 = vmatmul.bf16.gmra.mxu0 %v701
      %v1045 = vpop.f32.mrf.mxu0
      %v1046 = vadd.f32 0.0, %v1045
      %v1047 = vpop.f32.mrf.mxu0
      %v1048 = vadd.f32 0.0, %v1047
      %1049 = vmatmul.bf16.gmra.mxu0 %v704
      %v1050 = vpop.f32.mrf.mxu0
      %v1051 = vadd.f32 0.0, %v1050
      %v1052 = vpop.f32.mrf.mxu0
      %v1053 = vadd.f32 0.0, %v1052
      %1054 = vmatmul.bf16.gmra.mxu0 %v707
      %v1055 = vpop.f32.mrf.mxu0
      %v1056 = vadd.f32 0.0, %v1055
      %v1057 = vpop.f32.mrf.mxu0
      %v1058 = vadd.f32 0.0, %v1057
      %1059 = vmatmul.bf16.gmra.mxu0 %v710
      %v1060 = vpop.f32.mrf.mxu0
      %v1061 = vadd.f32 0.0, %v1060
      %v1062 = vpop.f32.mrf.mxu0
      %v1063 = vadd.f32 0.0, %v1062
      %1064 = vmatmul.bf16.gmra.mxu0 %v713
      %v1065 = vpop.f32.mrf.mxu0
      %v1066 = vadd.f32 0.0, %v1065
      %v1067 = vpop.f32.mrf.mxu0
      %v1068 = vadd.f32 0.0, %v1067
      %1069 = vmatmul.bf16.gmra.mxu0 %v716
      %v1070 = vpop.f32.mrf.mxu0
      %v1071 = vadd.f32 0.0, %v1070
      %v1072 = vpop.f32.mrf.mxu0
      %v1073 = vadd.f32 0.0, %v1072
      %1074 = vmatmul.bf16.gmra.mxu0 %v719
      %v1075 = vpop.f32.mrf.mxu0
      %v1076 = vadd.f32 0.0, %v1075
      %v1077 = vpop.f32.mrf.mxu0
      %v1078 = vadd.f32 0.0, %v1077
      %1079 = vmatmul.bf16.gmra.mxu0 %v722
      %v1080 = vpop.f32.mrf.mxu0
      %v1081 = vadd.f32 0.0, %v1080
      %v1082 = vpop.f32.mrf.mxu0
      %v1083 = vadd.f32 0.0, %v1082
      %1084 = vmatmul.bf16.gmra.mxu0 %v725
      %v1085 = vpop.f32.mrf.mxu0
      %v1086 = vadd.f32 0.0, %v1085
      %v1087 = vpop.f32.mrf.mxu0
      %v1088 = vadd.f32 0.0, %v1087
      %1089 = vmatmul.bf16.gmra.mxu0 %v728
      %v1090 = vpop.f32.mrf.mxu0
      %v1091 = vadd.f32 0.0, %v1090
      %v1092 = vpop.f32.mrf.mxu0
      %v1093 = vadd.f32 0.0, %v1092
      %1094 = vmatmul.bf16.gmra.mxu0 %v731
      %v1095 = vpop.f32.mrf.mxu0
      %v1096 = vadd.f32 0.0, %v1095
      %v1097 = vpop.f32.mrf.mxu0
      %v1098 = vadd.f32 0.0, %v1097
      %1099 = vmatmul.bf16.gmra.mxu0 %v734
      %v1100 = vpop.f32.mrf.mxu0
      %v1101 = vadd.f32 0.0, %v1100
      %v1102 = vpop.f32.mrf.mxu0
      %v1103 = vadd.f32 0.0, %v1102
      %1104 = vdwg.mxu0
      %v1105 = vadd.f32 %v818, 0.0
      %v1106 = vadd.f32 %v917, 0.0
      %v1107 = vadd.f32 %v1016, 0.0
      %v1108 = vadd.f32 %v820, 0.0
      %v1109 = vadd.f32 %v919, 0.0
      %v1110 = vadd.f32 %v1018, 0.0
      %v1111 = vadd.f32 %v823, 0.0
      %v1112 = vadd.f32 %v922, 0.0
      %v1113 = vadd.f32 %v1021, 0.0
      %v1114 = vadd.f32 %v825, 0.0
      %v1115 = vadd.f32 %v924, 0.0
      %v1116 = vadd.f32 %v1023, 0.0
      %1129 = vrot.lane.b32.xlu0 %v828, 127
      %v1130 = vpop.permute.xlu0 %1129
      %1131 = vrot.lane.b32.xlu0 %v927, 127
      %v1132 = vpop.permute.xlu0 %1131
      %1133 = vrot.lane.b32.xlu0 %v1026, 127
      %v1134 = vpop.permute.xlu0 %1133
      %1135 = vrot.lane.b32.xlu0 %v830, 127
      %v1136 = vpop.permute.xlu0 %1135
      %1137 = vrot.lane.b32.xlu0 %v929, 127
      %v1138 = vpop.permute.xlu0 %1137
      %1139 = vrot.lane.b32.xlu0 %v1028, 127
      %v1140 = vpop.permute.xlu0 %1139
      %1141 = vrot.lane.b32.xlu0 %v833, 127
      %v1142 = vpop.permute.xlu0 %1141
      %1143 = vrot.lane.b32.xlu0 %v932, 127
      %v1144 = vpop.permute.xlu0 %1143
      %1145 = vrot.lane.b32.xlu0 %v1031, 127
      %v1146 = vpop.permute.xlu0 %1145
      %1147 = vrot.lane.b32.xlu0 %v835, 127
      %v1148 = vpop.permute.xlu0 %1147
      %1149 = vrot.lane.b32.xlu0 %v934, 127
      %v1150 = vpop.permute.xlu0 %1149
      %1151 = vrot.lane.b32.xlu0 %v1033, 127
      %v1152 = vpop.permute.xlu0 %1151
      %vm1153 = vcmask 1039360
      %v1154 = vsel %vm1153, %v1130, %v1132
      %v1155 = vsel %vm1153, %v1132, %v1134
      %v1156 = vsel %vm1153, %v1136, %v1138
      %v1157 = vsel %vm1153, %v1138, %v1140
      %v1158 = vsel %vm1153, %v1142, %v1144
      %v1159 = vsel %vm1153, %v1144, %v1146
      %v1160 = vsel %vm1153, %v1148, %v1150
      %v1161 = vsel %vm1153, %v1150, %v1152
      %v1178 = vsel %vm1153, %v1134, %v1130
      %v1179 = vsel %vm1153, %v1140, %v1136
      %v1180 = vsel %vm1153, %v1146, %v1142
      %v1181 = vsel %vm1153, %v1152, %v1148
      %v1182 = vadd.f32 %v1105, %v1154
      %v1183 = vadd.f32 %v1106, %v1155
      %v1184 = vadd.f32 %v1107, %v1178
      %v1185 = vadd.f32 %v1108, %v1156
      %v1186 = vadd.f32 %v1109, %v1157
      %v1187 = vadd.f32 %v1110, %v1179
      %v1188 = vadd.f32 %v1111, %v1158
      %v1189 = vadd.f32 %v1112, %v1159
      %v1190 = vadd.f32 %v1113, %v1180
      %v1191 = vadd.f32 %v1114, %v1160
      %v1192 = vadd.f32 %v1115, %v1161
      %v1193 = vadd.f32 %v1116, %v1181
      %1206 = vrot.lane.b32.xlu0 %v838, 126
      %v1207 = vpop.permute.xlu0 %1206
      %1208 = vrot.lane.b32.xlu0 %v937, 126
      %v1209 = vpop.permute.xlu0 %1208
      %1210 = vrot.lane.b32.xlu0 %v1036, 126
      %v1211 = vpop.permute.xlu0 %1210
      %1212 = vrot.lane.b32.xlu0 %v840, 126
      %v1213 = vpop.permute.xlu0 %1212
      %1214 = vrot.lane.b32.xlu0 %v939, 126
      %v1215 = vpop.permute.xlu0 %1214
      %1216 = vrot.lane.b32.xlu0 %v1038, 126
      %v1217 = vpop.permute.xlu0 %1216
      %1218 = vrot.lane.b32.xlu0 %v843, 126
      %v1219 = vpop.permute.xlu0 %1218
      %1220 = vrot.lane.b32.xlu0 %v942, 126
      %v1221 = vpop.permute.xlu0 %1220
      %1222 = vrot.lane.b32.xlu0 %v1041, 126
      %v1223 = vpop.permute.xlu0 %1222
      %1224 = vrot.lane.b32.xlu0 %v845, 126
      %v1225 = vpop.permute.xlu0 %1224
      %1226 = vrot.lane.b32.xlu0 %v944, 126
      %v1227 = vpop.permute.xlu0 %1226
      %1228 = vrot.lane.b32.xlu0 %v1043, 126
      %v1229 = vpop.permute.xlu0 %1228
      %vm1230 = vcmask 1031168
      %v1231 = vsel %vm1230, %v1207, %v1209
      %v1232 = vsel %vm1230, %v1209, %v1211
      %v1233 = vsel %vm1230, %v1213, %v1215
      %v1234 = vsel %vm1230, %v1215, %v1217
      %v1235 = vsel %vm1230, %v1219, %v1221
      %v1236 = vsel %vm1230, %v1221, %v1223
      %v1237 = vsel %vm1230, %v1225, %v1227
      %v1238 = vsel %vm1230, %v1227, %v1229
      %v1255 = vsel %vm1230, %v1211, %v1207
      %v1256 = vsel %vm1230, %v1217, %v1213
      %v1257 = vsel %vm1230, %v1223, %v1219
      %v1258 = vsel %vm1230, %v1229, %v1225
      %v1259 = vadd.f32 %v1182, %v1231
      %v1260 = vadd.f32 %v1183, %v1232
      %v1261 = vadd.f32 %v1184, %v1255
      %v1262 = vadd.f32 %v1185, %v1233
      %v1263 = vadd.f32 %v1186, %v1234
      %v1264 = vadd.f32 %v1187, %v1256
      %v1265 = vadd.f32 %v1188, %v1235
      %v1266 = vadd.f32 %v1189, %v1236
      %v1267 = vadd.f32 %v1190, %v1257
      %v1268 = vadd.f32 %v1191, %v1237
      %v1269 = vadd.f32 %v1192, %v1238
      %v1270 = vadd.f32 %v1193, %v1258
      %1283 = vrot.lane.b32.xlu0 %v848, 125
      %v1284 = vpop.permute.xlu0 %1283
      %1285 = vrot.lane.b32.xlu0 %v947, 125
      %v1286 = vpop.permute.xlu0 %1285
      %1287 = vrot.lane.b32.xlu0 %v1046, 125
      %v1288 = vpop.permute.xlu0 %1287
      %1289 = vrot.lane.b32.xlu0 %v850, 125
      %v1290 = vpop.permute.xlu0 %1289
      %1291 = vrot.lane.b32.xlu0 %v949, 125
      %v1292 = vpop.permute.xlu0 %1291
      %1293 = vrot.lane.b32.xlu0 %v1048, 125
      %v1294 = vpop.permute.xlu0 %1293
      %1295 = vrot.lane.b32.xlu0 %v853, 125
      %v1296 = vpop.permute.xlu0 %1295
      %1297 = vrot.lane.b32.xlu0 %v952, 125
      %v1298 = vpop.permute.xlu0 %1297
      %1299 = vrot.lane.b32.xlu0 %v1051, 125
      %v1300 = vpop.permute.xlu0 %1299
      %1301 = vrot.lane.b32.xlu0 %v855, 125
      %v1302 = vpop.permute.xlu0 %1301
      %1303 = vrot.lane.b32.xlu0 %v954, 125
      %v1304 = vpop.permute.xlu0 %1303
      %1305 = vrot.lane.b32.xlu0 %v1053, 125
      %v1306 = vpop.permute.xlu0 %1305
      %vm1307 = vcmask 1022976
      %v1308 = vsel %vm1307, %v1284, %v1286
      %v1309 = vsel %vm1307, %v1286, %v1288
      %v1310 = vsel %vm1307, %v1290, %v1292
      %v1311 = vsel %vm1307, %v1292, %v1294
      %v1312 = vsel %vm1307, %v1296, %v1298
      %v1313 = vsel %vm1307, %v1298, %v1300
      %v1314 = vsel %vm1307, %v1302, %v1304
      %v1315 = vsel %vm1307, %v1304, %v1306
      %v1332 = vsel %vm1307, %v1288, %v1284
      %v1333 = vsel %vm1307, %v1294, %v1290
      %v1334 = vsel %vm1307, %v1300, %v1296
      %v1335 = vsel %vm1307, %v1306, %v1302
      %v1336 = vadd.f32 %v1259, %v1308
      %v1337 = vadd.f32 %v1260, %v1309
      %v1338 = vadd.f32 %v1261, %v1332
      %v1339 = vadd.f32 %v1262, %v1310
      %v1340 = vadd.f32 %v1263, %v1311
      %v1341 = vadd.f32 %v1264, %v1333
      %v1342 = vadd.f32 %v1265, %v1312
      %v1343 = vadd.f32 %v1266, %v1313
      %v1344 = vadd.f32 %v1267, %v1334
      %v1345 = vadd.f32 %v1268, %v1314
      %v1346 = vadd.f32 %v1269, %v1315
      %v1347 = vadd.f32 %v1270, %v1335
      %1360 = vrot.lane.b32.xlu0 %v858, 124
      %v1361 = vpop.permute.xlu0 %1360
      %1362 = vrot.lane.b32.xlu0 %v957, 124
      %v1363 = vpop.permute.xlu0 %1362
      %1364 = vrot.lane.b32.xlu0 %v1056, 124
      %v1365 = vpop.permute.xlu0 %1364
      %1366 = vrot.lane.b32.xlu0 %v860, 124
      %v1367 = vpop.permute.xlu0 %1366
      %1368 = vrot.lane.b32.xlu0 %v959, 124
      %v1369 = vpop.permute.xlu0 %1368
      %1370 = vrot.lane.b32.xlu0 %v1058, 124
      %v1371 = vpop.permute.xlu0 %1370
      %1372 = vrot.lane.b32.xlu0 %v863, 124
      %v1373 = vpop.permute.xlu0 %1372
      %1374 = vrot.lane.b32.xlu0 %v962, 124
      %v1375 = vpop.permute.xlu0 %1374
      %1376 = vrot.lane.b32.xlu0 %v1061, 124
      %v1377 = vpop.permute.xlu0 %1376
      %1378 = vrot.lane.b32.xlu0 %v865, 124
      %v1379 = vpop.permute.xlu0 %1378
      %1380 = vrot.lane.b32.xlu0 %v964, 124
      %v1381 = vpop.permute.xlu0 %1380
      %1382 = vrot.lane.b32.xlu0 %v1063, 124
      %v1383 = vpop.permute.xlu0 %1382
      %vm1384 = vcmask 1014784
      %v1385 = vsel %vm1384, %v1361, %v1363
      %v1386 = vsel %vm1384, %v1363, %v1365
      %v1387 = vsel %vm1384, %v1367, %v1369
      %v1388 = vsel %vm1384, %v1369, %v1371
      %v1389 = vsel %vm1384, %v1373, %v1375
      %v1390 = vsel %vm1384, %v1375, %v1377
      %v1391 = vsel %vm1384, %v1379, %v1381
      %v1392 = vsel %vm1384, %v1381, %v1383
      %v1409 = vsel %vm1384, %v1365, %v1361
      %v1410 = vsel %vm1384, %v1371, %v1367
      %v1411 = vsel %vm1384, %v1377, %v1373
      %v1412 = vsel %vm1384, %v1383, %v1379
      %v1413 = vadd.f32 %v1336, %v1385
      %v1414 = vadd.f32 %v1337, %v1386
      %v1415 = vadd.f32 %v1338, %v1409
      %v1416 = vadd.f32 %v1339, %v1387
      %v1417 = vadd.f32 %v1340, %v1388
      %v1418 = vadd.f32 %v1341, %v1410
      %v1419 = vadd.f32 %v1342, %v1389
      %v1420 = vadd.f32 %v1343, %v1390
      %v1421 = vadd.f32 %v1344, %v1411
      %v1422 = vadd.f32 %v1345, %v1391
      %v1423 = vadd.f32 %v1346, %v1392
      %v1424 = vadd.f32 %v1347, %v1412
      %1437 = vrot.lane.b32.xlu0 %v868, 123
      %v1438 = vpop.permute.xlu0 %1437
      %1439 = vrot.lane.b32.xlu0 %v967, 123
      %v1440 = vpop.permute.xlu0 %1439
      %1441 = vrot.lane.b32.xlu0 %v1066, 123
      %v1442 = vpop.permute.xlu0 %1441
      %1443 = vrot.lane.b32.xlu0 %v870, 123
      %v1444 = vpop.permute.xlu0 %1443
      %1445 = vrot.lane.b32.xlu0 %v969, 123
      %v1446 = vpop.permute.xlu0 %1445
      %1447 = vrot.lane.b32.xlu0 %v1068, 123
      %v1448 = vpop.permute.xlu0 %1447
      %1449 = vrot.lane.b32.xlu0 %v873, 123
      %v1450 = vpop.permute.xlu0 %1449
      %1451 = vrot.lane.b32.xlu0 %v972, 123
      %v1452 = vpop.permute.xlu0 %1451
      %1453 = vrot.lane.b32.xlu0 %v1071, 123
      %v1454 = vpop.permute.xlu0 %1453
      %1455 = vrot.lane.b32.xlu0 %v875, 123
      %v1456 = vpop.permute.xlu0 %1455
      %1457 = vrot.lane.b32.xlu0 %v974, 123
      %v1458 = vpop.permute.xlu0 %1457
      %1459 = vrot.lane.b32.xlu0 %v1073, 123
      %v1460 = vpop.permute.xlu0 %1459
      %vm1461 = vcmask 1006592
      %v1462 = vsel %vm1461, %v1438, %v1440
      %v1463 = vsel %vm1461, %v1440, %v1442
      %v1464 = vsel %vm1461, %v1444, %v1446
      %v1465 = vsel %vm1461, %v1446, %v1448
      %v1466 = vsel %vm1461, %v1450, %v1452
      %v1467 = vsel %vm1461, %v1452, %v1454
      %v1468 = vsel %vm1461, %v1456, %v1458
      %v1469 = vsel %vm1461, %v1458, %v1460
      %v1486 = vsel %vm1461, %v1442, %v1438
      %v1487 = vsel %vm1461, %v1448, %v1444
      %v1488 = vsel %vm1461, %v1454, %v1450
      %v1489 = vsel %vm1461, %v1460, %v1456
      %v1490 = vadd.f32 %v1413, %v1462
      %v1491 = vadd.f32 %v1414, %v1463
      %v1492 = vadd.f32 %v1415, %v1486
      %v1493 = vadd.f32 %v1416, %v1464
      %v1494 = vadd.f32 %v1417, %v1465
      %v1495 = vadd.f32 %v1418, %v1487
      %v1496 = vadd.f32 %v1419, %v1466
      %v1497 = vadd.f32 %v1420, %v1467
      %v1498 = vadd.f32 %v1421, %v1488
      %v1499 = vadd.f32 %v1422, %v1468
      %v1500 = vadd.f32 %v1423, %v1469
      %v1501 = vadd.f32 %v1424, %v1489
      %1514 = vrot.lane.b32.xlu0 %v878, 122
      %v1515 = vpop.permute.xlu0 %1514
      %1516 = vrot.lane.b32.xlu0 %v977, 122
      %v1517 = vpop.permute.xlu0 %1516
      %1518 = vrot.lane.b32.xlu0 %v1076, 122
      %v1519 = vpop.permute.xlu0 %1518
      %1520 = vrot.lane.b32.xlu0 %v880, 122
      %v1521 = vpop.permute.xlu0 %1520
      %1522 = vrot.lane.b32.xlu0 %v979, 122
      %v1523 = vpop.permute.xlu0 %1522
      %1524 = vrot.lane.b32.xlu0 %v1078, 122
      %v1525 = vpop.permute.xlu0 %1524
      %1526 = vrot.lane.b32.xlu0 %v883, 122
      %v1527 = vpop.permute.xlu0 %1526
      %1528 = vrot.lane.b32.xlu0 %v982, 122
      %v1529 = vpop.permute.xlu0 %1528
      %1530 = vrot.lane.b32.xlu0 %v1081, 122
      %v1531 = vpop.permute.xlu0 %1530
      %1532 = vrot.lane.b32.xlu0 %v885, 122
      %v1533 = vpop.permute.xlu0 %1532
      %1534 = vrot.lane.b32.xlu0 %v984, 122
      %v1535 = vpop.permute.xlu0 %1534
      %1536 = vrot.lane.b32.xlu0 %v1083, 122
      %v1537 = vpop.permute.xlu0 %1536
      %vm1538 = vcmask 998400
      %v1539 = vsel %vm1538, %v1515, %v1517
      %v1540 = vsel %vm1538, %v1517, %v1519
      %v1541 = vsel %vm1538, %v1521, %v1523
      %v1542 = vsel %vm1538, %v1523, %v1525
      %v1543 = vsel %vm1538, %v1527, %v1529
      %v1544 = vsel %vm1538, %v1529, %v1531
      %v1545 = vsel %vm1538, %v1533, %v1535
      %v1546 = vsel %vm1538, %v1535, %v1537
      %v1563 = vsel %vm1538, %v1519, %v1515
      %v1564 = vsel %vm1538, %v1525, %v1521
      %v1565 = vsel %vm1538, %v1531, %v1527
      %v1566 = vsel %vm1538, %v1537, %v1533
      %v1567 = vadd.f32 %v1490, %v1539
      %v1568 = vadd.f32 %v1491, %v1540
      %v1569 = vadd.f32 %v1492, %v1563
      %v1570 = vadd.f32 %v1493, %v1541
      %v1571 = vadd.f32 %v1494, %v1542
      %v1572 = vadd.f32 %v1495, %v1564
      %v1573 = vadd.f32 %v1496, %v1543
      %v1574 = vadd.f32 %v1497, %v1544
      %v1575 = vadd.f32 %v1498, %v1565
      %v1576 = vadd.f32 %v1499, %v1545
      %v1577 = vadd.f32 %v1500, %v1546
      %v1578 = vadd.f32 %v1501, %v1566
      %1591 = vrot.lane.b32.xlu0 %v888, 121
      %v1592 = vpop.permute.xlu0 %1591
      %1593 = vrot.lane.b32.xlu0 %v987, 121
      %v1594 = vpop.permute.xlu0 %1593
      %1595 = vrot.lane.b32.xlu0 %v1086, 121
      %v1596 = vpop.permute.xlu0 %1595
      %1597 = vrot.lane.b32.xlu0 %v890, 121
      %v1598 = vpop.permute.xlu0 %1597
      %1599 = vrot.lane.b32.xlu0 %v989, 121
      %v1600 = vpop.permute.xlu0 %1599
      %1601 = vrot.lane.b32.xlu0 %v1088, 121
      %v1602 = vpop.permute.xlu0 %1601
      %1603 = vrot.lane.b32.xlu0 %v893, 121
      %v1604 = vpop.permute.xlu0 %1603
      %1605 = vrot.lane.b32.xlu0 %v992, 121
      %v1606 = vpop.permute.xlu0 %1605
      %1607 = vrot.lane.b32.xlu0 %v1091, 121
      %v1608 = vpop.permute.xlu0 %1607
      %1609 = vrot.lane.b32.xlu0 %v895, 121
      %v1610 = vpop.permute.xlu0 %1609
      %1611 = vrot.lane.b32.xlu0 %v994, 121
      %v1612 = vpop.permute.xlu0 %1611
      %1613 = vrot.lane.b32.xlu0 %v1093, 121
      %v1614 = vpop.permute.xlu0 %1613
      %vm1615 = vcmask 990208
      %v1616 = vsel %vm1615, %v1592, %v1594
      %v1617 = vsel %vm1615, %v1594, %v1596
      %v1618 = vsel %vm1615, %v1598, %v1600
      %v1619 = vsel %vm1615, %v1600, %v1602
      %v1620 = vsel %vm1615, %v1604, %v1606
      %v1621 = vsel %vm1615, %v1606, %v1608
      %v1622 = vsel %vm1615, %v1610, %v1612
      %v1623 = vsel %vm1615, %v1612, %v1614
      %v1640 = vsel %vm1615, %v1596, %v1592
      %v1641 = vsel %vm1615, %v1602, %v1598
      %v1642 = vsel %vm1615, %v1608, %v1604
      %v1643 = vsel %vm1615, %v1614, %v1610
      %v1644 = vadd.f32 %v1567, %v1616
      %v1645 = vadd.f32 %v1568, %v1617
      %v1646 = vadd.f32 %v1569, %v1640
      %v1647 = vadd.f32 %v1570, %v1618
      %v1648 = vadd.f32 %v1571, %v1619
      %v1649 = vadd.f32 %v1572, %v1641
      %v1650 = vadd.f32 %v1573, %v1620
      %v1651 = vadd.f32 %v1574, %v1621
      %v1652 = vadd.f32 %v1575, %v1642
      %v1653 = vadd.f32 %v1576, %v1622
      %v1654 = vadd.f32 %v1577, %v1623
      %v1655 = vadd.f32 %v1578, %v1643
      %1668 = vrot.lane.b32.xlu0 %v898, 120
      %v1669 = vpop.permute.xlu0 %1668
      %1670 = vrot.lane.b32.xlu0 %v997, 120
      %v1671 = vpop.permute.xlu0 %1670
      %1672 = vrot.lane.b32.xlu0 %v1096, 120
      %v1673 = vpop.permute.xlu0 %1672
      %1674 = vrot.lane.b32.xlu0 %v900, 120
      %v1675 = vpop.permute.xlu0 %1674
      %1676 = vrot.lane.b32.xlu0 %v999, 120
      %v1677 = vpop.permute.xlu0 %1676
      %1678 = vrot.lane.b32.xlu0 %v1098, 120
      %v1679 = vpop.permute.xlu0 %1678
      %1680 = vrot.lane.b32.xlu0 %v903, 120
      %v1681 = vpop.permute.xlu0 %1680
      %1682 = vrot.lane.b32.xlu0 %v1002, 120
      %v1683 = vpop.permute.xlu0 %1682
      %1684 = vrot.lane.b32.xlu0 %v1101, 120
      %v1685 = vpop.permute.xlu0 %1684
      %1686 = vrot.lane.b32.xlu0 %v905, 120
      %v1687 = vpop.permute.xlu0 %1686
      %1688 = vrot.lane.b32.xlu0 %v1004, 120
      %v1689 = vpop.permute.xlu0 %1688
      %1690 = vrot.lane.b32.xlu0 %v1103, 120
      %v1691 = vpop.permute.xlu0 %1690
      %vm1692 = vcmask 982016
      %v1693 = vsel %vm1692, %v1669, %v1671
      %v1694 = vsel %vm1692, %v1671, %v1673
      %v1695 = vsel %vm1692, %v1675, %v1677
      %v1696 = vsel %vm1692, %v1677, %v1679
      %v1697 = vsel %vm1692, %v1681, %v1683
      %v1698 = vsel %vm1692, %v1683, %v1685
      %v1699 = vsel %vm1692, %v1687, %v1689
      %v1700 = vsel %vm1692, %v1689, %v1691
      %v1717 = vsel %vm1692, %v1673, %v1669
      %v1718 = vsel %vm1692, %v1679, %v1675
      %v1719 = vsel %vm1692, %v1685, %v1681
      %v1720 = vsel %vm1692, %v1691, %v1687
      %v1721 = vadd.f32 %v1644, %v1693
      %v1722 = vadd.f32 %v1645, %v1694
      %v1723 = vadd.f32 %v1646, %v1717
      %v1724 = vadd.f32 %v1647, %v1695
      %v1725 = vadd.f32 %v1648, %v1696
      %v1726 = vadd.f32 %v1649, %v1718
      %v1727 = vadd.f32 %v1650, %v1697
      %v1728 = vadd.f32 %v1651, %v1698
      %v1729 = vadd.f32 %v1652, %v1719
      %v1730 = vadd.f32 %v1653, %v1699
      %v1731 = vadd.f32 %v1654, %v1700
      %v1732 = vadd.f32 %v1655, %v1720
      %s1733 = scalar_lea.vmem %s345, 12
      %v1734 = vld [vmem:[%s1733] sm:$0xf]
      %v1735 = vld [vmem:[%s1733 + $0x4] sm:$0xf]
      %v1736 = vld [vmem:[%s1733 + $0x8] sm:$0xf]
      %v1737 = vld [vmem:[%s1733 + $0xc] sm:$0xf]
      %v1738 = vld [vmem:[%s1733 + $0x10] sm:$0xf]
      %v1739 = vld [vmem:[%s1733 + $0x14] sm:$0xf]
      %v1740 = vld [vmem:[%s1733 + $0x18] sm:$0xf]
      %v1741 = vld [vmem:[%s1733 + $0x1c] sm:$0xf]
      %v1742 = vld [vmem:[%s1733 + $0x20] sm:$0xf]
      %v1743 = vld [vmem:[%s1733 + $0x24] sm:$0xf]
      %v1744 = vld [vmem:[%s1733 + $0x28] sm:$0xf]
      %v1745 = vld [vmem:[%s1733 + $0x2c] sm:$0xf]
      %v1746 = vld [vmem:[%s1733 + $0x30] sm:$0xf]
      %v1747 = vld [vmem:[%s1733 + $0x34] sm:$0xf]
      %v1748 = vld [vmem:[%s1733 + $0x38] sm:$0xf]
      %v1749 = vld [vmem:[%s1733 + $0x3c] sm:$0xf]
      %v1750 = vld [vmem:[%s1733 + $0x40] sm:$0xf]
      %v1751 = vld [vmem:[%s1733 + $0x44] sm:$0xf]
      %v1752 = vld [vmem:[%s1733 + $0x48] sm:$0xf]
      %v1753 = vld [vmem:[%s1733 + $0x4c] sm:$0xf]
      %v1754 = vld [vmem:[%s1733 + $0x50] sm:$0xf]
      %v1755 = vld [vmem:[%s1733 + $0x54] sm:$0xf]
      %v1756 = vld [vmem:[%s1733 + $0x58] sm:$0xf]
      %v1757 = vld [vmem:[%s1733 + $0x5c] sm:$0xf]
      %v1758 = vld [vmem:[%s1733 + $0x60] sm:$0xf]
      %v1759 = vld [vmem:[%s1733 + $0x64] sm:$0xf]
      %v1760 = vld [vmem:[%s1733 + $0x68] sm:$0xf]
      %v1761 = vld [vmem:[%s1733 + $0x6c] sm:$0xf]
      %v1762 = vld [vmem:[%s1733 + $0x70] sm:$0xf]
      %v1763 = vld [vmem:[%s1733 + $0x74] sm:$0xf]
      %v1764 = vld [vmem:[%s1733 + $0x78] sm:$0xf]
      %v1765 = vld [vmem:[%s1733 + $0x7c] sm:$0xf]
      %v1766 = vld [vmem:[%s1733 + $0x80] sm:$0xf]
      %v1767 = vld [vmem:[%s1733 + $0x84] sm:$0xf]
      %v1768 = vld [vmem:[%s1733 + $0x88] sm:$0xf]
      %v1769 = vld [vmem:[%s1733 + $0x8c] sm:$0xf]
      %v1770 = vld [vmem:[%s1733 + $0x90] sm:$0xf]
      %v1771 = vld [vmem:[%s1733 + $0x94] sm:$0xf]
      %v1772 = vld [vmem:[%s1733 + $0x98] sm:$0xf]
      %v1773 = vld [vmem:[%s1733 + $0x9c] sm:$0xf]
      %v1774 = vld [vmem:[%s1733 + $0xa0] sm:$0xf]
      %v1775 = vld [vmem:[%s1733 + $0xa4] sm:$0xf]
      %v1776 = vld [vmem:[%s1733 + $0xa8] sm:$0xf]
      %v1777 = vld [vmem:[%s1733 + $0xac] sm:$0xf]
      %v1778 = vld [vmem:[%s1733 + $0xb0] sm:$0xf]
      %v1779 = vld [vmem:[%s1733 + $0xb4] sm:$0xf]
      %v1780 = vld [vmem:[%s1733 + $0xb8] sm:$0xf]
      %v1781 = vld [vmem:[%s1733 + $0xbc] sm:$0xf]
      %s1782 = scalar_lea.vmem %s350, 144
      %v1783 = vld [vmem:[%s1782] sm:$0xf]
      %v1784 = vld [vmem:[%s1782 + $0x4] sm:$0xf]
      %v1785 = vld [vmem:[%s1782 + $0x8] sm:$0xf]
      %v1786 = vld [vmem:[%s1782 + $0xc] sm:$0xf]
      %v1787 = vld [vmem:[%s1782 + $0x10] sm:$0xf]
      %v1788 = vld [vmem:[%s1782 + $0x14] sm:$0xf]
      %v1789 = vld [vmem:[%s1782 + $0x18] sm:$0xf]
      %v1790 = vld [vmem:[%s1782 + $0x1c] sm:$0xf]
      %v1791 = vld [vmem:[%s1782 + $0x20] sm:$0xf]
      %v1792 = vld [vmem:[%s1782 + $0x24] sm:$0xf]
      %v1793 = vld [vmem:[%s1782 + $0x28] sm:$0xf]
      %v1794 = vld [vmem:[%s1782 + $0x2c] sm:$0xf]
      %v1795 = vld [vmem:[%s1782 + $0x30] sm:$0xf]
      %v1796 = vld [vmem:[%s1782 + $0x34] sm:$0xf]
      %v1797 = vld [vmem:[%s1782 + $0x38] sm:$0xf]
      %v1798 = vld [vmem:[%s1782 + $0x3c] sm:$0xf]
      %v1799 = vld [vmem:[%s1782 + $0x40] sm:$0xf]
      %v1800 = vld [vmem:[%s1782 + $0x44] sm:$0xf]
      %v1801 = vld [vmem:[%s1782 + $0x48] sm:$0xf]
      %v1802 = vld [vmem:[%s1782 + $0x4c] sm:$0xf]
      %v1803 = vld [vmem:[%s1782 + $0x50] sm:$0xf]
      %v1804 = vld [vmem:[%s1782 + $0x54] sm:$0xf]
      %v1805 = vld [vmem:[%s1782 + $0x58] sm:$0xf]
      %v1806 = vld [vmem:[%s1782 + $0x5c] sm:$0xf]
      %v1807 = vld [vmem:[%s1782 + $0x60] sm:$0xf]
      %v1808 = vld [vmem:[%s1782 + $0x64] sm:$0xf]
      %v1809 = vld [vmem:[%s1782 + $0x68] sm:$0xf]
      %v1810 = vld [vmem:[%s1782 + $0x6c] sm:$0xf]
      %v1811 = vld [vmem:[%s1782 + $0x70] sm:$0xf]
      %v1812 = vld [vmem:[%s1782 + $0x74] sm:$0xf]
      %v1813 = vld [vmem:[%s1782 + $0x78] sm:$0xf]
      %v1814 = vld [vmem:[%s1782 + $0x7c] sm:$0xf]
      %v1815 = vld [vmem:[%s1782 + $0x80] sm:$0xf]
      %v1816 = vld [vmem:[%s1782 + $0x84] sm:$0xf]
      %v1817 = vld [vmem:[%s1782 + $0x88] sm:$0xf]
      %v1818 = vld [vmem:[%s1782 + $0x8c] sm:$0xf]
      %v1855 = vunpack.c.l.b16 %v1783
      %v1856 = vunpack.c.l.b16 %v1784
      %v1857 = vunpack.c.l.b16 %v1785
      %v1858 = vunpack.c.l.b16 %v1786
      %v1859 = vunpack.c.l.b16 %v1787
      %v1860 = vunpack.c.l.b16 %v1788
      %v1861 = vunpack.c.l.b16 %v1789
      %v1862 = vunpack.c.l.b16 %v1790
      %v1863 = vunpack.c.l.b16 %v1791
      %v1864 = vunpack.c.l.b16 %v1792
      %v1865 = vunpack.c.l.b16 %v1793
      %v1866 = vunpack.c.l.b16 %v1794
      %v1867 = vunpack.c.l.b16 %v1795
      %v1868 = vunpack.c.l.b16 %v1796
      %v1869 = vunpack.c.l.b16 %v1797
      %v1870 = vunpack.c.l.b16 %v1798
      %v1871 = vunpack.c.l.b16 %v1799
      %v1872 = vunpack.c.l.b16 %v1800
      %v1873 = vunpack.c.l.b16 %v1801
      %v1874 = vunpack.c.l.b16 %v1802
      %v1875 = vunpack.c.l.b16 %v1803
      %v1876 = vunpack.c.l.b16 %v1804
      %v1877 = vunpack.c.l.b16 %v1805
      %v1878 = vunpack.c.l.b16 %v1806
      %v1879 = vunpack.c.l.b16 %v1807
      %v1880 = vunpack.c.l.b16 %v1808
      %v1881 = vunpack.c.l.b16 %v1809
      %v1882 = vunpack.c.l.b16 %v1810
      %v1883 = vunpack.c.l.b16 %v1811
      %v1884 = vunpack.c.l.b16 %v1812
      %v1885 = vunpack.c.l.b16 %v1813
      %v1886 = vunpack.c.l.b16 %v1814
      %v1887 = vunpack.c.l.b16 %v1815
      %v1888 = vunpack.c.l.b16 %v1816
      %v1889 = vunpack.c.l.b16 %v1817
      %v1890 = vunpack.c.l.b16 %v1818
      %v1891 = vpack.c.b16 %v1856, %v1855
      %v1892 = vpack.c.b16 %v1858, %v1857
      %v1893 = vpack.c.b16 %v1860, %v1859
      %v1894 = vpack.c.b16 %v1862, %v1861
      %v1895 = vpack.c.b16 %v1864, %v1863
      %v1896 = vpack.c.b16 %v1866, %v1865
      %v1897 = vpack.c.b16 %v1868, %v1867
      %v1898 = vpack.c.b16 %v1870, %v1869
      %v1899 = vpack.c.b16 %v1872, %v1871
      %v1900 = vpack.c.b16 %v1874, %v1873
      %v1901 = vpack.c.b16 %v1876, %v1875
      %v1902 = vpack.c.b16 %v1878, %v1877
      %v1903 = vpack.c.b16 %v1880, %v1879
      %v1904 = vpack.c.b16 %v1882, %v1881
      %v1905 = vpack.c.b16 %v1884, %v1883
      %v1906 = vpack.c.b16 %v1886, %v1885
      %v1907 = vpack.c.b16 %v1888, %v1887
      %v1908 = vpack.c.b16 %v1890, %v1889
      %v1957 = vunpack.c.l.b16 %v1734
      %v1958 = vunpack.c.l.b16 %v1735
      %v1959 = vunpack.c.l.b16 %v1736
      %v1960 = vunpack.c.l.b16 %v1737
      %v1961 = vunpack.c.l.b16 %v1738
      %v1962 = vunpack.c.l.b16 %v1739
      %v1963 = vunpack.c.l.b16 %v1740
      %v1964 = vunpack.c.l.b16 %v1741
      %v1965 = vunpack.c.l.b16 %v1742
      %v1966 = vunpack.c.l.b16 %v1743
      %v1967 = vunpack.c.l.b16 %v1744
      %v1968 = vunpack.c.l.b16 %v1745
      %v1969 = vunpack.c.l.b16 %v1746
      %v1970 = vunpack.c.l.b16 %v1747
      %v1971 = vunpack.c.l.b16 %v1748
      %v1972 = vunpack.c.l.b16 %v1749
      %v1973 = vunpack.c.l.b16 %v1750
      %v1974 = vunpack.c.l.b16 %v1751
      %v1975 = vunpack.c.l.b16 %v1752
      %v1976 = vunpack.c.l.b16 %v1753
      %v1977 = vunpack.c.l.b16 %v1754
      %v1978 = vunpack.c.l.b16 %v1755
      %v1979 = vunpack.c.l.b16 %v1756
      %v1980 = vunpack.c.l.b16 %v1757
      %v1981 = vunpack.c.l.b16 %v1758
      %v1982 = vunpack.c.l.b16 %v1759
      %v1983 = vunpack.c.l.b16 %v1760
      %v1984 = vunpack.c.l.b16 %v1761
      %v1985 = vunpack.c.l.b16 %v1762
      %v1986 = vunpack.c.l.b16 %v1763
      %v1987 = vunpack.c.l.b16 %v1764
      %v1988 = vunpack.c.l.b16 %v1765
      %v1989 = vunpack.c.l.b16 %v1766
      %v1990 = vunpack.c.l.b16 %v1767
      %v1991 = vunpack.c.l.b16 %v1768
      %v1992 = vunpack.c.l.b16 %v1769
      %v1993 = vunpack.c.l.b16 %v1770
      %v1994 = vunpack.c.l.b16 %v1771
      %v1995 = vunpack.c.l.b16 %v1772
      %v1996 = vunpack.c.l.b16 %v1773
      %v1997 = vunpack.c.l.b16 %v1774
      %v1998 = vunpack.c.l.b16 %v1775
      %v1999 = vunpack.c.l.b16 %v1776
      %v2000 = vunpack.c.l.b16 %v1777
      %v2001 = vunpack.c.l.b16 %v1778
      %v2002 = vunpack.c.l.b16 %v1779
      %v2003 = vunpack.c.l.b16 %v1780
      %v2004 = vunpack.c.l.b16 %v1781
      %v2005 = vpack.c.b16 %v1958, %v1957
      %v2006 = vpack.c.b16 %v1960, %v1959
      %v2007 = vpack.c.b16 %v1962, %v1961
      %v2008 = vpack.c.b16 %v1964, %v1963
      %v2009 = vpack.c.b16 %v1966, %v1965
      %v2010 = vpack.c.b16 %v1968, %v1967
      %v2011 = vpack.c.b16 %v1970, %v1969
      %v2012 = vpack.c.b16 %v1972, %v1971
      %v2013 = vpack.c.b16 %v1974, %v1973
      %v2014 = vpack.c.b16 %v1976, %v1975
      %v2015 = vpack.c.b16 %v1978, %v1977
      %v2016 = vpack.c.b16 %v1980, %v1979
      %v2017 = vpack.c.b16 %v1982, %v1981
      %v2018 = vpack.c.b16 %v1984, %v1983
      %v2019 = vpack.c.b16 %v1986, %v1985
      %v2020 = vpack.c.b16 %v1988, %v1987
      %v2021 = vpack.c.b16 %v1990, %v1989
      %v2022 = vpack.c.b16 %v1992, %v1991
      %v2023 = vpack.c.b16 %v1994, %v1993
      %v2024 = vpack.c.b16 %v1996, %v1995
      %v2025 = vpack.c.b16 %v1998, %v1997
      %v2026 = vpack.c.b16 %v2000, %v1999
      %v2027 = vpack.c.b16 %v2002, %v2001
      %v2028 = vpack.c.b16 %v2004, %v2003
      %v2030 = vsel %vm681, %v1891, 0
      %v2033 = vsel %vm681, %v1892, 0
      %v2036 = vsel %vm681, %v1893, 0
      %v2039 = vsel %vm681, %v1894, 0
      %v2042 = vsel %vm681, %v1895, 0
      %v2045 = vsel %vm681, %v1896, 0
      %v2048 = vsel %vm681, %v1897, 0
      %v2051 = vsel %vm681, %v1898, 0
      %v2054 = vsel %vm681, %v1899, 0
      %v2057 = vsel %vm681, %v1900, 0
      %v2060 = vsel %vm681, %v1901, 0
      %v2063 = vsel %vm681, %v1902, 0
      %v2066 = vsel %vm681, %v1903, 0
      %v2069 = vsel %vm681, %v1904, 0
      %v2072 = vsel %vm681, %v1905, 0
      %v2075 = vsel %vm681, %v1906, 0
      %v2078 = vsel %vm681, %v1907, 0
      %v2081 = vsel %vm681, %v1908, 0
      %v2084 = vsel %vm681, %v2005, 0
      %v2087 = vsel %vm681, %v2006, 0
      %v2090 = vsel %vm681, %v2007, 0
      %v2093 = vsel %vm681, %v2008, 0
      %v2096 = vsel %vm681, %v2009, 0
      %v2099 = vsel %vm681, %v2010, 0
      %v2102 = vsel %vm681, %v2011, 0
      %v2105 = vsel %vm681, %v2012, 0
      %v2108 = vsel %vm681, %v2013, 0
      %v2111 = vsel %vm681, %v2014, 0
      %v2114 = vsel %vm681, %v2015, 0
      %v2117 = vsel %vm681, %v2016, 0
      %v2120 = vsel %vm681, %v2017, 0
      %v2123 = vsel %vm681, %v2018, 0
      %v2126 = vsel %vm681, %v2019, 0
      %v2129 = vsel %vm681, %v2020, 0
      %v2132 = vsel %vm681, %v2021, 0
      %v2135 = vsel %vm681, %v2022, 0
      %v2138 = vsel %vm681, %v2023, 0
      %v2141 = vsel %vm681, %v2024, 0
      %v2144 = vsel %vm681, %v2025, 0
      %v2147 = vsel %vm681, %v2026, 0
      %v2150 = vsel %vm681, %v2027, 0
      %v2153 = vsel %vm681, %v2028, 0
      %2155 = vmatpush.bf16.xpose.msra.mxu0 %v2105
      %2156 = vmatpush.bf16.xpose.msra.mxu0 %v2102
      %2157 = vmatpush.bf16.xpose.msra.mxu0 %v2099
      %2158 = vmatpush.bf16.xpose.msra.mxu0 %v2096
      %2159 = vmatpush.bf16.xpose.msra.mxu0 %v2093
      %2160 = vmatpush.bf16.xpose.msra.mxu0 %v2090
      %2161 = vmatpush.bf16.xpose.msra.mxu0 %v2087
      %2162 = vmatpush.bf16.xpose.msra.mxu0 %v2084
      %2163 = vmatmul.bf16.gmra.mxu0 %v2030
      %v2164 = vpop.f32.mrf.mxu0
      %v2165 = vadd.f32 0.0, %v2164
      %v2166 = vpop.f32.mrf.mxu0
      %v2167 = vadd.f32 0.0, %v2166
      %2168 = vmatmul.bf16.gmra.mxu0 %v2033
      %v2169 = vpop.f32.mrf.mxu0
      %v2170 = vadd.f32 0.0, %v2169
      %v2171 = vpop.f32.mrf.mxu0
      %v2172 = vadd.f32 0.0, %v2171
      %2173 = vmatmul.bf16.gmra.mxu0 %v2036
      %v2174 = vpop.f32.mrf.mxu0
      %v2175 = vadd.f32 0.0, %v2174
      %v2176 = vpop.f32.mrf.mxu0
      %v2177 = vadd.f32 0.0, %v2176
      %2178 = vmatmul.bf16.gmra.mxu0 %v2039
      %v2179 = vpop.f32.mrf.mxu0
      %v2180 = vadd.f32 0.0, %v2179
      %v2181 = vpop.f32.mrf.mxu0
      %v2182 = vadd.f32 0.0, %v2181
      %2183 = vmatmul.bf16.gmra.mxu0 %v2042
      %v2184 = vpop.f32.mrf.mxu0
      %v2185 = vadd.f32 0.0, %v2184
      %v2186 = vpop.f32.mrf.mxu0
      %v2187 = vadd.f32 0.0, %v2186
      %2188 = vmatmul.bf16.gmra.mxu0 %v2045
      %v2189 = vpop.f32.mrf.mxu0
      %v2190 = vadd.f32 0.0, %v2189
      %v2191 = vpop.f32.mrf.mxu0
      %v2192 = vadd.f32 0.0, %v2191
      %2193 = vmatmul.bf16.gmra.mxu0 %v2048
      %v2194 = vpop.f32.mrf.mxu0
      %v2195 = vadd.f32 0.0, %v2194
      %v2196 = vpop.f32.mrf.mxu0
      %v2197 = vadd.f32 0.0, %v2196
      %2198 = vmatmul.bf16.gmra.mxu0 %v2051
      %v2199 = vpop.f32.mrf.mxu0
      %v2200 = vadd.f32 0.0, %v2199
      %v2201 = vpop.f32.mrf.mxu0
      %v2202 = vadd.f32 0.0, %v2201
      %2203 = vmatmul.bf16.gmra.mxu0 %v2054
      %v2204 = vpop.f32.mrf.mxu0
      %v2205 = vadd.f32 0.0, %v2204
      %v2206 = vpop.f32.mrf.mxu0
      %v2207 = vadd.f32 0.0, %v2206
      %2208 = vmatmul.bf16.gmra.mxu0 %v2057
      %v2209 = vpop.f32.mrf.mxu0
      %v2210 = vadd.f32 0.0, %v2209
      %v2211 = vpop.f32.mrf.mxu0
      %v2212 = vadd.f32 0.0, %v2211
      %2213 = vmatmul.bf16.gmra.mxu0 %v2060
      %v2214 = vpop.f32.mrf.mxu0
      %v2215 = vadd.f32 0.0, %v2214
      %v2216 = vpop.f32.mrf.mxu0
      %v2217 = vadd.f32 0.0, %v2216
      %2218 = vmatmul.bf16.gmra.mxu0 %v2063
      %v2219 = vpop.f32.mrf.mxu0
      %v2220 = vadd.f32 0.0, %v2219
      %v2221 = vpop.f32.mrf.mxu0
      %v2222 = vadd.f32 0.0, %v2221
      %2223 = vmatmul.bf16.gmra.mxu0 %v2066
      %v2224 = vpop.f32.mrf.mxu0
      %v2225 = vadd.f32 0.0, %v2224
      %v2226 = vpop.f32.mrf.mxu0
      %v2227 = vadd.f32 0.0, %v2226
      %2228 = vmatmul.bf16.gmra.mxu0 %v2069
      %v2229 = vpop.f32.mrf.mxu0
      %v2230 = vadd.f32 0.0, %v2229
      %v2231 = vpop.f32.mrf.mxu0
      %v2232 = vadd.f32 0.0, %v2231
      %2233 = vmatmul.bf16.gmra.mxu0 %v2072
      %v2234 = vpop.f32.mrf.mxu0
      %v2235 = vadd.f32 0.0, %v2234
      %v2236 = vpop.f32.mrf.mxu0
      %v2237 = vadd.f32 0.0, %v2236
      %2238 = vmatmul.bf16.gmra.mxu0 %v2075
      %v2239 = vpop.f32.mrf.mxu0
      %v2240 = vadd.f32 0.0, %v2239
      %v2241 = vpop.f32.mrf.mxu0
      %v2242 = vadd.f32 0.0, %v2241
      %2243 = vmatmul.bf16.gmra.mxu0 %v2078
      %v2244 = vpop.f32.mrf.mxu0
      %v2245 = vadd.f32 0.0, %v2244
      %v2246 = vpop.f32.mrf.mxu0
      %v2247 = vadd.f32 0.0, %v2246
      %2248 = vmatmul.bf16.gmra.mxu0 %v2081
      %v2249 = vpop.f32.mrf.mxu0
      %v2250 = vadd.f32 0.0, %v2249
      %v2251 = vpop.f32.mrf.mxu0
      %v2252 = vadd.f32 0.0, %v2251
      %2253 = vdwg.mxu0
      %2254 = vmatpush.bf16.xpose.msra.mxu0 %v2129
      %2255 = vmatpush.bf16.xpose.msra.mxu0 %v2126
      %2256 = vmatpush.bf16.xpose.msra.mxu0 %v2123
      %2257 = vmatpush.bf16.xpose.msra.mxu0 %v2120
      %2258 = vmatpush.bf16.xpose.msra.mxu0 %v2117
      %2259 = vmatpush.bf16.xpose.msra.mxu0 %v2114
      %2260 = vmatpush.bf16.xpose.msra.mxu0 %v2111
      %2261 = vmatpush.bf16.xpose.msra.mxu0 %v2108
      %2262 = vmatmul.bf16.gmra.mxu0 %v2030
      %v2263 = vpop.f32.mrf.mxu0
      %v2264 = vadd.f32 0.0, %v2263
      %v2265 = vpop.f32.mrf.mxu0
      %v2266 = vadd.f32 0.0, %v2265
      %2267 = vmatmul.bf16.gmra.mxu0 %v2033
      %v2268 = vpop.f32.mrf.mxu0
      %v2269 = vadd.f32 0.0, %v2268
      %v2270 = vpop.f32.mrf.mxu0
      %v2271 = vadd.f32 0.0, %v2270
      %2272 = vmatmul.bf16.gmra.mxu0 %v2036
      %v2273 = vpop.f32.mrf.mxu0
      %v2274 = vadd.f32 0.0, %v2273
      %v2275 = vpop.f32.mrf.mxu0
      %v2276 = vadd.f32 0.0, %v2275
      %2277 = vmatmul.bf16.gmra.mxu0 %v2039
      %v2278 = vpop.f32.mrf.mxu0
      %v2279 = vadd.f32 0.0, %v2278
      %v2280 = vpop.f32.mrf.mxu0
      %v2281 = vadd.f32 0.0, %v2280
      %2282 = vmatmul.bf16.gmra.mxu0 %v2042
      %v2283 = vpop.f32.mrf.mxu0
      %v2284 = vadd.f32 0.0, %v2283
      %v2285 = vpop.f32.mrf.mxu0
      %v2286 = vadd.f32 0.0, %v2285
      %2287 = vmatmul.bf16.gmra.mxu0 %v2045
      %v2288 = vpop.f32.mrf.mxu0
      %v2289 = vadd.f32 0.0, %v2288
      %v2290 = vpop.f32.mrf.mxu0
      %v2291 = vadd.f32 0.0, %v2290
      %2292 = vmatmul.bf16.gmra.mxu0 %v2048
      %v2293 = vpop.f32.mrf.mxu0
      %v2294 = vadd.f32 0.0, %v2293
      %v2295 = vpop.f32.mrf.mxu0
      %v2296 = vadd.f32 0.0, %v2295
      %2297 = vmatmul.bf16.gmra.mxu0 %v2051
      %v2298 = vpop.f32.mrf.mxu0
      %v2299 = vadd.f32 0.0, %v2298
      %v2300 = vpop.f32.mrf.mxu0
      %v2301 = vadd.f32 0.0, %v2300
      %2302 = vmatmul.bf16.gmra.mxu0 %v2054
      %v2303 = vpop.f32.mrf.mxu0
      %v2304 = vadd.f32 0.0, %v2303
      %v2305 = vpop.f32.mrf.mxu0
      %v2306 = vadd.f32 0.0, %v2305
      %2307 = vmatmul.bf16.gmra.mxu0 %v2057
      %v2308 = vpop.f32.mrf.mxu0
      %v2309 = vadd.f32 0.0, %v2308
      %v2310 = vpop.f32.mrf.mxu0
      %v2311 = vadd.f32 0.0, %v2310
      %2312 = vmatmul.bf16.gmra.mxu0 %v2060
      %v2313 = vpop.f32.mrf.mxu0
      %v2314 = vadd.f32 0.0, %v2313
      %v2315 = vpop.f32.mrf.mxu0
      %v2316 = vadd.f32 0.0, %v2315
      %2317 = vmatmul.bf16.gmra.mxu0 %v2063
      %v2318 = vpop.f32.mrf.mxu0
      %v2319 = vadd.f32 0.0, %v2318
      %v2320 = vpop.f32.mrf.mxu0
      %v2321 = vadd.f32 0.0, %v2320
      %2322 = vmatmul.bf16.gmra.mxu0 %v2066
      %v2323 = vpop.f32.mrf.mxu0
      %v2324 = vadd.f32 0.0, %v2323
      %v2325 = vpop.f32.mrf.mxu0
      %v2326 = vadd.f32 0.0, %v2325
      %2327 = vmatmul.bf16.gmra.mxu0 %v2069
      %v2328 = vpop.f32.mrf.mxu0
      %v2329 = vadd.f32 0.0, %v2328
      %v2330 = vpop.f32.mrf.mxu0
      %v2331 = vadd.f32 0.0, %v2330
      %2332 = vmatmul.bf16.gmra.mxu0 %v2072
      %v2333 = vpop.f32.mrf.mxu0
      %v2334 = vadd.f32 0.0, %v2333
      %v2335 = vpop.f32.mrf.mxu0
      %v2336 = vadd.f32 0.0, %v2335
      %2337 = vmatmul.bf16.gmra.mxu0 %v2075
      %v2338 = vpop.f32.mrf.mxu0
      %v2339 = vadd.f32 0.0, %v2338
      %v2340 = vpop.f32.mrf.mxu0
      %v2341 = vadd.f32 0.0, %v2340
      %2342 = vmatmul.bf16.gmra.mxu0 %v2078
      %v2343 = vpop.f32.mrf.mxu0
      %v2344 = vadd.f32 0.0, %v2343
      %v2345 = vpop.f32.mrf.mxu0
      %v2346 = vadd.f32 0.0, %v2345
      %2347 = vmatmul.bf16.gmra.mxu0 %v2081
      %v2348 = vpop.f32.mrf.mxu0
      %v2349 = vadd.f32 0.0, %v2348
      %v2350 = vpop.f32.mrf.mxu0
      %v2351 = vadd.f32 0.0, %v2350
      %2352 = vdwg.mxu0
      %2353 = vmatpush.bf16.xpose.msra.mxu0 %v2153
      %2354 = vmatpush.bf16.xpose.msra.mxu0 %v2150
      %2355 = vmatpush.bf16.xpose.msra.mxu0 %v2147
      %2356 = vmatpush.bf16.xpose.msra.mxu0 %v2144
      %2357 = vmatpush.bf16.xpose.msra.mxu0 %v2141
      %2358 = vmatpush.bf16.xpose.msra.mxu0 %v2138
      %2359 = vmatpush.bf16.xpose.msra.mxu0 %v2135
      %2360 = vmatpush.bf16.xpose.msra.mxu0 %v2132
      %2361 = vmatmul.bf16.gmra.mxu0 %v2030
      %v2362 = vpop.f32.mrf.mxu0
      %v2363 = vadd.f32 0.0, %v2362
      %v2364 = vpop.f32.mrf.mxu0
      %v2365 = vadd.f32 0.0, %v2364
      %2366 = vmatmul.bf16.gmra.mxu0 %v2033
      %v2367 = vpop.f32.mrf.mxu0
      %v2368 = vadd.f32 0.0, %v2367
      %v2369 = vpop.f32.mrf.mxu0
      %v2370 = vadd.f32 0.0, %v2369
      %2371 = vmatmul.bf16.gmra.mxu0 %v2036
      %v2372 = vpop.f32.mrf.mxu0
      %v2373 = vadd.f32 0.0, %v2372
      %v2374 = vpop.f32.mrf.mxu0
      %v2375 = vadd.f32 0.0, %v2374
      %2376 = vmatmul.bf16.gmra.mxu0 %v2039
      %v2377 = vpop.f32.mrf.mxu0
      %v2378 = vadd.f32 0.0, %v2377
      %v2379 = vpop.f32.mrf.mxu0
      %v2380 = vadd.f32 0.0, %v2379
      %2381 = vmatmul.bf16.gmra.mxu0 %v2042
      %v2382 = vpop.f32.mrf.mxu0
      %v2383 = vadd.f32 0.0, %v2382
      %v2384 = vpop.f32.mrf.mxu0
      %v2385 = vadd.f32 0.0, %v2384
      %2386 = vmatmul.bf16.gmra.mxu0 %v2045
      %v2387 = vpop.f32.mrf.mxu0
      %v2388 = vadd.f32 0.0, %v2387
      %v2389 = vpop.f32.mrf.mxu0
      %v2390 = vadd.f32 0.0, %v2389
      %2391 = vmatmul.bf16.gmra.mxu0 %v2048
      %v2392 = vpop.f32.mrf.mxu0
      %v2393 = vadd.f32 0.0, %v2392
      %v2394 = vpop.f32.mrf.mxu0
      %v2395 = vadd.f32 0.0, %v2394
      %2396 = vmatmul.bf16.gmra.mxu0 %v2051
      %v2397 = vpop.f32.mrf.mxu0
      %v2398 = vadd.f32 0.0, %v2397
      %v2399 = vpop.f32.mrf.mxu0
      %v2400 = vadd.f32 0.0, %v2399
      %2401 = vmatmul.bf16.gmra.mxu0 %v2054
      %v2402 = vpop.f32.mrf.mxu0
      %v2403 = vadd.f32 0.0, %v2402
      %v2404 = vpop.f32.mrf.mxu0
      %v2405 = vadd.f32 0.0, %v2404
      %2406 = vmatmul.bf16.gmra.mxu0 %v2057
      %v2407 = vpop.f32.mrf.mxu0
      %v2408 = vadd.f32 0.0, %v2407
      %v2409 = vpop.f32.mrf.mxu0
      %v2410 = vadd.f32 0.0, %v2409
      %2411 = vmatmul.bf16.gmra.mxu0 %v2060
      %v2412 = vpop.f32.mrf.mxu0
      %v2413 = vadd.f32 0.0, %v2412
      %v2414 = vpop.f32.mrf.mxu0
      %v2415 = vadd.f32 0.0, %v2414
      %2416 = vmatmul.bf16.gmra.mxu0 %v2063
      %v2417 = vpop.f32.mrf.mxu0
      %v2418 = vadd.f32 0.0, %v2417
      %v2419 = vpop.f32.mrf.mxu0
      %v2420 = vadd.f32 0.0, %v2419
      %2421 = vmatmul.bf16.gmra.mxu0 %v2066
      %v2422 = vpop.f32.mrf.mxu0
      %v2423 = vadd.f32 0.0, %v2422
      %v2424 = vpop.f32.mrf.mxu0
      %v2425 = vadd.f32 0.0, %v2424
      %2426 = vmatmul.bf16.gmra.mxu0 %v2069
      %v2427 = vpop.f32.mrf.mxu0
      %v2428 = vadd.f32 0.0, %v2427
      %v2429 = vpop.f32.mrf.mxu0
      %v2430 = vadd.f32 0.0, %v2429
      %2431 = vmatmul.bf16.gmra.mxu0 %v2072
      %v2432 = vpop.f32.mrf.mxu0
      %v2433 = vadd.f32 0.0, %v2432
      %v2434 = vpop.f32.mrf.mxu0
      %v2435 = vadd.f32 0.0, %v2434
      %2436 = vmatmul.bf16.gmra.mxu0 %v2075
      %v2437 = vpop.f32.mrf.mxu0
      %v2438 = vadd.f32 0.0, %v2437
      %v2439 = vpop.f32.mrf.mxu0
      %v2440 = vadd.f32 0.0, %v2439
      %2441 = vmatmul.bf16.gmra.mxu0 %v2078
      %v2442 = vpop.f32.mrf.mxu0
      %v2443 = vadd.f32 0.0, %v2442
      %v2444 = vpop.f32.mrf.mxu0
      %v2445 = vadd.f32 0.0, %v2444
      %2446 = vmatmul.bf16.gmra.mxu0 %v2081
      %v2447 = vpop.f32.mrf.mxu0
      %v2448 = vadd.f32 0.0, %v2447
      %v2449 = vpop.f32.mrf.mxu0
      %v2450 = vadd.f32 0.0, %v2449
      %2451 = vdwg.mxu0
      %v2452 = vadd.f32 %v1721, %v2165
      %v2453 = vadd.f32 %v1722, %v2264
      %v2454 = vadd.f32 %v1723, %v2363
      %v2455 = vadd.f32 %v1724, %v2167
      %v2456 = vadd.f32 %v1725, %v2266
      %v2457 = vadd.f32 %v1726, %v2365
      %v2458 = vadd.f32 %v1727, %v2170
      %v2459 = vadd.f32 %v1728, %v2269
      %v2460 = vadd.f32 %v1729, %v2368
      %v2461 = vadd.f32 %v1730, %v2172
      %v2462 = vadd.f32 %v1731, %v2271
      %v2463 = vadd.f32 %v1732, %v2370
      %2476 = vrot.lane.b32.xlu0 %v2175, 127
      %v2477 = vpop.permute.xlu0 %2476
      %2478 = vrot.lane.b32.xlu0 %v2274, 127
      %v2479 = vpop.permute.xlu0 %2478
      %2480 = vrot.lane.b32.xlu0 %v2373, 127
      %v2481 = vpop.permute.xlu0 %2480
      %2482 = vrot.lane.b32.xlu0 %v2177, 127
      %v2483 = vpop.permute.xlu0 %2482
      %2484 = vrot.lane.b32.xlu0 %v2276, 127
      %v2485 = vpop.permute.xlu0 %2484
      %2486 = vrot.lane.b32.xlu0 %v2375, 127
      %v2487 = vpop.permute.xlu0 %2486
      %2488 = vrot.lane.b32.xlu0 %v2180, 127
      %v2489 = vpop.permute.xlu0 %2488
      %2490 = vrot.lane.b32.xlu0 %v2279, 127
      %v2491 = vpop.permute.xlu0 %2490
      %2492 = vrot.lane.b32.xlu0 %v2378, 127
      %v2493 = vpop.permute.xlu0 %2492
      %2494 = vrot.lane.b32.xlu0 %v2182, 127
      %v2495 = vpop.permute.xlu0 %2494
      %2496 = vrot.lane.b32.xlu0 %v2281, 127
      %v2497 = vpop.permute.xlu0 %2496
      %2498 = vrot.lane.b32.xlu0 %v2380, 127
      %v2499 = vpop.permute.xlu0 %2498
      %v2500 = vsel %vm1153, %v2477, %v2479
      %v2501 = vsel %vm1153, %v2479, %v2481
      %v2502 = vsel %vm1153, %v2483, %v2485
      %v2503 = vsel %vm1153, %v2485, %v2487
      %v2504 = vsel %vm1153, %v2489, %v2491
      %v2505 = vsel %vm1153, %v2491, %v2493
      %v2506 = vsel %vm1153, %v2495, %v2497
      %v2507 = vsel %vm1153, %v2497, %v2499
      %v2524 = vsel %vm1153, %v2481, %v2477
      %v2525 = vsel %vm1153, %v2487, %v2483
      %v2526 = vsel %vm1153, %v2493, %v2489
      %v2527 = vsel %vm1153, %v2499, %v2495
      %v2528 = vadd.f32 %v2452, %v2500
      %v2529 = vadd.f32 %v2453, %v2501
      %v2530 = vadd.f32 %v2454, %v2524
      %v2531 = vadd.f32 %v2455, %v2502
      %v2532 = vadd.f32 %v2456, %v2503
      %v2533 = vadd.f32 %v2457, %v2525
      %v2534 = vadd.f32 %v2458, %v2504
      %v2535 = vadd.f32 %v2459, %v2505
      %v2536 = vadd.f32 %v2460, %v2526
      %v2537 = vadd.f32 %v2461, %v2506
      %v2538 = vadd.f32 %v2462, %v2507
      %v2539 = vadd.f32 %v2463, %v2527
      %2552 = vrot.lane.b32.xlu0 %v2185, 126
      %v2553 = vpop.permute.xlu0 %2552
      %2554 = vrot.lane.b32.xlu0 %v2284, 126
      %v2555 = vpop.permute.xlu0 %2554
      %2556 = vrot.lane.b32.xlu0 %v2383, 126
      %v2557 = vpop.permute.xlu0 %2556
      %2558 = vrot.lane.b32.xlu0 %v2187, 126
      %v2559 = vpop.permute.xlu0 %2558
      %2560 = vrot.lane.b32.xlu0 %v2286, 126
      %v2561 = vpop.permute.xlu0 %2560
      %2562 = vrot.lane.b32.xlu0 %v2385, 126
      %v2563 = vpop.permute.xlu0 %2562
      %2564 = vrot.lane.b32.xlu0 %v2190, 126
      %v2565 = vpop.permute.xlu0 %2564
      %2566 = vrot.lane.b32.xlu0 %v2289, 126
      %v2567 = vpop.permute.xlu0 %2566
      %2568 = vrot.lane.b32.xlu0 %v2388, 126
      %v2569 = vpop.permute.xlu0 %2568
      %2570 = vrot.lane.b32.xlu0 %v2192, 126
      %v2571 = vpop.permute.xlu0 %2570
      %2572 = vrot.lane.b32.xlu0 %v2291, 126
      %v2573 = vpop.permute.xlu0 %2572
      %2574 = vrot.lane.b32.xlu0 %v2390, 126
      %v2575 = vpop.permute.xlu0 %2574
      %v2576 = vsel %vm1230, %v2553, %v2555
      %v2577 = vsel %vm1230, %v2555, %v2557
      %v2578 = vsel %vm1230, %v2559, %v2561
      %v2579 = vsel %vm1230, %v2561, %v2563
      %v2580 = vsel %vm1230, %v2565, %v2567
      %v2581 = vsel %vm1230, %v2567, %v2569
      %v2582 = vsel %vm1230, %v2571, %v2573
      %v2583 = vsel %vm1230, %v2573, %v2575
      %v2600 = vsel %vm1230, %v2557, %v2553
      %v2601 = vsel %vm1230, %v2563, %v2559
      %v2602 = vsel %vm1230, %v2569, %v2565
      %v2603 = vsel %vm1230, %v2575, %v2571
      %v2604 = vadd.f32 %v2528, %v2576
      %v2605 = vadd.f32 %v2529, %v2577
      %v2606 = vadd.f32 %v2530, %v2600
      %v2607 = vadd.f32 %v2531, %v2578
      %v2608 = vadd.f32 %v2532, %v2579
      %v2609 = vadd.f32 %v2533, %v2601
      %v2610 = vadd.f32 %v2534, %v2580
      %v2611 = vadd.f32 %v2535, %v2581
      %v2612 = vadd.f32 %v2536, %v2602
      %v2613 = vadd.f32 %v2537, %v2582
      %v2614 = vadd.f32 %v2538, %v2583
      %v2615 = vadd.f32 %v2539, %v2603
      %2628 = vrot.lane.b32.xlu0 %v2195, 125
      %v2629 = vpop.permute.xlu0 %2628
      %2630 = vrot.lane.b32.xlu0 %v2294, 125
      %v2631 = vpop.permute.xlu0 %2630
      %2632 = vrot.lane.b32.xlu0 %v2393, 125
      %v2633 = vpop.permute.xlu0 %2632
      %2634 = vrot.lane.b32.xlu0 %v2197, 125
      %v2635 = vpop.permute.xlu0 %2634
      %2636 = vrot.lane.b32.xlu0 %v2296, 125
      %v2637 = vpop.permute.xlu0 %2636
      %2638 = vrot.lane.b32.xlu0 %v2395, 125
      %v2639 = vpop.permute.xlu0 %2638
      %2640 = vrot.lane.b32.xlu0 %v2200, 125
      %v2641 = vpop.permute.xlu0 %2640
      %2642 = vrot.lane.b32.xlu0 %v2299, 125
      %v2643 = vpop.permute.xlu0 %2642
      %2644 = vrot.lane.b32.xlu0 %v2398, 125
      %v2645 = vpop.permute.xlu0 %2644
      %2646 = vrot.lane.b32.xlu0 %v2202, 125
      %v2647 = vpop.permute.xlu0 %2646
      %2648 = vrot.lane.b32.xlu0 %v2301, 125
      %v2649 = vpop.permute.xlu0 %2648
      %2650 = vrot.lane.b32.xlu0 %v2400, 125
      %v2651 = vpop.permute.xlu0 %2650
      %v2652 = vsel %vm1307, %v2629, %v2631
      %v2653 = vsel %vm1307, %v2631, %v2633
      %v2654 = vsel %vm1307, %v2635, %v2637
      %v2655 = vsel %vm1307, %v2637, %v2639
      %v2656 = vsel %vm1307, %v2641, %v2643
      %v2657 = vsel %vm1307, %v2643, %v2645
      %v2658 = vsel %vm1307, %v2647, %v2649
      %v2659 = vsel %vm1307, %v2649, %v2651
      %v2676 = vsel %vm1307, %v2633, %v2629
      %v2677 = vsel %vm1307, %v2639, %v2635
      %v2678 = vsel %vm1307, %v2645, %v2641
      %v2679 = vsel %vm1307, %v2651, %v2647
      %v2680 = vadd.f32 %v2604, %v2652
      %v2681 = vadd.f32 %v2605, %v2653
      %v2682 = vadd.f32 %v2606, %v2676
      %v2683 = vadd.f32 %v2607, %v2654
      %v2684 = vadd.f32 %v2608, %v2655
      %v2685 = vadd.f32 %v2609, %v2677
      %v2686 = vadd.f32 %v2610, %v2656
      %v2687 = vadd.f32 %v2611, %v2657
      %v2688 = vadd.f32 %v2612, %v2678
      %v2689 = vadd.f32 %v2613, %v2658
      %v2690 = vadd.f32 %v2614, %v2659
      %v2691 = vadd.f32 %v2615, %v2679
      %2704 = vrot.lane.b32.xlu0 %v2205, 124
      %v2705 = vpop.permute.xlu0 %2704
      %2706 = vrot.lane.b32.xlu0 %v2304, 124
      %v2707 = vpop.permute.xlu0 %2706
      %2708 = vrot.lane.b32.xlu0 %v2403, 124
      %v2709 = vpop.permute.xlu0 %2708
      %2710 = vrot.lane.b32.xlu0 %v2207, 124
      %v2711 = vpop.permute.xlu0 %2710
      %2712 = vrot.lane.b32.xlu0 %v2306, 124
      %v2713 = vpop.permute.xlu0 %2712
      %2714 = vrot.lane.b32.xlu0 %v2405, 124
      %v2715 = vpop.permute.xlu0 %2714
      %2716 = vrot.lane.b32.xlu0 %v2210, 124
      %v2717 = vpop.permute.xlu0 %2716
      %2718 = vrot.lane.b32.xlu0 %v2309, 124
      %v2719 = vpop.permute.xlu0 %2718
      %2720 = vrot.lane.b32.xlu0 %v2408, 124
      %v2721 = vpop.permute.xlu0 %2720
      %2722 = vrot.lane.b32.xlu0 %v2212, 124
      %v2723 = vpop.permute.xlu0 %2722
      %2724 = vrot.lane.b32.xlu0 %v2311, 124
      %v2725 = vpop.permute.xlu0 %2724
      %2726 = vrot.lane.b32.xlu0 %v2410, 124
      %v2727 = vpop.permute.xlu0 %2726
      %v2728 = vsel %vm1384, %v2705, %v2707
      %v2729 = vsel %vm1384, %v2707, %v2709
      %v2730 = vsel %vm1384, %v2711, %v2713
      %v2731 = vsel %vm1384, %v2713, %v2715
      %v2732 = vsel %vm1384, %v2717, %v2719
      %v2733 = vsel %vm1384, %v2719, %v2721
      %v2734 = vsel %vm1384, %v2723, %v2725
      %v2735 = vsel %vm1384, %v2725, %v2727
      %v2752 = vsel %vm1384, %v2709, %v2705
      %v2753 = vsel %vm1384, %v2715, %v2711
      %v2754 = vsel %vm1384, %v2721, %v2717
      %v2755 = vsel %vm1384, %v2727, %v2723
      %v2756 = vadd.f32 %v2680, %v2728
      %v2757 = vadd.f32 %v2681, %v2729
      %v2758 = vadd.f32 %v2682, %v2752
      %v2759 = vadd.f32 %v2683, %v2730
      %v2760 = vadd.f32 %v2684, %v2731
      %v2761 = vadd.f32 %v2685, %v2753
      %v2762 = vadd.f32 %v2686, %v2732
      %v2763 = vadd.f32 %v2687, %v2733
      %v2764 = vadd.f32 %v2688, %v2754
      %v2765 = vadd.f32 %v2689, %v2734
      %v2766 = vadd.f32 %v2690, %v2735
      %v2767 = vadd.f32 %v2691, %v2755
      %2780 = vrot.lane.b32.xlu0 %v2215, 123
      %v2781 = vpop.permute.xlu0 %2780
      %2782 = vrot.lane.b32.xlu0 %v2314, 123
      %v2783 = vpop.permute.xlu0 %2782
      %2784 = vrot.lane.b32.xlu0 %v2413, 123
      %v2785 = vpop.permute.xlu0 %2784
      %2786 = vrot.lane.b32.xlu0 %v2217, 123
      %v2787 = vpop.permute.xlu0 %2786
      %2788 = vrot.lane.b32.xlu0 %v2316, 123
      %v2789 = vpop.permute.xlu0 %2788
      %2790 = vrot.lane.b32.xlu0 %v2415, 123
      %v2791 = vpop.permute.xlu0 %2790
      %2792 = vrot.lane.b32.xlu0 %v2220, 123
      %v2793 = vpop.permute.xlu0 %2792
      %2794 = vrot.lane.b32.xlu0 %v2319, 123
      %v2795 = vpop.permute.xlu0 %2794
      %2796 = vrot.lane.b32.xlu0 %v2418, 123
      %v2797 = vpop.permute.xlu0 %2796
      %2798 = vrot.lane.b32.xlu0 %v2222, 123
      %v2799 = vpop.permute.xlu0 %2798
      %2800 = vrot.lane.b32.xlu0 %v2321, 123
      %v2801 = vpop.permute.xlu0 %2800
      %2802 = vrot.lane.b32.xlu0 %v2420, 123
      %v2803 = vpop.permute.xlu0 %2802
      %v2804 = vsel %vm1461, %v2781, %v2783
      %v2805 = vsel %vm1461, %v2783, %v2785
      %v2806 = vsel %vm1461, %v2787, %v2789
      %v2807 = vsel %vm1461, %v2789, %v2791
      %v2808 = vsel %vm1461, %v2793, %v2795
      %v2809 = vsel %vm1461, %v2795, %v2797
      %v2810 = vsel %vm1461, %v2799, %v2801
      %v2811 = vsel %vm1461, %v2801, %v2803
      %v2828 = vsel %vm1461, %v2785, %v2781
      %v2829 = vsel %vm1461, %v2791, %v2787
      %v2830 = vsel %vm1461, %v2797, %v2793
      %v2831 = vsel %vm1461, %v2803, %v2799
      %v2832 = vadd.f32 %v2756, %v2804
      %v2833 = vadd.f32 %v2757, %v2805
      %v2834 = vadd.f32 %v2758, %v2828
      %v2835 = vadd.f32 %v2759, %v2806
      %v2836 = vadd.f32 %v2760, %v2807
      %v2837 = vadd.f32 %v2761, %v2829
      %v2838 = vadd.f32 %v2762, %v2808
      %v2839 = vadd.f32 %v2763, %v2809
      %v2840 = vadd.f32 %v2764, %v2830
      %v2841 = vadd.f32 %v2765, %v2810
      %v2842 = vadd.f32 %v2766, %v2811
      %v2843 = vadd.f32 %v2767, %v2831
      %2856 = vrot.lane.b32.xlu0 %v2225, 122
      %v2857 = vpop.permute.xlu0 %2856
      %2858 = vrot.lane.b32.xlu0 %v2324, 122
      %v2859 = vpop.permute.xlu0 %2858
      %2860 = vrot.lane.b32.xlu0 %v2423, 122
      %v2861 = vpop.permute.xlu0 %2860
      %2862 = vrot.lane.b32.xlu0 %v2227, 122
      %v2863 = vpop.permute.xlu0 %2862
      %2864 = vrot.lane.b32.xlu0 %v2326, 122
      %v2865 = vpop.permute.xlu0 %2864
      %2866 = vrot.lane.b32.xlu0 %v2425, 122
      %v2867 = vpop.permute.xlu0 %2866
      %2868 = vrot.lane.b32.xlu0 %v2230, 122
      %v2869 = vpop.permute.xlu0 %2868
      %2870 = vrot.lane.b32.xlu0 %v2329, 122
      %v2871 = vpop.permute.xlu0 %2870
      %2872 = vrot.lane.b32.xlu0 %v2428, 122
      %v2873 = vpop.permute.xlu0 %2872
      %2874 = vrot.lane.b32.xlu0 %v2232, 122
      %v2875 = vpop.permute.xlu0 %2874
      %2876 = vrot.lane.b32.xlu0 %v2331, 122
      %v2877 = vpop.permute.xlu0 %2876
      %2878 = vrot.lane.b32.xlu0 %v2430, 122
      %v2879 = vpop.permute.xlu0 %2878
      %v2880 = vsel %vm1538, %v2857, %v2859
      %v2881 = vsel %vm1538, %v2859, %v2861
      %v2882 = vsel %vm1538, %v2863, %v2865
      %v2883 = vsel %vm1538, %v2865, %v2867
      %v2884 = vsel %vm1538, %v2869, %v2871
      %v2885 = vsel %vm1538, %v2871, %v2873
      %v2886 = vsel %vm1538, %v2875, %v2877
      %v2887 = vsel %vm1538, %v2877, %v2879
      %v2904 = vsel %vm1538, %v2861, %v2857
      %v2905 = vsel %vm1538, %v2867, %v2863
      %v2906 = vsel %vm1538, %v2873, %v2869
      %v2907 = vsel %vm1538, %v2879, %v2875
      %v2908 = vadd.f32 %v2832, %v2880
      %v2909 = vadd.f32 %v2833, %v2881
      %v2910 = vadd.f32 %v2834, %v2904
      %v2911 = vadd.f32 %v2835, %v2882
      %v2912 = vadd.f32 %v2836, %v2883
      %v2913 = vadd.f32 %v2837, %v2905
      %v2914 = vadd.f32 %v2838, %v2884
      %v2915 = vadd.f32 %v2839, %v2885
      %v2916 = vadd.f32 %v2840, %v2906
      %v2917 = vadd.f32 %v2841, %v2886
      %v2918 = vadd.f32 %v2842, %v2887
      %v2919 = vadd.f32 %v2843, %v2907
      %2932 = vrot.lane.b32.xlu0 %v2235, 121
      %v2933 = vpop.permute.xlu0 %2932
      %2934 = vrot.lane.b32.xlu0 %v2334, 121
      %v2935 = vpop.permute.xlu0 %2934
      %2936 = vrot.lane.b32.xlu0 %v2433, 121
      %v2937 = vpop.permute.xlu0 %2936
      %2938 = vrot.lane.b32.xlu0 %v2237, 121
      %v2939 = vpop.permute.xlu0 %2938
      %2940 = vrot.lane.b32.xlu0 %v2336, 121
      %v2941 = vpop.permute.xlu0 %2940
      %2942 = vrot.lane.b32.xlu0 %v2435, 121
      %v2943 = vpop.permute.xlu0 %2942
      %2944 = vrot.lane.b32.xlu0 %v2240, 121
      %v2945 = vpop.permute.xlu0 %2944
      %2946 = vrot.lane.b32.xlu0 %v2339, 121
      %v2947 = vpop.permute.xlu0 %2946
      %2948 = vrot.lane.b32.xlu0 %v2438, 121
      %v2949 = vpop.permute.xlu0 %2948
      %2950 = vrot.lane.b32.xlu0 %v2242, 121
      %v2951 = vpop.permute.xlu0 %2950
      %2952 = vrot.lane.b32.xlu0 %v2341, 121
      %v2953 = vpop.permute.xlu0 %2952
      %2954 = vrot.lane.b32.xlu0 %v2440, 121
      %v2955 = vpop.permute.xlu0 %2954
      %v2956 = vsel %vm1615, %v2933, %v2935
      %v2957 = vsel %vm1615, %v2935, %v2937
      %v2958 = vsel %vm1615, %v2939, %v2941
      %v2959 = vsel %vm1615, %v2941, %v2943
      %v2960 = vsel %vm1615, %v2945, %v2947
      %v2961 = vsel %vm1615, %v2947, %v2949
      %v2962 = vsel %vm1615, %v2951, %v2953
      %v2963 = vsel %vm1615, %v2953, %v2955
      %v2980 = vsel %vm1615, %v2937, %v2933
      %v2981 = vsel %vm1615, %v2943, %v2939
      %v2982 = vsel %vm1615, %v2949, %v2945
      %v2983 = vsel %vm1615, %v2955, %v2951
      %v2984 = vadd.f32 %v2908, %v2956
      %v2985 = vadd.f32 %v2909, %v2957
      %v2986 = vadd.f32 %v2910, %v2980
      %v2987 = vadd.f32 %v2911, %v2958
      %v2988 = vadd.f32 %v2912, %v2959
      %v2989 = vadd.f32 %v2913, %v2981
      %v2990 = vadd.f32 %v2914, %v2960
      %v2991 = vadd.f32 %v2915, %v2961
      %v2992 = vadd.f32 %v2916, %v2982
      %v2993 = vadd.f32 %v2917, %v2962
      %v2994 = vadd.f32 %v2918, %v2963
      %v2995 = vadd.f32 %v2919, %v2983
      %3008 = vrot.lane.b32.xlu0 %v2245, 120
      %v3009 = vpop.permute.xlu0 %3008
      %3010 = vrot.lane.b32.xlu0 %v2344, 120
      %v3011 = vpop.permute.xlu0 %3010
      %3012 = vrot.lane.b32.xlu0 %v2443, 120
      %v3013 = vpop.permute.xlu0 %3012
      %3014 = vrot.lane.b32.xlu0 %v2247, 120
      %v3015 = vpop.permute.xlu0 %3014
      %3016 = vrot.lane.b32.xlu0 %v2346, 120
      %v3017 = vpop.permute.xlu0 %3016
      %3018 = vrot.lane.b32.xlu0 %v2445, 120
      %v3019 = vpop.permute.xlu0 %3018
      %3020 = vrot.lane.b32.xlu0 %v2250, 120
      %v3021 = vpop.permute.xlu0 %3020
      %3022 = vrot.lane.b32.xlu0 %v2349, 120
      %v3023 = vpop.permute.xlu0 %3022
      %3024 = vrot.lane.b32.xlu0 %v2448, 120
      %v3025 = vpop.permute.xlu0 %3024
      %3026 = vrot.lane.b32.xlu0 %v2252, 120
      %v3027 = vpop.permute.xlu0 %3026
      %3028 = vrot.lane.b32.xlu0 %v2351, 120
      %v3029 = vpop.permute.xlu0 %3028
      %3030 = vrot.lane.b32.xlu0 %v2450, 120
      %v3031 = vpop.permute.xlu0 %3030
      %v3032 = vsel %vm1692, %v3009, %v3011
      %v3033 = vsel %vm1692, %v3011, %v3013
      %v3034 = vsel %vm1692, %v3015, %v3017
      %v3035 = vsel %vm1692, %v3017, %v3019
      %v3036 = vsel %vm1692, %v3021, %v3023
      %v3037 = vsel %vm1692, %v3023, %v3025
      %v3038 = vsel %vm1692, %v3027, %v3029
      %v3039 = vsel %vm1692, %v3029, %v3031
      %v3056 = vsel %vm1692, %v3013, %v3009
      %v3057 = vsel %vm1692, %v3019, %v3015
      %v3058 = vsel %vm1692, %v3025, %v3021
      %v3059 = vsel %vm1692, %v3031, %v3027
      %v3060 = vadd.f32 %v2984, %v3032
      %v3061 = vadd.f32 %v2985, %v3033
      %v3062 = vadd.f32 %v2986, %v3056
      %v3063 = vadd.f32 %v2987, %v3034
      %v3064 = vadd.f32 %v2988, %v3035
      %v3065 = vadd.f32 %v2989, %v3057
      %v3066 = vadd.f32 %v2990, %v3036
      %v3067 = vadd.f32 %v2991, %v3037
      %v3068 = vadd.f32 %v2992, %v3058
      %v3069 = vadd.f32 %v2993, %v3038
      %v3070 = vadd.f32 %v2994, %v3039
      %v3071 = vadd.f32 %v2995, %v3059
      %s3072 = scalar_lea.vmem %s345, 24
      %v3073 = vld [vmem:[%s3072] sm:$0xf]
      %v3074 = vld [vmem:[%s3072 + $0x4] sm:$0xf]
      %v3075 = vld [vmem:[%s3072 + $0x8] sm:$0xf]
      %v3076 = vld [vmem:[%s3072 + $0xc] sm:$0xf]
      %v3077 = vld [vmem:[%s3072 + $0x10] sm:$0xf]
      %v3078 = vld [vmem:[%s3072 + $0x14] sm:$0xf]
      %v3079 = vld [vmem:[%s3072 + $0x18] sm:$0xf]
      %v3080 = vld [vmem:[%s3072 + $0x1c] sm:$0xf]
      %v3081 = vld [vmem:[%s3072 + $0x20] sm:$0xf]
      %v3082 = vld [vmem:[%s3072 + $0x24] sm:$0xf]
      %v3083 = vld [vmem:[%s3072 + $0x28] sm:$0xf]
      %v3084 = vld [vmem:[%s3072 + $0x2c] sm:$0xf]
      %v3085 = vld [vmem:[%s3072 + $0x30] sm:$0xf]
      %v3086 = vld [vmem:[%s3072 + $0x34] sm:$0xf]
      %v3087 = vld [vmem:[%s3072 + $0x38] sm:$0xf]
      %v3088 = vld [vmem:[%s3072 + $0x3c] sm:$0xf]
      %v3089 = vld [vmem:[%s3072 + $0x40] sm:$0xf]
      %v3090 = vld [vmem:[%s3072 + $0x44] sm:$0xf]
      %v3091 = vld [vmem:[%s3072 + $0x48] sm:$0xf]
      %v3092 = vld [vmem:[%s3072 + $0x4c] sm:$0xf]
      %v3093 = vld [vmem:[%s3072 + $0x50] sm:$0xf]
      %v3094 = vld [vmem:[%s3072 + $0x54] sm:$0xf]
      %v3095 = vld [vmem:[%s3072 + $0x58] sm:$0xf]
      %v3096 = vld [vmem:[%s3072 + $0x5c] sm:$0xf]
      %v3097 = vld [vmem:[%s3072 + $0x60] sm:$0xf]
      %v3098 = vld [vmem:[%s3072 + $0x64] sm:$0xf]
      %v3099 = vld [vmem:[%s3072 + $0x68] sm:$0xf]
      %v3100 = vld [vmem:[%s3072 + $0x6c] sm:$0xf]
      %v3101 = vld [vmem:[%s3072 + $0x70] sm:$0xf]
      %v3102 = vld [vmem:[%s3072 + $0x74] sm:$0xf]
      %v3103 = vld [vmem:[%s3072 + $0x78] sm:$0xf]
      %v3104 = vld [vmem:[%s3072 + $0x7c] sm:$0xf]
      %v3105 = vld [vmem:[%s3072 + $0x80] sm:$0xf]
      %v3106 = vld [vmem:[%s3072 + $0x84] sm:$0xf]
      %v3107 = vld [vmem:[%s3072 + $0x88] sm:$0xf]
      %v3108 = vld [vmem:[%s3072 + $0x8c] sm:$0xf]
      %v3109 = vld [vmem:[%s3072 + $0x90] sm:$0xf]
      %v3110 = vld [vmem:[%s3072 + $0x94] sm:$0xf]
      %v3111 = vld [vmem:[%s3072 + $0x98] sm:$0xf]
      %v3112 = vld [vmem:[%s3072 + $0x9c] sm:$0xf]
      %v3113 = vld [vmem:[%s3072 + $0xa0] sm:$0xf]
      %v3114 = vld [vmem:[%s3072 + $0xa4] sm:$0xf]
      %v3115 = vld [vmem:[%s3072 + $0xa8] sm:$0xf]
      %v3116 = vld [vmem:[%s3072 + $0xac] sm:$0xf]
      %v3117 = vld [vmem:[%s3072 + $0xb0] sm:$0xf]
      %v3118 = vld [vmem:[%s3072 + $0xb4] sm:$0xf]
      %v3119 = vld [vmem:[%s3072 + $0xb8] sm:$0xf]
      %v3120 = vld [vmem:[%s3072 + $0xbc] sm:$0xf]
      %s3121 = scalar_lea.vmem %s350, 288
      %v3122 = vld [vmem:[%s3121] sm:$0xf]
      %v3123 = vld [vmem:[%s3121 + $0x4] sm:$0xf]
      %v3124 = vld [vmem:[%s3121 + $0x8] sm:$0xf]
      %v3125 = vld [vmem:[%s3121 + $0xc] sm:$0xf]
      %v3126 = vld [vmem:[%s3121 + $0x10] sm:$0xf]
      %v3127 = vld [vmem:[%s3121 + $0x14] sm:$0xf]
      %v3128 = vld [vmem:[%s3121 + $0x18] sm:$0xf]
      %v3129 = vld [vmem:[%s3121 + $0x1c] sm:$0xf]
      %v3130 = vld [vmem:[%s3121 + $0x20] sm:$0xf]
      %v3131 = vld [vmem:[%s3121 + $0x24] sm:$0xf]
      %v3132 = vld [vmem:[%s3121 + $0x28] sm:$0xf]
      %v3133 = vld [vmem:[%s3121 + $0x2c] sm:$0xf]
      %v3134 = vld [vmem:[%s3121 + $0x30] sm:$0xf]
      %v3135 = vld [vmem:[%s3121 + $0x34] sm:$0xf]
      %v3136 = vld [vmem:[%s3121 + $0x38] sm:$0xf]
      %v3137 = vld [vmem:[%s3121 + $0x3c] sm:$0xf]
      %v3138 = vld [vmem:[%s3121 + $0x40] sm:$0xf]
      %v3139 = vld [vmem:[%s3121 + $0x44] sm:$0xf]
      %v3140 = vld [vmem:[%s3121 + $0x48] sm:$0xf]
      %v3141 = vld [vmem:[%s3121 + $0x4c] sm:$0xf]
      %v3142 = vld [vmem:[%s3121 + $0x50] sm:$0xf]
      %v3143 = vld [vmem:[%s3121 + $0x54] sm:$0xf]
      %v3144 = vld [vmem:[%s3121 + $0x58] sm:$0xf]
      %v3145 = vld [vmem:[%s3121 + $0x5c] sm:$0xf]
      %v3146 = vld [vmem:[%s3121 + $0x60] sm:$0xf]
      %v3147 = vld [vmem:[%s3121 + $0x64] sm:$0xf]
      %v3148 = vld [vmem:[%s3121 + $0x68] sm:$0xf]
      %v3149 = vld [vmem:[%s3121 + $0x6c] sm:$0xf]
      %v3150 = vld [vmem:[%s3121 + $0x70] sm:$0xf]
      %v3151 = vld [vmem:[%s3121 + $0x74] sm:$0xf]
      %v3152 = vld [vmem:[%s3121 + $0x78] sm:$0xf]
      %v3153 = vld [vmem:[%s3121 + $0x7c] sm:$0xf]
      %v3154 = vld [vmem:[%s3121 + $0x80] sm:$0xf]
      %v3155 = vld [vmem:[%s3121 + $0x84] sm:$0xf]
      %v3156 = vld [vmem:[%s3121 + $0x88] sm:$0xf]
      %v3157 = vld [vmem:[%s3121 + $0x8c] sm:$0xf]
      %v3194 = vunpack.c.l.b16 %v3122
      %v3195 = vunpack.c.l.b16 %v3123
      %v3196 = vunpack.c.l.b16 %v3124
      %v3197 = vunpack.c.l.b16 %v3125
      %v3198 = vunpack.c.l.b16 %v3126
      %v3199 = vunpack.c.l.b16 %v3127
      %v3200 = vunpack.c.l.b16 %v3128
      %v3201 = vunpack.c.l.b16 %v3129
      %v3202 = vunpack.c.l.b16 %v3130
      %v3203 = vunpack.c.l.b16 %v3131
      %v3204 = vunpack.c.l.b16 %v3132
      %v3205 = vunpack.c.l.b16 %v3133
      %v3206 = vunpack.c.l.b16 %v3134
      %v3207 = vunpack.c.l.b16 %v3135
      %v3208 = vunpack.c.l.b16 %v3136
      %v3209 = vunpack.c.l.b16 %v3137
      %v3210 = vunpack.c.l.b16 %v3138
      %v3211 = vunpack.c.l.b16 %v3139
      %v3212 = vunpack.c.l.b16 %v3140
      %v3213 = vunpack.c.l.b16 %v3141
      %v3214 = vunpack.c.l.b16 %v3142
      %v3215 = vunpack.c.l.b16 %v3143
      %v3216 = vunpack.c.l.b16 %v3144
      %v3217 = vunpack.c.l.b16 %v3145
      %v3218 = vunpack.c.l.b16 %v3146
      %v3219 = vunpack.c.l.b16 %v3147
      %v3220 = vunpack.c.l.b16 %v3148
      %v3221 = vunpack.c.l.b16 %v3149
      %v3222 = vunpack.c.l.b16 %v3150
      %v3223 = vunpack.c.l.b16 %v3151
      %v3224 = vunpack.c.l.b16 %v3152
      %v3225 = vunpack.c.l.b16 %v3153
      %v3226 = vunpack.c.l.b16 %v3154
      %v3227 = vunpack.c.l.b16 %v3155
      %v3228 = vunpack.c.l.b16 %v3156
      %v3229 = vunpack.c.l.b16 %v3157
      %v3230 = vpack.c.b16 %v3195, %v3194
      %v3231 = vpack.c.b16 %v3197, %v3196
      %v3232 = vpack.c.b16 %v3199, %v3198
      %v3233 = vpack.c.b16 %v3201, %v3200
      %v3234 = vpack.c.b16 %v3203, %v3202
      %v3235 = vpack.c.b16 %v3205, %v3204
      %v3236 = vpack.c.b16 %v3207, %v3206
      %v3237 = vpack.c.b16 %v3209, %v3208
      %v3238 = vpack.c.b16 %v3211, %v3210
      %v3239 = vpack.c.b16 %v3213, %v3212
      %v3240 = vpack.c.b16 %v3215, %v3214
      %v3241 = vpack.c.b16 %v3217, %v3216
      %v3242 = vpack.c.b16 %v3219, %v3218
      %v3243 = vpack.c.b16 %v3221, %v3220
      %v3244 = vpack.c.b16 %v3223, %v3222
      %v3245 = vpack.c.b16 %v3225, %v3224
      %v3246 = vpack.c.b16 %v3227, %v3226
      %v3247 = vpack.c.b16 %v3229, %v3228
      %v3296 = vunpack.c.l.b16 %v3073
      %v3297 = vunpack.c.l.b16 %v3074
      %v3298 = vunpack.c.l.b16 %v3075
      %v3299 = vunpack.c.l.b16 %v3076
      %v3300 = vunpack.c.l.b16 %v3077
      %v3301 = vunpack.c.l.b16 %v3078
      %v3302 = vunpack.c.l.b16 %v3079
      %v3303 = vunpack.c.l.b16 %v3080
      %v3304 = vunpack.c.l.b16 %v3081
      %v3305 = vunpack.c.l.b16 %v3082
      %v3306 = vunpack.c.l.b16 %v3083
      %v3307 = vunpack.c.l.b16 %v3084
      %v3308 = vunpack.c.l.b16 %v3085
      %v3309 = vunpack.c.l.b16 %v3086
      %v3310 = vunpack.c.l.b16 %v3087
      %v3311 = vunpack.c.l.b16 %v3088
      %v3312 = vunpack.c.l.b16 %v3089
      %v3313 = vunpack.c.l.b16 %v3090
      %v3314 = vunpack.c.l.b16 %v3091
      %v3315 = vunpack.c.l.b16 %v3092
      %v3316 = vunpack.c.l.b16 %v3093
      %v3317 = vunpack.c.l.b16 %v3094
      %v3318 = vunpack.c.l.b16 %v3095
      %v3319 = vunpack.c.l.b16 %v3096
      %v3320 = vunpack.c.l.b16 %v3097
      %v3321 = vunpack.c.l.b16 %v3098
      %v3322 = vunpack.c.l.b16 %v3099
      %v3323 = vunpack.c.l.b16 %v3100
      %v3324 = vunpack.c.l.b16 %v3101
      %v3325 = vunpack.c.l.b16 %v3102
      %v3326 = vunpack.c.l.b16 %v3103
      %v3327 = vunpack.c.l.b16 %v3104
      %v3328 = vunpack.c.l.b16 %v3105
      %v3329 = vunpack.c.l.b16 %v3106
      %v3330 = vunpack.c.l.b16 %v3107
      %v3331 = vunpack.c.l.b16 %v3108
      %v3332 = vunpack.c.l.b16 %v3109
      %v3333 = vunpack.c.l.b16 %v3110
      %v3334 = vunpack.c.l.b16 %v3111
      %v3335 = vunpack.c.l.b16 %v3112
      %v3336 = vunpack.c.l.b16 %v3113
      %v3337 = vunpack.c.l.b16 %v3114
      %v3338 = vunpack.c.l.b16 %v3115
      %v3339 = vunpack.c.l.b16 %v3116
      %v3340 = vunpack.c.l.b16 %v3117
      %v3341 = vunpack.c.l.b16 %v3118
      %v3342 = vunpack.c.l.b16 %v3119
      %v3343 = vunpack.c.l.b16 %v3120
      %v3344 = vpack.c.b16 %v3297, %v3296
      %v3345 = vpack.c.b16 %v3299, %v3298
      %v3346 = vpack.c.b16 %v3301, %v3300
      %v3347 = vpack.c.b16 %v3303, %v3302
      %v3348 = vpack.c.b16 %v3305, %v3304
      %v3349 = vpack.c.b16 %v3307, %v3306
      %v3350 = vpack.c.b16 %v3309, %v3308
      %v3351 = vpack.c.b16 %v3311, %v3310
      %v3352 = vpack.c.b16 %v3313, %v3312
      %v3353 = vpack.c.b16 %v3315, %v3314
      %v3354 = vpack.c.b16 %v3317, %v3316
      %v3355 = vpack.c.b16 %v3319, %v3318
      %v3356 = vpack.c.b16 %v3321, %v3320
      %v3357 = vpack.c.b16 %v3323, %v3322
      %v3358 = vpack.c.b16 %v3325, %v3324
      %v3359 = vpack.c.b16 %v3327, %v3326
      %v3360 = vpack.c.b16 %v3329, %v3328
      %v3361 = vpack.c.b16 %v3331, %v3330
      %v3362 = vpack.c.b16 %v3333, %v3332
      %v3363 = vpack.c.b16 %v3335, %v3334
      %v3364 = vpack.c.b16 %v3337, %v3336
      %v3365 = vpack.c.b16 %v3339, %v3338
      %v3366 = vpack.c.b16 %v3341, %v3340
      %v3367 = vpack.c.b16 %v3343, %v3342
      %v3369 = vsel %vm681, %v3230, 0
      %v3372 = vsel %vm681, %v3231, 0
      %v3375 = vsel %vm681, %v3232, 0
      %v3378 = vsel %vm681, %v3233, 0
      %v3381 = vsel %vm681, %v3234, 0
      %v3384 = vsel %vm681, %v3235, 0
      %v3387 = vsel %vm681, %v3236, 0
      %v3390 = vsel %vm681, %v3237, 0
      %v3393 = vsel %vm681, %v3238, 0
      %v3396 = vsel %vm681, %v3239, 0
      %v3399 = vsel %vm681, %v3240, 0
      %v3402 = vsel %vm681, %v3241, 0
      %v3405 = vsel %vm681, %v3242, 0
      %v3408 = vsel %vm681, %v3243, 0
      %v3411 = vsel %vm681, %v3244, 0
      %v3414 = vsel %vm681, %v3245, 0
      %v3417 = vsel %vm681, %v3246, 0
      %v3420 = vsel %vm681, %v3247, 0
      %v3423 = vsel %vm681, %v3344, 0
      %v3426 = vsel %vm681, %v3345, 0
      %v3429 = vsel %vm681, %v3346, 0
      %v3432 = vsel %vm681, %v3347, 0
      %v3435 = vsel %vm681, %v3348, 0
      %v3438 = vsel %vm681, %v3349, 0
      %v3441 = vsel %vm681, %v3350, 0
      %v3444 = vsel %vm681, %v3351, 0
      %v3447 = vsel %vm681, %v3352, 0
      %v3450 = vsel %vm681, %v3353, 0
      %v3453 = vsel %vm681, %v3354, 0
      %v3456 = vsel %vm681, %v3355, 0
      %v3459 = vsel %vm681, %v3356, 0
      %v3462 = vsel %vm681, %v3357, 0
      %v3465 = vsel %vm681, %v3358, 0
      %v3468 = vsel %vm681, %v3359, 0
      %v3471 = vsel %vm681, %v3360, 0
      %v3474 = vsel %vm681, %v3361, 0
      %v3477 = vsel %vm681, %v3362, 0
      %v3480 = vsel %vm681, %v3363, 0
      %v3483 = vsel %vm681, %v3364, 0
      %v3486 = vsel %vm681, %v3365, 0
      %v3489 = vsel %vm681, %v3366, 0
      %v3492 = vsel %vm681, %v3367, 0
      %3494 = vmatpush.bf16.xpose.msra.mxu0 %v3444
      %3495 = vmatpush.bf16.xpose.msra.mxu0 %v3441
      %3496 = vmatpush.bf16.xpose.msra.mxu0 %v3438
      %3497 = vmatpush.bf16.xpose.msra.mxu0 %v3435
      %3498 = vmatpush.bf16.xpose.msra.mxu0 %v3432
      %3499 = vmatpush.bf16.xpose.msra.mxu0 %v3429
      %3500 = vmatpush.bf16.xpose.msra.mxu0 %v3426
      %3501 = vmatpush.bf16.xpose.msra.mxu0 %v3423
      %3502 = vmatmul.bf16.gmra.mxu0 %v3369
      %v3503 = vpop.f32.mrf.mxu0
      %v3504 = vadd.f32 0.0, %v3503
      %v3505 = vpop.f32.mrf.mxu0
      %v3506 = vadd.f32 0.0, %v3505
      %3507 = vmatmul.bf16.gmra.mxu0 %v3372
      %v3508 = vpop.f32.mrf.mxu0
      %v3509 = vadd.f32 0.0, %v3508
      %v3510 = vpop.f32.mrf.mxu0
      %v3511 = vadd.f32 0.0, %v3510
      %3512 = vmatmul.bf16.gmra.mxu0 %v3375
      %v3513 = vpop.f32.mrf.mxu0
      %v3514 = vadd.f32 0.0, %v3513
      %v3515 = vpop.f32.mrf.mxu0
      %v3516 = vadd.f32 0.0, %v3515
      %3517 = vmatmul.bf16.gmra.mxu0 %v3378
      %v3518 = vpop.f32.mrf.mxu0
      %v3519 = vadd.f32 0.0, %v3518
      %v3520 = vpop.f32.mrf.mxu0
      %v3521 = vadd.f32 0.0, %v3520
      %3522 = vmatmul.bf16.gmra.mxu0 %v3381
      %v3523 = vpop.f32.mrf.mxu0
      %v3524 = vadd.f32 0.0, %v3523
      %v3525 = vpop.f32.mrf.mxu0
      %v3526 = vadd.f32 0.0, %v3525
      %3527 = vmatmul.bf16.gmra.mxu0 %v3384
      %v3528 = vpop.f32.mrf.mxu0
      %v3529 = vadd.f32 0.0, %v3528
      %v3530 = vpop.f32.mrf.mxu0
      %v3531 = vadd.f32 0.0, %v3530
      %3532 = vmatmul.bf16.gmra.mxu0 %v3387
      %v3533 = vpop.f32.mrf.mxu0
      %v3534 = vadd.f32 0.0, %v3533
      %v3535 = vpop.f32.mrf.mxu0
      %v3536 = vadd.f32 0.0, %v3535
      %3537 = vmatmul.bf16.gmra.mxu0 %v3390
      %v3538 = vpop.f32.mrf.mxu0
      %v3539 = vadd.f32 0.0, %v3538
      %v3540 = vpop.f32.mrf.mxu0
      %v3541 = vadd.f32 0.0, %v3540
      %3542 = vmatmul.bf16.gmra.mxu0 %v3393
      %v3543 = vpop.f32.mrf.mxu0
      %v3544 = vadd.f32 0.0, %v3543
      %v3545 = vpop.f32.mrf.mxu0
      %v3546 = vadd.f32 0.0, %v3545
      %3547 = vmatmul.bf16.gmra.mxu0 %v3396
      %v3548 = vpop.f32.mrf.mxu0
      %v3549 = vadd.f32 0.0, %v3548
      %v3550 = vpop.f32.mrf.mxu0
      %v3551 = vadd.f32 0.0, %v3550
      %3552 = vmatmul.bf16.gmra.mxu0 %v3399
      %v3553 = vpop.f32.mrf.mxu0
      %v3554 = vadd.f32 0.0, %v3553
      %v3555 = vpop.f32.mrf.mxu0
      %v3556 = vadd.f32 0.0, %v3555
      %3557 = vmatmul.bf16.gmra.mxu0 %v3402
      %v3558 = vpop.f32.mrf.mxu0
      %v3559 = vadd.f32 0.0, %v3558
      %v3560 = vpop.f32.mrf.mxu0
      %v3561 = vadd.f32 0.0, %v3560
      %3562 = vmatmul.bf16.gmra.mxu0 %v3405
      %v3563 = vpop.f32.mrf.mxu0
      %v3564 = vadd.f32 0.0, %v3563
      %v3565 = vpop.f32.mrf.mxu0
      %v3566 = vadd.f32 0.0, %v3565
      %3567 = vmatmul.bf16.gmra.mxu0 %v3408
      %v3568 = vpop.f32.mrf.mxu0
      %v3569 = vadd.f32 0.0, %v3568
      %v3570 = vpop.f32.mrf.mxu0
      %v3571 = vadd.f32 0.0, %v3570
      %3572 = vmatmul.bf16.gmra.mxu0 %v3411
      %v3573 = vpop.f32.mrf.mxu0
      %v3574 = vadd.f32 0.0, %v3573
      %v3575 = vpop.f32.mrf.mxu0
      %v3576 = vadd.f32 0.0, %v3575
      %3577 = vmatmul.bf16.gmra.mxu0 %v3414
      %v3578 = vpop.f32.mrf.mxu0
      %v3579 = vadd.f32 0.0, %v3578
      %v3580 = vpop.f32.mrf.mxu0
      %v3581 = vadd.f32 0.0, %v3580
      %3582 = vmatmul.bf16.gmra.mxu0 %v3417
      %v3583 = vpop.f32.mrf.mxu0
      %v3584 = vadd.f32 0.0, %v3583
      %v3585 = vpop.f32.mrf.mxu0
      %v3586 = vadd.f32 0.0, %v3585
      %3587 = vmatmul.bf16.gmra.mxu0 %v3420
      %v3588 = vpop.f32.mrf.mxu0
      %v3589 = vadd.f32 0.0, %v3588
      %v3590 = vpop.f32.mrf.mxu0
      %v3591 = vadd.f32 0.0, %v3590
      %3592 = vdwg.mxu0
      %3593 = vmatpush.bf16.xpose.msra.mxu0 %v3468
      %3594 = vmatpush.bf16.xpose.msra.mxu0 %v3465
      %3595 = vmatpush.bf16.xpose.msra.mxu0 %v3462
      %3596 = vmatpush.bf16.xpose.msra.mxu0 %v3459
      %3597 = vmatpush.bf16.xpose.msra.mxu0 %v3456
      %3598 = vmatpush.bf16.xpose.msra.mxu0 %v3453
      %3599 = vmatpush.bf16.xpose.msra.mxu0 %v3450
      %3600 = vmatpush.bf16.xpose.msra.mxu0 %v3447
      %3601 = vmatmul.bf16.gmra.mxu0 %v3369
      %v3602 = vpop.f32.mrf.mxu0
      %v3603 = vadd.f32 0.0, %v3602
      %v3604 = vpop.f32.mrf.mxu0
      %v3605 = vadd.f32 0.0, %v3604
      %3606 = vmatmul.bf16.gmra.mxu0 %v3372
      %v3607 = vpop.f32.mrf.mxu0
      %v3608 = vadd.f32 0.0, %v3607
      %v3609 = vpop.f32.mrf.mxu0
      %v3610 = vadd.f32 0.0, %v3609
      %3611 = vmatmul.bf16.gmra.mxu0 %v3375
      %v3612 = vpop.f32.mrf.mxu0
      %v3613 = vadd.f32 0.0, %v3612
      %v3614 = vpop.f32.mrf.mxu0
      %v3615 = vadd.f32 0.0, %v3614
      %3616 = vmatmul.bf16.gmra.mxu0 %v3378
      %v3617 = vpop.f32.mrf.mxu0
      %v3618 = vadd.f32 0.0, %v3617
      %v3619 = vpop.f32.mrf.mxu0
      %v3620 = vadd.f32 0.0, %v3619
      %3621 = vmatmul.bf16.gmra.mxu0 %v3381
      %v3622 = vpop.f32.mrf.mxu0
      %v3623 = vadd.f32 0.0, %v3622
      %v3624 = vpop.f32.mrf.mxu0
      %v3625 = vadd.f32 0.0, %v3624
      %3626 = vmatmul.bf16.gmra.mxu0 %v3384
      %v3627 = vpop.f32.mrf.mxu0
      %v3628 = vadd.f32 0.0, %v3627
      %v3629 = vpop.f32.mrf.mxu0
      %v3630 = vadd.f32 0.0, %v3629
      %3631 = vmatmul.bf16.gmra.mxu0 %v3387
      %v3632 = vpop.f32.mrf.mxu0
      %v3633 = vadd.f32 0.0, %v3632
      %v3634 = vpop.f32.mrf.mxu0
      %v3635 = vadd.f32 0.0, %v3634
      %3636 = vmatmul.bf16.gmra.mxu0 %v3390
      %v3637 = vpop.f32.mrf.mxu0
      %v3638 = vadd.f32 0.0, %v3637
      %v3639 = vpop.f32.mrf.mxu0
      %v3640 = vadd.f32 0.0, %v3639
      %3641 = vmatmul.bf16.gmra.mxu0 %v3393
      %v3642 = vpop.f32.mrf.mxu0
      %v3643 = vadd.f32 0.0, %v3642
      %v3644 = vpop.f32.mrf.mxu0
      %v3645 = vadd.f32 0.0, %v3644
      %3646 = vmatmul.bf16.gmra.mxu0 %v3396
      %v3647 = vpop.f32.mrf.mxu0
      %v3648 = vadd.f32 0.0, %v3647
      %v3649 = vpop.f32.mrf.mxu0
      %v3650 = vadd.f32 0.0, %v3649
      %3651 = vmatmul.bf16.gmra.mxu0 %v3399
      %v3652 = vpop.f32.mrf.mxu0
      %v3653 = vadd.f32 0.0, %v3652
      %v3654 = vpop.f32.mrf.mxu0
      %v3655 = vadd.f32 0.0, %v3654
      %3656 = vmatmul.bf16.gmra.mxu0 %v3402
      %v3657 = vpop.f32.mrf.mxu0
      %v3658 = vadd.f32 0.0, %v3657
      %v3659 = vpop.f32.mrf.mxu0
      %v3660 = vadd.f32 0.0, %v3659
      %3661 = vmatmul.bf16.gmra.mxu0 %v3405
      %v3662 = vpop.f32.mrf.mxu0
      %v3663 = vadd.f32 0.0, %v3662
      %v3664 = vpop.f32.mrf.mxu0
      %v3665 = vadd.f32 0.0, %v3664
      %3666 = vmatmul.bf16.gmra.mxu0 %v3408
      %v3667 = vpop.f32.mrf.mxu0
      %v3668 = vadd.f32 0.0, %v3667
      %v3669 = vpop.f32.mrf.mxu0
      %v3670 = vadd.f32 0.0, %v3669
      %3671 = vmatmul.bf16.gmra.mxu0 %v3411
      %v3672 = vpop.f32.mrf.mxu0
      %v3673 = vadd.f32 0.0, %v3672
      %v3674 = vpop.f32.mrf.mxu0
      %v3675 = vadd.f32 0.0, %v3674
      %3676 = vmatmul.bf16.gmra.mxu0 %v3414
      %v3677 = vpop.f32.mrf.mxu0
      %v3678 = vadd.f32 0.0, %v3677
      %v3679 = vpop.f32.mrf.mxu0
      %v3680 = vadd.f32 0.0, %v3679
      %3681 = vmatmul.bf16.gmra.mxu0 %v3417
      %v3682 = vpop.f32.mrf.mxu0
      %v3683 = vadd.f32 0.0, %v3682
      %v3684 = vpop.f32.mrf.mxu0
      %v3685 = vadd.f32 0.0, %v3684
      %3686 = vmatmul.bf16.gmra.mxu0 %v3420
      %v3687 = vpop.f32.mrf.mxu0
      %v3688 = vadd.f32 0.0, %v3687
      %v3689 = vpop.f32.mrf.mxu0
      %v3690 = vadd.f32 0.0, %v3689
      %3691 = vdwg.mxu0
      %3692 = vmatpush.bf16.xpose.msra.mxu0 %v3492
      %3693 = vmatpush.bf16.xpose.msra.mxu0 %v3489
      %3694 = vmatpush.bf16.xpose.msra.mxu0 %v3486
      %3695 = vmatpush.bf16.xpose.msra.mxu0 %v3483
      %3696 = vmatpush.bf16.xpose.msra.mxu0 %v3480
      %3697 = vmatpush.bf16.xpose.msra.mxu0 %v3477
      %3698 = vmatpush.bf16.xpose.msra.mxu0 %v3474
      %3699 = vmatpush.bf16.xpose.msra.mxu0 %v3471
      %3700 = vmatmul.bf16.gmra.mxu0 %v3369
      %v3701 = vpop.f32.mrf.mxu0
      %v3702 = vadd.f32 0.0, %v3701
      %v3703 = vpop.f32.mrf.mxu0
      %v3704 = vadd.f32 0.0, %v3703
      %3705 = vmatmul.bf16.gmra.mxu0 %v3372
      %v3706 = vpop.f32.mrf.mxu0
      %v3707 = vadd.f32 0.0, %v3706
      %v3708 = vpop.f32.mrf.mxu0
      %v3709 = vadd.f32 0.0, %v3708
      %3710 = vmatmul.bf16.gmra.mxu0 %v3375
      %v3711 = vpop.f32.mrf.mxu0
      %v3712 = vadd.f32 0.0, %v3711
      %v3713 = vpop.f32.mrf.mxu0
      %v3714 = vadd.f32 0.0, %v3713
      %3715 = vmatmul.bf16.gmra.mxu0 %v3378
      %v3716 = vpop.f32.mrf.mxu0
      %v3717 = vadd.f32 0.0, %v3716
      %v3718 = vpop.f32.mrf.mxu0
      %v3719 = vadd.f32 0.0, %v3718
      %3720 = vmatmul.bf16.gmra.mxu0 %v3381
      %v3721 = vpop.f32.mrf.mxu0
      %v3722 = vadd.f32 0.0, %v3721
      %v3723 = vpop.f32.mrf.mxu0
      %v3724 = vadd.f32 0.0, %v3723
      %3725 = vmatmul.bf16.gmra.mxu0 %v3384
      %v3726 = vpop.f32.mrf.mxu0
      %v3727 = vadd.f32 0.0, %v3726
      %v3728 = vpop.f32.mrf.mxu0
      %v3729 = vadd.f32 0.0, %v3728
      %3730 = vmatmul.bf16.gmra.mxu0 %v3387
      %v3731 = vpop.f32.mrf.mxu0
      %v3732 = vadd.f32 0.0, %v3731
      %v3733 = vpop.f32.mrf.mxu0
      %v3734 = vadd.f32 0.0, %v3733
      %3735 = vmatmul.bf16.gmra.mxu0 %v3390
      %v3736 = vpop.f32.mrf.mxu0
      %v3737 = vadd.f32 0.0, %v3736
      %v3738 = vpop.f32.mrf.mxu0
      %v3739 = vadd.f32 0.0, %v3738
      %3740 = vmatmul.bf16.gmra.mxu0 %v3393
      %v3741 = vpop.f32.mrf.mxu0
      %v3742 = vadd.f32 0.0, %v3741
      %v3743 = vpop.f32.mrf.mxu0
      %v3744 = vadd.f32 0.0, %v3743
      %3745 = vmatmul.bf16.gmra.mxu0 %v3396
      %v3746 = vpop.f32.mrf.mxu0
      %v3747 = vadd.f32 0.0, %v3746
      %v3748 = vpop.f32.mrf.mxu0
      %v3749 = vadd.f32 0.0, %v3748
      %3750 = vmatmul.bf16.gmra.mxu0 %v3399
      %v3751 = vpop.f32.mrf.mxu0
      %v3752 = vadd.f32 0.0, %v3751
      %v3753 = vpop.f32.mrf.mxu0
      %v3754 = vadd.f32 0.0, %v3753
      %3755 = vmatmul.bf16.gmra.mxu0 %v3402
      %v3756 = vpop.f32.mrf.mxu0
      %v3757 = vadd.f32 0.0, %v3756
      %v3758 = vpop.f32.mrf.mxu0
      %v3759 = vadd.f32 0.0, %v3758
      %3760 = vmatmul.bf16.gmra.mxu0 %v3405
      %v3761 = vpop.f32.mrf.mxu0
      %v3762 = vadd.f32 0.0, %v3761
      %v3763 = vpop.f32.mrf.mxu0
      %v3764 = vadd.f32 0.0, %v3763
      %3765 = vmatmul.bf16.gmra.mxu0 %v3408
      %v3766 = vpop.f32.mrf.mxu0
      %v3767 = vadd.f32 0.0, %v3766
      %v3768 = vpop.f32.mrf.mxu0
      %v3769 = vadd.f32 0.0, %v3768
      %3770 = vmatmul.bf16.gmra.mxu0 %v3411
      %v3771 = vpop.f32.mrf.mxu0
      %v3772 = vadd.f32 0.0, %v3771
      %v3773 = vpop.f32.mrf.mxu0
      %v3774 = vadd.f32 0.0, %v3773
      %3775 = vmatmul.bf16.gmra.mxu0 %v3414
      %v3776 = vpop.f32.mrf.mxu0
      %v3777 = vadd.f32 0.0, %v3776
      %v3778 = vpop.f32.mrf.mxu0
      %v3779 = vadd.f32 0.0, %v3778
      %3780 = vmatmul.bf16.gmra.mxu0 %v3417
      %v3781 = vpop.f32.mrf.mxu0
      %v3782 = vadd.f32 0.0, %v3781
      %v3783 = vpop.f32.mrf.mxu0
      %v3784 = vadd.f32 0.0, %v3783
      %3785 = vmatmul.bf16.gmra.mxu0 %v3420
      %v3786 = vpop.f32.mrf.mxu0
      %v3787 = vadd.f32 0.0, %v3786
      %v3788 = vpop.f32.mrf.mxu0
      %v3789 = vadd.f32 0.0, %v3788
      %3790 = vdwg.mxu0
      %v3791 = vadd.f32 %v3060, %v3504
      %v3792 = vadd.f32 %v3061, %v3603
      %v3793 = vadd.f32 %v3062, %v3702
      %v3794 = vadd.f32 %v3063, %v3506
      %v3795 = vadd.f32 %v3064, %v3605
      %v3796 = vadd.f32 %v3065, %v3704
      %v3797 = vadd.f32 %v3066, %v3509
      %v3798 = vadd.f32 %v3067, %v3608
      %v3799 = vadd.f32 %v3068, %v3707
      %v3800 = vadd.f32 %v3069, %v3511
      %v3801 = vadd.f32 %v3070, %v3610
      %v3802 = vadd.f32 %v3071, %v3709
      %3815 = vrot.lane.b32.xlu0 %v3514, 127
      %v3816 = vpop.permute.xlu0 %3815
      %3817 = vrot.lane.b32.xlu0 %v3613, 127
      %v3818 = vpop.permute.xlu0 %3817
      %3819 = vrot.lane.b32.xlu0 %v3712, 127
      %v3820 = vpop.permute.xlu0 %3819
      %3821 = vrot.lane.b32.xlu0 %v3516, 127
      %v3822 = vpop.permute.xlu0 %3821
      %3823 = vrot.lane.b32.xlu0 %v3615, 127
      %v3824 = vpop.permute.xlu0 %3823
      %3825 = vrot.lane.b32.xlu0 %v3714, 127
      %v3826 = vpop.permute.xlu0 %3825
      %3827 = vrot.lane.b32.xlu0 %v3519, 127
      %v3828 = vpop.permute.xlu0 %3827
      %3829 = vrot.lane.b32.xlu0 %v3618, 127
      %v3830 = vpop.permute.xlu0 %3829
      %3831 = vrot.lane.b32.xlu0 %v3717, 127
      %v3832 = vpop.permute.xlu0 %3831
      %3833 = vrot.lane.b32.xlu0 %v3521, 127
      %v3834 = vpop.permute.xlu0 %3833
      %3835 = vrot.lane.b32.xlu0 %v3620, 127
      %v3836 = vpop.permute.xlu0 %3835
      %3837 = vrot.lane.b32.xlu0 %v3719, 127
      %v3838 = vpop.permute.xlu0 %3837
      %v3839 = vsel %vm1153, %v3816, %v3818
      %v3840 = vsel %vm1153, %v3818, %v3820
      %v3841 = vsel %vm1153, %v3822, %v3824
      %v3842 = vsel %vm1153, %v3824, %v3826
      %v3843 = vsel %vm1153, %v3828, %v3830
      %v3844 = vsel %vm1153, %v3830, %v3832
      %v3845 = vsel %vm1153, %v3834, %v3836
      %v3846 = vsel %vm1153, %v3836, %v3838
      %v3863 = vsel %vm1153, %v3820, %v3816
      %v3864 = vsel %vm1153, %v3826, %v3822
      %v3865 = vsel %vm1153, %v3832, %v3828
      %v3866 = vsel %vm1153, %v3838, %v3834
      %v3867 = vadd.f32 %v3791, %v3839
      %v3868 = vadd.f32 %v3792, %v3840
      %v3869 = vadd.f32 %v3793, %v3863
      %v3870 = vadd.f32 %v3794, %v3841
      %v3871 = vadd.f32 %v3795, %v3842
      %v3872 = vadd.f32 %v3796, %v3864
      %v3873 = vadd.f32 %v3797, %v3843
      %v3874 = vadd.f32 %v3798, %v3844
      %v3875 = vadd.f32 %v3799, %v3865
      %v3876 = vadd.f32 %v3800, %v3845
      %v3877 = vadd.f32 %v3801, %v3846
      %v3878 = vadd.f32 %v3802, %v3866
      %3891 = vrot.lane.b32.xlu0 %v3524, 126
      %v3892 = vpop.permute.xlu0 %3891
      %3893 = vrot.lane.b32.xlu0 %v3623, 126
      %v3894 = vpop.permute.xlu0 %3893
      %3895 = vrot.lane.b32.xlu0 %v3722, 126
      %v3896 = vpop.permute.xlu0 %3895
      %3897 = vrot.lane.b32.xlu0 %v3526, 126
      %v3898 = vpop.permute.xlu0 %3897
      %3899 = vrot.lane.b32.xlu0 %v3625, 126
      %v3900 = vpop.permute.xlu0 %3899
      %3901 = vrot.lane.b32.xlu0 %v3724, 126
      %v3902 = vpop.permute.xlu0 %3901
      %3903 = vrot.lane.b32.xlu0 %v3529, 126
      %v3904 = vpop.permute.xlu0 %3903
      %3905 = vrot.lane.b32.xlu0 %v3628, 126
      %v3906 = vpop.permute.xlu0 %3905
      %3907 = vrot.lane.b32.xlu0 %v3727, 126
      %v3908 = vpop.permute.xlu0 %3907
      %3909 = vrot.lane.b32.xlu0 %v3531, 126
      %v3910 = vpop.permute.xlu0 %3909
      %3911 = vrot.lane.b32.xlu0 %v3630, 126
      %v3912 = vpop.permute.xlu0 %3911
      %3913 = vrot.lane.b32.xlu0 %v3729, 126
      %v3914 = vpop.permute.xlu0 %3913
      %v3915 = vsel %vm1230, %v3892, %v3894
      %v3916 = vsel %vm1230, %v3894, %v3896
      %v3917 = vsel %vm1230, %v3898, %v3900
      %v3918 = vsel %vm1230, %v3900, %v3902
      %v3919 = vsel %vm1230, %v3904, %v3906
      %v3920 = vsel %vm1230, %v3906, %v3908
      %v3921 = vsel %vm1230, %v3910, %v3912
      %v3922 = vsel %vm1230, %v3912, %v3914
      %v3939 = vsel %vm1230, %v3896, %v3892
      %v3940 = vsel %vm1230, %v3902, %v3898
      %v3941 = vsel %vm1230, %v3908, %v3904
      %v3942 = vsel %vm1230, %v3914, %v3910
      %v3943 = vadd.f32 %v3867, %v3915
      %v3944 = vadd.f32 %v3868, %v3916
      %v3945 = vadd.f32 %v3869, %v3939
      %v3946 = vadd.f32 %v3870, %v3917
      %v3947 = vadd.f32 %v3871, %v3918
      %v3948 = vadd.f32 %v3872, %v3940
      %v3949 = vadd.f32 %v3873, %v3919
      %v3950 = vadd.f32 %v3874, %v3920
      %v3951 = vadd.f32 %v3875, %v3941
      %v3952 = vadd.f32 %v3876, %v3921
      %v3953 = vadd.f32 %v3877, %v3922
      %v3954 = vadd.f32 %v3878, %v3942
      %3967 = vrot.lane.b32.xlu0 %v3534, 125
      %v3968 = vpop.permute.xlu0 %3967
      %3969 = vrot.lane.b32.xlu0 %v3633, 125
      %v3970 = vpop.permute.xlu0 %3969
      %3971 = vrot.lane.b32.xlu0 %v3732, 125
      %v3972 = vpop.permute.xlu0 %3971
      %3973 = vrot.lane.b32.xlu0 %v3536, 125
      %v3974 = vpop.permute.xlu0 %3973
      %3975 = vrot.lane.b32.xlu0 %v3635, 125
      %v3976 = vpop.permute.xlu0 %3975
      %3977 = vrot.lane.b32.xlu0 %v3734, 125
      %v3978 = vpop.permute.xlu0 %3977
      %3979 = vrot.lane.b32.xlu0 %v3539, 125
      %v3980 = vpop.permute.xlu0 %3979
      %3981 = vrot.lane.b32.xlu0 %v3638, 125
      %v3982 = vpop.permute.xlu0 %3981
      %3983 = vrot.lane.b32.xlu0 %v3737, 125
      %v3984 = vpop.permute.xlu0 %3983
      %3985 = vrot.lane.b32.xlu0 %v3541, 125
      %v3986 = vpop.permute.xlu0 %3985
      %3987 = vrot.lane.b32.xlu0 %v3640, 125
      %v3988 = vpop.permute.xlu0 %3987
      %3989 = vrot.lane.b32.xlu0 %v3739, 125
      %v3990 = vpop.permute.xlu0 %3989
      %v3991 = vsel %vm1307, %v3968, %v3970
      %v3992 = vsel %vm1307, %v3970, %v3972
      %v3993 = vsel %vm1307, %v3974, %v3976
      %v3994 = vsel %vm1307, %v3976, %v3978
      %v3995 = vsel %vm1307, %v3980, %v3982
      %v3996 = vsel %vm1307, %v3982, %v3984
      %v3997 = vsel %vm1307, %v3986, %v3988
      %v3998 = vsel %vm1307, %v3988, %v3990
      %v4015 = vsel %vm1307, %v3972, %v3968
      %v4016 = vsel %vm1307, %v3978, %v3974
      %v4017 = vsel %vm1307, %v3984, %v3980
      %v4018 = vsel %vm1307, %v3990, %v3986
      %v4019 = vadd.f32 %v3943, %v3991
      %v4020 = vadd.f32 %v3944, %v3992
      %v4021 = vadd.f32 %v3945, %v4015
      %v4022 = vadd.f32 %v3946, %v3993
      %v4023 = vadd.f32 %v3947, %v3994
      %v4024 = vadd.f32 %v3948, %v4016
      %v4025 = vadd.f32 %v3949, %v3995
      %v4026 = vadd.f32 %v3950, %v3996
      %v4027 = vadd.f32 %v3951, %v4017
      %v4028 = vadd.f32 %v3952, %v3997
      %v4029 = vadd.f32 %v3953, %v3998
      %v4030 = vadd.f32 %v3954, %v4018
      %4043 = vrot.lane.b32.xlu0 %v3544, 124
      %v4044 = vpop.permute.xlu0 %4043
      %4045 = vrot.lane.b32.xlu0 %v3643, 124
      %v4046 = vpop.permute.xlu0 %4045
      %4047 = vrot.lane.b32.xlu0 %v3742, 124
      %v4048 = vpop.permute.xlu0 %4047
      %4049 = vrot.lane.b32.xlu0 %v3546, 124
      %v4050 = vpop.permute.xlu0 %4049
      %4051 = vrot.lane.b32.xlu0 %v3645, 124
      %v4052 = vpop.permute.xlu0 %4051
      %4053 = vrot.lane.b32.xlu0 %v3744, 124
      %v4054 = vpop.permute.xlu0 %4053
      %4055 = vrot.lane.b32.xlu0 %v3549, 124
      %v4056 = vpop.permute.xlu0 %4055
      %4057 = vrot.lane.b32.xlu0 %v3648, 124
      %v4058 = vpop.permute.xlu0 %4057
      %4059 = vrot.lane.b32.xlu0 %v3747, 124
      %v4060 = vpop.permute.xlu0 %4059
      %4061 = vrot.lane.b32.xlu0 %v3551, 124
      %v4062 = vpop.permute.xlu0 %4061
      %4063 = vrot.lane.b32.xlu0 %v3650, 124
      %v4064 = vpop.permute.xlu0 %4063
      %4065 = vrot.lane.b32.xlu0 %v3749, 124
      %v4066 = vpop.permute.xlu0 %4065
      %v4067 = vsel %vm1384, %v4044, %v4046
      %v4068 = vsel %vm1384, %v4046, %v4048
      %v4069 = vsel %vm1384, %v4050, %v4052
      %v4070 = vsel %vm1384, %v4052, %v4054
      %v4071 = vsel %vm1384, %v4056, %v4058
      %v4072 = vsel %vm1384, %v4058, %v4060
      %v4073 = vsel %vm1384, %v4062, %v4064
      %v4074 = vsel %vm1384, %v4064, %v4066
      %v4091 = vsel %vm1384, %v4048, %v4044
      %v4092 = vsel %vm1384, %v4054, %v4050
      %v4093 = vsel %vm1384, %v4060, %v4056
      %v4094 = vsel %vm1384, %v4066, %v4062
      %v4095 = vadd.f32 %v4019, %v4067
      %v4096 = vadd.f32 %v4020, %v4068
      %v4097 = vadd.f32 %v4021, %v4091
      %v4098 = vadd.f32 %v4022, %v4069
      %v4099 = vadd.f32 %v4023, %v4070
      %v4100 = vadd.f32 %v4024, %v4092
      %v4101 = vadd.f32 %v4025, %v4071
      %v4102 = vadd.f32 %v4026, %v4072
      %v4103 = vadd.f32 %v4027, %v4093
      %v4104 = vadd.f32 %v4028, %v4073
      %v4105 = vadd.f32 %v4029, %v4074
      %v4106 = vadd.f32 %v4030, %v4094
      %4119 = vrot.lane.b32.xlu0 %v3554, 123
      %v4120 = vpop.permute.xlu0 %4119
      %4121 = vrot.lane.b32.xlu0 %v3653, 123
      %v4122 = vpop.permute.xlu0 %4121
      %4123 = vrot.lane.b32.xlu0 %v3752, 123
      %v4124 = vpop.permute.xlu0 %4123
      %4125 = vrot.lane.b32.xlu0 %v3556, 123
      %v4126 = vpop.permute.xlu0 %4125
      %4127 = vrot.lane.b32.xlu0 %v3655, 123
      %v4128 = vpop.permute.xlu0 %4127
      %4129 = vrot.lane.b32.xlu0 %v3754, 123
      %v4130 = vpop.permute.xlu0 %4129
      %4131 = vrot.lane.b32.xlu0 %v3559, 123
      %v4132 = vpop.permute.xlu0 %4131
      %4133 = vrot.lane.b32.xlu0 %v3658, 123
      %v4134 = vpop.permute.xlu0 %4133
      %4135 = vrot.lane.b32.xlu0 %v3757, 123
      %v4136 = vpop.permute.xlu0 %4135
      %4137 = vrot.lane.b32.xlu0 %v3561, 123
      %v4138 = vpop.permute.xlu0 %4137
      %4139 = vrot.lane.b32.xlu0 %v3660, 123
      %v4140 = vpop.permute.xlu0 %4139
      %4141 = vrot.lane.b32.xlu0 %v3759, 123
      %v4142 = vpop.permute.xlu0 %4141
      %v4143 = vsel %vm1461, %v4120, %v4122
      %v4144 = vsel %vm1461, %v4122, %v4124
      %v4145 = vsel %vm1461, %v4126, %v4128
      %v4146 = vsel %vm1461, %v4128, %v4130
      %v4147 = vsel %vm1461, %v4132, %v4134
      %v4148 = vsel %vm1461, %v4134, %v4136
      %v4149 = vsel %vm1461, %v4138, %v4140
      %v4150 = vsel %vm1461, %v4140, %v4142
      %v4167 = vsel %vm1461, %v4124, %v4120
      %v4168 = vsel %vm1461, %v4130, %v4126
      %v4169 = vsel %vm1461, %v4136, %v4132
      %v4170 = vsel %vm1461, %v4142, %v4138
      %v4171 = vadd.f32 %v4095, %v4143
      %v4172 = vadd.f32 %v4096, %v4144
      %v4173 = vadd.f32 %v4097, %v4167
      %v4174 = vadd.f32 %v4098, %v4145
      %v4175 = vadd.f32 %v4099, %v4146
      %v4176 = vadd.f32 %v4100, %v4168
      %v4177 = vadd.f32 %v4101, %v4147
      %v4178 = vadd.f32 %v4102, %v4148
      %v4179 = vadd.f32 %v4103, %v4169
      %v4180 = vadd.f32 %v4104, %v4149
      %v4181 = vadd.f32 %v4105, %v4150
      %v4182 = vadd.f32 %v4106, %v4170
      %4195 = vrot.lane.b32.xlu0 %v3564, 122
      %v4196 = vpop.permute.xlu0 %4195
      %4197 = vrot.lane.b32.xlu0 %v3663, 122
      %v4198 = vpop.permute.xlu0 %4197
      %4199 = vrot.lane.b32.xlu0 %v3762, 122
      %v4200 = vpop.permute.xlu0 %4199
      %4201 = vrot.lane.b32.xlu0 %v3566, 122
      %v4202 = vpop.permute.xlu0 %4201
      %4203 = vrot.lane.b32.xlu0 %v3665, 122
      %v4204 = vpop.permute.xlu0 %4203
      %4205 = vrot.lane.b32.xlu0 %v3764, 122
      %v4206 = vpop.permute.xlu0 %4205
      %4207 = vrot.lane.b32.xlu0 %v3569, 122
      %v4208 = vpop.permute.xlu0 %4207
      %4209 = vrot.lane.b32.xlu0 %v3668, 122
      %v4210 = vpop.permute.xlu0 %4209
      %4211 = vrot.lane.b32.xlu0 %v3767, 122
      %v4212 = vpop.permute.xlu0 %4211
      %4213 = vrot.lane.b32.xlu0 %v3571, 122
      %v4214 = vpop.permute.xlu0 %4213
      %4215 = vrot.lane.b32.xlu0 %v3670, 122
      %v4216 = vpop.permute.xlu0 %4215
      %4217 = vrot.lane.b32.xlu0 %v3769, 122
      %v4218 = vpop.permute.xlu0 %4217
      %v4219 = vsel %vm1538, %v4196, %v4198
      %v4220 = vsel %vm1538, %v4198, %v4200
      %v4221 = vsel %vm1538, %v4202, %v4204
      %v4222 = vsel %vm1538, %v4204, %v4206
      %v4223 = vsel %vm1538, %v4208, %v4210
      %v4224 = vsel %vm1538, %v4210, %v4212
      %v4225 = vsel %vm1538, %v4214, %v4216
      %v4226 = vsel %vm1538, %v4216, %v4218
      %v4243 = vsel %vm1538, %v4200, %v4196
      %v4244 = vsel %vm1538, %v4206, %v4202
      %v4245 = vsel %vm1538, %v4212, %v4208
      %v4246 = vsel %vm1538, %v4218, %v4214
      %v4247 = vadd.f32 %v4171, %v4219
      %v4248 = vadd.f32 %v4172, %v4220
      %v4249 = vadd.f32 %v4173, %v4243
      %v4250 = vadd.f32 %v4174, %v4221
      %v4251 = vadd.f32 %v4175, %v4222
      %v4252 = vadd.f32 %v4176, %v4244
      %v4253 = vadd.f32 %v4177, %v4223
      %v4254 = vadd.f32 %v4178, %v4224
      %v4255 = vadd.f32 %v4179, %v4245
      %v4256 = vadd.f32 %v4180, %v4225
      %v4257 = vadd.f32 %v4181, %v4226
      %v4258 = vadd.f32 %v4182, %v4246
      %4271 = vrot.lane.b32.xlu0 %v3574, 121
      %v4272 = vpop.permute.xlu0 %4271
      %4273 = vrot.lane.b32.xlu0 %v3673, 121
      %v4274 = vpop.permute.xlu0 %4273
      %4275 = vrot.lane.b32.xlu0 %v3772, 121
      %v4276 = vpop.permute.xlu0 %4275
      %4277 = vrot.lane.b32.xlu0 %v3576, 121
      %v4278 = vpop.permute.xlu0 %4277
      %4279 = vrot.lane.b32.xlu0 %v3675, 121
      %v4280 = vpop.permute.xlu0 %4279
      %4281 = vrot.lane.b32.xlu0 %v3774, 121
      %v4282 = vpop.permute.xlu0 %4281
      %4283 = vrot.lane.b32.xlu0 %v3579, 121
      %v4284 = vpop.permute.xlu0 %4283
      %4285 = vrot.lane.b32.xlu0 %v3678, 121
      %v4286 = vpop.permute.xlu0 %4285
      %4287 = vrot.lane.b32.xlu0 %v3777, 121
      %v4288 = vpop.permute.xlu0 %4287
      %4289 = vrot.lane.b32.xlu0 %v3581, 121
      %v4290 = vpop.permute.xlu0 %4289
      %4291 = vrot.lane.b32.xlu0 %v3680, 121
      %v4292 = vpop.permute.xlu0 %4291
      %4293 = vrot.lane.b32.xlu0 %v3779, 121
      %v4294 = vpop.permute.xlu0 %4293
      %v4295 = vsel %vm1615, %v4272, %v4274
      %v4296 = vsel %vm1615, %v4274, %v4276
      %v4297 = vsel %vm1615, %v4278, %v4280
      %v4298 = vsel %vm1615, %v4280, %v4282
      %v4299 = vsel %vm1615, %v4284, %v4286
      %v4300 = vsel %vm1615, %v4286, %v4288
      %v4301 = vsel %vm1615, %v4290, %v4292
      %v4302 = vsel %vm1615, %v4292, %v4294
      %v4319 = vsel %vm1615, %v4276, %v4272
      %v4320 = vsel %vm1615, %v4282, %v4278
      %v4321 = vsel %vm1615, %v4288, %v4284
      %v4322 = vsel %vm1615, %v4294, %v4290
      %v4323 = vadd.f32 %v4247, %v4295
      %v4324 = vadd.f32 %v4248, %v4296
      %v4325 = vadd.f32 %v4249, %v4319
      %v4326 = vadd.f32 %v4250, %v4297
      %v4327 = vadd.f32 %v4251, %v4298
      %v4328 = vadd.f32 %v4252, %v4320
      %v4329 = vadd.f32 %v4253, %v4299
      %v4330 = vadd.f32 %v4254, %v4300
      %v4331 = vadd.f32 %v4255, %v4321
      %v4332 = vadd.f32 %v4256, %v4301
      %v4333 = vadd.f32 %v4257, %v4302
      %v4334 = vadd.f32 %v4258, %v4322
      %4347 = vrot.lane.b32.xlu0 %v3584, 120
      %v4348 = vpop.permute.xlu0 %4347
      %4349 = vrot.lane.b32.xlu0 %v3683, 120
      %v4350 = vpop.permute.xlu0 %4349
      %4351 = vrot.lane.b32.xlu0 %v3782, 120
      %v4352 = vpop.permute.xlu0 %4351
      %4353 = vrot.lane.b32.xlu0 %v3586, 120
      %v4354 = vpop.permute.xlu0 %4353
      %4355 = vrot.lane.b32.xlu0 %v3685, 120
      %v4356 = vpop.permute.xlu0 %4355
      %4357 = vrot.lane.b32.xlu0 %v3784, 120
      %v4358 = vpop.permute.xlu0 %4357
      %4359 = vrot.lane.b32.xlu0 %v3589, 120
      %v4360 = vpop.permute.xlu0 %4359
      %4361 = vrot.lane.b32.xlu0 %v3688, 120
      %v4362 = vpop.permute.xlu0 %4361
      %4363 = vrot.lane.b32.xlu0 %v3787, 120
      %v4364 = vpop.permute.xlu0 %4363
      %4365 = vrot.lane.b32.xlu0 %v3591, 120
      %v4366 = vpop.permute.xlu0 %4365
      %4367 = vrot.lane.b32.xlu0 %v3690, 120
      %v4368 = vpop.permute.xlu0 %4367
      %4369 = vrot.lane.b32.xlu0 %v3789, 120
      %v4370 = vpop.permute.xlu0 %4369
      %v4371 = vsel %vm1692, %v4348, %v4350
      %v4372 = vsel %vm1692, %v4350, %v4352
      %v4373 = vsel %vm1692, %v4354, %v4356
      %v4374 = vsel %vm1692, %v4356, %v4358
      %v4375 = vsel %vm1692, %v4360, %v4362
      %v4376 = vsel %vm1692, %v4362, %v4364
      %v4377 = vsel %vm1692, %v4366, %v4368
      %v4378 = vsel %vm1692, %v4368, %v4370
      %v4395 = vsel %vm1692, %v4352, %v4348
      %v4396 = vsel %vm1692, %v4358, %v4354
      %v4397 = vsel %vm1692, %v4364, %v4360
      %v4398 = vsel %vm1692, %v4370, %v4366
      %v4399 = vadd.f32 %v4323, %v4371
      %v4400 = vadd.f32 %v4324, %v4372
      %v4401 = vadd.f32 %v4325, %v4395
      %v4402 = vadd.f32 %v4326, %v4373
      %v4403 = vadd.f32 %v4327, %v4374
      %v4404 = vadd.f32 %v4328, %v4396
      %v4405 = vadd.f32 %v4329, %v4375
      %v4406 = vadd.f32 %v4330, %v4376
      %v4407 = vadd.f32 %v4331, %v4397
      %v4408 = vadd.f32 %v4332, %v4377
      %v4409 = vadd.f32 %v4333, %v4378
      %v4410 = vadd.f32 %v4334, %v4398
      %s4411 = scalar_lea.vmem %s345, 36
      %v4412 = vld [vmem:[%s4411] sm:$0xf]
      %v4413 = vld [vmem:[%s4411 + $0x4] sm:$0xf]
      %v4414 = vld [vmem:[%s4411 + $0x8] sm:$0xf]
      %v4415 = vld [vmem:[%s4411 + $0xc] sm:$0xf]
      %v4416 = vld [vmem:[%s4411 + $0x10] sm:$0xf]
      %v4417 = vld [vmem:[%s4411 + $0x14] sm:$0xf]
      %v4418 = vld [vmem:[%s4411 + $0x18] sm:$0xf]
      %v4419 = vld [vmem:[%s4411 + $0x1c] sm:$0xf]
      %v4420 = vld [vmem:[%s4411 + $0x20] sm:$0xf]
      %v4421 = vld [vmem:[%s4411 + $0x24] sm:$0xf]
      %v4422 = vld [vmem:[%s4411 + $0x28] sm:$0xf]
      %v4423 = vld [vmem:[%s4411 + $0x2c] sm:$0xf]
      %v4424 = vld [vmem:[%s4411 + $0x30] sm:$0xf]
      %v4425 = vld [vmem:[%s4411 + $0x34] sm:$0xf]
      %v4426 = vld [vmem:[%s4411 + $0x38] sm:$0xf]
      %v4427 = vld [vmem:[%s4411 + $0x3c] sm:$0xf]
      %v4428 = vld [vmem:[%s4411 + $0x40] sm:$0xf]
      %v4429 = vld [vmem:[%s4411 + $0x44] sm:$0xf]
      %v4430 = vld [vmem:[%s4411 + $0x48] sm:$0xf]
      %v4431 = vld [vmem:[%s4411 + $0x4c] sm:$0xf]
      %v4432 = vld [vmem:[%s4411 + $0x50] sm:$0xf]
      %v4433 = vld [vmem:[%s4411 + $0x54] sm:$0xf]
      %v4434 = vld [vmem:[%s4411 + $0x58] sm:$0xf]
      %v4435 = vld [vmem:[%s4411 + $0x5c] sm:$0xf]
      %v4436 = vld [vmem:[%s4411 + $0x60] sm:$0xf]
      %v4437 = vld [vmem:[%s4411 + $0x64] sm:$0xf]
      %v4438 = vld [vmem:[%s4411 + $0x68] sm:$0xf]
      %v4439 = vld [vmem:[%s4411 + $0x6c] sm:$0xf]
      %v4440 = vld [vmem:[%s4411 + $0x70] sm:$0xf]
      %v4441 = vld [vmem:[%s4411 + $0x74] sm:$0xf]
      %v4442 = vld [vmem:[%s4411 + $0x78] sm:$0xf]
      %v4443 = vld [vmem:[%s4411 + $0x7c] sm:$0xf]
      %v4444 = vld [vmem:[%s4411 + $0x80] sm:$0xf]
      %v4445 = vld [vmem:[%s4411 + $0x84] sm:$0xf]
      %v4446 = vld [vmem:[%s4411 + $0x88] sm:$0xf]
      %v4447 = vld [vmem:[%s4411 + $0x8c] sm:$0xf]
      %v4448 = vld [vmem:[%s4411 + $0x90] sm:$0xf]
      %v4449 = vld [vmem:[%s4411 + $0x94] sm:$0xf]
      %v4450 = vld [vmem:[%s4411 + $0x98] sm:$0xf]
      %v4451 = vld [vmem:[%s4411 + $0x9c] sm:$0xf]
      %v4452 = vld [vmem:[%s4411 + $0xa0] sm:$0xf]
      %v4453 = vld [vmem:[%s4411 + $0xa4] sm:$0xf]
      %v4454 = vld [vmem:[%s4411 + $0xa8] sm:$0xf]
      %v4455 = vld [vmem:[%s4411 + $0xac] sm:$0xf]
      %v4456 = vld [vmem:[%s4411 + $0xb0] sm:$0xf]
      %v4457 = vld [vmem:[%s4411 + $0xb4] sm:$0xf]
      %v4458 = vld [vmem:[%s4411 + $0xb8] sm:$0xf]
      %v4459 = vld [vmem:[%s4411 + $0xbc] sm:$0xf]
      %s4460 = scalar_lea.vmem %s350, 432
      %v4461 = vld [vmem:[%s4460] sm:$0xf]
      %v4462 = vld [vmem:[%s4460 + $0x4] sm:$0xf]
      %v4463 = vld [vmem:[%s4460 + $0x8] sm:$0xf]
      %v4464 = vld [vmem:[%s4460 + $0xc] sm:$0xf]
      %v4465 = vld [vmem:[%s4460 + $0x10] sm:$0xf]
      %v4466 = vld [vmem:[%s4460 + $0x14] sm:$0xf]
      %v4467 = vld [vmem:[%s4460 + $0x18] sm:$0xf]
      %v4468 = vld [vmem:[%s4460 + $0x1c] sm:$0xf]
      %v4469 = vld [vmem:[%s4460 + $0x20] sm:$0xf]
      %v4470 = vld [vmem:[%s4460 + $0x24] sm:$0xf]
      %v4471 = vld [vmem:[%s4460 + $0x28] sm:$0xf]
      %v4472 = vld [vmem:[%s4460 + $0x2c] sm:$0xf]
      %v4473 = vld [vmem:[%s4460 + $0x30] sm:$0xf]
      %v4474 = vld [vmem:[%s4460 + $0x34] sm:$0xf]
      %v4475 = vld [vmem:[%s4460 + $0x38] sm:$0xf]
      %v4476 = vld [vmem:[%s4460 + $0x3c] sm:$0xf]
      %v4477 = vld [vmem:[%s4460 + $0x40] sm:$0xf]
      %v4478 = vld [vmem:[%s4460 + $0x44] sm:$0xf]
      %v4479 = vld [vmem:[%s4460 + $0x48] sm:$0xf]
      %v4480 = vld [vmem:[%s4460 + $0x4c] sm:$0xf]
      %v4481 = vld [vmem:[%s4460 + $0x50] sm:$0xf]
      %v4482 = vld [vmem:[%s4460 + $0x54] sm:$0xf]
      %v4483 = vld [vmem:[%s4460 + $0x58] sm:$0xf]
      %v4484 = vld [vmem:[%s4460 + $0x5c] sm:$0xf]
      %v4485 = vld [vmem:[%s4460 + $0x60] sm:$0xf]
      %v4486 = vld [vmem:[%s4460 + $0x64] sm:$0xf]
      %v4487 = vld [vmem:[%s4460 + $0x68] sm:$0xf]
      %v4488 = vld [vmem:[%s4460 + $0x6c] sm:$0xf]
      %v4489 = vld [vmem:[%s4460 + $0x70] sm:$0xf]
      %v4490 = vld [vmem:[%s4460 + $0x74] sm:$0xf]
      %v4491 = vld [vmem:[%s4460 + $0x78] sm:$0xf]
      %v4492 = vld [vmem:[%s4460 + $0x7c] sm:$0xf]
      %v4493 = vld [vmem:[%s4460 + $0x80] sm:$0xf]
      %v4494 = vld [vmem:[%s4460 + $0x84] sm:$0xf]
      %v4495 = vld [vmem:[%s4460 + $0x88] sm:$0xf]
      %v4496 = vld [vmem:[%s4460 + $0x8c] sm:$0xf]
      %v4533 = vunpack.c.l.b16 %v4461
      %v4534 = vunpack.c.l.b16 %v4462
      %v4535 = vunpack.c.l.b16 %v4463
      %v4536 = vunpack.c.l.b16 %v4464
      %v4537 = vunpack.c.l.b16 %v4465
      %v4538 = vunpack.c.l.b16 %v4466
      %v4539 = vunpack.c.l.b16 %v4467
      %v4540 = vunpack.c.l.b16 %v4468
      %v4541 = vunpack.c.l.b16 %v4469
      %v4542 = vunpack.c.l.b16 %v4470
      %v4543 = vunpack.c.l.b16 %v4471
      %v4544 = vunpack.c.l.b16 %v4472
      %v4545 = vunpack.c.l.b16 %v4473
      %v4546 = vunpack.c.l.b16 %v4474
      %v4547 = vunpack.c.l.b16 %v4475
      %v4548 = vunpack.c.l.b16 %v4476
      %v4549 = vunpack.c.l.b16 %v4477
      %v4550 = vunpack.c.l.b16 %v4478
      %v4551 = vunpack.c.l.b16 %v4479
      %v4552 = vunpack.c.l.b16 %v4480
      %v4553 = vunpack.c.l.b16 %v4481
      %v4554 = vunpack.c.l.b16 %v4482
      %v4555 = vunpack.c.l.b16 %v4483
      %v4556 = vunpack.c.l.b16 %v4484
      %v4557 = vunpack.c.l.b16 %v4485
      %v4558 = vunpack.c.l.b16 %v4486
      %v4559 = vunpack.c.l.b16 %v4487
      %v4560 = vunpack.c.l.b16 %v4488
      %v4561 = vunpack.c.l.b16 %v4489
      %v4562 = vunpack.c.l.b16 %v4490
      %v4563 = vunpack.c.l.b16 %v4491
      %v4564 = vunpack.c.l.b16 %v4492
      %v4565 = vunpack.c.l.b16 %v4493
      %v4566 = vunpack.c.l.b16 %v4494
      %v4567 = vunpack.c.l.b16 %v4495
      %v4568 = vunpack.c.l.b16 %v4496
      %v4569 = vpack.c.b16 %v4534, %v4533
      %v4570 = vpack.c.b16 %v4536, %v4535
      %v4571 = vpack.c.b16 %v4538, %v4537
      %v4572 = vpack.c.b16 %v4540, %v4539
      %v4573 = vpack.c.b16 %v4542, %v4541
      %v4574 = vpack.c.b16 %v4544, %v4543
      %v4575 = vpack.c.b16 %v4546, %v4545
      %v4576 = vpack.c.b16 %v4548, %v4547
      %v4577 = vpack.c.b16 %v4550, %v4549
      %v4578 = vpack.c.b16 %v4552, %v4551
      %v4579 = vpack.c.b16 %v4554, %v4553
      %v4580 = vpack.c.b16 %v4556, %v4555
      %v4581 = vpack.c.b16 %v4558, %v4557
      %v4582 = vpack.c.b16 %v4560, %v4559
      %v4583 = vpack.c.b16 %v4562, %v4561
      %v4584 = vpack.c.b16 %v4564, %v4563
      %v4585 = vpack.c.b16 %v4566, %v4565
      %v4586 = vpack.c.b16 %v4568, %v4567
      %v4635 = vunpack.c.l.b16 %v4412
      %v4636 = vunpack.c.l.b16 %v4413
      %v4637 = vunpack.c.l.b16 %v4414
      %v4638 = vunpack.c.l.b16 %v4415
      %v4639 = vunpack.c.l.b16 %v4416
      %v4640 = vunpack.c.l.b16 %v4417
      %v4641 = vunpack.c.l.b16 %v4418
      %v4642 = vunpack.c.l.b16 %v4419
      %v4643 = vunpack.c.l.b16 %v4420
      %v4644 = vunpack.c.l.b16 %v4421
      %v4645 = vunpack.c.l.b16 %v4422
      %v4646 = vunpack.c.l.b16 %v4423
      %v4647 = vunpack.c.l.b16 %v4424
      %v4648 = vunpack.c.l.b16 %v4425
      %v4649 = vunpack.c.l.b16 %v4426
      %v4650 = vunpack.c.l.b16 %v4427
      %v4651 = vunpack.c.l.b16 %v4428
      %v4652 = vunpack.c.l.b16 %v4429
      %v4653 = vunpack.c.l.b16 %v4430
      %v4654 = vunpack.c.l.b16 %v4431
      %v4655 = vunpack.c.l.b16 %v4432
      %v4656 = vunpack.c.l.b16 %v4433
      %v4657 = vunpack.c.l.b16 %v4434
      %v4658 = vunpack.c.l.b16 %v4435
      %v4659 = vunpack.c.l.b16 %v4436
      %v4660 = vunpack.c.l.b16 %v4437
      %v4661 = vunpack.c.l.b16 %v4438
      %v4662 = vunpack.c.l.b16 %v4439
      %v4663 = vunpack.c.l.b16 %v4440
      %v4664 = vunpack.c.l.b16 %v4441
      %v4665 = vunpack.c.l.b16 %v4442
      %v4666 = vunpack.c.l.b16 %v4443
      %v4667 = vunpack.c.l.b16 %v4444
      %v4668 = vunpack.c.l.b16 %v4445
      %v4669 = vunpack.c.l.b16 %v4446
      %v4670 = vunpack.c.l.b16 %v4447
      %v4671 = vunpack.c.l.b16 %v4448
      %v4672 = vunpack.c.l.b16 %v4449
      %v4673 = vunpack.c.l.b16 %v4450
      %v4674 = vunpack.c.l.b16 %v4451
      %v4675 = vunpack.c.l.b16 %v4452
      %v4676 = vunpack.c.l.b16 %v4453
      %v4677 = vunpack.c.l.b16 %v4454
      %v4678 = vunpack.c.l.b16 %v4455
      %v4679 = vunpack.c.l.b16 %v4456
      %v4680 = vunpack.c.l.b16 %v4457
      %v4681 = vunpack.c.l.b16 %v4458
      %v4682 = vunpack.c.l.b16 %v4459
      %v4683 = vpack.c.b16 %v4636, %v4635
      %v4684 = vpack.c.b16 %v4638, %v4637
      %v4685 = vpack.c.b16 %v4640, %v4639
      %v4686 = vpack.c.b16 %v4642, %v4641
      %v4687 = vpack.c.b16 %v4644, %v4643
      %v4688 = vpack.c.b16 %v4646, %v4645
      %v4689 = vpack.c.b16 %v4648, %v4647
      %v4690 = vpack.c.b16 %v4650, %v4649
      %v4691 = vpack.c.b16 %v4652, %v4651
      %v4692 = vpack.c.b16 %v4654, %v4653
      %v4693 = vpack.c.b16 %v4656, %v4655
      %v4694 = vpack.c.b16 %v4658, %v4657
      %v4695 = vpack.c.b16 %v4660, %v4659
      %v4696 = vpack.c.b16 %v4662, %v4661
      %v4697 = vpack.c.b16 %v4664, %v4663
      %v4698 = vpack.c.b16 %v4666, %v4665
      %v4699 = vpack.c.b16 %v4668, %v4667
      %v4700 = vpack.c.b16 %v4670, %v4669
      %v4701 = vpack.c.b16 %v4672, %v4671
      %v4702 = vpack.c.b16 %v4674, %v4673
      %v4703 = vpack.c.b16 %v4676, %v4675
      %v4704 = vpack.c.b16 %v4678, %v4677
      %v4705 = vpack.c.b16 %v4680, %v4679
      %v4706 = vpack.c.b16 %v4682, %v4681
      %v4708 = vsel %vm681, %v4569, 0
      %v4711 = vsel %vm681, %v4570, 0
      %v4714 = vsel %vm681, %v4571, 0
      %v4717 = vsel %vm681, %v4572, 0
      %v4720 = vsel %vm681, %v4573, 0
      %v4723 = vsel %vm681, %v4574, 0
      %v4726 = vsel %vm681, %v4575, 0
      %v4729 = vsel %vm681, %v4576, 0
      %v4732 = vsel %vm681, %v4577, 0
      %v4735 = vsel %vm681, %v4578, 0
      %v4738 = vsel %vm681, %v4579, 0
      %v4741 = vsel %vm681, %v4580, 0
      %v4744 = vsel %vm681, %v4581, 0
      %v4747 = vsel %vm681, %v4582, 0
      %v4750 = vsel %vm681, %v4583, 0
      %v4753 = vsel %vm681, %v4584, 0
      %v4756 = vsel %vm681, %v4585, 0
      %v4759 = vsel %vm681, %v4586, 0
      %v4762 = vsel %vm681, %v4683, 0
      %v4765 = vsel %vm681, %v4684, 0
      %v4768 = vsel %vm681, %v4685, 0
      %v4771 = vsel %vm681, %v4686, 0
      %v4774 = vsel %vm681, %v4687, 0
      %v4777 = vsel %vm681, %v4688, 0
      %v4780 = vsel %vm681, %v4689, 0
      %v4783 = vsel %vm681, %v4690, 0
      %v4786 = vsel %vm681, %v4691, 0
      %v4789 = vsel %vm681, %v4692, 0
      %v4792 = vsel %vm681, %v4693, 0
      %v4795 = vsel %vm681, %v4694, 0
      %v4798 = vsel %vm681, %v4695, 0
      %v4801 = vsel %vm681, %v4696, 0
      %v4804 = vsel %vm681, %v4697, 0
      %v4807 = vsel %vm681, %v4698, 0
      %v4810 = vsel %vm681, %v4699, 0
      %v4813 = vsel %vm681, %v4700, 0
      %v4816 = vsel %vm681, %v4701, 0
      %v4819 = vsel %vm681, %v4702, 0
      %v4822 = vsel %vm681, %v4703, 0
      %v4825 = vsel %vm681, %v4704, 0
      %v4828 = vsel %vm681, %v4705, 0
      %v4831 = vsel %vm681, %v4706, 0
      %4833 = vmatpush.bf16.xpose.msra.mxu0 %v4783
      %4834 = vmatpush.bf16.xpose.msra.mxu0 %v4780
      %4835 = vmatpush.bf16.xpose.msra.mxu0 %v4777
      %4836 = vmatpush.bf16.xpose.msra.mxu0 %v4774
      %4837 = vmatpush.bf16.xpose.msra.mxu0 %v4771
      %4838 = vmatpush.bf16.xpose.msra.mxu0 %v4768
      %4839 = vmatpush.bf16.xpose.msra.mxu0 %v4765
      %4840 = vmatpush.bf16.xpose.msra.mxu0 %v4762
      %4841 = vmatmul.bf16.gmra.mxu0 %v4708
      %v4842 = vpop.f32.mrf.mxu0
      %v4843 = vadd.f32 0.0, %v4842
      %v4844 = vpop.f32.mrf.mxu0
      %v4845 = vadd.f32 0.0, %v4844
      %4846 = vmatmul.bf16.gmra.mxu0 %v4711
      %v4847 = vpop.f32.mrf.mxu0
      %v4848 = vadd.f32 0.0, %v4847
      %v4849 = vpop.f32.mrf.mxu0
      %v4850 = vadd.f32 0.0, %v4849
      %4851 = vmatmul.bf16.gmra.mxu0 %v4714
      %v4852 = vpop.f32.mrf.mxu0
      %v4853 = vadd.f32 0.0, %v4852
      %v4854 = vpop.f32.mrf.mxu0
      %v4855 = vadd.f32 0.0, %v4854
      %4856 = vmatmul.bf16.gmra.mxu0 %v4717
      %v4857 = vpop.f32.mrf.mxu0
      %v4858 = vadd.f32 0.0, %v4857
      %v4859 = vpop.f32.mrf.mxu0
      %v4860 = vadd.f32 0.0, %v4859
      %4861 = vmatmul.bf16.gmra.mxu0 %v4720
      %v4862 = vpop.f32.mrf.mxu0
      %v4863 = vadd.f32 0.0, %v4862
      %v4864 = vpop.f32.mrf.mxu0
      %v4865 = vadd.f32 0.0, %v4864
      %4866 = vmatmul.bf16.gmra.mxu0 %v4723
      %v4867 = vpop.f32.mrf.mxu0
      %v4868 = vadd.f32 0.0, %v4867
      %v4869 = vpop.f32.mrf.mxu0
      %v4870 = vadd.f32 0.0, %v4869
      %4871 = vmatmul.bf16.gmra.mxu0 %v4726
      %v4872 = vpop.f32.mrf.mxu0
      %v4873 = vadd.f32 0.0, %v4872
      %v4874 = vpop.f32.mrf.mxu0
      %v4875 = vadd.f32 0.0, %v4874
      %4876 = vmatmul.bf16.gmra.mxu0 %v4729
      %v4877 = vpop.f32.mrf.mxu0
      %v4878 = vadd.f32 0.0, %v4877
      %v4879 = vpop.f32.mrf.mxu0
      %v4880 = vadd.f32 0.0, %v4879
      %4881 = vmatmul.bf16.gmra.mxu0 %v4732
      %v4882 = vpop.f32.mrf.mxu0
      %v4883 = vadd.f32 0.0, %v4882
      %v4884 = vpop.f32.mrf.mxu0
      %v4885 = vadd.f32 0.0, %v4884
      %4886 = vmatmul.bf16.gmra.mxu0 %v4735
      %v4887 = vpop.f32.mrf.mxu0
      %v4888 = vadd.f32 0.0, %v4887
      %v4889 = vpop.f32.mrf.mxu0
      %v4890 = vadd.f32 0.0, %v4889
      %4891 = vmatmul.bf16.gmra.mxu0 %v4738
      %v4892 = vpop.f32.mrf.mxu0
      %v4893 = vadd.f32 0.0, %v4892
      %v4894 = vpop.f32.mrf.mxu0
      %v4895 = vadd.f32 0.0, %v4894
      %4896 = vmatmul.bf16.gmra.mxu0 %v4741
      %v4897 = vpop.f32.mrf.mxu0
      %v4898 = vadd.f32 0.0, %v4897
      %v4899 = vpop.f32.mrf.mxu0
      %v4900 = vadd.f32 0.0, %v4899
      %4901 = vmatmul.bf16.gmra.mxu0 %v4744
      %v4902 = vpop.f32.mrf.mxu0
      %v4903 = vadd.f32 0.0, %v4902
      %v4904 = vpop.f32.mrf.mxu0
      %v4905 = vadd.f32 0.0, %v4904
      %4906 = vmatmul.bf16.gmra.mxu0 %v4747
      %v4907 = vpop.f32.mrf.mxu0
      %v4908 = vadd.f32 0.0, %v4907
      %v4909 = vpop.f32.mrf.mxu0
      %v4910 = vadd.f32 0.0, %v4909
      %4911 = vmatmul.bf16.gmra.mxu0 %v4750
      %v4912 = vpop.f32.mrf.mxu0
      %v4913 = vadd.f32 0.0, %v4912
      %v4914 = vpop.f32.mrf.mxu0
      %v4915 = vadd.f32 0.0, %v4914
      %4916 = vmatmul.bf16.gmra.mxu0 %v4753
      %v4917 = vpop.f32.mrf.mxu0
      %v4918 = vadd.f32 0.0, %v4917
      %v4919 = vpop.f32.mrf.mxu0
      %v4920 = vadd.f32 0.0, %v4919
      %4921 = vmatmul.bf16.gmra.mxu0 %v4756
      %v4922 = vpop.f32.mrf.mxu0
      %v4923 = vadd.f32 0.0, %v4922
      %v4924 = vpop.f32.mrf.mxu0
      %v4925 = vadd.f32 0.0, %v4924
      %4926 = vmatmul.bf16.gmra.mxu0 %v4759
      %v4927 = vpop.f32.mrf.mxu0
      %v4928 = vadd.f32 0.0, %v4927
      %v4929 = vpop.f32.mrf.mxu0
      %v4930 = vadd.f32 0.0, %v4929
      %4931 = vdwg.mxu0
      %4932 = vmatpush.bf16.xpose.msra.mxu0 %v4807
      %4933 = vmatpush.bf16.xpose.msra.mxu0 %v4804
      %4934 = vmatpush.bf16.xpose.msra.mxu0 %v4801
      %4935 = vmatpush.bf16.xpose.msra.mxu0 %v4798
      %4936 = vmatpush.bf16.xpose.msra.mxu0 %v4795
      %4937 = vmatpush.bf16.xpose.msra.mxu0 %v4792
      %4938 = vmatpush.bf16.xpose.msra.mxu0 %v4789
      %4939 = vmatpush.bf16.xpose.msra.mxu0 %v4786
      %4940 = vmatmul.bf16.gmra.mxu0 %v4708
      %v4941 = vpop.f32.mrf.mxu0
      %v4942 = vadd.f32 0.0, %v4941
      %v4943 = vpop.f32.mrf.mxu0
      %v4944 = vadd.f32 0.0, %v4943
      %4945 = vmatmul.bf16.gmra.mxu0 %v4711
      %v4946 = vpop.f32.mrf.mxu0
      %v4947 = vadd.f32 0.0, %v4946
      %v4948 = vpop.f32.mrf.mxu0
      %v4949 = vadd.f32 0.0, %v4948
      %4950 = vmatmul.bf16.gmra.mxu0 %v4714
      %v4951 = vpop.f32.mrf.mxu0
      %v4952 = vadd.f32 0.0, %v4951
      %v4953 = vpop.f32.mrf.mxu0
      %v4954 = vadd.f32 0.0, %v4953
      %4955 = vmatmul.bf16.gmra.mxu0 %v4717
      %v4956 = vpop.f32.mrf.mxu0
      %v4957 = vadd.f32 0.0, %v4956
      %v4958 = vpop.f32.mrf.mxu0
      %v4959 = vadd.f32 0.0, %v4958
      %4960 = vmatmul.bf16.gmra.mxu0 %v4720
      %v4961 = vpop.f32.mrf.mxu0
      %v4962 = vadd.f32 0.0, %v4961
      %v4963 = vpop.f32.mrf.mxu0
      %v4964 = vadd.f32 0.0, %v4963
      %4965 = vmatmul.bf16.gmra.mxu0 %v4723
      %v4966 = vpop.f32.mrf.mxu0
      %v4967 = vadd.f32 0.0, %v4966
      %v4968 = vpop.f32.mrf.mxu0
      %v4969 = vadd.f32 0.0, %v4968
      %4970 = vmatmul.bf16.gmra.mxu0 %v4726
      %v4971 = vpop.f32.mrf.mxu0
      %v4972 = vadd.f32 0.0, %v4971
      %v4973 = vpop.f32.mrf.mxu0
      %v4974 = vadd.f32 0.0, %v4973
      %4975 = vmatmul.bf16.gmra.mxu0 %v4729
      %v4976 = vpop.f32.mrf.mxu0
      %v4977 = vadd.f32 0.0, %v4976
      %v4978 = vpop.f32.mrf.mxu0
      %v4979 = vadd.f32 0.0, %v4978
      %4980 = vmatmul.bf16.gmra.mxu0 %v4732
      %v4981 = vpop.f32.mrf.mxu0
      %v4982 = vadd.f32 0.0, %v4981
      %v4983 = vpop.f32.mrf.mxu0
      %v4984 = vadd.f32 0.0, %v4983
      %4985 = vmatmul.bf16.gmra.mxu0 %v4735
      %v4986 = vpop.f32.mrf.mxu0
      %v4987 = vadd.f32 0.0, %v4986
      %v4988 = vpop.f32.mrf.mxu0
      %v4989 = vadd.f32 0.0, %v4988
      %4990 = vmatmul.bf16.gmra.mxu0 %v4738
      %v4991 = vpop.f32.mrf.mxu0
      %v4992 = vadd.f32 0.0, %v4991
      %v4993 = vpop.f32.mrf.mxu0
      %v4994 = vadd.f32 0.0, %v4993
      %4995 = vmatmul.bf16.gmra.mxu0 %v4741
      %v4996 = vpop.f32.mrf.mxu0
      %v4997 = vadd.f32 0.0, %v4996
      %v4998 = vpop.f32.mrf.mxu0
      %v4999 = vadd.f32 0.0, %v4998
      %5000 = vmatmul.bf16.gmra.mxu0 %v4744
      %v5001 = vpop.f32.mrf.mxu0
      %v5002 = vadd.f32 0.0, %v5001
      %v5003 = vpop.f32.mrf.mxu0
      %v5004 = vadd.f32 0.0, %v5003
      %5005 = vmatmul.bf16.gmra.mxu0 %v4747
      %v5006 = vpop.f32.mrf.mxu0
      %v5007 = vadd.f32 0.0, %v5006
      %v5008 = vpop.f32.mrf.mxu0
      %v5009 = vadd.f32 0.0, %v5008
      %5010 = vmatmul.bf16.gmra.mxu0 %v4750
      %v5011 = vpop.f32.mrf.mxu0
      %v5012 = vadd.f32 0.0, %v5011
      %v5013 = vpop.f32.mrf.mxu0
      %v5014 = vadd.f32 0.0, %v5013
      %5015 = vmatmul.bf16.gmra.mxu0 %v4753
      %v5016 = vpop.f32.mrf.mxu0
      %v5017 = vadd.f32 0.0, %v5016
      %v5018 = vpop.f32.mrf.mxu0
      %v5019 = vadd.f32 0.0, %v5018
      %5020 = vmatmul.bf16.gmra.mxu0 %v4756
      %v5021 = vpop.f32.mrf.mxu0
      %v5022 = vadd.f32 0.0, %v5021
      %v5023 = vpop.f32.mrf.mxu0
      %v5024 = vadd.f32 0.0, %v5023
      %5025 = vmatmul.bf16.gmra.mxu0 %v4759
      %v5026 = vpop.f32.mrf.mxu0
      %v5027 = vadd.f32 0.0, %v5026
      %v5028 = vpop.f32.mrf.mxu0
      %v5029 = vadd.f32 0.0, %v5028
      %5030 = vdwg.mxu0
      %5031 = vmatpush.bf16.xpose.msra.mxu0 %v4831
      %5032 = vmatpush.bf16.xpose.msra.mxu0 %v4828
      %5033 = vmatpush.bf16.xpose.msra.mxu0 %v4825
      %5034 = vmatpush.bf16.xpose.msra.mxu0 %v4822
      %5035 = vmatpush.bf16.xpose.msra.mxu0 %v4819
      %5036 = vmatpush.bf16.xpose.msra.mxu0 %v4816
      %5037 = vmatpush.bf16.xpose.msra.mxu0 %v4813
      %5038 = vmatpush.bf16.xpose.msra.mxu0 %v4810
      %5039 = vmatmul.bf16.gmra.mxu0 %v4708
      %v5040 = vpop.f32.mrf.mxu0
      %v5041 = vadd.f32 0.0, %v5040
      %v5042 = vpop.f32.mrf.mxu0
      %v5043 = vadd.f32 0.0, %v5042
      %5044 = vmatmul.bf16.gmra.mxu0 %v4711
      %v5045 = vpop.f32.mrf.mxu0
      %v5046 = vadd.f32 0.0, %v5045
      %v5047 = vpop.f32.mrf.mxu0
      %v5048 = vadd.f32 0.0, %v5047
      %5049 = vmatmul.bf16.gmra.mxu0 %v4714
      %v5050 = vpop.f32.mrf.mxu0
      %v5051 = vadd.f32 0.0, %v5050
      %v5052 = vpop.f32.mrf.mxu0
      %v5053 = vadd.f32 0.0, %v5052
      %5054 = vmatmul.bf16.gmra.mxu0 %v4717
      %v5055 = vpop.f32.mrf.mxu0
      %v5056 = vadd.f32 0.0, %v5055
      %v5057 = vpop.f32.mrf.mxu0
      %v5058 = vadd.f32 0.0, %v5057
      %5059 = vmatmul.bf16.gmra.mxu0 %v4720
      %v5060 = vpop.f32.mrf.mxu0
      %v5061 = vadd.f32 0.0, %v5060
      %v5062 = vpop.f32.mrf.mxu0
      %v5063 = vadd.f32 0.0, %v5062
      %5064 = vmatmul.bf16.gmra.mxu0 %v4723
      %v5065 = vpop.f32.mrf.mxu0
      %v5066 = vadd.f32 0.0, %v5065
      %v5067 = vpop.f32.mrf.mxu0
      %v5068 = vadd.f32 0.0, %v5067
      %5069 = vmatmul.bf16.gmra.mxu0 %v4726
      %v5070 = vpop.f32.mrf.mxu0
      %v5071 = vadd.f32 0.0, %v5070
      %v5072 = vpop.f32.mrf.mxu0
      %v5073 = vadd.f32 0.0, %v5072
      %5074 = vmatmul.bf16.gmra.mxu0 %v4729
      %v5075 = vpop.f32.mrf.mxu0
      %v5076 = vadd.f32 0.0, %v5075
      %v5077 = vpop.f32.mrf.mxu0
      %v5078 = vadd.f32 0.0, %v5077
      %5079 = vmatmul.bf16.gmra.mxu0 %v4732
      %v5080 = vpop.f32.mrf.mxu0
      %v5081 = vadd.f32 0.0, %v5080
      %v5082 = vpop.f32.mrf.mxu0
      %v5083 = vadd.f32 0.0, %v5082
      %5084 = vmatmul.bf16.gmra.mxu0 %v4735
      %v5085 = vpop.f32.mrf.mxu0
      %v5086 = vadd.f32 0.0, %v5085
      %v5087 = vpop.f32.mrf.mxu0
      %v5088 = vadd.f32 0.0, %v5087
      %5089 = vmatmul.bf16.gmra.mxu0 %v4738
      %v5090 = vpop.f32.mrf.mxu0
      %v5091 = vadd.f32 0.0, %v5090
      %v5092 = vpop.f32.mrf.mxu0
      %v5093 = vadd.f32 0.0, %v5092
      %5094 = vmatmul.bf16.gmra.mxu0 %v4741
      %v5095 = vpop.f32.mrf.mxu0
      %v5096 = vadd.f32 0.0, %v5095
      %v5097 = vpop.f32.mrf.mxu0
      %v5098 = vadd.f32 0.0, %v5097
      %5099 = vmatmul.bf16.gmra.mxu0 %v4744
      %v5100 = vpop.f32.mrf.mxu0
      %v5101 = vadd.f32 0.0, %v5100
      %v5102 = vpop.f32.mrf.mxu0
      %v5103 = vadd.f32 0.0, %v5102
      %5104 = vmatmul.bf16.gmra.mxu0 %v4747
      %v5105 = vpop.f32.mrf.mxu0
      %v5106 = vadd.f32 0.0, %v5105
      %v5107 = vpop.f32.mrf.mxu0
      %v5108 = vadd.f32 0.0, %v5107
      %5109 = vmatmul.bf16.gmra.mxu0 %v4750
      %v5110 = vpop.f32.mrf.mxu0
      %v5111 = vadd.f32 0.0, %v5110
      %v5112 = vpop.f32.mrf.mxu0
      %v5113 = vadd.f32 0.0, %v5112
      %5114 = vmatmul.bf16.gmra.mxu0 %v4753
      %v5115 = vpop.f32.mrf.mxu0
      %v5116 = vadd.f32 0.0, %v5115
      %v5117 = vpop.f32.mrf.mxu0
      %v5118 = vadd.f32 0.0, %v5117
      %5119 = vmatmul.bf16.gmra.mxu0 %v4756
      %v5120 = vpop.f32.mrf.mxu0
      %v5121 = vadd.f32 0.0, %v5120
      %v5122 = vpop.f32.mrf.mxu0
      %v5123 = vadd.f32 0.0, %v5122
      %5124 = vmatmul.bf16.gmra.mxu0 %v4759
      %v5125 = vpop.f32.mrf.mxu0
      %v5126 = vadd.f32 0.0, %v5125
      %v5127 = vpop.f32.mrf.mxu0
      %v5128 = vadd.f32 0.0, %v5127
      %5129 = vdwg.mxu0
      %v5130 = vadd.f32 %v4399, %v4843
      %v5131 = vadd.f32 %v4400, %v4942
      %v5132 = vadd.f32 %v4401, %v5041
      %v5133 = vadd.f32 %v4402, %v4845
      %v5134 = vadd.f32 %v4403, %v4944
      %v5135 = vadd.f32 %v4404, %v5043
      %v5136 = vadd.f32 %v4405, %v4848
      %v5137 = vadd.f32 %v4406, %v4947
      %v5138 = vadd.f32 %v4407, %v5046
      %v5139 = vadd.f32 %v4408, %v4850
      %v5140 = vadd.f32 %v4409, %v4949
      %v5141 = vadd.f32 %v4410, %v5048
      %5154 = vrot.lane.b32.xlu0 %v4853, 127
      %v5155 = vpop.permute.xlu0 %5154
      %5156 = vrot.lane.b32.xlu0 %v4952, 127
      %v5157 = vpop.permute.xlu0 %5156
      %5158 = vrot.lane.b32.xlu0 %v5051, 127
      %v5159 = vpop.permute.xlu0 %5158
      %5160 = vrot.lane.b32.xlu0 %v4855, 127
      %v5161 = vpop.permute.xlu0 %5160
      %5162 = vrot.lane.b32.xlu0 %v4954, 127
      %v5163 = vpop.permute.xlu0 %5162
      %5164 = vrot.lane.b32.xlu0 %v5053, 127
      %v5165 = vpop.permute.xlu0 %5164
      %5166 = vrot.lane.b32.xlu0 %v4858, 127
      %v5167 = vpop.permute.xlu0 %5166
      %5168 = vrot.lane.b32.xlu0 %v4957, 127
      %v5169 = vpop.permute.xlu0 %5168
      %5170 = vrot.lane.b32.xlu0 %v5056, 127
      %v5171 = vpop.permute.xlu0 %5170
      %5172 = vrot.lane.b32.xlu0 %v4860, 127
      %v5173 = vpop.permute.xlu0 %5172
      %5174 = vrot.lane.b32.xlu0 %v4959, 127
      %v5175 = vpop.permute.xlu0 %5174
      %5176 = vrot.lane.b32.xlu0 %v5058, 127
      %v5177 = vpop.permute.xlu0 %5176
      %v5178 = vsel %vm1153, %v5155, %v5157
      %v5179 = vsel %vm1153, %v5157, %v5159
      %v5180 = vsel %vm1153, %v5161, %v5163
      %v5181 = vsel %vm1153, %v5163, %v5165
      %v5182 = vsel %vm1153, %v5167, %v5169
      %v5183 = vsel %vm1153, %v5169, %v5171
      %v5184 = vsel %vm1153, %v5173, %v5175
      %v5185 = vsel %vm1153, %v5175, %v5177
      %v5202 = vsel %vm1153, %v5159, %v5155
      %v5203 = vsel %vm1153, %v5165, %v5161
      %v5204 = vsel %vm1153, %v5171, %v5167
      %v5205 = vsel %vm1153, %v5177, %v5173
      %v5206 = vadd.f32 %v5130, %v5178
      %v5207 = vadd.f32 %v5131, %v5179
      %v5208 = vadd.f32 %v5132, %v5202
      %v5209 = vadd.f32 %v5133, %v5180
      %v5210 = vadd.f32 %v5134, %v5181
      %v5211 = vadd.f32 %v5135, %v5203
      %v5212 = vadd.f32 %v5136, %v5182
      %v5213 = vadd.f32 %v5137, %v5183
      %v5214 = vadd.f32 %v5138, %v5204
      %v5215 = vadd.f32 %v5139, %v5184
      %v5216 = vadd.f32 %v5140, %v5185
      %v5217 = vadd.f32 %v5141, %v5205
      %5230 = vrot.lane.b32.xlu0 %v4863, 126
      %v5231 = vpop.permute.xlu0 %5230
      %5232 = vrot.lane.b32.xlu0 %v4962, 126
      %v5233 = vpop.permute.xlu0 %5232
      %5234 = vrot.lane.b32.xlu0 %v5061, 126
      %v5235 = vpop.permute.xlu0 %5234
      %5236 = vrot.lane.b32.xlu0 %v4865, 126
      %v5237 = vpop.permute.xlu0 %5236
      %5238 = vrot.lane.b32.xlu0 %v4964, 126
      %v5239 = vpop.permute.xlu0 %5238
      %5240 = vrot.lane.b32.xlu0 %v5063, 126
      %v5241 = vpop.permute.xlu0 %5240
      %5242 = vrot.lane.b32.xlu0 %v4868, 126
      %v5243 = vpop.permute.xlu0 %5242
      %5244 = vrot.lane.b32.xlu0 %v4967, 126
      %v5245 = vpop.permute.xlu0 %5244
      %5246 = vrot.lane.b32.xlu0 %v5066, 126
      %v5247 = vpop.permute.xlu0 %5246
      %5248 = vrot.lane.b32.xlu0 %v4870, 126
      %v5249 = vpop.permute.xlu0 %5248
      %5250 = vrot.lane.b32.xlu0 %v4969, 126
      %v5251 = vpop.permute.xlu0 %5250
      %5252 = vrot.lane.b32.xlu0 %v5068, 126
      %v5253 = vpop.permute.xlu0 %5252
      %v5254 = vsel %vm1230, %v5231, %v5233
      %v5255 = vsel %vm1230, %v5233, %v5235
      %v5256 = vsel %vm1230, %v5237, %v5239
      %v5257 = vsel %vm1230, %v5239, %v5241
      %v5258 = vsel %vm1230, %v5243, %v5245
      %v5259 = vsel %vm1230, %v5245, %v5247
      %v5260 = vsel %vm1230, %v5249, %v5251
      %v5261 = vsel %vm1230, %v5251, %v5253
      %v5278 = vsel %vm1230, %v5235, %v5231
      %v5279 = vsel %vm1230, %v5241, %v5237
      %v5280 = vsel %vm1230, %v5247, %v5243
      %v5281 = vsel %vm1230, %v5253, %v5249
      %v5282 = vadd.f32 %v5206, %v5254
      %v5283 = vadd.f32 %v5207, %v5255
      %v5284 = vadd.f32 %v5208, %v5278
      %v5285 = vadd.f32 %v5209, %v5256
      %v5286 = vadd.f32 %v5210, %v5257
      %v5287 = vadd.f32 %v5211, %v5279
      %v5288 = vadd.f32 %v5212, %v5258
      %v5289 = vadd.f32 %v5213, %v5259
      %v5290 = vadd.f32 %v5214, %v5280
      %v5291 = vadd.f32 %v5215, %v5260
      %v5292 = vadd.f32 %v5216, %v5261
      %v5293 = vadd.f32 %v5217, %v5281
      %5306 = vrot.lane.b32.xlu0 %v4873, 125
      %v5307 = vpop.permute.xlu0 %5306
      %5308 = vrot.lane.b32.xlu0 %v4972, 125
      %v5309 = vpop.permute.xlu0 %5308
      %5310 = vrot.lane.b32.xlu0 %v5071, 125
      %v5311 = vpop.permute.xlu0 %5310
      %5312 = vrot.lane.b32.xlu0 %v4875, 125
      %v5313 = vpop.permute.xlu0 %5312
      %5314 = vrot.lane.b32.xlu0 %v4974, 125
      %v5315 = vpop.permute.xlu0 %5314
      %5316 = vrot.lane.b32.xlu0 %v5073, 125
      %v5317 = vpop.permute.xlu0 %5316
      %5318 = vrot.lane.b32.xlu0 %v4878, 125
      %v5319 = vpop.permute.xlu0 %5318
      %5320 = vrot.lane.b32.xlu0 %v4977, 125
      %v5321 = vpop.permute.xlu0 %5320
      %5322 = vrot.lane.b32.xlu0 %v5076, 125
      %v5323 = vpop.permute.xlu0 %5322
      %5324 = vrot.lane.b32.xlu0 %v4880, 125
      %v5325 = vpop.permute.xlu0 %5324
      %5326 = vrot.lane.b32.xlu0 %v4979, 125
      %v5327 = vpop.permute.xlu0 %5326
      %5328 = vrot.lane.b32.xlu0 %v5078, 125
      %v5329 = vpop.permute.xlu0 %5328
      %v5330 = vsel %vm1307, %v5307, %v5309
      %v5331 = vsel %vm1307, %v5309, %v5311
      %v5332 = vsel %vm1307, %v5313, %v5315
      %v5333 = vsel %vm1307, %v5315, %v5317
      %v5334 = vsel %vm1307, %v5319, %v5321
      %v5335 = vsel %vm1307, %v5321, %v5323
      %v5336 = vsel %vm1307, %v5325, %v5327
      %v5337 = vsel %vm1307, %v5327, %v5329
      %v5354 = vsel %vm1307, %v5311, %v5307
      %v5355 = vsel %vm1307, %v5317, %v5313
      %v5356 = vsel %vm1307, %v5323, %v5319
      %v5357 = vsel %vm1307, %v5329, %v5325
      %v5358 = vadd.f32 %v5282, %v5330
      %v5359 = vadd.f32 %v5283, %v5331
      %v5360 = vadd.f32 %v5284, %v5354
      %v5361 = vadd.f32 %v5285, %v5332
      %v5362 = vadd.f32 %v5286, %v5333
      %v5363 = vadd.f32 %v5287, %v5355
      %v5364 = vadd.f32 %v5288, %v5334
      %v5365 = vadd.f32 %v5289, %v5335
      %v5366 = vadd.f32 %v5290, %v5356
      %v5367 = vadd.f32 %v5291, %v5336
      %v5368 = vadd.f32 %v5292, %v5337
      %v5369 = vadd.f32 %v5293, %v5357
      %5382 = vrot.lane.b32.xlu0 %v4883, 124
      %v5383 = vpop.permute.xlu0 %5382
      %5384 = vrot.lane.b32.xlu0 %v4982, 124
      %v5385 = vpop.permute.xlu0 %5384
      %5386 = vrot.lane.b32.xlu0 %v5081, 124
      %v5387 = vpop.permute.xlu0 %5386
      %5388 = vrot.lane.b32.xlu0 %v4885, 124
      %v5389 = vpop.permute.xlu0 %5388
      %5390 = vrot.lane.b32.xlu0 %v4984, 124
      %v5391 = vpop.permute.xlu0 %5390
      %5392 = vrot.lane.b32.xlu0 %v5083, 124
      %v5393 = vpop.permute.xlu0 %5392
      %5394 = vrot.lane.b32.xlu0 %v4888, 124
      %v5395 = vpop.permute.xlu0 %5394
      %5396 = vrot.lane.b32.xlu0 %v4987, 124
      %v5397 = vpop.permute.xlu0 %5396
      %5398 = vrot.lane.b32.xlu0 %v5086, 124
      %v5399 = vpop.permute.xlu0 %5398
      %5400 = vrot.lane.b32.xlu0 %v4890, 124
      %v5401 = vpop.permute.xlu0 %5400
      %5402 = vrot.lane.b32.xlu0 %v4989, 124
      %v5403 = vpop.permute.xlu0 %5402
      %5404 = vrot.lane.b32.xlu0 %v5088, 124
      %v5405 = vpop.permute.xlu0 %5404
      %v5406 = vsel %vm1384, %v5383, %v5385
      %v5407 = vsel %vm1384, %v5385, %v5387
      %v5408 = vsel %vm1384, %v5389, %v5391
      %v5409 = vsel %vm1384, %v5391, %v5393
      %v5410 = vsel %vm1384, %v5395, %v5397
      %v5411 = vsel %vm1384, %v5397, %v5399
      %v5412 = vsel %vm1384, %v5401, %v5403
      %v5413 = vsel %vm1384, %v5403, %v5405
      %v5430 = vsel %vm1384, %v5387, %v5383
      %v5431 = vsel %vm1384, %v5393, %v5389
      %v5432 = vsel %vm1384, %v5399, %v5395
      %v5433 = vsel %vm1384, %v5405, %v5401
      %v5434 = vadd.f32 %v5358, %v5406
      %v5435 = vadd.f32 %v5359, %v5407
      %v5436 = vadd.f32 %v5360, %v5430
      %v5437 = vadd.f32 %v5361, %v5408
      %v5438 = vadd.f32 %v5362, %v5409
      %v5439 = vadd.f32 %v5363, %v5431
      %v5440 = vadd.f32 %v5364, %v5410
      %v5441 = vadd.f32 %v5365, %v5411
      %v5442 = vadd.f32 %v5366, %v5432
      %v5443 = vadd.f32 %v5367, %v5412
      %v5444 = vadd.f32 %v5368, %v5413
      %v5445 = vadd.f32 %v5369, %v5433
      %5458 = vrot.lane.b32.xlu0 %v4893, 123
      %v5459 = vpop.permute.xlu0 %5458
      %5460 = vrot.lane.b32.xlu0 %v4992, 123
      %v5461 = vpop.permute.xlu0 %5460
      %5462 = vrot.lane.b32.xlu0 %v5091, 123
      %v5463 = vpop.permute.xlu0 %5462
      %5464 = vrot.lane.b32.xlu0 %v4895, 123
      %v5465 = vpop.permute.xlu0 %5464
      %5466 = vrot.lane.b32.xlu0 %v4994, 123
      %v5467 = vpop.permute.xlu0 %5466
      %5468 = vrot.lane.b32.xlu0 %v5093, 123
      %v5469 = vpop.permute.xlu0 %5468
      %5470 = vrot.lane.b32.xlu0 %v4898, 123
      %v5471 = vpop.permute.xlu0 %5470
      %5472 = vrot.lane.b32.xlu0 %v4997, 123
      %v5473 = vpop.permute.xlu0 %5472
      %5474 = vrot.lane.b32.xlu0 %v5096, 123
      %v5475 = vpop.permute.xlu0 %5474
      %5476 = vrot.lane.b32.xlu0 %v4900, 123
      %v5477 = vpop.permute.xlu0 %5476
      %5478 = vrot.lane.b32.xlu0 %v4999, 123
      %v5479 = vpop.permute.xlu0 %5478
      %5480 = vrot.lane.b32.xlu0 %v5098, 123
      %v5481 = vpop.permute.xlu0 %5480
      %v5482 = vsel %vm1461, %v5459, %v5461
      %v5483 = vsel %vm1461, %v5461, %v5463
      %v5484 = vsel %vm1461, %v5465, %v5467
      %v5485 = vsel %vm1461, %v5467, %v5469
      %v5486 = vsel %vm1461, %v5471, %v5473
      %v5487 = vsel %vm1461, %v5473, %v5475
      %v5488 = vsel %vm1461, %v5477, %v5479
      %v5489 = vsel %vm1461, %v5479, %v5481
      %v5506 = vsel %vm1461, %v5463, %v5459
      %v5507 = vsel %vm1461, %v5469, %v5465
      %v5508 = vsel %vm1461, %v5475, %v5471
      %v5509 = vsel %vm1461, %v5481, %v5477
      %v5510 = vadd.f32 %v5434, %v5482
      %v5511 = vadd.f32 %v5435, %v5483
      %v5512 = vadd.f32 %v5436, %v5506
      %v5513 = vadd.f32 %v5437, %v5484
      %v5514 = vadd.f32 %v5438, %v5485
      %v5515 = vadd.f32 %v5439, %v5507
      %v5516 = vadd.f32 %v5440, %v5486
      %v5517 = vadd.f32 %v5441, %v5487
      %v5518 = vadd.f32 %v5442, %v5508
      %v5519 = vadd.f32 %v5443, %v5488
      %v5520 = vadd.f32 %v5444, %v5489
      %v5521 = vadd.f32 %v5445, %v5509
      %5534 = vrot.lane.b32.xlu0 %v4903, 122
      %v5535 = vpop.permute.xlu0 %5534
      %5536 = vrot.lane.b32.xlu0 %v5002, 122
      %v5537 = vpop.permute.xlu0 %5536
      %5538 = vrot.lane.b32.xlu0 %v5101, 122
      %v5539 = vpop.permute.xlu0 %5538
      %5540 = vrot.lane.b32.xlu0 %v4905, 122
      %v5541 = vpop.permute.xlu0 %5540
      %5542 = vrot.lane.b32.xlu0 %v5004, 122
      %v5543 = vpop.permute.xlu0 %5542
      %5544 = vrot.lane.b32.xlu0 %v5103, 122
      %v5545 = vpop.permute.xlu0 %5544
      %5546 = vrot.lane.b32.xlu0 %v4908, 122
      %v5547 = vpop.permute.xlu0 %5546
      %5548 = vrot.lane.b32.xlu0 %v5007, 122
      %v5549 = vpop.permute.xlu0 %5548
      %5550 = vrot.lane.b32.xlu0 %v5106, 122
      %v5551 = vpop.permute.xlu0 %5550
      %5552 = vrot.lane.b32.xlu0 %v4910, 122
      %v5553 = vpop.permute.xlu0 %5552
      %5554 = vrot.lane.b32.xlu0 %v5009, 122
      %v5555 = vpop.permute.xlu0 %5554
      %5556 = vrot.lane.b32.xlu0 %v5108, 122
      %v5557 = vpop.permute.xlu0 %5556
      %v5558 = vsel %vm1538, %v5535, %v5537
      %v5559 = vsel %vm1538, %v5537, %v5539
      %v5560 = vsel %vm1538, %v5541, %v5543
      %v5561 = vsel %vm1538, %v5543, %v5545
      %v5562 = vsel %vm1538, %v5547, %v5549
      %v5563 = vsel %vm1538, %v5549, %v5551
      %v5564 = vsel %vm1538, %v5553, %v5555
      %v5565 = vsel %vm1538, %v5555, %v5557
      %v5582 = vsel %vm1538, %v5539, %v5535
      %v5583 = vsel %vm1538, %v5545, %v5541
      %v5584 = vsel %vm1538, %v5551, %v5547
      %v5585 = vsel %vm1538, %v5557, %v5553
      %v5586 = vadd.f32 %v5510, %v5558
      %v5587 = vadd.f32 %v5511, %v5559
      %v5588 = vadd.f32 %v5512, %v5582
      %v5589 = vadd.f32 %v5513, %v5560
      %v5590 = vadd.f32 %v5514, %v5561
      %v5591 = vadd.f32 %v5515, %v5583
      %v5592 = vadd.f32 %v5516, %v5562
      %v5593 = vadd.f32 %v5517, %v5563
      %v5594 = vadd.f32 %v5518, %v5584
      %v5595 = vadd.f32 %v5519, %v5564
      %v5596 = vadd.f32 %v5520, %v5565
      %v5597 = vadd.f32 %v5521, %v5585
      %5610 = vrot.lane.b32.xlu0 %v4913, 121
      %v5611 = vpop.permute.xlu0 %5610
      %5612 = vrot.lane.b32.xlu0 %v5012, 121
      %v5613 = vpop.permute.xlu0 %5612
      %5614 = vrot.lane.b32.xlu0 %v5111, 121
      %v5615 = vpop.permute.xlu0 %5614
      %5616 = vrot.lane.b32.xlu0 %v4915, 121
      %v5617 = vpop.permute.xlu0 %5616
      %5618 = vrot.lane.b32.xlu0 %v5014, 121
      %v5619 = vpop.permute.xlu0 %5618
      %5620 = vrot.lane.b32.xlu0 %v5113, 121
      %v5621 = vpop.permute.xlu0 %5620
      %5622 = vrot.lane.b32.xlu0 %v4918, 121
      %v5623 = vpop.permute.xlu0 %5622
      %5624 = vrot.lane.b32.xlu0 %v5017, 121
      %v5625 = vpop.permute.xlu0 %5624
      %5626 = vrot.lane.b32.xlu0 %v5116, 121
      %v5627 = vpop.permute.xlu0 %5626
      %5628 = vrot.lane.b32.xlu0 %v4920, 121
      %v5629 = vpop.permute.xlu0 %5628
      %5630 = vrot.lane.b32.xlu0 %v5019, 121
      %v5631 = vpop.permute.xlu0 %5630
      %5632 = vrot.lane.b32.xlu0 %v5118, 121
      %v5633 = vpop.permute.xlu0 %5632
      %v5634 = vsel %vm1615, %v5611, %v5613
      %v5635 = vsel %vm1615, %v5613, %v5615
      %v5636 = vsel %vm1615, %v5617, %v5619
      %v5637 = vsel %vm1615, %v5619, %v5621
      %v5638 = vsel %vm1615, %v5623, %v5625
      %v5639 = vsel %vm1615, %v5625, %v5627
      %v5640 = vsel %vm1615, %v5629, %v5631
      %v5641 = vsel %vm1615, %v5631, %v5633
      %v5658 = vsel %vm1615, %v5615, %v5611
      %v5659 = vsel %vm1615, %v5621, %v5617
      %v5660 = vsel %vm1615, %v5627, %v5623
      %v5661 = vsel %vm1615, %v5633, %v5629
      %v5662 = vadd.f32 %v5586, %v5634
      %v5663 = vadd.f32 %v5587, %v5635
      %v5664 = vadd.f32 %v5588, %v5658
      %v5665 = vadd.f32 %v5589, %v5636
      %v5666 = vadd.f32 %v5590, %v5637
      %v5667 = vadd.f32 %v5591, %v5659
      %v5668 = vadd.f32 %v5592, %v5638
      %v5669 = vadd.f32 %v5593, %v5639
      %v5670 = vadd.f32 %v5594, %v5660
      %v5671 = vadd.f32 %v5595, %v5640
      %v5672 = vadd.f32 %v5596, %v5641
      %v5673 = vadd.f32 %v5597, %v5661
      %5686 = vrot.lane.b32.xlu0 %v4923, 120
      %v5687 = vpop.permute.xlu0 %5686
      %5688 = vrot.lane.b32.xlu0 %v5022, 120
      %v5689 = vpop.permute.xlu0 %5688
      %5690 = vrot.lane.b32.xlu0 %v5121, 120
      %v5691 = vpop.permute.xlu0 %5690
      %5692 = vrot.lane.b32.xlu0 %v4925, 120
      %v5693 = vpop.permute.xlu0 %5692
      %5694 = vrot.lane.b32.xlu0 %v5024, 120
      %v5695 = vpop.permute.xlu0 %5694
      %5696 = vrot.lane.b32.xlu0 %v5123, 120
      %v5697 = vpop.permute.xlu0 %5696
      %5698 = vrot.lane.b32.xlu0 %v4928, 120
      %v5699 = vpop.permute.xlu0 %5698
      %5700 = vrot.lane.b32.xlu0 %v5027, 120
      %v5701 = vpop.permute.xlu0 %5700
      %5702 = vrot.lane.b32.xlu0 %v5126, 120
      %v5703 = vpop.permute.xlu0 %5702
      %5704 = vrot.lane.b32.xlu0 %v4930, 120
      %v5705 = vpop.permute.xlu0 %5704
      %5706 = vrot.lane.b32.xlu0 %v5029, 120
      %v5707 = vpop.permute.xlu0 %5706
      %5708 = vrot.lane.b32.xlu0 %v5128, 120
      %v5709 = vpop.permute.xlu0 %5708
      %v5710 = vsel %vm1692, %v5687, %v5689
      %v5711 = vsel %vm1692, %v5689, %v5691
      %v5712 = vsel %vm1692, %v5693, %v5695
      %v5713 = vsel %vm1692, %v5695, %v5697
      %v5714 = vsel %vm1692, %v5699, %v5701
      %v5715 = vsel %vm1692, %v5701, %v5703
      %v5716 = vsel %vm1692, %v5705, %v5707
      %v5717 = vsel %vm1692, %v5707, %v5709
      %v5734 = vsel %vm1692, %v5691, %v5687
      %v5735 = vsel %vm1692, %v5697, %v5693
      %v5736 = vsel %vm1692, %v5703, %v5699
      %v5737 = vsel %vm1692, %v5709, %v5705
      %v5738 = vadd.f32 %v5662, %v5710
      %v5739 = vadd.f32 %v5663, %v5711
      %v5740 = vadd.f32 %v5664, %v5734
      %v5741 = vadd.f32 %v5665, %v5712
      %v5742 = vadd.f32 %v5666, %v5713
      %v5743 = vadd.f32 %v5667, %v5735
      %v5744 = vadd.f32 %v5668, %v5714
      %v5745 = vadd.f32 %v5669, %v5715
      %v5746 = vadd.f32 %v5670, %v5736
      %v5747 = vadd.f32 %v5671, %v5716
      %v5748 = vadd.f32 %v5672, %v5717
      %v5749 = vadd.f32 %v5673, %v5737
      %s5750 = scalar_lea.vmem %s345, 48
      %v5751 = vld [vmem:[%s5750] sm:$0xf]
      %v5752 = vld [vmem:[%s5750 + $0x4] sm:$0xf]
      %v5753 = vld [vmem:[%s5750 + $0x8] sm:$0xf]
      %v5754 = vld [vmem:[%s5750 + $0xc] sm:$0xf]
      %v5755 = vld [vmem:[%s5750 + $0x10] sm:$0xf]
      %v5756 = vld [vmem:[%s5750 + $0x14] sm:$0xf]
      %v5757 = vld [vmem:[%s5750 + $0x18] sm:$0xf]
      %v5758 = vld [vmem:[%s5750 + $0x1c] sm:$0xf]
      %v5759 = vld [vmem:[%s5750 + $0x20] sm:$0xf]
      %v5760 = vld [vmem:[%s5750 + $0x24] sm:$0xf]
      %v5761 = vld [vmem:[%s5750 + $0x28] sm:$0xf]
      %v5762 = vld [vmem:[%s5750 + $0x2c] sm:$0xf]
      %v5763 = vld [vmem:[%s5750 + $0x30] sm:$0xf]
      %v5764 = vld [vmem:[%s5750 + $0x34] sm:$0xf]
      %v5765 = vld [vmem:[%s5750 + $0x38] sm:$0xf]
      %v5766 = vld [vmem:[%s5750 + $0x3c] sm:$0xf]
      %v5767 = vld [vmem:[%s5750 + $0x40] sm:$0xf]
      %v5768 = vld [vmem:[%s5750 + $0x44] sm:$0xf]
      %v5769 = vld [vmem:[%s5750 + $0x48] sm:$0xf]
      %v5770 = vld [vmem:[%s5750 + $0x4c] sm:$0xf]
      %v5771 = vld [vmem:[%s5750 + $0x50] sm:$0xf]
      %v5772 = vld [vmem:[%s5750 + $0x54] sm:$0xf]
      %v5773 = vld [vmem:[%s5750 + $0x58] sm:$0xf]
      %v5774 = vld [vmem:[%s5750 + $0x5c] sm:$0xf]
      %v5775 = vld [vmem:[%s5750 + $0x60] sm:$0xf]
      %v5776 = vld [vmem:[%s5750 + $0x64] sm:$0xf]
      %v5777 = vld [vmem:[%s5750 + $0x68] sm:$0xf]
      %v5778 = vld [vmem:[%s5750 + $0x6c] sm:$0xf]
      %v5779 = vld [vmem:[%s5750 + $0x70] sm:$0xf]
      %v5780 = vld [vmem:[%s5750 + $0x74] sm:$0xf]
      %v5781 = vld [vmem:[%s5750 + $0x78] sm:$0xf]
      %v5782 = vld [vmem:[%s5750 + $0x7c] sm:$0xf]
      %v5783 = vld [vmem:[%s5750 + $0x80] sm:$0xf]
      %v5784 = vld [vmem:[%s5750 + $0x84] sm:$0xf]
      %v5785 = vld [vmem:[%s5750 + $0x88] sm:$0xf]
      %v5786 = vld [vmem:[%s5750 + $0x8c] sm:$0xf]
      %v5787 = vld [vmem:[%s5750 + $0x90] sm:$0xf]
      %v5788 = vld [vmem:[%s5750 + $0x94] sm:$0xf]
      %v5789 = vld [vmem:[%s5750 + $0x98] sm:$0xf]
      %v5790 = vld [vmem:[%s5750 + $0x9c] sm:$0xf]
      %v5791 = vld [vmem:[%s5750 + $0xa0] sm:$0xf]
      %v5792 = vld [vmem:[%s5750 + $0xa4] sm:$0xf]
      %v5793 = vld [vmem:[%s5750 + $0xa8] sm:$0xf]
      %v5794 = vld [vmem:[%s5750 + $0xac] sm:$0xf]
      %v5795 = vld [vmem:[%s5750 + $0xb0] sm:$0xf]
      %v5796 = vld [vmem:[%s5750 + $0xb4] sm:$0xf]
      %v5797 = vld [vmem:[%s5750 + $0xb8] sm:$0xf]
      %v5798 = vld [vmem:[%s5750 + $0xbc] sm:$0xf]
      %s5799 = scalar_lea.vmem %s350, 576
      %v5800 = vld [vmem:[%s5799] sm:$0xf]
      %v5801 = vld [vmem:[%s5799 + $0x4] sm:$0xf]
      %v5802 = vld [vmem:[%s5799 + $0x8] sm:$0xf]
      %v5803 = vld [vmem:[%s5799 + $0xc] sm:$0xf]
      %v5804 = vld [vmem:[%s5799 + $0x10] sm:$0xf]
      %v5805 = vld [vmem:[%s5799 + $0x14] sm:$0xf]
      %v5806 = vld [vmem:[%s5799 + $0x18] sm:$0xf]
      %v5807 = vld [vmem:[%s5799 + $0x1c] sm:$0xf]
      %v5808 = vld [vmem:[%s5799 + $0x20] sm:$0xf]
      %v5809 = vld [vmem:[%s5799 + $0x24] sm:$0xf]
      %v5810 = vld [vmem:[%s5799 + $0x28] sm:$0xf]
      %v5811 = vld [vmem:[%s5799 + $0x2c] sm:$0xf]
      %v5812 = vld [vmem:[%s5799 + $0x30] sm:$0xf]
      %v5813 = vld [vmem:[%s5799 + $0x34] sm:$0xf]
      %v5814 = vld [vmem:[%s5799 + $0x38] sm:$0xf]
      %v5815 = vld [vmem:[%s5799 + $0x3c] sm:$0xf]
      %v5816 = vld [vmem:[%s5799 + $0x40] sm:$0xf]
      %v5817 = vld [vmem:[%s5799 + $0x44] sm:$0xf]
      %v5818 = vld [vmem:[%s5799 + $0x48] sm:$0xf]
      %v5819 = vld [vmem:[%s5799 + $0x4c] sm:$0xf]
      %v5820 = vld [vmem:[%s5799 + $0x50] sm:$0xf]
      %v5821 = vld [vmem:[%s5799 + $0x54] sm:$0xf]
      %v5822 = vld [vmem:[%s5799 + $0x58] sm:$0xf]
      %v5823 = vld [vmem:[%s5799 + $0x5c] sm:$0xf]
      %v5824 = vld [vmem:[%s5799 + $0x60] sm:$0xf]
      %v5825 = vld [vmem:[%s5799 + $0x64] sm:$0xf]
      %v5826 = vld [vmem:[%s5799 + $0x68] sm:$0xf]
      %v5827 = vld [vmem:[%s5799 + $0x6c] sm:$0xf]
      %v5828 = vld [vmem:[%s5799 + $0x70] sm:$0xf]
      %v5829 = vld [vmem:[%s5799 + $0x74] sm:$0xf]
      %v5830 = vld [vmem:[%s5799 + $0x78] sm:$0xf]
      %v5831 = vld [vmem:[%s5799 + $0x7c] sm:$0xf]
      %v5832 = vld [vmem:[%s5799 + $0x80] sm:$0xf]
      %v5833 = vld [vmem:[%s5799 + $0x84] sm:$0xf]
      %v5834 = vld [vmem:[%s5799 + $0x88] sm:$0xf]
      %v5835 = vld [vmem:[%s5799 + $0x8c] sm:$0xf]
      %v5872 = vunpack.c.l.b16 %v5800
      %v5873 = vunpack.c.l.b16 %v5801
      %v5874 = vunpack.c.l.b16 %v5802
      %v5875 = vunpack.c.l.b16 %v5803
      %v5876 = vunpack.c.l.b16 %v5804
      %v5877 = vunpack.c.l.b16 %v5805
      %v5878 = vunpack.c.l.b16 %v5806
      %v5879 = vunpack.c.l.b16 %v5807
      %v5880 = vunpack.c.l.b16 %v5808
      %v5881 = vunpack.c.l.b16 %v5809
      %v5882 = vunpack.c.l.b16 %v5810
      %v5883 = vunpack.c.l.b16 %v5811
      %v5884 = vunpack.c.l.b16 %v5812
      %v5885 = vunpack.c.l.b16 %v5813
      %v5886 = vunpack.c.l.b16 %v5814
      %v5887 = vunpack.c.l.b16 %v5815
      %v5888 = vunpack.c.l.b16 %v5816
      %v5889 = vunpack.c.l.b16 %v5817
      %v5890 = vunpack.c.l.b16 %v5818
      %v5891 = vunpack.c.l.b16 %v5819
      %v5892 = vunpack.c.l.b16 %v5820
      %v5893 = vunpack.c.l.b16 %v5821
      %v5894 = vunpack.c.l.b16 %v5822
      %v5895 = vunpack.c.l.b16 %v5823
      %v5896 = vunpack.c.l.b16 %v5824
      %v5897 = vunpack.c.l.b16 %v5825
      %v5898 = vunpack.c.l.b16 %v5826
      %v5899 = vunpack.c.l.b16 %v5827
      %v5900 = vunpack.c.l.b16 %v5828
      %v5901 = vunpack.c.l.b16 %v5829
      %v5902 = vunpack.c.l.b16 %v5830
      %v5903 = vunpack.c.l.b16 %v5831
      %v5904 = vunpack.c.l.b16 %v5832
      %v5905 = vunpack.c.l.b16 %v5833
      %v5906 = vunpack.c.l.b16 %v5834
      %v5907 = vunpack.c.l.b16 %v5835
      %v5908 = vpack.c.b16 %v5873, %v5872
      %v5909 = vpack.c.b16 %v5875, %v5874
      %v5910 = vpack.c.b16 %v5877, %v5876
      %v5911 = vpack.c.b16 %v5879, %v5878
      %v5912 = vpack.c.b16 %v5881, %v5880
      %v5913 = vpack.c.b16 %v5883, %v5882
      %v5914 = vpack.c.b16 %v5885, %v5884
      %v5915 = vpack.c.b16 %v5887, %v5886
      %v5916 = vpack.c.b16 %v5889, %v5888
      %v5917 = vpack.c.b16 %v5891, %v5890
      %v5918 = vpack.c.b16 %v5893, %v5892
      %v5919 = vpack.c.b16 %v5895, %v5894
      %v5920 = vpack.c.b16 %v5897, %v5896
      %v5921 = vpack.c.b16 %v5899, %v5898
      %v5922 = vpack.c.b16 %v5901, %v5900
      %v5923 = vpack.c.b16 %v5903, %v5902
      %v5924 = vpack.c.b16 %v5905, %v5904
      %v5925 = vpack.c.b16 %v5907, %v5906
      %v5974 = vunpack.c.l.b16 %v5751
      %v5975 = vunpack.c.l.b16 %v5752
      %v5976 = vunpack.c.l.b16 %v5753
      %v5977 = vunpack.c.l.b16 %v5754
      %v5978 = vunpack.c.l.b16 %v5755
      %v5979 = vunpack.c.l.b16 %v5756
      %v5980 = vunpack.c.l.b16 %v5757
      %v5981 = vunpack.c.l.b16 %v5758
      %v5982 = vunpack.c.l.b16 %v5759
      %v5983 = vunpack.c.l.b16 %v5760
      %v5984 = vunpack.c.l.b16 %v5761
      %v5985 = vunpack.c.l.b16 %v5762
      %v5986 = vunpack.c.l.b16 %v5763
      %v5987 = vunpack.c.l.b16 %v5764
      %v5988 = vunpack.c.l.b16 %v5765
      %v5989 = vunpack.c.l.b16 %v5766
      %v5990 = vunpack.c.l.b16 %v5767
      %v5991 = vunpack.c.l.b16 %v5768
      %v5992 = vunpack.c.l.b16 %v5769
      %v5993 = vunpack.c.l.b16 %v5770
      %v5994 = vunpack.c.l.b16 %v5771
      %v5995 = vunpack.c.l.b16 %v5772
      %v5996 = vunpack.c.l.b16 %v5773
      %v5997 = vunpack.c.l.b16 %v5774
      %v5998 = vunpack.c.l.b16 %v5775
      %v5999 = vunpack.c.l.b16 %v5776
      %v6000 = vunpack.c.l.b16 %v5777
      %v6001 = vunpack.c.l.b16 %v5778
      %v6002 = vunpack.c.l.b16 %v5779
      %v6003 = vunpack.c.l.b16 %v5780
      %v6004 = vunpack.c.l.b16 %v5781
      %v6005 = vunpack.c.l.b16 %v5782
      %v6006 = vunpack.c.l.b16 %v5783
      %v6007 = vunpack.c.l.b16 %v5784
      %v6008 = vunpack.c.l.b16 %v5785
      %v6009 = vunpack.c.l.b16 %v5786
      %v6010 = vunpack.c.l.b16 %v5787
      %v6011 = vunpack.c.l.b16 %v5788
      %v6012 = vunpack.c.l.b16 %v5789
      %v6013 = vunpack.c.l.b16 %v5790
      %v6014 = vunpack.c.l.b16 %v5791
      %v6015 = vunpack.c.l.b16 %v5792
      %v6016 = vunpack.c.l.b16 %v5793
      %v6017 = vunpack.c.l.b16 %v5794
      %v6018 = vunpack.c.l.b16 %v5795
      %v6019 = vunpack.c.l.b16 %v5796
      %v6020 = vunpack.c.l.b16 %v5797
      %v6021 = vunpack.c.l.b16 %v5798
      %v6022 = vpack.c.b16 %v5975, %v5974
      %v6023 = vpack.c.b16 %v5977, %v5976
      %v6024 = vpack.c.b16 %v5979, %v5978
      %v6025 = vpack.c.b16 %v5981, %v5980
      %v6026 = vpack.c.b16 %v5983, %v5982
      %v6027 = vpack.c.b16 %v5985, %v5984
      %v6028 = vpack.c.b16 %v5987, %v5986
      %v6029 = vpack.c.b16 %v5989, %v5988
      %v6030 = vpack.c.b16 %v5991, %v5990
      %v6031 = vpack.c.b16 %v5993, %v5992
      %v6032 = vpack.c.b16 %v5995, %v5994
      %v6033 = vpack.c.b16 %v5997, %v5996
      %v6034 = vpack.c.b16 %v5999, %v5998
      %v6035 = vpack.c.b16 %v6001, %v6000
      %v6036 = vpack.c.b16 %v6003, %v6002
      %v6037 = vpack.c.b16 %v6005, %v6004
      %v6038 = vpack.c.b16 %v6007, %v6006
      %v6039 = vpack.c.b16 %v6009, %v6008
      %v6040 = vpack.c.b16 %v6011, %v6010
      %v6041 = vpack.c.b16 %v6013, %v6012
      %v6042 = vpack.c.b16 %v6015, %v6014
      %v6043 = vpack.c.b16 %v6017, %v6016
      %v6044 = vpack.c.b16 %v6019, %v6018
      %v6045 = vpack.c.b16 %v6021, %v6020
      %v6047 = vsel %vm681, %v5908, 0
      %v6050 = vsel %vm681, %v5909, 0
      %v6053 = vsel %vm681, %v5910, 0
      %v6056 = vsel %vm681, %v5911, 0
      %v6059 = vsel %vm681, %v5912, 0
      %v6062 = vsel %vm681, %v5913, 0
      %v6065 = vsel %vm681, %v5914, 0
      %v6068 = vsel %vm681, %v5915, 0
      %v6071 = vsel %vm681, %v5916, 0
      %v6074 = vsel %vm681, %v5917, 0
      %v6077 = vsel %vm681, %v5918, 0
      %v6080 = vsel %vm681, %v5919, 0
      %v6083 = vsel %vm681, %v5920, 0
      %v6086 = vsel %vm681, %v5921, 0
      %v6089 = vsel %vm681, %v5922, 0
      %v6092 = vsel %vm681, %v5923, 0
      %v6095 = vsel %vm681, %v5924, 0
      %v6098 = vsel %vm681, %v5925, 0
      %v6101 = vsel %vm681, %v6022, 0
      %v6104 = vsel %vm681, %v6023, 0
      %v6107 = vsel %vm681, %v6024, 0
      %v6110 = vsel %vm681, %v6025, 0
      %v6113 = vsel %vm681, %v6026, 0
      %v6116 = vsel %vm681, %v6027, 0
      %v6119 = vsel %vm681, %v6028, 0
      %v6122 = vsel %vm681, %v6029, 0
      %v6125 = vsel %vm681, %v6030, 0
      %v6128 = vsel %vm681, %v6031, 0
      %v6131 = vsel %vm681, %v6032, 0
      %v6134 = vsel %vm681, %v6033, 0
      %v6137 = vsel %vm681, %v6034, 0
      %v6140 = vsel %vm681, %v6035, 0
      %v6143 = vsel %vm681, %v6036, 0
      %v6146 = vsel %vm681, %v6037, 0
      %v6149 = vsel %vm681, %v6038, 0
      %v6152 = vsel %vm681, %v6039, 0
      %v6155 = vsel %vm681, %v6040, 0
      %v6158 = vsel %vm681, %v6041, 0
      %v6161 = vsel %vm681, %v6042, 0
      %v6164 = vsel %vm681, %v6043, 0
      %v6167 = vsel %vm681, %v6044, 0
      %v6170 = vsel %vm681, %v6045, 0
      %6172 = vmatpush.bf16.xpose.msra.mxu0 %v6122
      %6173 = vmatpush.bf16.xpose.msra.mxu0 %v6119
      %6174 = vmatpush.bf16.xpose.msra.mxu0 %v6116
      %6175 = vmatpush.bf16.xpose.msra.mxu0 %v6113
      %6176 = vmatpush.bf16.xpose.msra.mxu0 %v6110
      %6177 = vmatpush.bf16.xpose.msra.mxu0 %v6107
      %6178 = vmatpush.bf16.xpose.msra.mxu0 %v6104
      %6179 = vmatpush.bf16.xpose.msra.mxu0 %v6101
      %6180 = vmatmul.bf16.gmra.mxu0 %v6047
      %v6181 = vpop.f32.mrf.mxu0
      %v6182 = vadd.f32 0.0, %v6181
      %v6183 = vpop.f32.mrf.mxu0
      %v6184 = vadd.f32 0.0, %v6183
      %6185 = vmatmul.bf16.gmra.mxu0 %v6050
      %v6186 = vpop.f32.mrf.mxu0
      %v6187 = vadd.f32 0.0, %v6186
      %v6188 = vpop.f32.mrf.mxu0
      %v6189 = vadd.f32 0.0, %v6188
      %6190 = vmatmul.bf16.gmra.mxu0 %v6053
      %v6191 = vpop.f32.mrf.mxu0
      %v6192 = vadd.f32 0.0, %v6191
      %v6193 = vpop.f32.mrf.mxu0
      %v6194 = vadd.f32 0.0, %v6193
      %6195 = vmatmul.bf16.gmra.mxu0 %v6056
      %v6196 = vpop.f32.mrf.mxu0
      %v6197 = vadd.f32 0.0, %v6196
      %v6198 = vpop.f32.mrf.mxu0
      %v6199 = vadd.f32 0.0, %v6198
      %6200 = vmatmul.bf16.gmra.mxu0 %v6059
      %v6201 = vpop.f32.mrf.mxu0
      %v6202 = vadd.f32 0.0, %v6201
      %v6203 = vpop.f32.mrf.mxu0
      %v6204 = vadd.f32 0.0, %v6203
      %6205 = vmatmul.bf16.gmra.mxu0 %v6062
      %v6206 = vpop.f32.mrf.mxu0
      %v6207 = vadd.f32 0.0, %v6206
      %v6208 = vpop.f32.mrf.mxu0
      %v6209 = vadd.f32 0.0, %v6208
      %6210 = vmatmul.bf16.gmra.mxu0 %v6065
      %v6211 = vpop.f32.mrf.mxu0
      %v6212 = vadd.f32 0.0, %v6211
      %v6213 = vpop.f32.mrf.mxu0
      %v6214 = vadd.f32 0.0, %v6213
      %6215 = vmatmul.bf16.gmra.mxu0 %v6068
      %v6216 = vpop.f32.mrf.mxu0
      %v6217 = vadd.f32 0.0, %v6216
      %v6218 = vpop.f32.mrf.mxu0
      %v6219 = vadd.f32 0.0, %v6218
      %6220 = vmatmul.bf16.gmra.mxu0 %v6071
      %v6221 = vpop.f32.mrf.mxu0
      %v6222 = vadd.f32 0.0, %v6221
      %v6223 = vpop.f32.mrf.mxu0
      %v6224 = vadd.f32 0.0, %v6223
      %6225 = vmatmul.bf16.gmra.mxu0 %v6074
      %v6226 = vpop.f32.mrf.mxu0
      %v6227 = vadd.f32 0.0, %v6226
      %v6228 = vpop.f32.mrf.mxu0
      %v6229 = vadd.f32 0.0, %v6228
      %6230 = vmatmul.bf16.gmra.mxu0 %v6077
      %v6231 = vpop.f32.mrf.mxu0
      %v6232 = vadd.f32 0.0, %v6231
      %v6233 = vpop.f32.mrf.mxu0
      %v6234 = vadd.f32 0.0, %v6233
      %6235 = vmatmul.bf16.gmra.mxu0 %v6080
      %v6236 = vpop.f32.mrf.mxu0
      %v6237 = vadd.f32 0.0, %v6236
      %v6238 = vpop.f32.mrf.mxu0
      %v6239 = vadd.f32 0.0, %v6238
      %6240 = vmatmul.bf16.gmra.mxu0 %v6083
      %v6241 = vpop.f32.mrf.mxu0
      %v6242 = vadd.f32 0.0, %v6241
      %v6243 = vpop.f32.mrf.mxu0
      %v6244 = vadd.f32 0.0, %v6243
      %6245 = vmatmul.bf16.gmra.mxu0 %v6086
      %v6246 = vpop.f32.mrf.mxu0
      %v6247 = vadd.f32 0.0, %v6246
      %v6248 = vpop.f32.mrf.mxu0
      %v6249 = vadd.f32 0.0, %v6248
      %6250 = vmatmul.bf16.gmra.mxu0 %v6089
      %v6251 = vpop.f32.mrf.mxu0
      %v6252 = vadd.f32 0.0, %v6251
      %v6253 = vpop.f32.mrf.mxu0
      %v6254 = vadd.f32 0.0, %v6253
      %6255 = vmatmul.bf16.gmra.mxu0 %v6092
      %v6256 = vpop.f32.mrf.mxu0
      %v6257 = vadd.f32 0.0, %v6256
      %v6258 = vpop.f32.mrf.mxu0
      %v6259 = vadd.f32 0.0, %v6258
      %6260 = vmatmul.bf16.gmra.mxu0 %v6095
      %v6261 = vpop.f32.mrf.mxu0
      %v6262 = vadd.f32 0.0, %v6261
      %v6263 = vpop.f32.mrf.mxu0
      %v6264 = vadd.f32 0.0, %v6263
      %6265 = vmatmul.bf16.gmra.mxu0 %v6098
      %v6266 = vpop.f32.mrf.mxu0
      %v6267 = vadd.f32 0.0, %v6266
      %v6268 = vpop.f32.mrf.mxu0
      %v6269 = vadd.f32 0.0, %v6268
      %6270 = vdwg.mxu0
      %6271 = vmatpush.bf16.xpose.msra.mxu0 %v6146
      %6272 = vmatpush.bf16.xpose.msra.mxu0 %v6143
      %6273 = vmatpush.bf16.xpose.msra.mxu0 %v6140
      %6274 = vmatpush.bf16.xpose.msra.mxu0 %v6137
      %6275 = vmatpush.bf16.xpose.msra.mxu0 %v6134
      %6276 = vmatpush.bf16.xpose.msra.mxu0 %v6131
      %6277 = vmatpush.bf16.xpose.msra.mxu0 %v6128
      %6278 = vmatpush.bf16.xpose.msra.mxu0 %v6125
      %6279 = vmatmul.bf16.gmra.mxu0 %v6047
      %v6280 = vpop.f32.mrf.mxu0
      %v6281 = vadd.f32 0.0, %v6280
      %v6282 = vpop.f32.mrf.mxu0
      %v6283 = vadd.f32 0.0, %v6282
      %6284 = vmatmul.bf16.gmra.mxu0 %v6050
      %v6285 = vpop.f32.mrf.mxu0
      %v6286 = vadd.f32 0.0, %v6285
      %v6287 = vpop.f32.mrf.mxu0
      %v6288 = vadd.f32 0.0, %v6287
      %6289 = vmatmul.bf16.gmra.mxu0 %v6053
      %v6290 = vpop.f32.mrf.mxu0
      %v6291 = vadd.f32 0.0, %v6290
      %v6292 = vpop.f32.mrf.mxu0
      %v6293 = vadd.f32 0.0, %v6292
      %6294 = vmatmul.bf16.gmra.mxu0 %v6056
      %v6295 = vpop.f32.mrf.mxu0
      %v6296 = vadd.f32 0.0, %v6295
      %v6297 = vpop.f32.mrf.mxu0
      %v6298 = vadd.f32 0.0, %v6297
      %6299 = vmatmul.bf16.gmra.mxu0 %v6059
      %v6300 = vpop.f32.mrf.mxu0
      %v6301 = vadd.f32 0.0, %v6300
      %v6302 = vpop.f32.mrf.mxu0
      %v6303 = vadd.f32 0.0, %v6302
      %6304 = vmatmul.bf16.gmra.mxu0 %v6062
      %v6305 = vpop.f32.mrf.mxu0
      %v6306 = vadd.f32 0.0, %v6305
      %v6307 = vpop.f32.mrf.mxu0
      %v6308 = vadd.f32 0.0, %v6307
      %6309 = vmatmul.bf16.gmra.mxu0 %v6065
      %v6310 = vpop.f32.mrf.mxu0
      %v6311 = vadd.f32 0.0, %v6310
      %v6312 = vpop.f32.mrf.mxu0
      %v6313 = vadd.f32 0.0, %v6312
      %6314 = vmatmul.bf16.gmra.mxu0 %v6068
      %v6315 = vpop.f32.mrf.mxu0
      %v6316 = vadd.f32 0.0, %v6315
      %v6317 = vpop.f32.mrf.mxu0
      %v6318 = vadd.f32 0.0, %v6317
      %6319 = vmatmul.bf16.gmra.mxu0 %v6071
      %v6320 = vpop.f32.mrf.mxu0
      %v6321 = vadd.f32 0.0, %v6320
      %v6322 = vpop.f32.mrf.mxu0
      %v6323 = vadd.f32 0.0, %v6322
      %6324 = vmatmul.bf16.gmra.mxu0 %v6074
      %v6325 = vpop.f32.mrf.mxu0
      %v6326 = vadd.f32 0.0, %v6325
      %v6327 = vpop.f32.mrf.mxu0
      %v6328 = vadd.f32 0.0, %v6327
      %6329 = vmatmul.bf16.gmra.mxu0 %v6077
      %v6330 = vpop.f32.mrf.mxu0
      %v6331 = vadd.f32 0.0, %v6330
      %v6332 = vpop.f32.mrf.mxu0
      %v6333 = vadd.f32 0.0, %v6332
      %6334 = vmatmul.bf16.gmra.mxu0 %v6080
      %v6335 = vpop.f32.mrf.mxu0
      %v6336 = vadd.f32 0.0, %v6335
      %v6337 = vpop.f32.mrf.mxu0
      %v6338 = vadd.f32 0.0, %v6337
      %6339 = vmatmul.bf16.gmra.mxu0 %v6083
      %v6340 = vpop.f32.mrf.mxu0
      %v6341 = vadd.f32 0.0, %v6340
      %v6342 = vpop.f32.mrf.mxu0
      %v6343 = vadd.f32 0.0, %v6342
      %6344 = vmatmul.bf16.gmra.mxu0 %v6086
      %v6345 = vpop.f32.mrf.mxu0
      %v6346 = vadd.f32 0.0, %v6345
      %v6347 = vpop.f32.mrf.mxu0
      %v6348 = vadd.f32 0.0, %v6347
      %6349 = vmatmul.bf16.gmra.mxu0 %v6089
      %v6350 = vpop.f32.mrf.mxu0
      %v6351 = vadd.f32 0.0, %v6350
      %v6352 = vpop.f32.mrf.mxu0
      %v6353 = vadd.f32 0.0, %v6352
      %6354 = vmatmul.bf16.gmra.mxu0 %v6092
      %v6355 = vpop.f32.mrf.mxu0
      %v6356 = vadd.f32 0.0, %v6355
      %v6357 = vpop.f32.mrf.mxu0
      %v6358 = vadd.f32 0.0, %v6357
      %6359 = vmatmul.bf16.gmra.mxu0 %v6095
      %v6360 = vpop.f32.mrf.mxu0
      %v6361 = vadd.f32 0.0, %v6360
      %v6362 = vpop.f32.mrf.mxu0
      %v6363 = vadd.f32 0.0, %v6362
      %6364 = vmatmul.bf16.gmra.mxu0 %v6098
      %v6365 = vpop.f32.mrf.mxu0
      %v6366 = vadd.f32 0.0, %v6365
      %v6367 = vpop.f32.mrf.mxu0
      %v6368 = vadd.f32 0.0, %v6367
      %6369 = vdwg.mxu0
      %6370 = vmatpush.bf16.xpose.msra.mxu0 %v6170
      %6371 = vmatpush.bf16.xpose.msra.mxu0 %v6167
      %6372 = vmatpush.bf16.xpose.msra.mxu0 %v6164
      %6373 = vmatpush.bf16.xpose.msra.mxu0 %v6161
      %6374 = vmatpush.bf16.xpose.msra.mxu0 %v6158
      %6375 = vmatpush.bf16.xpose.msra.mxu0 %v6155
      %6376 = vmatpush.bf16.xpose.msra.mxu0 %v6152
      %6377 = vmatpush.bf16.xpose.msra.mxu0 %v6149
      %6378 = vmatmul.bf16.gmra.mxu0 %v6047
      %v6379 = vpop.f32.mrf.mxu0
      %v6380 = vadd.f32 0.0, %v6379
      %v6381 = vpop.f32.mrf.mxu0
      %v6382 = vadd.f32 0.0, %v6381
      %6383 = vmatmul.bf16.gmra.mxu0 %v6050
      %v6384 = vpop.f32.mrf.mxu0
      %v6385 = vadd.f32 0.0, %v6384
      %v6386 = vpop.f32.mrf.mxu0
      %v6387 = vadd.f32 0.0, %v6386
      %6388 = vmatmul.bf16.gmra.mxu0 %v6053
      %v6389 = vpop.f32.mrf.mxu0
      %v6390 = vadd.f32 0.0, %v6389
      %v6391 = vpop.f32.mrf.mxu0
      %v6392 = vadd.f32 0.0, %v6391
      %6393 = vmatmul.bf16.gmra.mxu0 %v6056
      %v6394 = vpop.f32.mrf.mxu0
      %v6395 = vadd.f32 0.0, %v6394
      %v6396 = vpop.f32.mrf.mxu0
      %v6397 = vadd.f32 0.0, %v6396
      %6398 = vmatmul.bf16.gmra.mxu0 %v6059
      %v6399 = vpop.f32.mrf.mxu0
      %v6400 = vadd.f32 0.0, %v6399
      %v6401 = vpop.f32.mrf.mxu0
      %v6402 = vadd.f32 0.0, %v6401
      %6403 = vmatmul.bf16.gmra.mxu0 %v6062
      %v6404 = vpop.f32.mrf.mxu0
      %v6405 = vadd.f32 0.0, %v6404
      %v6406 = vpop.f32.mrf.mxu0
      %v6407 = vadd.f32 0.0, %v6406
      %6408 = vmatmul.bf16.gmra.mxu0 %v6065
      %v6409 = vpop.f32.mrf.mxu0
      %v6410 = vadd.f32 0.0, %v6409
      %v6411 = vpop.f32.mrf.mxu0
      %v6412 = vadd.f32 0.0, %v6411
      %6413 = vmatmul.bf16.gmra.mxu0 %v6068
      %v6414 = vpop.f32.mrf.mxu0
      %v6415 = vadd.f32 0.0, %v6414
      %v6416 = vpop.f32.mrf.mxu0
      %v6417 = vadd.f32 0.0, %v6416
      %6418 = vmatmul.bf16.gmra.mxu0 %v6071
      %v6419 = vpop.f32.mrf.mxu0
      %v6420 = vadd.f32 0.0, %v6419
      %v6421 = vpop.f32.mrf.mxu0
      %v6422 = vadd.f32 0.0, %v6421
      %6423 = vmatmul.bf16.gmra.mxu0 %v6074
      %v6424 = vpop.f32.mrf.mxu0
      %v6425 = vadd.f32 0.0, %v6424
      %v6426 = vpop.f32.mrf.mxu0
      %v6427 = vadd.f32 0.0, %v6426
      %6428 = vmatmul.bf16.gmra.mxu0 %v6077
      %v6429 = vpop.f32.mrf.mxu0
      %v6430 = vadd.f32 0.0, %v6429
      %v6431 = vpop.f32.mrf.mxu0
      %v6432 = vadd.f32 0.0, %v6431
      %6433 = vmatmul.bf16.gmra.mxu0 %v6080
      %v6434 = vpop.f32.mrf.mxu0
      %v6435 = vadd.f32 0.0, %v6434
      %v6436 = vpop.f32.mrf.mxu0
      %v6437 = vadd.f32 0.0, %v6436
      %6438 = vmatmul.bf16.gmra.mxu0 %v6083
      %v6439 = vpop.f32.mrf.mxu0
      %v6440 = vadd.f32 0.0, %v6439
      %v6441 = vpop.f32.mrf.mxu0
      %v6442 = vadd.f32 0.0, %v6441
      %6443 = vmatmul.bf16.gmra.mxu0 %v6086
      %v6444 = vpop.f32.mrf.mxu0
      %v6445 = vadd.f32 0.0, %v6444
      %v6446 = vpop.f32.mrf.mxu0
      %v6447 = vadd.f32 0.0, %v6446
      %6448 = vmatmul.bf16.gmra.mxu0 %v6089
      %v6449 = vpop.f32.mrf.mxu0
      %v6450 = vadd.f32 0.0, %v6449
      %v6451 = vpop.f32.mrf.mxu0
      %v6452 = vadd.f32 0.0, %v6451
      %6453 = vmatmul.bf16.gmra.mxu0 %v6092
      %v6454 = vpop.f32.mrf.mxu0
      %v6455 = vadd.f32 0.0, %v6454
      %v6456 = vpop.f32.mrf.mxu0
      %v6457 = vadd.f32 0.0, %v6456
      %6458 = vmatmul.bf16.gmra.mxu0 %v6095
      %v6459 = vpop.f32.mrf.mxu0
      %v6460 = vadd.f32 0.0, %v6459
      %v6461 = vpop.f32.mrf.mxu0
      %v6462 = vadd.f32 0.0, %v6461
      %6463 = vmatmul.bf16.gmra.mxu0 %v6098
      %v6464 = vpop.f32.mrf.mxu0
      %v6465 = vadd.f32 0.0, %v6464
      %v6466 = vpop.f32.mrf.mxu0
      %v6467 = vadd.f32 0.0, %v6466
      %6468 = vdwg.mxu0
      %v6469 = vadd.f32 %v5738, %v6182
      %v6470 = vadd.f32 %v5739, %v6281
      %v6471 = vadd.f32 %v5740, %v6380
      %v6472 = vadd.f32 %v5741, %v6184
      %v6473 = vadd.f32 %v5742, %v6283
      %v6474 = vadd.f32 %v5743, %v6382
      %v6475 = vadd.f32 %v5744, %v6187
      %v6476 = vadd.f32 %v5745, %v6286
      %v6477 = vadd.f32 %v5746, %v6385
      %v6478 = vadd.f32 %v5747, %v6189
      %v6479 = vadd.f32 %v5748, %v6288
      %v6480 = vadd.f32 %v5749, %v6387
      %6493 = vrot.lane.b32.xlu0 %v6192, 127
      %v6494 = vpop.permute.xlu0 %6493
      %6495 = vrot.lane.b32.xlu0 %v6291, 127
      %v6496 = vpop.permute.xlu0 %6495
      %6497 = vrot.lane.b32.xlu0 %v6390, 127
      %v6498 = vpop.permute.xlu0 %6497
      %6499 = vrot.lane.b32.xlu0 %v6194, 127
      %v6500 = vpop.permute.xlu0 %6499
      %6501 = vrot.lane.b32.xlu0 %v6293, 127
      %v6502 = vpop.permute.xlu0 %6501
      %6503 = vrot.lane.b32.xlu0 %v6392, 127
      %v6504 = vpop.permute.xlu0 %6503
      %6505 = vrot.lane.b32.xlu0 %v6197, 127
      %v6506 = vpop.permute.xlu0 %6505
      %6507 = vrot.lane.b32.xlu0 %v6296, 127
      %v6508 = vpop.permute.xlu0 %6507
      %6509 = vrot.lane.b32.xlu0 %v6395, 127
      %v6510 = vpop.permute.xlu0 %6509
      %6511 = vrot.lane.b32.xlu0 %v6199, 127
      %v6512 = vpop.permute.xlu0 %6511
      %6513 = vrot.lane.b32.xlu0 %v6298, 127
      %v6514 = vpop.permute.xlu0 %6513
      %6515 = vrot.lane.b32.xlu0 %v6397, 127
      %v6516 = vpop.permute.xlu0 %6515
      %v6517 = vsel %vm1153, %v6494, %v6496
      %v6518 = vsel %vm1153, %v6496, %v6498
      %v6519 = vsel %vm1153, %v6500, %v6502
      %v6520 = vsel %vm1153, %v6502, %v6504
      %v6521 = vsel %vm1153, %v6506, %v6508
      %v6522 = vsel %vm1153, %v6508, %v6510
      %v6523 = vsel %vm1153, %v6512, %v6514
      %v6524 = vsel %vm1153, %v6514, %v6516
      %v6541 = vsel %vm1153, %v6498, %v6494
      %v6542 = vsel %vm1153, %v6504, %v6500
      %v6543 = vsel %vm1153, %v6510, %v6506
      %v6544 = vsel %vm1153, %v6516, %v6512
      %v6545 = vadd.f32 %v6469, %v6517
      %v6546 = vadd.f32 %v6470, %v6518
      %v6547 = vadd.f32 %v6471, %v6541
      %v6548 = vadd.f32 %v6472, %v6519
      %v6549 = vadd.f32 %v6473, %v6520
      %v6550 = vadd.f32 %v6474, %v6542
      %v6551 = vadd.f32 %v6475, %v6521
      %v6552 = vadd.f32 %v6476, %v6522
      %v6553 = vadd.f32 %v6477, %v6543
      %v6554 = vadd.f32 %v6478, %v6523
      %v6555 = vadd.f32 %v6479, %v6524
      %v6556 = vadd.f32 %v6480, %v6544
      %6569 = vrot.lane.b32.xlu0 %v6202, 126
      %v6570 = vpop.permute.xlu0 %6569
      %6571 = vrot.lane.b32.xlu0 %v6301, 126
      %v6572 = vpop.permute.xlu0 %6571
      %6573 = vrot.lane.b32.xlu0 %v6400, 126
      %v6574 = vpop.permute.xlu0 %6573
      %6575 = vrot.lane.b32.xlu0 %v6204, 126
      %v6576 = vpop.permute.xlu0 %6575
      %6577 = vrot.lane.b32.xlu0 %v6303, 126
      %v6578 = vpop.permute.xlu0 %6577
      %6579 = vrot.lane.b32.xlu0 %v6402, 126
      %v6580 = vpop.permute.xlu0 %6579
      %6581 = vrot.lane.b32.xlu0 %v6207, 126
      %v6582 = vpop.permute.xlu0 %6581
      %6583 = vrot.lane.b32.xlu0 %v6306, 126
      %v6584 = vpop.permute.xlu0 %6583
      %6585 = vrot.lane.b32.xlu0 %v6405, 126
      %v6586 = vpop.permute.xlu0 %6585
      %6587 = vrot.lane.b32.xlu0 %v6209, 126
      %v6588 = vpop.permute.xlu0 %6587
      %6589 = vrot.lane.b32.xlu0 %v6308, 126
      %v6590 = vpop.permute.xlu0 %6589
      %6591 = vrot.lane.b32.xlu0 %v6407, 126
      %v6592 = vpop.permute.xlu0 %6591
      %v6593 = vsel %vm1230, %v6570, %v6572
      %v6594 = vsel %vm1230, %v6572, %v6574
      %v6595 = vsel %vm1230, %v6576, %v6578
      %v6596 = vsel %vm1230, %v6578, %v6580
      %v6597 = vsel %vm1230, %v6582, %v6584
      %v6598 = vsel %vm1230, %v6584, %v6586
      %v6599 = vsel %vm1230, %v6588, %v6590
      %v6600 = vsel %vm1230, %v6590, %v6592
      %v6617 = vsel %vm1230, %v6574, %v6570
      %v6618 = vsel %vm1230, %v6580, %v6576
      %v6619 = vsel %vm1230, %v6586, %v6582
      %v6620 = vsel %vm1230, %v6592, %v6588
      %v6621 = vadd.f32 %v6545, %v6593
      %v6622 = vadd.f32 %v6546, %v6594
      %v6623 = vadd.f32 %v6547, %v6617
      %v6624 = vadd.f32 %v6548, %v6595
      %v6625 = vadd.f32 %v6549, %v6596
      %v6626 = vadd.f32 %v6550, %v6618
      %v6627 = vadd.f32 %v6551, %v6597
      %v6628 = vadd.f32 %v6552, %v6598
      %v6629 = vadd.f32 %v6553, %v6619
      %v6630 = vadd.f32 %v6554, %v6599
      %v6631 = vadd.f32 %v6555, %v6600
      %v6632 = vadd.f32 %v6556, %v6620
      %6645 = vrot.lane.b32.xlu0 %v6212, 125
      %v6646 = vpop.permute.xlu0 %6645
      %6647 = vrot.lane.b32.xlu0 %v6311, 125
      %v6648 = vpop.permute.xlu0 %6647
      %6649 = vrot.lane.b32.xlu0 %v6410, 125
      %v6650 = vpop.permute.xlu0 %6649
      %6651 = vrot.lane.b32.xlu0 %v6214, 125
      %v6652 = vpop.permute.xlu0 %6651
      %6653 = vrot.lane.b32.xlu0 %v6313, 125
      %v6654 = vpop.permute.xlu0 %6653
      %6655 = vrot.lane.b32.xlu0 %v6412, 125
      %v6656 = vpop.permute.xlu0 %6655
      %6657 = vrot.lane.b32.xlu0 %v6217, 125
      %v6658 = vpop.permute.xlu0 %6657
      %6659 = vrot.lane.b32.xlu0 %v6316, 125
      %v6660 = vpop.permute.xlu0 %6659
      %6661 = vrot.lane.b32.xlu0 %v6415, 125
      %v6662 = vpop.permute.xlu0 %6661
      %6663 = vrot.lane.b32.xlu0 %v6219, 125
      %v6664 = vpop.permute.xlu0 %6663
      %6665 = vrot.lane.b32.xlu0 %v6318, 125
      %v6666 = vpop.permute.xlu0 %6665
      %6667 = vrot.lane.b32.xlu0 %v6417, 125
      %v6668 = vpop.permute.xlu0 %6667
      %v6669 = vsel %vm1307, %v6646, %v6648
      %v6670 = vsel %vm1307, %v6648, %v6650
      %v6671 = vsel %vm1307, %v6652, %v6654
      %v6672 = vsel %vm1307, %v6654, %v6656
      %v6673 = vsel %vm1307, %v6658, %v6660
      %v6674 = vsel %vm1307, %v6660, %v6662
      %v6675 = vsel %vm1307, %v6664, %v6666
      %v6676 = vsel %vm1307, %v6666, %v6668
      %v6693 = vsel %vm1307, %v6650, %v6646
      %v6694 = vsel %vm1307, %v6656, %v6652
      %v6695 = vsel %vm1307, %v6662, %v6658
      %v6696 = vsel %vm1307, %v6668, %v6664
      %v6697 = vadd.f32 %v6621, %v6669
      %v6698 = vadd.f32 %v6622, %v6670
      %v6699 = vadd.f32 %v6623, %v6693
      %v6700 = vadd.f32 %v6624, %v6671
      %v6701 = vadd.f32 %v6625, %v6672
      %v6702 = vadd.f32 %v6626, %v6694
      %v6703 = vadd.f32 %v6627, %v6673
      %v6704 = vadd.f32 %v6628, %v6674
      %v6705 = vadd.f32 %v6629, %v6695
      %v6706 = vadd.f32 %v6630, %v6675
      %v6707 = vadd.f32 %v6631, %v6676
      %v6708 = vadd.f32 %v6632, %v6696
      %6721 = vrot.lane.b32.xlu0 %v6222, 124
      %v6722 = vpop.permute.xlu0 %6721
      %6723 = vrot.lane.b32.xlu0 %v6321, 124
      %v6724 = vpop.permute.xlu0 %6723
      %6725 = vrot.lane.b32.xlu0 %v6420, 124
      %v6726 = vpop.permute.xlu0 %6725
      %6727 = vrot.lane.b32.xlu0 %v6224, 124
      %v6728 = vpop.permute.xlu0 %6727
      %6729 = vrot.lane.b32.xlu0 %v6323, 124
      %v6730 = vpop.permute.xlu0 %6729
      %6731 = vrot.lane.b32.xlu0 %v6422, 124
      %v6732 = vpop.permute.xlu0 %6731
      %6733 = vrot.lane.b32.xlu0 %v6227, 124
      %v6734 = vpop.permute.xlu0 %6733
      %6735 = vrot.lane.b32.xlu0 %v6326, 124
      %v6736 = vpop.permute.xlu0 %6735
      %6737 = vrot.lane.b32.xlu0 %v6425, 124
      %v6738 = vpop.permute.xlu0 %6737
      %6739 = vrot.lane.b32.xlu0 %v6229, 124
      %v6740 = vpop.permute.xlu0 %6739
      %6741 = vrot.lane.b32.xlu0 %v6328, 124
      %v6742 = vpop.permute.xlu0 %6741
      %6743 = vrot.lane.b32.xlu0 %v6427, 124
      %v6744 = vpop.permute.xlu0 %6743
      %v6745 = vsel %vm1384, %v6722, %v6724
      %v6746 = vsel %vm1384, %v6724, %v6726
      %v6747 = vsel %vm1384, %v6728, %v6730
      %v6748 = vsel %vm1384, %v6730, %v6732
      %v6749 = vsel %vm1384, %v6734, %v6736
      %v6750 = vsel %vm1384, %v6736, %v6738
      %v6751 = vsel %vm1384, %v6740, %v6742
      %v6752 = vsel %vm1384, %v6742, %v6744
      %v6769 = vsel %vm1384, %v6726, %v6722
      %v6770 = vsel %vm1384, %v6732, %v6728
      %v6771 = vsel %vm1384, %v6738, %v6734
      %v6772 = vsel %vm1384, %v6744, %v6740
      %v6773 = vadd.f32 %v6697, %v6745
      %v6774 = vadd.f32 %v6698, %v6746
      %v6775 = vadd.f32 %v6699, %v6769
      %v6776 = vadd.f32 %v6700, %v6747
      %v6777 = vadd.f32 %v6701, %v6748
      %v6778 = vadd.f32 %v6702, %v6770
      %v6779 = vadd.f32 %v6703, %v6749
      %v6780 = vadd.f32 %v6704, %v6750
      %v6781 = vadd.f32 %v6705, %v6771
      %v6782 = vadd.f32 %v6706, %v6751
      %v6783 = vadd.f32 %v6707, %v6752
      %v6784 = vadd.f32 %v6708, %v6772
      %6797 = vrot.lane.b32.xlu0 %v6232, 123
      %v6798 = vpop.permute.xlu0 %6797
      %6799 = vrot.lane.b32.xlu0 %v6331, 123
      %v6800 = vpop.permute.xlu0 %6799
      %6801 = vrot.lane.b32.xlu0 %v6430, 123
      %v6802 = vpop.permute.xlu0 %6801
      %6803 = vrot.lane.b32.xlu0 %v6234, 123
      %v6804 = vpop.permute.xlu0 %6803
      %6805 = vrot.lane.b32.xlu0 %v6333, 123
      %v6806 = vpop.permute.xlu0 %6805
      %6807 = vrot.lane.b32.xlu0 %v6432, 123
      %v6808 = vpop.permute.xlu0 %6807
      %6809 = vrot.lane.b32.xlu0 %v6237, 123
      %v6810 = vpop.permute.xlu0 %6809
      %6811 = vrot.lane.b32.xlu0 %v6336, 123
      %v6812 = vpop.permute.xlu0 %6811
      %6813 = vrot.lane.b32.xlu0 %v6435, 123
      %v6814 = vpop.permute.xlu0 %6813
      %6815 = vrot.lane.b32.xlu0 %v6239, 123
      %v6816 = vpop.permute.xlu0 %6815
      %6817 = vrot.lane.b32.xlu0 %v6338, 123
      %v6818 = vpop.permute.xlu0 %6817
      %6819 = vrot.lane.b32.xlu0 %v6437, 123
      %v6820 = vpop.permute.xlu0 %6819
      %v6821 = vsel %vm1461, %v6798, %v6800
      %v6822 = vsel %vm1461, %v6800, %v6802
      %v6823 = vsel %vm1461, %v6804, %v6806
      %v6824 = vsel %vm1461, %v6806, %v6808
      %v6825 = vsel %vm1461, %v6810, %v6812
      %v6826 = vsel %vm1461, %v6812, %v6814
      %v6827 = vsel %vm1461, %v6816, %v6818
      %v6828 = vsel %vm1461, %v6818, %v6820
      %v6845 = vsel %vm1461, %v6802, %v6798
      %v6846 = vsel %vm1461, %v6808, %v6804
      %v6847 = vsel %vm1461, %v6814, %v6810
      %v6848 = vsel %vm1461, %v6820, %v6816
      %v6849 = vadd.f32 %v6773, %v6821
      %v6850 = vadd.f32 %v6774, %v6822
      %v6851 = vadd.f32 %v6775, %v6845
      %v6852 = vadd.f32 %v6776, %v6823
      %v6853 = vadd.f32 %v6777, %v6824
      %v6854 = vadd.f32 %v6778, %v6846
      %v6855 = vadd.f32 %v6779, %v6825
      %v6856 = vadd.f32 %v6780, %v6826
      %v6857 = vadd.f32 %v6781, %v6847
      %v6858 = vadd.f32 %v6782, %v6827
      %v6859 = vadd.f32 %v6783, %v6828
      %v6860 = vadd.f32 %v6784, %v6848
      %6873 = vrot.lane.b32.xlu0 %v6242, 122
      %v6874 = vpop.permute.xlu0 %6873
      %6875 = vrot.lane.b32.xlu0 %v6341, 122
      %v6876 = vpop.permute.xlu0 %6875
      %6877 = vrot.lane.b32.xlu0 %v6440, 122
      %v6878 = vpop.permute.xlu0 %6877
      %6879 = vrot.lane.b32.xlu0 %v6244, 122
      %v6880 = vpop.permute.xlu0 %6879
      %6881 = vrot.lane.b32.xlu0 %v6343, 122
      %v6882 = vpop.permute.xlu0 %6881
      %6883 = vrot.lane.b32.xlu0 %v6442, 122
      %v6884 = vpop.permute.xlu0 %6883
      %6885 = vrot.lane.b32.xlu0 %v6247, 122
      %v6886 = vpop.permute.xlu0 %6885
      %6887 = vrot.lane.b32.xlu0 %v6346, 122
      %v6888 = vpop.permute.xlu0 %6887
      %6889 = vrot.lane.b32.xlu0 %v6445, 122
      %v6890 = vpop.permute.xlu0 %6889
      %6891 = vrot.lane.b32.xlu0 %v6249, 122
      %v6892 = vpop.permute.xlu0 %6891
      %6893 = vrot.lane.b32.xlu0 %v6348, 122
      %v6894 = vpop.permute.xlu0 %6893
      %6895 = vrot.lane.b32.xlu0 %v6447, 122
      %v6896 = vpop.permute.xlu0 %6895
      %v6897 = vsel %vm1538, %v6874, %v6876
      %v6898 = vsel %vm1538, %v6876, %v6878
      %v6899 = vsel %vm1538, %v6880, %v6882
      %v6900 = vsel %vm1538, %v6882, %v6884
      %v6901 = vsel %vm1538, %v6886, %v6888
      %v6902 = vsel %vm1538, %v6888, %v6890
      %v6903 = vsel %vm1538, %v6892, %v6894
      %v6904 = vsel %vm1538, %v6894, %v6896
      %v6921 = vsel %vm1538, %v6878, %v6874
      %v6922 = vsel %vm1538, %v6884, %v6880
      %v6923 = vsel %vm1538, %v6890, %v6886
      %v6924 = vsel %vm1538, %v6896, %v6892
      %v6925 = vadd.f32 %v6849, %v6897
      %v6926 = vadd.f32 %v6850, %v6898
      %v6927 = vadd.f32 %v6851, %v6921
      %v6928 = vadd.f32 %v6852, %v6899
      %v6929 = vadd.f32 %v6853, %v6900
      %v6930 = vadd.f32 %v6854, %v6922
      %v6931 = vadd.f32 %v6855, %v6901
      %v6932 = vadd.f32 %v6856, %v6902
      %v6933 = vadd.f32 %v6857, %v6923
      %v6934 = vadd.f32 %v6858, %v6903
      %v6935 = vadd.f32 %v6859, %v6904
      %v6936 = vadd.f32 %v6860, %v6924
      %6949 = vrot.lane.b32.xlu0 %v6252, 121
      %v6950 = vpop.permute.xlu0 %6949
      %6951 = vrot.lane.b32.xlu0 %v6351, 121
      %v6952 = vpop.permute.xlu0 %6951
      %6953 = vrot.lane.b32.xlu0 %v6450, 121
      %v6954 = vpop.permute.xlu0 %6953
      %6955 = vrot.lane.b32.xlu0 %v6254, 121
      %v6956 = vpop.permute.xlu0 %6955
      %6957 = vrot.lane.b32.xlu0 %v6353, 121
      %v6958 = vpop.permute.xlu0 %6957
      %6959 = vrot.lane.b32.xlu0 %v6452, 121
      %v6960 = vpop.permute.xlu0 %6959
      %6961 = vrot.lane.b32.xlu0 %v6257, 121
      %v6962 = vpop.permute.xlu0 %6961
      %6963 = vrot.lane.b32.xlu0 %v6356, 121
      %v6964 = vpop.permute.xlu0 %6963
      %6965 = vrot.lane.b32.xlu0 %v6455, 121
      %v6966 = vpop.permute.xlu0 %6965
      %6967 = vrot.lane.b32.xlu0 %v6259, 121
      %v6968 = vpop.permute.xlu0 %6967
      %6969 = vrot.lane.b32.xlu0 %v6358, 121
      %v6970 = vpop.permute.xlu0 %6969
      %6971 = vrot.lane.b32.xlu0 %v6457, 121
      %v6972 = vpop.permute.xlu0 %6971
      %v6973 = vsel %vm1615, %v6950, %v6952
      %v6974 = vsel %vm1615, %v6952, %v6954
      %v6975 = vsel %vm1615, %v6956, %v6958
      %v6976 = vsel %vm1615, %v6958, %v6960
      %v6977 = vsel %vm1615, %v6962, %v6964
      %v6978 = vsel %vm1615, %v6964, %v6966
      %v6979 = vsel %vm1615, %v6968, %v6970
      %v6980 = vsel %vm1615, %v6970, %v6972
      %v6997 = vsel %vm1615, %v6954, %v6950
      %v6998 = vsel %vm1615, %v6960, %v6956
      %v6999 = vsel %vm1615, %v6966, %v6962
      %v7000 = vsel %vm1615, %v6972, %v6968
      %v7001 = vadd.f32 %v6925, %v6973
      %v7002 = vadd.f32 %v6926, %v6974
      %v7003 = vadd.f32 %v6927, %v6997
      %v7004 = vadd.f32 %v6928, %v6975
      %v7005 = vadd.f32 %v6929, %v6976
      %v7006 = vadd.f32 %v6930, %v6998
      %v7007 = vadd.f32 %v6931, %v6977
      %v7008 = vadd.f32 %v6932, %v6978
      %v7009 = vadd.f32 %v6933, %v6999
      %v7010 = vadd.f32 %v6934, %v6979
      %v7011 = vadd.f32 %v6935, %v6980
      %v7012 = vadd.f32 %v6936, %v7000
      %7025 = vrot.lane.b32.xlu0 %v6262, 120
      %v7026 = vpop.permute.xlu0 %7025
      %7027 = vrot.lane.b32.xlu0 %v6361, 120
      %v7028 = vpop.permute.xlu0 %7027
      %7029 = vrot.lane.b32.xlu0 %v6460, 120
      %v7030 = vpop.permute.xlu0 %7029
      %7031 = vrot.lane.b32.xlu0 %v6264, 120
      %v7032 = vpop.permute.xlu0 %7031
      %7033 = vrot.lane.b32.xlu0 %v6363, 120
      %v7034 = vpop.permute.xlu0 %7033
      %7035 = vrot.lane.b32.xlu0 %v6462, 120
      %v7036 = vpop.permute.xlu0 %7035
      %7037 = vrot.lane.b32.xlu0 %v6267, 120
      %v7038 = vpop.permute.xlu0 %7037
      %7039 = vrot.lane.b32.xlu0 %v6366, 120
      %v7040 = vpop.permute.xlu0 %7039
      %7041 = vrot.lane.b32.xlu0 %v6465, 120
      %v7042 = vpop.permute.xlu0 %7041
      %7043 = vrot.lane.b32.xlu0 %v6269, 120
      %v7044 = vpop.permute.xlu0 %7043
      %7045 = vrot.lane.b32.xlu0 %v6368, 120
      %v7046 = vpop.permute.xlu0 %7045
      %7047 = vrot.lane.b32.xlu0 %v6467, 120
      %v7048 = vpop.permute.xlu0 %7047
      %v7049 = vsel %vm1692, %v7026, %v7028
      %v7050 = vsel %vm1692, %v7028, %v7030
      %v7051 = vsel %vm1692, %v7032, %v7034
      %v7052 = vsel %vm1692, %v7034, %v7036
      %v7053 = vsel %vm1692, %v7038, %v7040
      %v7054 = vsel %vm1692, %v7040, %v7042
      %v7055 = vsel %vm1692, %v7044, %v7046
      %v7056 = vsel %vm1692, %v7046, %v7048
      %v7073 = vsel %vm1692, %v7030, %v7026
      %v7074 = vsel %vm1692, %v7036, %v7032
      %v7075 = vsel %vm1692, %v7042, %v7038
      %v7076 = vsel %vm1692, %v7048, %v7044
      %v7077 = vadd.f32 %v7001, %v7049
      %v7078 = vadd.f32 %v7002, %v7050
      %v7079 = vadd.f32 %v7003, %v7073
      %v7080 = vadd.f32 %v7004, %v7051
      %v7081 = vadd.f32 %v7005, %v7052
      %v7082 = vadd.f32 %v7006, %v7074
      %v7083 = vadd.f32 %v7007, %v7053
      %v7084 = vadd.f32 %v7008, %v7054
      %v7085 = vadd.f32 %v7009, %v7075
      %v7086 = vadd.f32 %v7010, %v7055
      %v7087 = vadd.f32 %v7011, %v7056
      %v7088 = vadd.f32 %v7012, %v7076
      %s7089 = scalar_lea.vmem %s345, 60
      %v7090 = vld [vmem:[%s7089] sm:$0xf]
      %v7091 = vld [vmem:[%s7089 + $0x4] sm:$0xf]
      %v7092 = vld [vmem:[%s7089 + $0x8] sm:$0xf]
      %v7093 = vld [vmem:[%s7089 + $0xc] sm:$0xf]
      %v7094 = vld [vmem:[%s7089 + $0x10] sm:$0xf]
      %v7095 = vld [vmem:[%s7089 + $0x14] sm:$0xf]
      %v7096 = vld [vmem:[%s7089 + $0x18] sm:$0xf]
      %v7097 = vld [vmem:[%s7089 + $0x1c] sm:$0xf]
      %v7098 = vld [vmem:[%s7089 + $0x20] sm:$0xf]
      %v7099 = vld [vmem:[%s7089 + $0x24] sm:$0xf]
      %v7100 = vld [vmem:[%s7089 + $0x28] sm:$0xf]
      %v7101 = vld [vmem:[%s7089 + $0x2c] sm:$0xf]
      %v7102 = vld [vmem:[%s7089 + $0x30] sm:$0xf]
      %v7103 = vld [vmem:[%s7089 + $0x34] sm:$0xf]
      %v7104 = vld [vmem:[%s7089 + $0x38] sm:$0xf]
      %v7105 = vld [vmem:[%s7089 + $0x3c] sm:$0xf]
      %v7106 = vld [vmem:[%s7089 + $0x40] sm:$0xf]
      %v7107 = vld [vmem:[%s7089 + $0x44] sm:$0xf]
      %v7108 = vld [vmem:[%s7089 + $0x48] sm:$0xf]
      %v7109 = vld [vmem:[%s7089 + $0x4c] sm:$0xf]
      %v7110 = vld [vmem:[%s7089 + $0x50] sm:$0xf]
      %v7111 = vld [vmem:[%s7089 + $0x54] sm:$0xf]
      %v7112 = vld [vmem:[%s7089 + $0x58] sm:$0xf]
      %v7113 = vld [vmem:[%s7089 + $0x5c] sm:$0xf]
      %v7114 = vld [vmem:[%s7089 + $0x60] sm:$0xf]
      %v7115 = vld [vmem:[%s7089 + $0x64] sm:$0xf]
      %v7116 = vld [vmem:[%s7089 + $0x68] sm:$0xf]
      %v7117 = vld [vmem:[%s7089 + $0x6c] sm:$0xf]
      %v7118 = vld [vmem:[%s7089 + $0x70] sm:$0xf]
      %v7119 = vld [vmem:[%s7089 + $0x74] sm:$0xf]
      %v7120 = vld [vmem:[%s7089 + $0x78] sm:$0xf]
      %v7121 = vld [vmem:[%s7089 + $0x7c] sm:$0xf]
      %v7122 = vld [vmem:[%s7089 + $0x80] sm:$0xf]
      %v7123 = vld [vmem:[%s7089 + $0x84] sm:$0xf]
      %v7124 = vld [vmem:[%s7089 + $0x88] sm:$0xf]
      %v7125 = vld [vmem:[%s7089 + $0x8c] sm:$0xf]
      %v7126 = vld [vmem:[%s7089 + $0x90] sm:$0xf]
      %v7127 = vld [vmem:[%s7089 + $0x94] sm:$0xf]
      %v7128 = vld [vmem:[%s7089 + $0x98] sm:$0xf]
      %v7129 = vld [vmem:[%s7089 + $0x9c] sm:$0xf]
      %v7130 = vld [vmem:[%s7089 + $0xa0] sm:$0xf]
      %v7131 = vld [vmem:[%s7089 + $0xa4] sm:$0xf]
      %v7132 = vld [vmem:[%s7089 + $0xa8] sm:$0xf]
      %v7133 = vld [vmem:[%s7089 + $0xac] sm:$0xf]
      %v7134 = vld [vmem:[%s7089 + $0xb0] sm:$0xf]
      %v7135 = vld [vmem:[%s7089 + $0xb4] sm:$0xf]
      %v7136 = vld [vmem:[%s7089 + $0xb8] sm:$0xf]
      %v7137 = vld [vmem:[%s7089 + $0xbc] sm:$0xf]
      %s7138 = scalar_lea.vmem %s350, 720
      %v7139 = vld [vmem:[%s7138] sm:$0xf]
      %v7140 = vld [vmem:[%s7138 + $0x4] sm:$0xf]
      %v7141 = vld [vmem:[%s7138 + $0x8] sm:$0xf]
      %v7142 = vld [vmem:[%s7138 + $0xc] sm:$0xf]
      %v7143 = vld [vmem:[%s7138 + $0x10] sm:$0xf]
      %v7144 = vld [vmem:[%s7138 + $0x14] sm:$0xf]
      %v7145 = vld [vmem:[%s7138 + $0x18] sm:$0xf]
      %v7146 = vld [vmem:[%s7138 + $0x1c] sm:$0xf]
      %v7147 = vld [vmem:[%s7138 + $0x20] sm:$0xf]
      %v7148 = vld [vmem:[%s7138 + $0x24] sm:$0xf]
      %v7149 = vld [vmem:[%s7138 + $0x28] sm:$0xf]
      %v7150 = vld [vmem:[%s7138 + $0x2c] sm:$0xf]
      %v7151 = vld [vmem:[%s7138 + $0x30] sm:$0xf]
      %v7152 = vld [vmem:[%s7138 + $0x34] sm:$0xf]
      %v7153 = vld [vmem:[%s7138 + $0x38] sm:$0xf]
      %v7154 = vld [vmem:[%s7138 + $0x3c] sm:$0xf]
      %v7155 = vld [vmem:[%s7138 + $0x40] sm:$0xf]
      %v7156 = vld [vmem:[%s7138 + $0x44] sm:$0xf]
      %v7157 = vld [vmem:[%s7138 + $0x48] sm:$0xf]
      %v7158 = vld [vmem:[%s7138 + $0x4c] sm:$0xf]
      %v7159 = vld [vmem:[%s7138 + $0x50] sm:$0xf]
      %v7160 = vld [vmem:[%s7138 + $0x54] sm:$0xf]
      %v7161 = vld [vmem:[%s7138 + $0x58] sm:$0xf]
      %v7162 = vld [vmem:[%s7138 + $0x5c] sm:$0xf]
      %v7163 = vld [vmem:[%s7138 + $0x60] sm:$0xf]
      %v7164 = vld [vmem:[%s7138 + $0x64] sm:$0xf]
      %v7165 = vld [vmem:[%s7138 + $0x68] sm:$0xf]
      %v7166 = vld [vmem:[%s7138 + $0x6c] sm:$0xf]
      %v7167 = vld [vmem:[%s7138 + $0x70] sm:$0xf]
      %v7168 = vld [vmem:[%s7138 + $0x74] sm:$0xf]
      %v7169 = vld [vmem:[%s7138 + $0x78] sm:$0xf]
      %v7170 = vld [vmem:[%s7138 + $0x7c] sm:$0xf]
      %v7171 = vld [vmem:[%s7138 + $0x80] sm:$0xf]
      %v7172 = vld [vmem:[%s7138 + $0x84] sm:$0xf]
      %v7173 = vld [vmem:[%s7138 + $0x88] sm:$0xf]
      %v7174 = vld [vmem:[%s7138 + $0x8c] sm:$0xf]
      %v7211 = vunpack.c.l.b16 %v7139
      %v7212 = vunpack.c.l.b16 %v7140
      %v7213 = vunpack.c.l.b16 %v7141
      %v7214 = vunpack.c.l.b16 %v7142
      %v7215 = vunpack.c.l.b16 %v7143
      %v7216 = vunpack.c.l.b16 %v7144
      %v7217 = vunpack.c.l.b16 %v7145
      %v7218 = vunpack.c.l.b16 %v7146
      %v7219 = vunpack.c.l.b16 %v7147
      %v7220 = vunpack.c.l.b16 %v7148
      %v7221 = vunpack.c.l.b16 %v7149
      %v7222 = vunpack.c.l.b16 %v7150
      %v7223 = vunpack.c.l.b16 %v7151
      %v7224 = vunpack.c.l.b16 %v7152
      %v7225 = vunpack.c.l.b16 %v7153
      %v7226 = vunpack.c.l.b16 %v7154
      %v7227 = vunpack.c.l.b16 %v7155
      %v7228 = vunpack.c.l.b16 %v7156
      %v7229 = vunpack.c.l.b16 %v7157
      %v7230 = vunpack.c.l.b16 %v7158
      %v7231 = vunpack.c.l.b16 %v7159
      %v7232 = vunpack.c.l.b16 %v7160
      %v7233 = vunpack.c.l.b16 %v7161
      %v7234 = vunpack.c.l.b16 %v7162
      %v7235 = vunpack.c.l.b16 %v7163
      %v7236 = vunpack.c.l.b16 %v7164
      %v7237 = vunpack.c.l.b16 %v7165
      %v7238 = vunpack.c.l.b16 %v7166
      %v7239 = vunpack.c.l.b16 %v7167
      %v7240 = vunpack.c.l.b16 %v7168
      %v7241 = vunpack.c.l.b16 %v7169
      %v7242 = vunpack.c.l.b16 %v7170
      %v7243 = vunpack.c.l.b16 %v7171
      %v7244 = vunpack.c.l.b16 %v7172
      %v7245 = vunpack.c.l.b16 %v7173
      %v7246 = vunpack.c.l.b16 %v7174
      %v7247 = vpack.c.b16 %v7212, %v7211
      %v7248 = vpack.c.b16 %v7214, %v7213
      %v7249 = vpack.c.b16 %v7216, %v7215
      %v7250 = vpack.c.b16 %v7218, %v7217
      %v7251 = vpack.c.b16 %v7220, %v7219
      %v7252 = vpack.c.b16 %v7222, %v7221
      %v7253 = vpack.c.b16 %v7224, %v7223
      %v7254 = vpack.c.b16 %v7226, %v7225
      %v7255 = vpack.c.b16 %v7228, %v7227
      %v7256 = vpack.c.b16 %v7230, %v7229
      %v7257 = vpack.c.b16 %v7232, %v7231
      %v7258 = vpack.c.b16 %v7234, %v7233
      %v7259 = vpack.c.b16 %v7236, %v7235
      %v7260 = vpack.c.b16 %v7238, %v7237
      %v7261 = vpack.c.b16 %v7240, %v7239
      %v7262 = vpack.c.b16 %v7242, %v7241
      %v7263 = vpack.c.b16 %v7244, %v7243
      %v7264 = vpack.c.b16 %v7246, %v7245
      %v7313 = vunpack.c.l.b16 %v7090
      %v7314 = vunpack.c.l.b16 %v7091
      %v7315 = vunpack.c.l.b16 %v7092
      %v7316 = vunpack.c.l.b16 %v7093
      %v7317 = vunpack.c.l.b16 %v7094
      %v7318 = vunpack.c.l.b16 %v7095
      %v7319 = vunpack.c.l.b16 %v7096
      %v7320 = vunpack.c.l.b16 %v7097
      %v7321 = vunpack.c.l.b16 %v7098
      %v7322 = vunpack.c.l.b16 %v7099
      %v7323 = vunpack.c.l.b16 %v7100
      %v7324 = vunpack.c.l.b16 %v7101
      %v7325 = vunpack.c.l.b16 %v7102
      %v7326 = vunpack.c.l.b16 %v7103
      %v7327 = vunpack.c.l.b16 %v7104
      %v7328 = vunpack.c.l.b16 %v7105
      %v7329 = vunpack.c.l.b16 %v7106
      %v7330 = vunpack.c.l.b16 %v7107
      %v7331 = vunpack.c.l.b16 %v7108
      %v7332 = vunpack.c.l.b16 %v7109
      %v7333 = vunpack.c.l.b16 %v7110
      %v7334 = vunpack.c.l.b16 %v7111
      %v7335 = vunpack.c.l.b16 %v7112
      %v7336 = vunpack.c.l.b16 %v7113
      %v7337 = vunpack.c.l.b16 %v7114
      %v7338 = vunpack.c.l.b16 %v7115
      %v7339 = vunpack.c.l.b16 %v7116
      %v7340 = vunpack.c.l.b16 %v7117
      %v7341 = vunpack.c.l.b16 %v7118
      %v7342 = vunpack.c.l.b16 %v7119
      %v7343 = vunpack.c.l.b16 %v7120
      %v7344 = vunpack.c.l.b16 %v7121
      %v7345 = vunpack.c.l.b16 %v7122
      %v7346 = vunpack.c.l.b16 %v7123
      %v7347 = vunpack.c.l.b16 %v7124
      %v7348 = vunpack.c.l.b16 %v7125
      %v7349 = vunpack.c.l.b16 %v7126
      %v7350 = vunpack.c.l.b16 %v7127
      %v7351 = vunpack.c.l.b16 %v7128
      %v7352 = vunpack.c.l.b16 %v7129
      %v7353 = vunpack.c.l.b16 %v7130
      %v7354 = vunpack.c.l.b16 %v7131
      %v7355 = vunpack.c.l.b16 %v7132
      %v7356 = vunpack.c.l.b16 %v7133
      %v7357 = vunpack.c.l.b16 %v7134
      %v7358 = vunpack.c.l.b16 %v7135
      %v7359 = vunpack.c.l.b16 %v7136
      %v7360 = vunpack.c.l.b16 %v7137
      %v7361 = vpack.c.b16 %v7314, %v7313
      %v7362 = vpack.c.b16 %v7316, %v7315
      %v7363 = vpack.c.b16 %v7318, %v7317
      %v7364 = vpack.c.b16 %v7320, %v7319
      %v7365 = vpack.c.b16 %v7322, %v7321
      %v7366 = vpack.c.b16 %v7324, %v7323
      %v7367 = vpack.c.b16 %v7326, %v7325
      %v7368 = vpack.c.b16 %v7328, %v7327
      %v7369 = vpack.c.b16 %v7330, %v7329
      %v7370 = vpack.c.b16 %v7332, %v7331
      %v7371 = vpack.c.b16 %v7334, %v7333
      %v7372 = vpack.c.b16 %v7336, %v7335
      %v7373 = vpack.c.b16 %v7338, %v7337
      %v7374 = vpack.c.b16 %v7340, %v7339
      %v7375 = vpack.c.b16 %v7342, %v7341
      %v7376 = vpack.c.b16 %v7344, %v7343
      %v7377 = vpack.c.b16 %v7346, %v7345
      %v7378 = vpack.c.b16 %v7348, %v7347
      %v7379 = vpack.c.b16 %v7350, %v7349
      %v7380 = vpack.c.b16 %v7352, %v7351
      %v7381 = vpack.c.b16 %v7354, %v7353
      %v7382 = vpack.c.b16 %v7356, %v7355
      %v7383 = vpack.c.b16 %v7358, %v7357
      %v7384 = vpack.c.b16 %v7360, %v7359
      %v7386 = vsel %vm681, %v7247, 0
      %v7389 = vsel %vm681, %v7248, 0
      %v7392 = vsel %vm681, %v7249, 0
      %v7395 = vsel %vm681, %v7250, 0
      %v7398 = vsel %vm681, %v7251, 0
      %v7401 = vsel %vm681, %v7252, 0
      %v7404 = vsel %vm681, %v7253, 0
      %v7407 = vsel %vm681, %v7254, 0
      %v7410 = vsel %vm681, %v7255, 0
      %v7413 = vsel %vm681, %v7256, 0
      %v7416 = vsel %vm681, %v7257, 0
      %v7419 = vsel %vm681, %v7258, 0
      %v7422 = vsel %vm681, %v7259, 0
      %v7425 = vsel %vm681, %v7260, 0
      %v7428 = vsel %vm681, %v7261, 0
      %v7431 = vsel %vm681, %v7262, 0
      %v7434 = vsel %vm681, %v7263, 0
      %v7437 = vsel %vm681, %v7264, 0
      %v7440 = vsel %vm681, %v7361, 0
      %v7443 = vsel %vm681, %v7362, 0
      %v7446 = vsel %vm681, %v7363, 0
      %v7449 = vsel %vm681, %v7364, 0
      %v7452 = vsel %vm681, %v7365, 0
      %v7455 = vsel %vm681, %v7366, 0
      %v7458 = vsel %vm681, %v7367, 0
      %v7461 = vsel %vm681, %v7368, 0
      %v7464 = vsel %vm681, %v7369, 0
      %v7467 = vsel %vm681, %v7370, 0
      %v7470 = vsel %vm681, %v7371, 0
      %v7473 = vsel %vm681, %v7372, 0
      %v7476 = vsel %vm681, %v7373, 0
      %v7479 = vsel %vm681, %v7374, 0
      %v7482 = vsel %vm681, %v7375, 0
      %v7485 = vsel %vm681, %v7376, 0
      %v7488 = vsel %vm681, %v7377, 0
      %v7491 = vsel %vm681, %v7378, 0
      %v7494 = vsel %vm681, %v7379, 0
      %v7497 = vsel %vm681, %v7380, 0
      %v7500 = vsel %vm681, %v7381, 0
      %v7503 = vsel %vm681, %v7382, 0
      %v7506 = vsel %vm681, %v7383, 0
      %v7509 = vsel %vm681, %v7384, 0
      %7511 = vmatpush.bf16.xpose.msra.mxu0 %v7461
      %7512 = vmatpush.bf16.xpose.msra.mxu0 %v7458
      %7513 = vmatpush.bf16.xpose.msra.mxu0 %v7455
      %7514 = vmatpush.bf16.xpose.msra.mxu0 %v7452
      %7515 = vmatpush.bf16.xpose.msra.mxu0 %v7449
      %7516 = vmatpush.bf16.xpose.msra.mxu0 %v7446
      %7517 = vmatpush.bf16.xpose.msra.mxu0 %v7443
      %7518 = vmatpush.bf16.xpose.msra.mxu0 %v7440
      %7519 = vmatmul.bf16.gmra.mxu0 %v7386
      %v7520 = vpop.f32.mrf.mxu0
      %v7521 = vadd.f32 0.0, %v7520
      %v7522 = vpop.f32.mrf.mxu0
      %v7523 = vadd.f32 0.0, %v7522
      %7524 = vmatmul.bf16.gmra.mxu0 %v7389
      %v7525 = vpop.f32.mrf.mxu0
      %v7526 = vadd.f32 0.0, %v7525
      %v7527 = vpop.f32.mrf.mxu0
      %v7528 = vadd.f32 0.0, %v7527
      %7529 = vmatmul.bf16.gmra.mxu0 %v7392
      %v7530 = vpop.f32.mrf.mxu0
      %v7531 = vadd.f32 0.0, %v7530
      %v7532 = vpop.f32.mrf.mxu0
      %v7533 = vadd.f32 0.0, %v7532
      %7534 = vmatmul.bf16.gmra.mxu0 %v7395
      %v7535 = vpop.f32.mrf.mxu0
      %v7536 = vadd.f32 0.0, %v7535
      %v7537 = vpop.f32.mrf.mxu0
      %v7538 = vadd.f32 0.0, %v7537
      %7539 = vmatmul.bf16.gmra.mxu0 %v7398
      %v7540 = vpop.f32.mrf.mxu0
      %v7541 = vadd.f32 0.0, %v7540
      %v7542 = vpop.f32.mrf.mxu0
      %v7543 = vadd.f32 0.0, %v7542
      %7544 = vmatmul.bf16.gmra.mxu0 %v7401
      %v7545 = vpop.f32.mrf.mxu0
      %v7546 = vadd.f32 0.0, %v7545
      %v7547 = vpop.f32.mrf.mxu0
      %v7548 = vadd.f32 0.0, %v7547
      %7549 = vmatmul.bf16.gmra.mxu0 %v7404
      %v7550 = vpop.f32.mrf.mxu0
      %v7551 = vadd.f32 0.0, %v7550
      %v7552 = vpop.f32.mrf.mxu0
      %v7553 = vadd.f32 0.0, %v7552
      %7554 = vmatmul.bf16.gmra.mxu0 %v7407
      %v7555 = vpop.f32.mrf.mxu0
      %v7556 = vadd.f32 0.0, %v7555
      %v7557 = vpop.f32.mrf.mxu0
      %v7558 = vadd.f32 0.0, %v7557
      %7559 = vmatmul.bf16.gmra.mxu0 %v7410
      %v7560 = vpop.f32.mrf.mxu0
      %v7561 = vadd.f32 0.0, %v7560
      %v7562 = vpop.f32.mrf.mxu0
      %v7563 = vadd.f32 0.0, %v7562
      %7564 = vmatmul.bf16.gmra.mxu0 %v7413
      %v7565 = vpop.f32.mrf.mxu0
      %v7566 = vadd.f32 0.0, %v7565
      %v7567 = vpop.f32.mrf.mxu0
      %v7568 = vadd.f32 0.0, %v7567
      %7569 = vmatmul.bf16.gmra.mxu0 %v7416
      %v7570 = vpop.f32.mrf.mxu0
      %v7571 = vadd.f32 0.0, %v7570
      %v7572 = vpop.f32.mrf.mxu0
      %v7573 = vadd.f32 0.0, %v7572
      %7574 = vmatmul.bf16.gmra.mxu0 %v7419
      %v7575 = vpop.f32.mrf.mxu0
      %v7576 = vadd.f32 0.0, %v7575
      %v7577 = vpop.f32.mrf.mxu0
      %v7578 = vadd.f32 0.0, %v7577
      %7579 = vmatmul.bf16.gmra.mxu0 %v7422
      %v7580 = vpop.f32.mrf.mxu0
      %v7581 = vadd.f32 0.0, %v7580
      %v7582 = vpop.f32.mrf.mxu0
      %v7583 = vadd.f32 0.0, %v7582
      %7584 = vmatmul.bf16.gmra.mxu0 %v7425
      %v7585 = vpop.f32.mrf.mxu0
      %v7586 = vadd.f32 0.0, %v7585
      %v7587 = vpop.f32.mrf.mxu0
      %v7588 = vadd.f32 0.0, %v7587
      %7589 = vmatmul.bf16.gmra.mxu0 %v7428
      %v7590 = vpop.f32.mrf.mxu0
      %v7591 = vadd.f32 0.0, %v7590
      %v7592 = vpop.f32.mrf.mxu0
      %v7593 = vadd.f32 0.0, %v7592
      %7594 = vmatmul.bf16.gmra.mxu0 %v7431
      %v7595 = vpop.f32.mrf.mxu0
      %v7596 = vadd.f32 0.0, %v7595
      %v7597 = vpop.f32.mrf.mxu0
      %v7598 = vadd.f32 0.0, %v7597
      %7599 = vmatmul.bf16.gmra.mxu0 %v7434
      %v7600 = vpop.f32.mrf.mxu0
      %v7601 = vadd.f32 0.0, %v7600
      %v7602 = vpop.f32.mrf.mxu0
      %v7603 = vadd.f32 0.0, %v7602
      %7604 = vmatmul.bf16.gmra.mxu0 %v7437
      %v7605 = vpop.f32.mrf.mxu0
      %v7606 = vadd.f32 0.0, %v7605
      %v7607 = vpop.f32.mrf.mxu0
      %v7608 = vadd.f32 0.0, %v7607
      %7609 = vdwg.mxu0
      %7610 = vmatpush.bf16.xpose.msra.mxu0 %v7485
      %7611 = vmatpush.bf16.xpose.msra.mxu0 %v7482
      %7612 = vmatpush.bf16.xpose.msra.mxu0 %v7479
      %7613 = vmatpush.bf16.xpose.msra.mxu0 %v7476
      %7614 = vmatpush.bf16.xpose.msra.mxu0 %v7473
      %7615 = vmatpush.bf16.xpose.msra.mxu0 %v7470
      %7616 = vmatpush.bf16.xpose.msra.mxu0 %v7467
      %7617 = vmatpush.bf16.xpose.msra.mxu0 %v7464
      %7618 = vmatmul.bf16.gmra.mxu0 %v7386
      %v7619 = vpop.f32.mrf.mxu0
      %v7620 = vadd.f32 0.0, %v7619
      %v7621 = vpop.f32.mrf.mxu0
      %v7622 = vadd.f32 0.0, %v7621
      %7623 = vmatmul.bf16.gmra.mxu0 %v7389
      %v7624 = vpop.f32.mrf.mxu0
      %v7625 = vadd.f32 0.0, %v7624
      %v7626 = vpop.f32.mrf.mxu0
      %v7627 = vadd.f32 0.0, %v7626
      %7628 = vmatmul.bf16.gmra.mxu0 %v7392
      %v7629 = vpop.f32.mrf.mxu0
      %v7630 = vadd.f32 0.0, %v7629
      %v7631 = vpop.f32.mrf.mxu0
      %v7632 = vadd.f32 0.0, %v7631
      %7633 = vmatmul.bf16.gmra.mxu0 %v7395
      %v7634 = vpop.f32.mrf.mxu0
      %v7635 = vadd.f32 0.0, %v7634
      %v7636 = vpop.f32.mrf.mxu0
      %v7637 = vadd.f32 0.0, %v7636
      %7638 = vmatmul.bf16.gmra.mxu0 %v7398
      %v7639 = vpop.f32.mrf.mxu0
      %v7640 = vadd.f32 0.0, %v7639
      %v7641 = vpop.f32.mrf.mxu0
      %v7642 = vadd.f32 0.0, %v7641
      %7643 = vmatmul.bf16.gmra.mxu0 %v7401
      %v7644 = vpop.f32.mrf.mxu0
      %v7645 = vadd.f32 0.0, %v7644
      %v7646 = vpop.f32.mrf.mxu0
      %v7647 = vadd.f32 0.0, %v7646
      %7648 = vmatmul.bf16.gmra.mxu0 %v7404
      %v7649 = vpop.f32.mrf.mxu0
      %v7650 = vadd.f32 0.0, %v7649
      %v7651 = vpop.f32.mrf.mxu0
      %v7652 = vadd.f32 0.0, %v7651
      %7653 = vmatmul.bf16.gmra.mxu0 %v7407
      %v7654 = vpop.f32.mrf.mxu0
      %v7655 = vadd.f32 0.0, %v7654
      %v7656 = vpop.f32.mrf.mxu0
      %v7657 = vadd.f32 0.0, %v7656
      %7658 = vmatmul.bf16.gmra.mxu0 %v7410
      %v7659 = vpop.f32.mrf.mxu0
      %v7660 = vadd.f32 0.0, %v7659
      %v7661 = vpop.f32.mrf.mxu0
      %v7662 = vadd.f32 0.0, %v7661
      %7663 = vmatmul.bf16.gmra.mxu0 %v7413
      %v7664 = vpop.f32.mrf.mxu0
      %v7665 = vadd.f32 0.0, %v7664
      %v7666 = vpop.f32.mrf.mxu0
      %v7667 = vadd.f32 0.0, %v7666
      %7668 = vmatmul.bf16.gmra.mxu0 %v7416
      %v7669 = vpop.f32.mrf.mxu0
      %v7670 = vadd.f32 0.0, %v7669
      %v7671 = vpop.f32.mrf.mxu0
      %v7672 = vadd.f32 0.0, %v7671
      %7673 = vmatmul.bf16.gmra.mxu0 %v7419
      %v7674 = vpop.f32.mrf.mxu0
      %v7675 = vadd.f32 0.0, %v7674
      %v7676 = vpop.f32.mrf.mxu0
      %v7677 = vadd.f32 0.0, %v7676
      %7678 = vmatmul.bf16.gmra.mxu0 %v7422
      %v7679 = vpop.f32.mrf.mxu0
      %v7680 = vadd.f32 0.0, %v7679
      %v7681 = vpop.f32.mrf.mxu0
      %v7682 = vadd.f32 0.0, %v7681
      %7683 = vmatmul.bf16.gmra.mxu0 %v7425
      %v7684 = vpop.f32.mrf.mxu0
      %v7685 = vadd.f32 0.0, %v7684
      %v7686 = vpop.f32.mrf.mxu0
      %v7687 = vadd.f32 0.0, %v7686
      %7688 = vmatmul.bf16.gmra.mxu0 %v7428
      %v7689 = vpop.f32.mrf.mxu0
      %v7690 = vadd.f32 0.0, %v7689
      %v7691 = vpop.f32.mrf.mxu0
      %v7692 = vadd.f32 0.0, %v7691
      %7693 = vmatmul.bf16.gmra.mxu0 %v7431
      %v7694 = vpop.f32.mrf.mxu0
      %v7695 = vadd.f32 0.0, %v7694
      %v7696 = vpop.f32.mrf.mxu0
      %v7697 = vadd.f32 0.0, %v7696
      %7698 = vmatmul.bf16.gmra.mxu0 %v7434
      %v7699 = vpop.f32.mrf.mxu0
      %v7700 = vadd.f32 0.0, %v7699
      %v7701 = vpop.f32.mrf.mxu0
      %v7702 = vadd.f32 0.0, %v7701
      %7703 = vmatmul.bf16.gmra.mxu0 %v7437
      %v7704 = vpop.f32.mrf.mxu0
      %v7705 = vadd.f32 0.0, %v7704
      %v7706 = vpop.f32.mrf.mxu0
      %v7707 = vadd.f32 0.0, %v7706
      %7708 = vdwg.mxu0
      %7709 = vmatpush.bf16.xpose.msra.mxu0 %v7509
      %7710 = vmatpush.bf16.xpose.msra.mxu0 %v7506
      %7711 = vmatpush.bf16.xpose.msra.mxu0 %v7503
      %7712 = vmatpush.bf16.xpose.msra.mxu0 %v7500
      %7713 = vmatpush.bf16.xpose.msra.mxu0 %v7497
      %7714 = vmatpush.bf16.xpose.msra.mxu0 %v7494
      %7715 = vmatpush.bf16.xpose.msra.mxu0 %v7491
      %7716 = vmatpush.bf16.xpose.msra.mxu0 %v7488
      %7717 = vmatmul.bf16.gmra.mxu0 %v7386
      %v7718 = vpop.f32.mrf.mxu0
      %v7719 = vadd.f32 0.0, %v7718
      %v7720 = vpop.f32.mrf.mxu0
      %v7721 = vadd.f32 0.0, %v7720
      %7722 = vmatmul.bf16.gmra.mxu0 %v7389
      %v7723 = vpop.f32.mrf.mxu0
      %v7724 = vadd.f32 0.0, %v7723
      %v7725 = vpop.f32.mrf.mxu0
      %v7726 = vadd.f32 0.0, %v7725
      %7727 = vmatmul.bf16.gmra.mxu0 %v7392
      %v7728 = vpop.f32.mrf.mxu0
      %v7729 = vadd.f32 0.0, %v7728
      %v7730 = vpop.f32.mrf.mxu0
      %v7731 = vadd.f32 0.0, %v7730
      %7732 = vmatmul.bf16.gmra.mxu0 %v7395
      %v7733 = vpop.f32.mrf.mxu0
      %v7734 = vadd.f32 0.0, %v7733
      %v7735 = vpop.f32.mrf.mxu0
      %v7736 = vadd.f32 0.0, %v7735
      %7737 = vmatmul.bf16.gmra.mxu0 %v7398
      %v7738 = vpop.f32.mrf.mxu0
      %v7739 = vadd.f32 0.0, %v7738
      %v7740 = vpop.f32.mrf.mxu0
      %v7741 = vadd.f32 0.0, %v7740
      %7742 = vmatmul.bf16.gmra.mxu0 %v7401
      %v7743 = vpop.f32.mrf.mxu0
      %v7744 = vadd.f32 0.0, %v7743
      %v7745 = vpop.f32.mrf.mxu0
      %v7746 = vadd.f32 0.0, %v7745
      %7747 = vmatmul.bf16.gmra.mxu0 %v7404
      %v7748 = vpop.f32.mrf.mxu0
      %v7749 = vadd.f32 0.0, %v7748
      %v7750 = vpop.f32.mrf.mxu0
      %v7751 = vadd.f32 0.0, %v7750
      %7752 = vmatmul.bf16.gmra.mxu0 %v7407
      %v7753 = vpop.f32.mrf.mxu0
      %v7754 = vadd.f32 0.0, %v7753
      %v7755 = vpop.f32.mrf.mxu0
      %v7756 = vadd.f32 0.0, %v7755
      %7757 = vmatmul.bf16.gmra.mxu0 %v7410
      %v7758 = vpop.f32.mrf.mxu0
      %v7759 = vadd.f32 0.0, %v7758
      %v7760 = vpop.f32.mrf.mxu0
      %v7761 = vadd.f32 0.0, %v7760
      %7762 = vmatmul.bf16.gmra.mxu0 %v7413
      %v7763 = vpop.f32.mrf.mxu0
      %v7764 = vadd.f32 0.0, %v7763
      %v7765 = vpop.f32.mrf.mxu0
      %v7766 = vadd.f32 0.0, %v7765
      %7767 = vmatmul.bf16.gmra.mxu0 %v7416
      %v7768 = vpop.f32.mrf.mxu0
      %v7769 = vadd.f32 0.0, %v7768
      %v7770 = vpop.f32.mrf.mxu0
      %v7771 = vadd.f32 0.0, %v7770
      %7772 = vmatmul.bf16.gmra.mxu0 %v7419
      %v7773 = vpop.f32.mrf.mxu0
      %v7774 = vadd.f32 0.0, %v7773
      %v7775 = vpop.f32.mrf.mxu0
      %v7776 = vadd.f32 0.0, %v7775
      %7777 = vmatmul.bf16.gmra.mxu0 %v7422
      %v7778 = vpop.f32.mrf.mxu0
      %v7779 = vadd.f32 0.0, %v7778
      %v7780 = vpop.f32.mrf.mxu0
      %v7781 = vadd.f32 0.0, %v7780
      %7782 = vmatmul.bf16.gmra.mxu0 %v7425
      %v7783 = vpop.f32.mrf.mxu0
      %v7784 = vadd.f32 0.0, %v7783
      %v7785 = vpop.f32.mrf.mxu0
      %v7786 = vadd.f32 0.0, %v7785
      %7787 = vmatmul.bf16.gmra.mxu0 %v7428
      %v7788 = vpop.f32.mrf.mxu0
      %v7789 = vadd.f32 0.0, %v7788
      %v7790 = vpop.f32.mrf.mxu0
      %v7791 = vadd.f32 0.0, %v7790
      %7792 = vmatmul.bf16.gmra.mxu0 %v7431
      %v7793 = vpop.f32.mrf.mxu0
      %v7794 = vadd.f32 0.0, %v7793
      %v7795 = vpop.f32.mrf.mxu0
      %v7796 = vadd.f32 0.0, %v7795
      %7797 = vmatmul.bf16.gmra.mxu0 %v7434
      %v7798 = vpop.f32.mrf.mxu0
      %v7799 = vadd.f32 0.0, %v7798
      %v7800 = vpop.f32.mrf.mxu0
      %v7801 = vadd.f32 0.0, %v7800
      %7802 = vmatmul.bf16.gmra.mxu0 %v7437
      %v7803 = vpop.f32.mrf.mxu0
      %v7804 = vadd.f32 0.0, %v7803
      %v7805 = vpop.f32.mrf.mxu0
      %v7806 = vadd.f32 0.0, %v7805
      %7807 = vdwg.mxu0
      %v7808 = vadd.f32 %v7077, %v7521
      %v7809 = vadd.f32 %v7078, %v7620
      %v7810 = vadd.f32 %v7079, %v7719
      %v7811 = vadd.f32 %v7080, %v7523
      %v7812 = vadd.f32 %v7081, %v7622
      %v7813 = vadd.f32 %v7082, %v7721
      %v7814 = vadd.f32 %v7083, %v7526
      %v7815 = vadd.f32 %v7084, %v7625
      %v7816 = vadd.f32 %v7085, %v7724
      %v7817 = vadd.f32 %v7086, %v7528
      %v7818 = vadd.f32 %v7087, %v7627
      %v7819 = vadd.f32 %v7088, %v7726
      %7832 = vrot.lane.b32.xlu0 %v7531, 127
      %v7833 = vpop.permute.xlu0 %7832
      %7834 = vrot.lane.b32.xlu0 %v7630, 127
      %v7835 = vpop.permute.xlu0 %7834
      %7836 = vrot.lane.b32.xlu0 %v7729, 127
      %v7837 = vpop.permute.xlu0 %7836
      %7838 = vrot.lane.b32.xlu0 %v7533, 127
      %v7839 = vpop.permute.xlu0 %7838
      %7840 = vrot.lane.b32.xlu0 %v7632, 127
      %v7841 = vpop.permute.xlu0 %7840
      %7842 = vrot.lane.b32.xlu0 %v7731, 127
      %v7843 = vpop.permute.xlu0 %7842
      %7844 = vrot.lane.b32.xlu0 %v7536, 127
      %v7845 = vpop.permute.xlu0 %7844
      %7846 = vrot.lane.b32.xlu0 %v7635, 127
      %v7847 = vpop.permute.xlu0 %7846
      %7848 = vrot.lane.b32.xlu0 %v7734, 127
      %v7849 = vpop.permute.xlu0 %7848
      %7850 = vrot.lane.b32.xlu0 %v7538, 127
      %v7851 = vpop.permute.xlu0 %7850
      %7852 = vrot.lane.b32.xlu0 %v7637, 127
      %v7853 = vpop.permute.xlu0 %7852
      %7854 = vrot.lane.b32.xlu0 %v7736, 127
      %v7855 = vpop.permute.xlu0 %7854
      %v7856 = vsel %vm1153, %v7833, %v7835
      %v7857 = vsel %vm1153, %v7835, %v7837
      %v7858 = vsel %vm1153, %v7839, %v7841
      %v7859 = vsel %vm1153, %v7841, %v7843
      %v7860 = vsel %vm1153, %v7845, %v7847
      %v7861 = vsel %vm1153, %v7847, %v7849
      %v7862 = vsel %vm1153, %v7851, %v7853
      %v7863 = vsel %vm1153, %v7853, %v7855
      %v7880 = vsel %vm1153, %v7837, %v7833
      %v7881 = vsel %vm1153, %v7843, %v7839
      %v7882 = vsel %vm1153, %v7849, %v7845
      %v7883 = vsel %vm1153, %v7855, %v7851
      %v7884 = vadd.f32 %v7808, %v7856
      %v7885 = vadd.f32 %v7809, %v7857
      %v7886 = vadd.f32 %v7810, %v7880
      %v7887 = vadd.f32 %v7811, %v7858
      %v7888 = vadd.f32 %v7812, %v7859
      %v7889 = vadd.f32 %v7813, %v7881
      %v7890 = vadd.f32 %v7814, %v7860
      %v7891 = vadd.f32 %v7815, %v7861
      %v7892 = vadd.f32 %v7816, %v7882
      %v7893 = vadd.f32 %v7817, %v7862
      %v7894 = vadd.f32 %v7818, %v7863
      %v7895 = vadd.f32 %v7819, %v7883
      %7908 = vrot.lane.b32.xlu0 %v7541, 126
      %v7909 = vpop.permute.xlu0 %7908
      %7910 = vrot.lane.b32.xlu0 %v7640, 126
      %v7911 = vpop.permute.xlu0 %7910
      %7912 = vrot.lane.b32.xlu0 %v7739, 126
      %v7913 = vpop.permute.xlu0 %7912
      %7914 = vrot.lane.b32.xlu0 %v7543, 126
      %v7915 = vpop.permute.xlu0 %7914
      %7916 = vrot.lane.b32.xlu0 %v7642, 126
      %v7917 = vpop.permute.xlu0 %7916
      %7918 = vrot.lane.b32.xlu0 %v7741, 126
      %v7919 = vpop.permute.xlu0 %7918
      %7920 = vrot.lane.b32.xlu0 %v7546, 126
      %v7921 = vpop.permute.xlu0 %7920
      %7922 = vrot.lane.b32.xlu0 %v7645, 126
      %v7923 = vpop.permute.xlu0 %7922
      %7924 = vrot.lane.b32.xlu0 %v7744, 126
      %v7925 = vpop.permute.xlu0 %7924
      %7926 = vrot.lane.b32.xlu0 %v7548, 126
      %v7927 = vpop.permute.xlu0 %7926
      %7928 = vrot.lane.b32.xlu0 %v7647, 126
      %v7929 = vpop.permute.xlu0 %7928
      %7930 = vrot.lane.b32.xlu0 %v7746, 126
      %v7931 = vpop.permute.xlu0 %7930
      %v7932 = vsel %vm1230, %v7909, %v7911
      %v7933 = vsel %vm1230, %v7911, %v7913
      %v7934 = vsel %vm1230, %v7915, %v7917
      %v7935 = vsel %vm1230, %v7917, %v7919
      %v7936 = vsel %vm1230, %v7921, %v7923
      %v7937 = vsel %vm1230, %v7923, %v7925
      %v7938 = vsel %vm1230, %v7927, %v7929
      %v7939 = vsel %vm1230, %v7929, %v7931
      %v7956 = vsel %vm1230, %v7913, %v7909
      %v7957 = vsel %vm1230, %v7919, %v7915
      %v7958 = vsel %vm1230, %v7925, %v7921
      %v7959 = vsel %vm1230, %v7931, %v7927
      %v7960 = vadd.f32 %v7884, %v7932
      %v7961 = vadd.f32 %v7885, %v7933
      %v7962 = vadd.f32 %v7886, %v7956
      %v7963 = vadd.f32 %v7887, %v7934
      %v7964 = vadd.f32 %v7888, %v7935
      %v7965 = vadd.f32 %v7889, %v7957
      %v7966 = vadd.f32 %v7890, %v7936
      %v7967 = vadd.f32 %v7891, %v7937
      %v7968 = vadd.f32 %v7892, %v7958
      %v7969 = vadd.f32 %v7893, %v7938
      %v7970 = vadd.f32 %v7894, %v7939
      %v7971 = vadd.f32 %v7895, %v7959
      %7984 = vrot.lane.b32.xlu0 %v7551, 125
      %v7985 = vpop.permute.xlu0 %7984
      %7986 = vrot.lane.b32.xlu0 %v7650, 125
      %v7987 = vpop.permute.xlu0 %7986
      %7988 = vrot.lane.b32.xlu0 %v7749, 125
      %v7989 = vpop.permute.xlu0 %7988
      %7990 = vrot.lane.b32.xlu0 %v7553, 125
      %v7991 = vpop.permute.xlu0 %7990
      %7992 = vrot.lane.b32.xlu0 %v7652, 125
      %v7993 = vpop.permute.xlu0 %7992
      %7994 = vrot.lane.b32.xlu0 %v7751, 125
      %v7995 = vpop.permute.xlu0 %7994
      %7996 = vrot.lane.b32.xlu0 %v7556, 125
      %v7997 = vpop.permute.xlu0 %7996
      %7998 = vrot.lane.b32.xlu0 %v7655, 125
      %v7999 = vpop.permute.xlu0 %7998
      %8000 = vrot.lane.b32.xlu0 %v7754, 125
      %v8001 = vpop.permute.xlu0 %8000
      %8002 = vrot.lane.b32.xlu0 %v7558, 125
      %v8003 = vpop.permute.xlu0 %8002
      %8004 = vrot.lane.b32.xlu0 %v7657, 125
      %v8005 = vpop.permute.xlu0 %8004
      %8006 = vrot.lane.b32.xlu0 %v7756, 125
      %v8007 = vpop.permute.xlu0 %8006
      %v8008 = vsel %vm1307, %v7985, %v7987
      %v8009 = vsel %vm1307, %v7987, %v7989
      %v8010 = vsel %vm1307, %v7991, %v7993
      %v8011 = vsel %vm1307, %v7993, %v7995
      %v8012 = vsel %vm1307, %v7997, %v7999
      %v8013 = vsel %vm1307, %v7999, %v8001
      %v8014 = vsel %vm1307, %v8003, %v8005
      %v8015 = vsel %vm1307, %v8005, %v8007
      %v8032 = vsel %vm1307, %v7989, %v7985
      %v8033 = vsel %vm1307, %v7995, %v7991
      %v8034 = vsel %vm1307, %v8001, %v7997
      %v8035 = vsel %vm1307, %v8007, %v8003
      %v8036 = vadd.f32 %v7960, %v8008
      %v8037 = vadd.f32 %v7961, %v8009
      %v8038 = vadd.f32 %v7962, %v8032
      %v8039 = vadd.f32 %v7963, %v8010
      %v8040 = vadd.f32 %v7964, %v8011
      %v8041 = vadd.f32 %v7965, %v8033
      %v8042 = vadd.f32 %v7966, %v8012
      %v8043 = vadd.f32 %v7967, %v8013
      %v8044 = vadd.f32 %v7968, %v8034
      %v8045 = vadd.f32 %v7969, %v8014
      %v8046 = vadd.f32 %v7970, %v8015
      %v8047 = vadd.f32 %v7971, %v8035
      %8060 = vrot.lane.b32.xlu0 %v7561, 124
      %v8061 = vpop.permute.xlu0 %8060
      %8062 = vrot.lane.b32.xlu0 %v7660, 124
      %v8063 = vpop.permute.xlu0 %8062
      %8064 = vrot.lane.b32.xlu0 %v7759, 124
      %v8065 = vpop.permute.xlu0 %8064
      %8066 = vrot.lane.b32.xlu0 %v7563, 124
      %v8067 = vpop.permute.xlu0 %8066
      %8068 = vrot.lane.b32.xlu0 %v7662, 124
      %v8069 = vpop.permute.xlu0 %8068
      %8070 = vrot.lane.b32.xlu0 %v7761, 124
      %v8071 = vpop.permute.xlu0 %8070
      %8072 = vrot.lane.b32.xlu0 %v7566, 124
      %v8073 = vpop.permute.xlu0 %8072
      %8074 = vrot.lane.b32.xlu0 %v7665, 124
      %v8075 = vpop.permute.xlu0 %8074
      %8076 = vrot.lane.b32.xlu0 %v7764, 124
      %v8077 = vpop.permute.xlu0 %8076
      %8078 = vrot.lane.b32.xlu0 %v7568, 124
      %v8079 = vpop.permute.xlu0 %8078
      %8080 = vrot.lane.b32.xlu0 %v7667, 124
      %v8081 = vpop.permute.xlu0 %8080
      %8082 = vrot.lane.b32.xlu0 %v7766, 124
      %v8083 = vpop.permute.xlu0 %8082
      %v8084 = vsel %vm1384, %v8061, %v8063
      %v8085 = vsel %vm1384, %v8063, %v8065
      %v8086 = vsel %vm1384, %v8067, %v8069
      %v8087 = vsel %vm1384, %v8069, %v8071
      %v8088 = vsel %vm1384, %v8073, %v8075
      %v8089 = vsel %vm1384, %v8075, %v8077
      %v8090 = vsel %vm1384, %v8079, %v8081
      %v8091 = vsel %vm1384, %v8081, %v8083
      %v8108 = vsel %vm1384, %v8065, %v8061
      %v8109 = vsel %vm1384, %v8071, %v8067
      %v8110 = vsel %vm1384, %v8077, %v8073
      %v8111 = vsel %vm1384, %v8083, %v8079
      %v8112 = vadd.f32 %v8036, %v8084
      %v8113 = vadd.f32 %v8037, %v8085
      %v8114 = vadd.f32 %v8038, %v8108
      %v8115 = vadd.f32 %v8039, %v8086
      %v8116 = vadd.f32 %v8040, %v8087
      %v8117 = vadd.f32 %v8041, %v8109
      %v8118 = vadd.f32 %v8042, %v8088
      %v8119 = vadd.f32 %v8043, %v8089
      %v8120 = vadd.f32 %v8044, %v8110
      %v8121 = vadd.f32 %v8045, %v8090
      %v8122 = vadd.f32 %v8046, %v8091
      %v8123 = vadd.f32 %v8047, %v8111
      %8136 = vrot.lane.b32.xlu0 %v7571, 123
      %v8137 = vpop.permute.xlu0 %8136
      %8138 = vrot.lane.b32.xlu0 %v7670, 123
      %v8139 = vpop.permute.xlu0 %8138
      %8140 = vrot.lane.b32.xlu0 %v7769, 123
      %v8141 = vpop.permute.xlu0 %8140
      %8142 = vrot.lane.b32.xlu0 %v7573, 123
      %v8143 = vpop.permute.xlu0 %8142
      %8144 = vrot.lane.b32.xlu0 %v7672, 123
      %v8145 = vpop.permute.xlu0 %8144
      %8146 = vrot.lane.b32.xlu0 %v7771, 123
      %v8147 = vpop.permute.xlu0 %8146
      %8148 = vrot.lane.b32.xlu0 %v7576, 123
      %v8149 = vpop.permute.xlu0 %8148
      %8150 = vrot.lane.b32.xlu0 %v7675, 123
      %v8151 = vpop.permute.xlu0 %8150
      %8152 = vrot.lane.b32.xlu0 %v7774, 123
      %v8153 = vpop.permute.xlu0 %8152
      %8154 = vrot.lane.b32.xlu0 %v7578, 123
      %v8155 = vpop.permute.xlu0 %8154
      %8156 = vrot.lane.b32.xlu0 %v7677, 123
      %v8157 = vpop.permute.xlu0 %8156
      %8158 = vrot.lane.b32.xlu0 %v7776, 123
      %v8159 = vpop.permute.xlu0 %8158
      %v8160 = vsel %vm1461, %v8137, %v8139
      %v8161 = vsel %vm1461, %v8139, %v8141
      %v8162 = vsel %vm1461, %v8143, %v8145
      %v8163 = vsel %vm1461, %v8145, %v8147
      %v8164 = vsel %vm1461, %v8149, %v8151
      %v8165 = vsel %vm1461, %v8151, %v8153
      %v8166 = vsel %vm1461, %v8155, %v8157
      %v8167 = vsel %vm1461, %v8157, %v8159
      %v8184 = vsel %vm1461, %v8141, %v8137
      %v8185 = vsel %vm1461, %v8147, %v8143
      %v8186 = vsel %vm1461, %v8153, %v8149
      %v8187 = vsel %vm1461, %v8159, %v8155
      %v8188 = vadd.f32 %v8112, %v8160
      %v8189 = vadd.f32 %v8113, %v8161
      %v8190 = vadd.f32 %v8114, %v8184
      %v8191 = vadd.f32 %v8115, %v8162
      %v8192 = vadd.f32 %v8116, %v8163
      %v8193 = vadd.f32 %v8117, %v8185
      %v8194 = vadd.f32 %v8118, %v8164
      %v8195 = vadd.f32 %v8119, %v8165
      %v8196 = vadd.f32 %v8120, %v8186
      %v8197 = vadd.f32 %v8121, %v8166
      %v8198 = vadd.f32 %v8122, %v8167
      %v8199 = vadd.f32 %v8123, %v8187
      %8212 = vrot.lane.b32.xlu0 %v7581, 122
      %v8213 = vpop.permute.xlu0 %8212
      %8214 = vrot.lane.b32.xlu0 %v7680, 122
      %v8215 = vpop.permute.xlu0 %8214
      %8216 = vrot.lane.b32.xlu0 %v7779, 122
      %v8217 = vpop.permute.xlu0 %8216
      %8218 = vrot.lane.b32.xlu0 %v7583, 122
      %v8219 = vpop.permute.xlu0 %8218
      %8220 = vrot.lane.b32.xlu0 %v7682, 122
      %v8221 = vpop.permute.xlu0 %8220
      %8222 = vrot.lane.b32.xlu0 %v7781, 122
      %v8223 = vpop.permute.xlu0 %8222
      %8224 = vrot.lane.b32.xlu0 %v7586, 122
      %v8225 = vpop.permute.xlu0 %8224
      %8226 = vrot.lane.b32.xlu0 %v7685, 122
      %v8227 = vpop.permute.xlu0 %8226
      %8228 = vrot.lane.b32.xlu0 %v7784, 122
      %v8229 = vpop.permute.xlu0 %8228
      %8230 = vrot.lane.b32.xlu0 %v7588, 122
      %v8231 = vpop.permute.xlu0 %8230
      %8232 = vrot.lane.b32.xlu0 %v7687, 122
      %v8233 = vpop.permute.xlu0 %8232
      %8234 = vrot.lane.b32.xlu0 %v7786, 122
      %v8235 = vpop.permute.xlu0 %8234
      %v8236 = vsel %vm1538, %v8213, %v8215
      %v8237 = vsel %vm1538, %v8215, %v8217
      %v8238 = vsel %vm1538, %v8219, %v8221
      %v8239 = vsel %vm1538, %v8221, %v8223
      %v8240 = vsel %vm1538, %v8225, %v8227
      %v8241 = vsel %vm1538, %v8227, %v8229
      %v8242 = vsel %vm1538, %v8231, %v8233
      %v8243 = vsel %vm1538, %v8233, %v8235
      %v8260 = vsel %vm1538, %v8217, %v8213
      %v8261 = vsel %vm1538, %v8223, %v8219
      %v8262 = vsel %vm1538, %v8229, %v8225
      %v8263 = vsel %vm1538, %v8235, %v8231
      %v8264 = vadd.f32 %v8188, %v8236
      %v8265 = vadd.f32 %v8189, %v8237
      %v8266 = vadd.f32 %v8190, %v8260
      %v8267 = vadd.f32 %v8191, %v8238
      %v8268 = vadd.f32 %v8192, %v8239
      %v8269 = vadd.f32 %v8193, %v8261
      %v8270 = vadd.f32 %v8194, %v8240
      %v8271 = vadd.f32 %v8195, %v8241
      %v8272 = vadd.f32 %v8196, %v8262
      %v8273 = vadd.f32 %v8197, %v8242
      %v8274 = vadd.f32 %v8198, %v8243
      %v8275 = vadd.f32 %v8199, %v8263
      %8288 = vrot.lane.b32.xlu0 %v7591, 121
      %v8289 = vpop.permute.xlu0 %8288
      %8290 = vrot.lane.b32.xlu0 %v7690, 121
      %v8291 = vpop.permute.xlu0 %8290
      %8292 = vrot.lane.b32.xlu0 %v7789, 121
      %v8293 = vpop.permute.xlu0 %8292
      %8294 = vrot.lane.b32.xlu0 %v7593, 121
      %v8295 = vpop.permute.xlu0 %8294
      %8296 = vrot.lane.b32.xlu0 %v7692, 121
      %v8297 = vpop.permute.xlu0 %8296
      %8298 = vrot.lane.b32.xlu0 %v7791, 121
      %v8299 = vpop.permute.xlu0 %8298
      %8300 = vrot.lane.b32.xlu0 %v7596, 121
      %v8301 = vpop.permute.xlu0 %8300
      %8302 = vrot.lane.b32.xlu0 %v7695, 121
      %v8303 = vpop.permute.xlu0 %8302
      %8304 = vrot.lane.b32.xlu0 %v7794, 121
      %v8305 = vpop.permute.xlu0 %8304
      %8306 = vrot.lane.b32.xlu0 %v7598, 121
      %v8307 = vpop.permute.xlu0 %8306
      %8308 = vrot.lane.b32.xlu0 %v7697, 121
      %v8309 = vpop.permute.xlu0 %8308
      %8310 = vrot.lane.b32.xlu0 %v7796, 121
      %v8311 = vpop.permute.xlu0 %8310
      %v8312 = vsel %vm1615, %v8289, %v8291
      %v8313 = vsel %vm1615, %v8291, %v8293
      %v8314 = vsel %vm1615, %v8295, %v8297
      %v8315 = vsel %vm1615, %v8297, %v8299
      %v8316 = vsel %vm1615, %v8301, %v8303
      %v8317 = vsel %vm1615, %v8303, %v8305
      %v8318 = vsel %vm1615, %v8307, %v8309
      %v8319 = vsel %vm1615, %v8309, %v8311
      %v8336 = vsel %vm1615, %v8293, %v8289
      %v8337 = vsel %vm1615, %v8299, %v8295
      %v8338 = vsel %vm1615, %v8305, %v8301
      %v8339 = vsel %vm1615, %v8311, %v8307
      %v8340 = vadd.f32 %v8264, %v8312
      %v8341 = vadd.f32 %v8265, %v8313
      %v8342 = vadd.f32 %v8266, %v8336
      %v8343 = vadd.f32 %v8267, %v8314
      %v8344 = vadd.f32 %v8268, %v8315
      %v8345 = vadd.f32 %v8269, %v8337
      %v8346 = vadd.f32 %v8270, %v8316
      %v8347 = vadd.f32 %v8271, %v8317
      %v8348 = vadd.f32 %v8272, %v8338
      %v8349 = vadd.f32 %v8273, %v8318
      %v8350 = vadd.f32 %v8274, %v8319
      %v8351 = vadd.f32 %v8275, %v8339
      %8364 = vrot.lane.b32.xlu0 %v7601, 120
      %v8365 = vpop.permute.xlu0 %8364
      %8366 = vrot.lane.b32.xlu0 %v7700, 120
      %v8367 = vpop.permute.xlu0 %8366
      %8368 = vrot.lane.b32.xlu0 %v7799, 120
      %v8369 = vpop.permute.xlu0 %8368
      %8370 = vrot.lane.b32.xlu0 %v7603, 120
      %v8371 = vpop.permute.xlu0 %8370
      %8372 = vrot.lane.b32.xlu0 %v7702, 120
      %v8373 = vpop.permute.xlu0 %8372
      %8374 = vrot.lane.b32.xlu0 %v7801, 120
      %v8375 = vpop.permute.xlu0 %8374
      %8376 = vrot.lane.b32.xlu0 %v7606, 120
      %v8377 = vpop.permute.xlu0 %8376
      %8378 = vrot.lane.b32.xlu0 %v7705, 120
      %v8379 = vpop.permute.xlu0 %8378
      %8380 = vrot.lane.b32.xlu0 %v7804, 120
      %v8381 = vpop.permute.xlu0 %8380
      %8382 = vrot.lane.b32.xlu0 %v7608, 120
      %v8383 = vpop.permute.xlu0 %8382
      %8384 = vrot.lane.b32.xlu0 %v7707, 120
      %v8385 = vpop.permute.xlu0 %8384
      %8386 = vrot.lane.b32.xlu0 %v7806, 120
      %v8387 = vpop.permute.xlu0 %8386
      %v8388 = vsel %vm1692, %v8365, %v8367
      %v8389 = vsel %vm1692, %v8367, %v8369
      %v8390 = vsel %vm1692, %v8371, %v8373
      %v8391 = vsel %vm1692, %v8373, %v8375
      %v8392 = vsel %vm1692, %v8377, %v8379
      %v8393 = vsel %vm1692, %v8379, %v8381
      %v8394 = vsel %vm1692, %v8383, %v8385
      %v8395 = vsel %vm1692, %v8385, %v8387
      %v8412 = vsel %vm1692, %v8369, %v8365
      %v8413 = vsel %vm1692, %v8375, %v8371
      %v8414 = vsel %vm1692, %v8381, %v8377
      %v8415 = vsel %vm1692, %v8387, %v8383
      %v8416 = vadd.f32 %v8340, %v8388
      %v8417 = vadd.f32 %v8341, %v8389
      %v8418 = vadd.f32 %v8342, %v8412
      %v8419 = vadd.f32 %v8343, %v8390
      %v8420 = vadd.f32 %v8344, %v8391
      %v8421 = vadd.f32 %v8345, %v8413
      %v8422 = vadd.f32 %v8346, %v8392
      %v8423 = vadd.f32 %v8347, %v8393
      %v8424 = vadd.f32 %v8348, %v8414
      %v8425 = vadd.f32 %v8349, %v8394
      %v8426 = vadd.f32 %v8350, %v8395
      %v8427 = vadd.f32 %v8351, %v8415
      %s8428 = scalar_lea.vmem %s345, 72
      %v8429 = vld [vmem:[%s8428] sm:$0xf]
      %v8430 = vld [vmem:[%s8428 + $0x4] sm:$0xf]
      %v8431 = vld [vmem:[%s8428 + $0x8] sm:$0xf]
      %v8432 = vld [vmem:[%s8428 + $0xc] sm:$0xf]
      %v8433 = vld [vmem:[%s8428 + $0x10] sm:$0xf]
      %v8434 = vld [vmem:[%s8428 + $0x14] sm:$0xf]
      %v8435 = vld [vmem:[%s8428 + $0x18] sm:$0xf]
      %v8436 = vld [vmem:[%s8428 + $0x1c] sm:$0xf]
      %v8437 = vld [vmem:[%s8428 + $0x20] sm:$0xf]
      %v8438 = vld [vmem:[%s8428 + $0x24] sm:$0xf]
      %v8439 = vld [vmem:[%s8428 + $0x28] sm:$0xf]
      %v8440 = vld [vmem:[%s8428 + $0x2c] sm:$0xf]
      %v8441 = vld [vmem:[%s8428 + $0x30] sm:$0xf]
      %v8442 = vld [vmem:[%s8428 + $0x34] sm:$0xf]
      %v8443 = vld [vmem:[%s8428 + $0x38] sm:$0xf]
      %v8444 = vld [vmem:[%s8428 + $0x3c] sm:$0xf]
      %v8445 = vld [vmem:[%s8428 + $0x40] sm:$0xf]
      %v8446 = vld [vmem:[%s8428 + $0x44] sm:$0xf]
      %v8447 = vld [vmem:[%s8428 + $0x48] sm:$0xf]
      %v8448 = vld [vmem:[%s8428 + $0x4c] sm:$0xf]
      %v8449 = vld [vmem:[%s8428 + $0x50] sm:$0xf]
      %v8450 = vld [vmem:[%s8428 + $0x54] sm:$0xf]
      %v8451 = vld [vmem:[%s8428 + $0x58] sm:$0xf]
      %v8452 = vld [vmem:[%s8428 + $0x5c] sm:$0xf]
      %v8453 = vld [vmem:[%s8428 + $0x60] sm:$0xf]
      %v8454 = vld [vmem:[%s8428 + $0x64] sm:$0xf]
      %v8455 = vld [vmem:[%s8428 + $0x68] sm:$0xf]
      %v8456 = vld [vmem:[%s8428 + $0x6c] sm:$0xf]
      %v8457 = vld [vmem:[%s8428 + $0x70] sm:$0xf]
      %v8458 = vld [vmem:[%s8428 + $0x74] sm:$0xf]
      %v8459 = vld [vmem:[%s8428 + $0x78] sm:$0xf]
      %v8460 = vld [vmem:[%s8428 + $0x7c] sm:$0xf]
      %v8461 = vld [vmem:[%s8428 + $0x80] sm:$0xf]
      %v8462 = vld [vmem:[%s8428 + $0x84] sm:$0xf]
      %v8463 = vld [vmem:[%s8428 + $0x88] sm:$0xf]
      %v8464 = vld [vmem:[%s8428 + $0x8c] sm:$0xf]
      %v8465 = vld [vmem:[%s8428 + $0x90] sm:$0xf]
      %v8466 = vld [vmem:[%s8428 + $0x94] sm:$0xf]
      %v8467 = vld [vmem:[%s8428 + $0x98] sm:$0xf]
      %v8468 = vld [vmem:[%s8428 + $0x9c] sm:$0xf]
      %v8469 = vld [vmem:[%s8428 + $0xa0] sm:$0xf]
      %v8470 = vld [vmem:[%s8428 + $0xa4] sm:$0xf]
      %v8471 = vld [vmem:[%s8428 + $0xa8] sm:$0xf]
      %v8472 = vld [vmem:[%s8428 + $0xac] sm:$0xf]
      %v8473 = vld [vmem:[%s8428 + $0xb0] sm:$0xf]
      %v8474 = vld [vmem:[%s8428 + $0xb4] sm:$0xf]
      %v8475 = vld [vmem:[%s8428 + $0xb8] sm:$0xf]
      %v8476 = vld [vmem:[%s8428 + $0xbc] sm:$0xf]
      %s8477 = scalar_lea.vmem %s350, 864
      %v8478 = vld [vmem:[%s8477] sm:$0xf]
      %v8479 = vld [vmem:[%s8477 + $0x4] sm:$0xf]
      %v8480 = vld [vmem:[%s8477 + $0x8] sm:$0xf]
      %v8481 = vld [vmem:[%s8477 + $0xc] sm:$0xf]
      %v8482 = vld [vmem:[%s8477 + $0x10] sm:$0xf]
      %v8483 = vld [vmem:[%s8477 + $0x14] sm:$0xf]
      %v8484 = vld [vmem:[%s8477 + $0x18] sm:$0xf]
      %v8485 = vld [vmem:[%s8477 + $0x1c] sm:$0xf]
      %v8486 = vld [vmem:[%s8477 + $0x20] sm:$0xf]
      %v8487 = vld [vmem:[%s8477 + $0x24] sm:$0xf]
      %v8488 = vld [vmem:[%s8477 + $0x28] sm:$0xf]
      %v8489 = vld [vmem:[%s8477 + $0x2c] sm:$0xf]
      %v8490 = vld [vmem:[%s8477 + $0x30] sm:$0xf]
      %v8491 = vld [vmem:[%s8477 + $0x34] sm:$0xf]
      %v8492 = vld [vmem:[%s8477 + $0x38] sm:$0xf]
      %v8493 = vld [vmem:[%s8477 + $0x3c] sm:$0xf]
      %v8494 = vld [vmem:[%s8477 + $0x40] sm:$0xf]
      %v8495 = vld [vmem:[%s8477 + $0x44] sm:$0xf]
      %v8496 = vld [vmem:[%s8477 + $0x48] sm:$0xf]
      %v8497 = vld [vmem:[%s8477 + $0x4c] sm:$0xf]
      %v8498 = vld [vmem:[%s8477 + $0x50] sm:$0xf]
      %v8499 = vld [vmem:[%s8477 + $0x54] sm:$0xf]
      %v8500 = vld [vmem:[%s8477 + $0x58] sm:$0xf]
      %v8501 = vld [vmem:[%s8477 + $0x5c] sm:$0xf]
      %v8502 = vld [vmem:[%s8477 + $0x60] sm:$0xf]
      %v8503 = vld [vmem:[%s8477 + $0x64] sm:$0xf]
      %v8504 = vld [vmem:[%s8477 + $0x68] sm:$0xf]
      %v8505 = vld [vmem:[%s8477 + $0x6c] sm:$0xf]
      %v8506 = vld [vmem:[%s8477 + $0x70] sm:$0xf]
      %v8507 = vld [vmem:[%s8477 + $0x74] sm:$0xf]
      %v8508 = vld [vmem:[%s8477 + $0x78] sm:$0xf]
      %v8509 = vld [vmem:[%s8477 + $0x7c] sm:$0xf]
      %v8510 = vld [vmem:[%s8477 + $0x80] sm:$0xf]
      %v8511 = vld [vmem:[%s8477 + $0x84] sm:$0xf]
      %v8512 = vld [vmem:[%s8477 + $0x88] sm:$0xf]
      %v8513 = vld [vmem:[%s8477 + $0x8c] sm:$0xf]
      %v8550 = vunpack.c.l.b16 %v8478
      %v8551 = vunpack.c.l.b16 %v8479
      %v8552 = vunpack.c.l.b16 %v8480
      %v8553 = vunpack.c.l.b16 %v8481
      %v8554 = vunpack.c.l.b16 %v8482
      %v8555 = vunpack.c.l.b16 %v8483
      %v8556 = vunpack.c.l.b16 %v8484
      %v8557 = vunpack.c.l.b16 %v8485
      %v8558 = vunpack.c.l.b16 %v8486
      %v8559 = vunpack.c.l.b16 %v8487
      %v8560 = vunpack.c.l.b16 %v8488
      %v8561 = vunpack.c.l.b16 %v8489
      %v8562 = vunpack.c.l.b16 %v8490
      %v8563 = vunpack.c.l.b16 %v8491
      %v8564 = vunpack.c.l.b16 %v8492
      %v8565 = vunpack.c.l.b16 %v8493
      %v8566 = vunpack.c.l.b16 %v8494
      %v8567 = vunpack.c.l.b16 %v8495
      %v8568 = vunpack.c.l.b16 %v8496
      %v8569 = vunpack.c.l.b16 %v8497
      %v8570 = vunpack.c.l.b16 %v8498
      %v8571 = vunpack.c.l.b16 %v8499
      %v8572 = vunpack.c.l.b16 %v8500
      %v8573 = vunpack.c.l.b16 %v8501
      %v8574 = vunpack.c.l.b16 %v8502
      %v8575 = vunpack.c.l.b16 %v8503
      %v8576 = vunpack.c.l.b16 %v8504
      %v8577 = vunpack.c.l.b16 %v8505
      %v8578 = vunpack.c.l.b16 %v8506
      %v8579 = vunpack.c.l.b16 %v8507
      %v8580 = vunpack.c.l.b16 %v8508
      %v8581 = vunpack.c.l.b16 %v8509
      %v8582 = vunpack.c.l.b16 %v8510
      %v8583 = vunpack.c.l.b16 %v8511
      %v8584 = vunpack.c.l.b16 %v8512
      %v8585 = vunpack.c.l.b16 %v8513
      %v8586 = vpack.c.b16 %v8551, %v8550
      %v8587 = vpack.c.b16 %v8553, %v8552
      %v8588 = vpack.c.b16 %v8555, %v8554
      %v8589 = vpack.c.b16 %v8557, %v8556
      %v8590 = vpack.c.b16 %v8559, %v8558
      %v8591 = vpack.c.b16 %v8561, %v8560
      %v8592 = vpack.c.b16 %v8563, %v8562
      %v8593 = vpack.c.b16 %v8565, %v8564
      %v8594 = vpack.c.b16 %v8567, %v8566
      %v8595 = vpack.c.b16 %v8569, %v8568
      %v8596 = vpack.c.b16 %v8571, %v8570
      %v8597 = vpack.c.b16 %v8573, %v8572
      %v8598 = vpack.c.b16 %v8575, %v8574
      %v8599 = vpack.c.b16 %v8577, %v8576
      %v8600 = vpack.c.b16 %v8579, %v8578
      %v8601 = vpack.c.b16 %v8581, %v8580
      %v8602 = vpack.c.b16 %v8583, %v8582
      %v8603 = vpack.c.b16 %v8585, %v8584
      %v8652 = vunpack.c.l.b16 %v8429
      %v8653 = vunpack.c.l.b16 %v8430
      %v8654 = vunpack.c.l.b16 %v8431
      %v8655 = vunpack.c.l.b16 %v8432
      %v8656 = vunpack.c.l.b16 %v8433
      %v8657 = vunpack.c.l.b16 %v8434
      %v8658 = vunpack.c.l.b16 %v8435
      %v8659 = vunpack.c.l.b16 %v8436
      %v8660 = vunpack.c.l.b16 %v8437
      %v8661 = vunpack.c.l.b16 %v8438
      %v8662 = vunpack.c.l.b16 %v8439
      %v8663 = vunpack.c.l.b16 %v8440
      %v8664 = vunpack.c.l.b16 %v8441
      %v8665 = vunpack.c.l.b16 %v8442
      %v8666 = vunpack.c.l.b16 %v8443
      %v8667 = vunpack.c.l.b16 %v8444
      %v8668 = vunpack.c.l.b16 %v8445
      %v8669 = vunpack.c.l.b16 %v8446
      %v8670 = vunpack.c.l.b16 %v8447
      %v8671 = vunpack.c.l.b16 %v8448
      %v8672 = vunpack.c.l.b16 %v8449
      %v8673 = vunpack.c.l.b16 %v8450
      %v8674 = vunpack.c.l.b16 %v8451
      %v8675 = vunpack.c.l.b16 %v8452
      %v8676 = vunpack.c.l.b16 %v8453
      %v8677 = vunpack.c.l.b16 %v8454
      %v8678 = vunpack.c.l.b16 %v8455
      %v8679 = vunpack.c.l.b16 %v8456
      %v8680 = vunpack.c.l.b16 %v8457
      %v8681 = vunpack.c.l.b16 %v8458
      %v8682 = vunpack.c.l.b16 %v8459
      %v8683 = vunpack.c.l.b16 %v8460
      %v8684 = vunpack.c.l.b16 %v8461
      %v8685 = vunpack.c.l.b16 %v8462
      %v8686 = vunpack.c.l.b16 %v8463
      %v8687 = vunpack.c.l.b16 %v8464
      %v8688 = vunpack.c.l.b16 %v8465
      %v8689 = vunpack.c.l.b16 %v8466
      %v8690 = vunpack.c.l.b16 %v8467
      %v8691 = vunpack.c.l.b16 %v8468
      %v8692 = vunpack.c.l.b16 %v8469
      %v8693 = vunpack.c.l.b16 %v8470
      %v8694 = vunpack.c.l.b16 %v8471
      %v8695 = vunpack.c.l.b16 %v8472
      %v8696 = vunpack.c.l.b16 %v8473
      %v8697 = vunpack.c.l.b16 %v8474
      %v8698 = vunpack.c.l.b16 %v8475
      %v8699 = vunpack.c.l.b16 %v8476
      %v8700 = vpack.c.b16 %v8653, %v8652
      %v8701 = vpack.c.b16 %v8655, %v8654
      %v8702 = vpack.c.b16 %v8657, %v8656
      %v8703 = vpack.c.b16 %v8659, %v8658
      %v8704 = vpack.c.b16 %v8661, %v8660
      %v8705 = vpack.c.b16 %v8663, %v8662
      %v8706 = vpack.c.b16 %v8665, %v8664
      %v8707 = vpack.c.b16 %v8667, %v8666
      %v8708 = vpack.c.b16 %v8669, %v8668
      %v8709 = vpack.c.b16 %v8671, %v8670
      %v8710 = vpack.c.b16 %v8673, %v8672
      %v8711 = vpack.c.b16 %v8675, %v8674
      %v8712 = vpack.c.b16 %v8677, %v8676
      %v8713 = vpack.c.b16 %v8679, %v8678
      %v8714 = vpack.c.b16 %v8681, %v8680
      %v8715 = vpack.c.b16 %v8683, %v8682
      %v8716 = vpack.c.b16 %v8685, %v8684
      %v8717 = vpack.c.b16 %v8687, %v8686
      %v8718 = vpack.c.b16 %v8689, %v8688
      %v8719 = vpack.c.b16 %v8691, %v8690
      %v8720 = vpack.c.b16 %v8693, %v8692
      %v8721 = vpack.c.b16 %v8695, %v8694
      %v8722 = vpack.c.b16 %v8697, %v8696
      %v8723 = vpack.c.b16 %v8699, %v8698
      %v8725 = vsel %vm681, %v8586, 0
      %v8728 = vsel %vm681, %v8587, 0
      %v8731 = vsel %vm681, %v8588, 0
      %v8734 = vsel %vm681, %v8589, 0
      %v8737 = vsel %vm681, %v8590, 0
      %v8740 = vsel %vm681, %v8591, 0
      %v8743 = vsel %vm681, %v8592, 0
      %v8746 = vsel %vm681, %v8593, 0
      %v8749 = vsel %vm681, %v8594, 0
      %v8752 = vsel %vm681, %v8595, 0
      %v8755 = vsel %vm681, %v8596, 0
      %v8758 = vsel %vm681, %v8597, 0
      %v8761 = vsel %vm681, %v8598, 0
      %v8764 = vsel %vm681, %v8599, 0
      %v8767 = vsel %vm681, %v8600, 0
      %v8770 = vsel %vm681, %v8601, 0
      %v8773 = vsel %vm681, %v8602, 0
      %v8776 = vsel %vm681, %v8603, 0
      %v8779 = vsel %vm681, %v8700, 0
      %v8782 = vsel %vm681, %v8701, 0
      %v8785 = vsel %vm681, %v8702, 0
      %v8788 = vsel %vm681, %v8703, 0
      %v8791 = vsel %vm681, %v8704, 0
      %v8794 = vsel %vm681, %v8705, 0
      %v8797 = vsel %vm681, %v8706, 0
      %v8800 = vsel %vm681, %v8707, 0
      %v8803 = vsel %vm681, %v8708, 0
      %v8806 = vsel %vm681, %v8709, 0
      %v8809 = vsel %vm681, %v8710, 0
      %v8812 = vsel %vm681, %v8711, 0
      %v8815 = vsel %vm681, %v8712, 0
      %v8818 = vsel %vm681, %v8713, 0
      %v8821 = vsel %vm681, %v8714, 0
      %v8824 = vsel %vm681, %v8715, 0
      %v8827 = vsel %vm681, %v8716, 0
      %v8830 = vsel %vm681, %v8717, 0
      %v8833 = vsel %vm681, %v8718, 0
      %v8836 = vsel %vm681, %v8719, 0
      %v8839 = vsel %vm681, %v8720, 0
      %v8842 = vsel %vm681, %v8721, 0
      %v8845 = vsel %vm681, %v8722, 0
      %v8848 = vsel %vm681, %v8723, 0
      %8850 = vmatpush.bf16.xpose.msra.mxu0 %v8800
      %8851 = vmatpush.bf16.xpose.msra.mxu0 %v8797
      %8852 = vmatpush.bf16.xpose.msra.mxu0 %v8794
      %8853 = vmatpush.bf16.xpose.msra.mxu0 %v8791
      %8854 = vmatpush.bf16.xpose.msra.mxu0 %v8788
      %8855 = vmatpush.bf16.xpose.msra.mxu0 %v8785
      %8856 = vmatpush.bf16.xpose.msra.mxu0 %v8782
      %8857 = vmatpush.bf16.xpose.msra.mxu0 %v8779
      %8858 = vmatmul.bf16.gmra.mxu0 %v8725
      %v8859 = vpop.f32.mrf.mxu0
      %v8860 = vadd.f32 0.0, %v8859
      %v8861 = vpop.f32.mrf.mxu0
      %v8862 = vadd.f32 0.0, %v8861
      %8863 = vmatmul.bf16.gmra.mxu0 %v8728
      %v8864 = vpop.f32.mrf.mxu0
      %v8865 = vadd.f32 0.0, %v8864
      %v8866 = vpop.f32.mrf.mxu0
      %v8867 = vadd.f32 0.0, %v8866
      %8868 = vmatmul.bf16.gmra.mxu0 %v8731
      %v8869 = vpop.f32.mrf.mxu0
      %v8870 = vadd.f32 0.0, %v8869
      %v8871 = vpop.f32.mrf.mxu0
      %v8872 = vadd.f32 0.0, %v8871
      %8873 = vmatmul.bf16.gmra.mxu0 %v8734
      %v8874 = vpop.f32.mrf.mxu0
      %v8875 = vadd.f32 0.0, %v8874
      %v8876 = vpop.f32.mrf.mxu0
      %v8877 = vadd.f32 0.0, %v8876
      %8878 = vmatmul.bf16.gmra.mxu0 %v8737
      %v8879 = vpop.f32.mrf.mxu0
      %v8880 = vadd.f32 0.0, %v8879
      %v8881 = vpop.f32.mrf.mxu0
      %v8882 = vadd.f32 0.0, %v8881
      %8883 = vmatmul.bf16.gmra.mxu0 %v8740
      %v8884 = vpop.f32.mrf.mxu0
      %v8885 = vadd.f32 0.0, %v8884
      %v8886 = vpop.f32.mrf.mxu0
      %v8887 = vadd.f32 0.0, %v8886
      %8888 = vmatmul.bf16.gmra.mxu0 %v8743
      %v8889 = vpop.f32.mrf.mxu0
      %v8890 = vadd.f32 0.0, %v8889
      %v8891 = vpop.f32.mrf.mxu0
      %v8892 = vadd.f32 0.0, %v8891
      %8893 = vmatmul.bf16.gmra.mxu0 %v8746
      %v8894 = vpop.f32.mrf.mxu0
      %v8895 = vadd.f32 0.0, %v8894
      %v8896 = vpop.f32.mrf.mxu0
      %v8897 = vadd.f32 0.0, %v8896
      %8898 = vmatmul.bf16.gmra.mxu0 %v8749
      %v8899 = vpop.f32.mrf.mxu0
      %v8900 = vadd.f32 0.0, %v8899
      %v8901 = vpop.f32.mrf.mxu0
      %v8902 = vadd.f32 0.0, %v8901
      %8903 = vmatmul.bf16.gmra.mxu0 %v8752
      %v8904 = vpop.f32.mrf.mxu0
      %v8905 = vadd.f32 0.0, %v8904
      %v8906 = vpop.f32.mrf.mxu0
      %v8907 = vadd.f32 0.0, %v8906
      %8908 = vmatmul.bf16.gmra.mxu0 %v8755
      %v8909 = vpop.f32.mrf.mxu0
      %v8910 = vadd.f32 0.0, %v8909
      %v8911 = vpop.f32.mrf.mxu0
      %v8912 = vadd.f32 0.0, %v8911
      %8913 = vmatmul.bf16.gmra.mxu0 %v8758
      %v8914 = vpop.f32.mrf.mxu0
      %v8915 = vadd.f32 0.0, %v8914
      %v8916 = vpop.f32.mrf.mxu0
      %v8917 = vadd.f32 0.0, %v8916
      %8918 = vmatmul.bf16.gmra.mxu0 %v8761
      %v8919 = vpop.f32.mrf.mxu0
      %v8920 = vadd.f32 0.0, %v8919
      %v8921 = vpop.f32.mrf.mxu0
      %v8922 = vadd.f32 0.0, %v8921
      %8923 = vmatmul.bf16.gmra.mxu0 %v8764
      %v8924 = vpop.f32.mrf.mxu0
      %v8925 = vadd.f32 0.0, %v8924
      %v8926 = vpop.f32.mrf.mxu0
      %v8927 = vadd.f32 0.0, %v8926
      %8928 = vmatmul.bf16.gmra.mxu0 %v8767
      %v8929 = vpop.f32.mrf.mxu0
      %v8930 = vadd.f32 0.0, %v8929
      %v8931 = vpop.f32.mrf.mxu0
      %v8932 = vadd.f32 0.0, %v8931
      %8933 = vmatmul.bf16.gmra.mxu0 %v8770
      %v8934 = vpop.f32.mrf.mxu0
      %v8935 = vadd.f32 0.0, %v8934
      %v8936 = vpop.f32.mrf.mxu0
      %v8937 = vadd.f32 0.0, %v8936
      %8938 = vmatmul.bf16.gmra.mxu0 %v8773
      %v8939 = vpop.f32.mrf.mxu0
      %v8940 = vadd.f32 0.0, %v8939
      %v8941 = vpop.f32.mrf.mxu0
      %v8942 = vadd.f32 0.0, %v8941
      %8943 = vmatmul.bf16.gmra.mxu0 %v8776
      %v8944 = vpop.f32.mrf.mxu0
      %v8945 = vadd.f32 0.0, %v8944
      %v8946 = vpop.f32.mrf.mxu0
      %v8947 = vadd.f32 0.0, %v8946
      %8948 = vdwg.mxu0
      %8949 = vmatpush.bf16.xpose.msra.mxu0 %v8824
      %8950 = vmatpush.bf16.xpose.msra.mxu0 %v8821
      %8951 = vmatpush.bf16.xpose.msra.mxu0 %v8818
      %8952 = vmatpush.bf16.xpose.msra.mxu0 %v8815
      %8953 = vmatpush.bf16.xpose.msra.mxu0 %v8812
      %8954 = vmatpush.bf16.xpose.msra.mxu0 %v8809
      %8955 = vmatpush.bf16.xpose.msra.mxu0 %v8806
      %8956 = vmatpush.bf16.xpose.msra.mxu0 %v8803
      %8957 = vmatmul.bf16.gmra.mxu0 %v8725
      %v8958 = vpop.f32.mrf.mxu0
      %v8959 = vadd.f32 0.0, %v8958
      %v8960 = vpop.f32.mrf.mxu0
      %v8961 = vadd.f32 0.0, %v8960
      %8962 = vmatmul.bf16.gmra.mxu0 %v8728
      %v8963 = vpop.f32.mrf.mxu0
      %v8964 = vadd.f32 0.0, %v8963
      %v8965 = vpop.f32.mrf.mxu0
      %v8966 = vadd.f32 0.0, %v8965
      %8967 = vmatmul.bf16.gmra.mxu0 %v8731
      %v8968 = vpop.f32.mrf.mxu0
      %v8969 = vadd.f32 0.0, %v8968
      %v8970 = vpop.f32.mrf.mxu0
      %v8971 = vadd.f32 0.0, %v8970
      %8972 = vmatmul.bf16.gmra.mxu0 %v8734
      %v8973 = vpop.f32.mrf.mxu0
      %v8974 = vadd.f32 0.0, %v8973
      %v8975 = vpop.f32.mrf.mxu0
      %v8976 = vadd.f32 0.0, %v8975
      %8977 = vmatmul.bf16.gmra.mxu0 %v8737
      %v8978 = vpop.f32.mrf.mxu0
      %v8979 = vadd.f32 0.0, %v8978
      %v8980 = vpop.f32.mrf.mxu0
      %v8981 = vadd.f32 0.0, %v8980
      %8982 = vmatmul.bf16.gmra.mxu0 %v8740
      %v8983 = vpop.f32.mrf.mxu0
      %v8984 = vadd.f32 0.0, %v8983
      %v8985 = vpop.f32.mrf.mxu0
      %v8986 = vadd.f32 0.0, %v8985
      %8987 = vmatmul.bf16.gmra.mxu0 %v8743
      %v8988 = vpop.f32.mrf.mxu0
      %v8989 = vadd.f32 0.0, %v8988
      %v8990 = vpop.f32.mrf.mxu0
      %v8991 = vadd.f32 0.0, %v8990
      %8992 = vmatmul.bf16.gmra.mxu0 %v8746
      %v8993 = vpop.f32.mrf.mxu0
      %v8994 = vadd.f32 0.0, %v8993
      %v8995 = vpop.f32.mrf.mxu0
      %v8996 = vadd.f32 0.0, %v8995
      %8997 = vmatmul.bf16.gmra.mxu0 %v8749
      %v8998 = vpop.f32.mrf.mxu0
      %v8999 = vadd.f32 0.0, %v8998
      %v9000 = vpop.f32.mrf.mxu0
      %v9001 = vadd.f32 0.0, %v9000
      %9002 = vmatmul.bf16.gmra.mxu0 %v8752
      %v9003 = vpop.f32.mrf.mxu0
      %v9004 = vadd.f32 0.0, %v9003
      %v9005 = vpop.f32.mrf.mxu0
      %v9006 = vadd.f32 0.0, %v9005
      %9007 = vmatmul.bf16.gmra.mxu0 %v8755
      %v9008 = vpop.f32.mrf.mxu0
      %v9009 = vadd.f32 0.0, %v9008
      %v9010 = vpop.f32.mrf.mxu0
      %v9011 = vadd.f32 0.0, %v9010
      %9012 = vmatmul.bf16.gmra.mxu0 %v8758
      %v9013 = vpop.f32.mrf.mxu0
      %v9014 = vadd.f32 0.0, %v9013
      %v9015 = vpop.f32.mrf.mxu0
      %v9016 = vadd.f32 0.0, %v9015
      %9017 = vmatmul.bf16.gmra.mxu0 %v8761
      %v9018 = vpop.f32.mrf.mxu0
      %v9019 = vadd.f32 0.0, %v9018
      %v9020 = vpop.f32.mrf.mxu0
      %v9021 = vadd.f32 0.0, %v9020
      %9022 = vmatmul.bf16.gmra.mxu0 %v8764
      %v9023 = vpop.f32.mrf.mxu0
      %v9024 = vadd.f32 0.0, %v9023
      %v9025 = vpop.f32.mrf.mxu0
      %v9026 = vadd.f32 0.0, %v9025
      %9027 = vmatmul.bf16.gmra.mxu0 %v8767
      %v9028 = vpop.f32.mrf.mxu0
      %v9029 = vadd.f32 0.0, %v9028
      %v9030 = vpop.f32.mrf.mxu0
      %v9031 = vadd.f32 0.0, %v9030
      %9032 = vmatmul.bf16.gmra.mxu0 %v8770
      %v9033 = vpop.f32.mrf.mxu0
      %v9034 = vadd.f32 0.0, %v9033
      %v9035 = vpop.f32.mrf.mxu0
      %v9036 = vadd.f32 0.0, %v9035
      %9037 = vmatmul.bf16.gmra.mxu0 %v8773
      %v9038 = vpop.f32.mrf.mxu0
      %v9039 = vadd.f32 0.0, %v9038
      %v9040 = vpop.f32.mrf.mxu0
      %v9041 = vadd.f32 0.0, %v9040
      %9042 = vmatmul.bf16.gmra.mxu0 %v8776
      %v9043 = vpop.f32.mrf.mxu0
      %v9044 = vadd.f32 0.0, %v9043
      %v9045 = vpop.f32.mrf.mxu0
      %v9046 = vadd.f32 0.0, %v9045
      %9047 = vdwg.mxu0
      %9048 = vmatpush.bf16.xpose.msra.mxu0 %v8848
      %9049 = vmatpush.bf16.xpose.msra.mxu0 %v8845
      %9050 = vmatpush.bf16.xpose.msra.mxu0 %v8842
      %9051 = vmatpush.bf16.xpose.msra.mxu0 %v8839
      %9052 = vmatpush.bf16.xpose.msra.mxu0 %v8836
      %9053 = vmatpush.bf16.xpose.msra.mxu0 %v8833
      %9054 = vmatpush.bf16.xpose.msra.mxu0 %v8830
      %9055 = vmatpush.bf16.xpose.msra.mxu0 %v8827
      %9056 = vmatmul.bf16.gmra.mxu0 %v8725
      %v9057 = vpop.f32.mrf.mxu0
      %v9058 = vadd.f32 0.0, %v9057
      %v9059 = vpop.f32.mrf.mxu0
      %v9060 = vadd.f32 0.0, %v9059
      %9061 = vmatmul.bf16.gmra.mxu0 %v8728
      %v9062 = vpop.f32.mrf.mxu0
      %v9063 = vadd.f32 0.0, %v9062
      %v9064 = vpop.f32.mrf.mxu0
      %v9065 = vadd.f32 0.0, %v9064
      %9066 = vmatmul.bf16.gmra.mxu0 %v8731
      %v9067 = vpop.f32.mrf.mxu0
      %v9068 = vadd.f32 0.0, %v9067
      %v9069 = vpop.f32.mrf.mxu0
      %v9070 = vadd.f32 0.0, %v9069
      %9071 = vmatmul.bf16.gmra.mxu0 %v8734
      %v9072 = vpop.f32.mrf.mxu0
      %v9073 = vadd.f32 0.0, %v9072
      %v9074 = vpop.f32.mrf.mxu0
      %v9075 = vadd.f32 0.0, %v9074
      %9076 = vmatmul.bf16.gmra.mxu0 %v8737
      %v9077 = vpop.f32.mrf.mxu0
      %v9078 = vadd.f32 0.0, %v9077
      %v9079 = vpop.f32.mrf.mxu0
      %v9080 = vadd.f32 0.0, %v9079
      %9081 = vmatmul.bf16.gmra.mxu0 %v8740
      %v9082 = vpop.f32.mrf.mxu0
      %v9083 = vadd.f32 0.0, %v9082
      %v9084 = vpop.f32.mrf.mxu0
      %v9085 = vadd.f32 0.0, %v9084
      %9086 = vmatmul.bf16.gmra.mxu0 %v8743
      %v9087 = vpop.f32.mrf.mxu0
      %v9088 = vadd.f32 0.0, %v9087
      %v9089 = vpop.f32.mrf.mxu0
      %v9090 = vadd.f32 0.0, %v9089
      %9091 = vmatmul.bf16.gmra.mxu0 %v8746
      %v9092 = vpop.f32.mrf.mxu0
      %v9093 = vadd.f32 0.0, %v9092
      %v9094 = vpop.f32.mrf.mxu0
      %v9095 = vadd.f32 0.0, %v9094
      %9096 = vmatmul.bf16.gmra.mxu0 %v8749
      %v9097 = vpop.f32.mrf.mxu0
      %v9098 = vadd.f32 0.0, %v9097
      %v9099 = vpop.f32.mrf.mxu0
      %v9100 = vadd.f32 0.0, %v9099
      %9101 = vmatmul.bf16.gmra.mxu0 %v8752
      %v9102 = vpop.f32.mrf.mxu0
      %v9103 = vadd.f32 0.0, %v9102
      %v9104 = vpop.f32.mrf.mxu0
      %v9105 = vadd.f32 0.0, %v9104
      %9106 = vmatmul.bf16.gmra.mxu0 %v8755
      %v9107 = vpop.f32.mrf.mxu0
      %v9108 = vadd.f32 0.0, %v9107
      %v9109 = vpop.f32.mrf.mxu0
      %v9110 = vadd.f32 0.0, %v9109
      %9111 = vmatmul.bf16.gmra.mxu0 %v8758
      %v9112 = vpop.f32.mrf.mxu0
      %v9113 = vadd.f32 0.0, %v9112
      %v9114 = vpop.f32.mrf.mxu0
      %v9115 = vadd.f32 0.0, %v9114
      %9116 = vmatmul.bf16.gmra.mxu0 %v8761
      %v9117 = vpop.f32.mrf.mxu0
      %v9118 = vadd.f32 0.0, %v9117
      %v9119 = vpop.f32.mrf.mxu0
      %v9120 = vadd.f32 0.0, %v9119
      %9121 = vmatmul.bf16.gmra.mxu0 %v8764
      %v9122 = vpop.f32.mrf.mxu0
      %v9123 = vadd.f32 0.0, %v9122
      %v9124 = vpop.f32.mrf.mxu0
      %v9125 = vadd.f32 0.0, %v9124
      %9126 = vmatmul.bf16.gmra.mxu0 %v8767
      %v9127 = vpop.f32.mrf.mxu0
      %v9128 = vadd.f32 0.0, %v9127
      %v9129 = vpop.f32.mrf.mxu0
      %v9130 = vadd.f32 0.0, %v9129
      %9131 = vmatmul.bf16.gmra.mxu0 %v8770
      %v9132 = vpop.f32.mrf.mxu0
      %v9133 = vadd.f32 0.0, %v9132
      %v9134 = vpop.f32.mrf.mxu0
      %v9135 = vadd.f32 0.0, %v9134
      %9136 = vmatmul.bf16.gmra.mxu0 %v8773
      %v9137 = vpop.f32.mrf.mxu0
      %v9138 = vadd.f32 0.0, %v9137
      %v9139 = vpop.f32.mrf.mxu0
      %v9140 = vadd.f32 0.0, %v9139
      %9141 = vmatmul.bf16.gmra.mxu0 %v8776
      %v9142 = vpop.f32.mrf.mxu0
      %v9143 = vadd.f32 0.0, %v9142
      %v9144 = vpop.f32.mrf.mxu0
      %v9145 = vadd.f32 0.0, %v9144
      %9146 = vdwg.mxu0
      %v9147 = vadd.f32 %v8416, %v8860
      %v9148 = vadd.f32 %v8417, %v8959
      %v9149 = vadd.f32 %v8418, %v9058
      %v9150 = vadd.f32 %v8419, %v8862
      %v9151 = vadd.f32 %v8420, %v8961
      %v9152 = vadd.f32 %v8421, %v9060
      %v9153 = vadd.f32 %v8422, %v8865
      %v9154 = vadd.f32 %v8423, %v8964
      %v9155 = vadd.f32 %v8424, %v9063
      %v9156 = vadd.f32 %v8425, %v8867
      %v9157 = vadd.f32 %v8426, %v8966
      %v9158 = vadd.f32 %v8427, %v9065
      %9171 = vrot.lane.b32.xlu0 %v8870, 127
      %v9172 = vpop.permute.xlu0 %9171
      %9173 = vrot.lane.b32.xlu0 %v8969, 127
      %v9174 = vpop.permute.xlu0 %9173
      %9175 = vrot.lane.b32.xlu0 %v9068, 127
      %v9176 = vpop.permute.xlu0 %9175
      %9177 = vrot.lane.b32.xlu0 %v8872, 127
      %v9178 = vpop.permute.xlu0 %9177
      %9179 = vrot.lane.b32.xlu0 %v8971, 127
      %v9180 = vpop.permute.xlu0 %9179
      %9181 = vrot.lane.b32.xlu0 %v9070, 127
      %v9182 = vpop.permute.xlu0 %9181
      %9183 = vrot.lane.b32.xlu0 %v8875, 127
      %v9184 = vpop.permute.xlu0 %9183
      %9185 = vrot.lane.b32.xlu0 %v8974, 127
      %v9186 = vpop.permute.xlu0 %9185
      %9187 = vrot.lane.b32.xlu0 %v9073, 127
      %v9188 = vpop.permute.xlu0 %9187
      %9189 = vrot.lane.b32.xlu0 %v8877, 127
      %v9190 = vpop.permute.xlu0 %9189
      %9191 = vrot.lane.b32.xlu0 %v8976, 127
      %v9192 = vpop.permute.xlu0 %9191
      %9193 = vrot.lane.b32.xlu0 %v9075, 127
      %v9194 = vpop.permute.xlu0 %9193
      %v9195 = vsel %vm1153, %v9172, %v9174
      %v9196 = vsel %vm1153, %v9174, %v9176
      %v9197 = vsel %vm1153, %v9178, %v9180
      %v9198 = vsel %vm1153, %v9180, %v9182
      %v9199 = vsel %vm1153, %v9184, %v9186
      %v9200 = vsel %vm1153, %v9186, %v9188
      %v9201 = vsel %vm1153, %v9190, %v9192
      %v9202 = vsel %vm1153, %v9192, %v9194
      %v9219 = vsel %vm1153, %v9176, %v9172
      %v9220 = vsel %vm1153, %v9182, %v9178
      %v9221 = vsel %vm1153, %v9188, %v9184
      %v9222 = vsel %vm1153, %v9194, %v9190
      %v9223 = vadd.f32 %v9147, %v9195
      %v9224 = vadd.f32 %v9148, %v9196
      %v9225 = vadd.f32 %v9149, %v9219
      %v9226 = vadd.f32 %v9150, %v9197
      %v9227 = vadd.f32 %v9151, %v9198
      %v9228 = vadd.f32 %v9152, %v9220
      %v9229 = vadd.f32 %v9153, %v9199
      %v9230 = vadd.f32 %v9154, %v9200
      %v9231 = vadd.f32 %v9155, %v9221
      %v9232 = vadd.f32 %v9156, %v9201
      %v9233 = vadd.f32 %v9157, %v9202
      %v9234 = vadd.f32 %v9158, %v9222
      %9247 = vrot.lane.b32.xlu0 %v8880, 126
      %v9248 = vpop.permute.xlu0 %9247
      %9249 = vrot.lane.b32.xlu0 %v8979, 126
      %v9250 = vpop.permute.xlu0 %9249
      %9251 = vrot.lane.b32.xlu0 %v9078, 126
      %v9252 = vpop.permute.xlu0 %9251
      %9253 = vrot.lane.b32.xlu0 %v8882, 126
      %v9254 = vpop.permute.xlu0 %9253
      %9255 = vrot.lane.b32.xlu0 %v8981, 126
      %v9256 = vpop.permute.xlu0 %9255
      %9257 = vrot.lane.b32.xlu0 %v9080, 126
      %v9258 = vpop.permute.xlu0 %9257
      %9259 = vrot.lane.b32.xlu0 %v8885, 126
      %v9260 = vpop.permute.xlu0 %9259
      %9261 = vrot.lane.b32.xlu0 %v8984, 126
      %v9262 = vpop.permute.xlu0 %9261
      %9263 = vrot.lane.b32.xlu0 %v9083, 126
      %v9264 = vpop.permute.xlu0 %9263
      %9265 = vrot.lane.b32.xlu0 %v8887, 126
      %v9266 = vpop.permute.xlu0 %9265
      %9267 = vrot.lane.b32.xlu0 %v8986, 126
      %v9268 = vpop.permute.xlu0 %9267
      %9269 = vrot.lane.b32.xlu0 %v9085, 126
      %v9270 = vpop.permute.xlu0 %9269
      %v9271 = vsel %vm1230, %v9248, %v9250
      %v9272 = vsel %vm1230, %v9250, %v9252
      %v9273 = vsel %vm1230, %v9254, %v9256
      %v9274 = vsel %vm1230, %v9256, %v9258
      %v9275 = vsel %vm1230, %v9260, %v9262
      %v9276 = vsel %vm1230, %v9262, %v9264
      %v9277 = vsel %vm1230, %v9266, %v9268
      %v9278 = vsel %vm1230, %v9268, %v9270
      %v9295 = vsel %vm1230, %v9252, %v9248
      %v9296 = vsel %vm1230, %v9258, %v9254
      %v9297 = vsel %vm1230, %v9264, %v9260
      %v9298 = vsel %vm1230, %v9270, %v9266
      %v9299 = vadd.f32 %v9223, %v9271
      %v9300 = vadd.f32 %v9224, %v9272
      %v9301 = vadd.f32 %v9225, %v9295
      %v9302 = vadd.f32 %v9226, %v9273
      %v9303 = vadd.f32 %v9227, %v9274
      %v9304 = vadd.f32 %v9228, %v9296
      %v9305 = vadd.f32 %v9229, %v9275
      %v9306 = vadd.f32 %v9230, %v9276
      %v9307 = vadd.f32 %v9231, %v9297
      %v9308 = vadd.f32 %v9232, %v9277
      %v9309 = vadd.f32 %v9233, %v9278
      %v9310 = vadd.f32 %v9234, %v9298
      %9323 = vrot.lane.b32.xlu0 %v8890, 125
      %v9324 = vpop.permute.xlu0 %9323
      %9325 = vrot.lane.b32.xlu0 %v8989, 125
      %v9326 = vpop.permute.xlu0 %9325
      %9327 = vrot.lane.b32.xlu0 %v9088, 125
      %v9328 = vpop.permute.xlu0 %9327
      %9329 = vrot.lane.b32.xlu0 %v8892, 125
      %v9330 = vpop.permute.xlu0 %9329
      %9331 = vrot.lane.b32.xlu0 %v8991, 125
      %v9332 = vpop.permute.xlu0 %9331
      %9333 = vrot.lane.b32.xlu0 %v9090, 125
      %v9334 = vpop.permute.xlu0 %9333
      %9335 = vrot.lane.b32.xlu0 %v8895, 125
      %v9336 = vpop.permute.xlu0 %9335
      %9337 = vrot.lane.b32.xlu0 %v8994, 125
      %v9338 = vpop.permute.xlu0 %9337
      %9339 = vrot.lane.b32.xlu0 %v9093, 125
      %v9340 = vpop.permute.xlu0 %9339
      %9341 = vrot.lane.b32.xlu0 %v8897, 125
      %v9342 = vpop.permute.xlu0 %9341
      %9343 = vrot.lane.b32.xlu0 %v8996, 125
      %v9344 = vpop.permute.xlu0 %9343
      %9345 = vrot.lane.b32.xlu0 %v9095, 125
      %v9346 = vpop.permute.xlu0 %9345
      %v9347 = vsel %vm1307, %v9324, %v9326
      %v9348 = vsel %vm1307, %v9326, %v9328
      %v9349 = vsel %vm1307, %v9330, %v9332
      %v9350 = vsel %vm1307, %v9332, %v9334
      %v9351 = vsel %vm1307, %v9336, %v9338
      %v9352 = vsel %vm1307, %v9338, %v9340
      %v9353 = vsel %vm1307, %v9342, %v9344
      %v9354 = vsel %vm1307, %v9344, %v9346
      %v9371 = vsel %vm1307, %v9328, %v9324
      %v9372 = vsel %vm1307, %v9334, %v9330
      %v9373 = vsel %vm1307, %v9340, %v9336
      %v9374 = vsel %vm1307, %v9346, %v9342
      %v9375 = vadd.f32 %v9299, %v9347
      %v9376 = vadd.f32 %v9300, %v9348
      %v9377 = vadd.f32 %v9301, %v9371
      %v9378 = vadd.f32 %v9302, %v9349
      %v9379 = vadd.f32 %v9303, %v9350
      %v9380 = vadd.f32 %v9304, %v9372
      %v9381 = vadd.f32 %v9305, %v9351
      %v9382 = vadd.f32 %v9306, %v9352
      %v9383 = vadd.f32 %v9307, %v9373
      %v9384 = vadd.f32 %v9308, %v9353
      %v9385 = vadd.f32 %v9309, %v9354
      %v9386 = vadd.f32 %v9310, %v9374
      %9399 = vrot.lane.b32.xlu0 %v8900, 124
      %v9400 = vpop.permute.xlu0 %9399
      %9401 = vrot.lane.b32.xlu0 %v8999, 124
      %v9402 = vpop.permute.xlu0 %9401
      %9403 = vrot.lane.b32.xlu0 %v9098, 124
      %v9404 = vpop.permute.xlu0 %9403
      %9405 = vrot.lane.b32.xlu0 %v8902, 124
      %v9406 = vpop.permute.xlu0 %9405
      %9407 = vrot.lane.b32.xlu0 %v9001, 124
      %v9408 = vpop.permute.xlu0 %9407
      %9409 = vrot.lane.b32.xlu0 %v9100, 124
      %v9410 = vpop.permute.xlu0 %9409
      %9411 = vrot.lane.b32.xlu0 %v8905, 124
      %v9412 = vpop.permute.xlu0 %9411
      %9413 = vrot.lane.b32.xlu0 %v9004, 124
      %v9414 = vpop.permute.xlu0 %9413
      %9415 = vrot.lane.b32.xlu0 %v9103, 124
      %v9416 = vpop.permute.xlu0 %9415
      %9417 = vrot.lane.b32.xlu0 %v8907, 124
      %v9418 = vpop.permute.xlu0 %9417
      %9419 = vrot.lane.b32.xlu0 %v9006, 124
      %v9420 = vpop.permute.xlu0 %9419
      %9421 = vrot.lane.b32.xlu0 %v9105, 124
      %v9422 = vpop.permute.xlu0 %9421
      %v9423 = vsel %vm1384, %v9400, %v9402
      %v9424 = vsel %vm1384, %v9402, %v9404
      %v9425 = vsel %vm1384, %v9406, %v9408
      %v9426 = vsel %vm1384, %v9408, %v9410
      %v9427 = vsel %vm1384, %v9412, %v9414
      %v9428 = vsel %vm1384, %v9414, %v9416
      %v9429 = vsel %vm1384, %v9418, %v9420
      %v9430 = vsel %vm1384, %v9420, %v9422
      %v9447 = vsel %vm1384, %v9404, %v9400
      %v9448 = vsel %vm1384, %v9410, %v9406
      %v9449 = vsel %vm1384, %v9416, %v9412
      %v9450 = vsel %vm1384, %v9422, %v9418
      %v9451 = vadd.f32 %v9375, %v9423
      %v9452 = vadd.f32 %v9376, %v9424
      %v9453 = vadd.f32 %v9377, %v9447
      %v9454 = vadd.f32 %v9378, %v9425
      %v9455 = vadd.f32 %v9379, %v9426
      %v9456 = vadd.f32 %v9380, %v9448
      %v9457 = vadd.f32 %v9381, %v9427
      %v9458 = vadd.f32 %v9382, %v9428
      %v9459 = vadd.f32 %v9383, %v9449
      %v9460 = vadd.f32 %v9384, %v9429
      %v9461 = vadd.f32 %v9385, %v9430
      %v9462 = vadd.f32 %v9386, %v9450
      %9475 = vrot.lane.b32.xlu0 %v8910, 123
      %v9476 = vpop.permute.xlu0 %9475
      %9477 = vrot.lane.b32.xlu0 %v9009, 123
      %v9478 = vpop.permute.xlu0 %9477
      %9479 = vrot.lane.b32.xlu0 %v9108, 123
      %v9480 = vpop.permute.xlu0 %9479
      %9481 = vrot.lane.b32.xlu0 %v8912, 123
      %v9482 = vpop.permute.xlu0 %9481
      %9483 = vrot.lane.b32.xlu0 %v9011, 123
      %v9484 = vpop.permute.xlu0 %9483
      %9485 = vrot.lane.b32.xlu0 %v9110, 123
      %v9486 = vpop.permute.xlu0 %9485
      %9487 = vrot.lane.b32.xlu0 %v8915, 123
      %v9488 = vpop.permute.xlu0 %9487
      %9489 = vrot.lane.b32.xlu0 %v9014, 123
      %v9490 = vpop.permute.xlu0 %9489
      %9491 = vrot.lane.b32.xlu0 %v9113, 123
      %v9492 = vpop.permute.xlu0 %9491
      %9493 = vrot.lane.b32.xlu0 %v8917, 123
      %v9494 = vpop.permute.xlu0 %9493
      %9495 = vrot.lane.b32.xlu0 %v9016, 123
      %v9496 = vpop.permute.xlu0 %9495
      %9497 = vrot.lane.b32.xlu0 %v9115, 123
      %v9498 = vpop.permute.xlu0 %9497
      %v9499 = vsel %vm1461, %v9476, %v9478
      %v9500 = vsel %vm1461, %v9478, %v9480
      %v9501 = vsel %vm1461, %v9482, %v9484
      %v9502 = vsel %vm1461, %v9484, %v9486
      %v9503 = vsel %vm1461, %v9488, %v9490
      %v9504 = vsel %vm1461, %v9490, %v9492
      %v9505 = vsel %vm1461, %v9494, %v9496
      %v9506 = vsel %vm1461, %v9496, %v9498
      %v9523 = vsel %vm1461, %v9480, %v9476
      %v9524 = vsel %vm1461, %v9486, %v9482
      %v9525 = vsel %vm1461, %v9492, %v9488
      %v9526 = vsel %vm1461, %v9498, %v9494
      %v9527 = vadd.f32 %v9451, %v9499
      %v9528 = vadd.f32 %v9452, %v9500
      %v9529 = vadd.f32 %v9453, %v9523
      %v9530 = vadd.f32 %v9454, %v9501
      %v9531 = vadd.f32 %v9455, %v9502
      %v9532 = vadd.f32 %v9456, %v9524
      %v9533 = vadd.f32 %v9457, %v9503
      %v9534 = vadd.f32 %v9458, %v9504
      %v9535 = vadd.f32 %v9459, %v9525
      %v9536 = vadd.f32 %v9460, %v9505
      %v9537 = vadd.f32 %v9461, %v9506
      %v9538 = vadd.f32 %v9462, %v9526
      %9551 = vrot.lane.b32.xlu0 %v8920, 122
      %v9552 = vpop.permute.xlu0 %9551
      %9553 = vrot.lane.b32.xlu0 %v9019, 122
      %v9554 = vpop.permute.xlu0 %9553
      %9555 = vrot.lane.b32.xlu0 %v9118, 122
      %v9556 = vpop.permute.xlu0 %9555
      %9557 = vrot.lane.b32.xlu0 %v8922, 122
      %v9558 = vpop.permute.xlu0 %9557
      %9559 = vrot.lane.b32.xlu0 %v9021, 122
      %v9560 = vpop.permute.xlu0 %9559
      %9561 = vrot.lane.b32.xlu0 %v9120, 122
      %v9562 = vpop.permute.xlu0 %9561
      %9563 = vrot.lane.b32.xlu0 %v8925, 122
      %v9564 = vpop.permute.xlu0 %9563
      %9565 = vrot.lane.b32.xlu0 %v9024, 122
      %v9566 = vpop.permute.xlu0 %9565
      %9567 = vrot.lane.b32.xlu0 %v9123, 122
      %v9568 = vpop.permute.xlu0 %9567
      %9569 = vrot.lane.b32.xlu0 %v8927, 122
      %v9570 = vpop.permute.xlu0 %9569
      %9571 = vrot.lane.b32.xlu0 %v9026, 122
      %v9572 = vpop.permute.xlu0 %9571
      %9573 = vrot.lane.b32.xlu0 %v9125, 122
      %v9574 = vpop.permute.xlu0 %9573
      %v9575 = vsel %vm1538, %v9552, %v9554
      %v9576 = vsel %vm1538, %v9554, %v9556
      %v9577 = vsel %vm1538, %v9558, %v9560
      %v9578 = vsel %vm1538, %v9560, %v9562
      %v9579 = vsel %vm1538, %v9564, %v9566
      %v9580 = vsel %vm1538, %v9566, %v9568
      %v9581 = vsel %vm1538, %v9570, %v9572
      %v9582 = vsel %vm1538, %v9572, %v9574
      %v9599 = vsel %vm1538, %v9556, %v9552
      %v9600 = vsel %vm1538, %v9562, %v9558
      %v9601 = vsel %vm1538, %v9568, %v9564
      %v9602 = vsel %vm1538, %v9574, %v9570
      %v9603 = vadd.f32 %v9527, %v9575
      %v9604 = vadd.f32 %v9528, %v9576
      %v9605 = vadd.f32 %v9529, %v9599
      %v9606 = vadd.f32 %v9530, %v9577
      %v9607 = vadd.f32 %v9531, %v9578
      %v9608 = vadd.f32 %v9532, %v9600
      %v9609 = vadd.f32 %v9533, %v9579
      %v9610 = vadd.f32 %v9534, %v9580
      %v9611 = vadd.f32 %v9535, %v9601
      %v9612 = vadd.f32 %v9536, %v9581
      %v9613 = vadd.f32 %v9537, %v9582
      %v9614 = vadd.f32 %v9538, %v9602
      %9627 = vrot.lane.b32.xlu0 %v8930, 121
      %v9628 = vpop.permute.xlu0 %9627
      %9629 = vrot.lane.b32.xlu0 %v9029, 121
      %v9630 = vpop.permute.xlu0 %9629
      %9631 = vrot.lane.b32.xlu0 %v9128, 121
      %v9632 = vpop.permute.xlu0 %9631
      %9633 = vrot.lane.b32.xlu0 %v8932, 121
      %v9634 = vpop.permute.xlu0 %9633
      %9635 = vrot.lane.b32.xlu0 %v9031, 121
      %v9636 = vpop.permute.xlu0 %9635
      %9637 = vrot.lane.b32.xlu0 %v9130, 121
      %v9638 = vpop.permute.xlu0 %9637
      %9639 = vrot.lane.b32.xlu0 %v8935, 121
      %v9640 = vpop.permute.xlu0 %9639
      %9641 = vrot.lane.b32.xlu0 %v9034, 121
      %v9642 = vpop.permute.xlu0 %9641
      %9643 = vrot.lane.b32.xlu0 %v9133, 121
      %v9644 = vpop.permute.xlu0 %9643
      %9645 = vrot.lane.b32.xlu0 %v8937, 121
      %v9646 = vpop.permute.xlu0 %9645
      %9647 = vrot.lane.b32.xlu0 %v9036, 121
      %v9648 = vpop.permute.xlu0 %9647
      %9649 = vrot.lane.b32.xlu0 %v9135, 121
      %v9650 = vpop.permute.xlu0 %9649
      %v9651 = vsel %vm1615, %v9628, %v9630
      %v9652 = vsel %vm1615, %v9630, %v9632
      %v9653 = vsel %vm1615, %v9634, %v9636
      %v9654 = vsel %vm1615, %v9636, %v9638
      %v9655 = vsel %vm1615, %v9640, %v9642
      %v9656 = vsel %vm1615, %v9642, %v9644
      %v9657 = vsel %vm1615, %v9646, %v9648
      %v9658 = vsel %vm1615, %v9648, %v9650
      %v9675 = vsel %vm1615, %v9632, %v9628
      %v9676 = vsel %vm1615, %v9638, %v9634
      %v9677 = vsel %vm1615, %v9644, %v9640
      %v9678 = vsel %vm1615, %v9650, %v9646
      %v9679 = vadd.f32 %v9603, %v9651
      %v9680 = vadd.f32 %v9604, %v9652
      %v9681 = vadd.f32 %v9605, %v9675
      %v9682 = vadd.f32 %v9606, %v9653
      %v9683 = vadd.f32 %v9607, %v9654
      %v9684 = vadd.f32 %v9608, %v9676
      %v9685 = vadd.f32 %v9609, %v9655
      %v9686 = vadd.f32 %v9610, %v9656
      %v9687 = vadd.f32 %v9611, %v9677
      %v9688 = vadd.f32 %v9612, %v9657
      %v9689 = vadd.f32 %v9613, %v9658
      %v9690 = vadd.f32 %v9614, %v9678
      %9703 = vrot.lane.b32.xlu0 %v8940, 120
      %v9704 = vpop.permute.xlu0 %9703
      %9705 = vrot.lane.b32.xlu0 %v9039, 120
      %v9706 = vpop.permute.xlu0 %9705
      %9707 = vrot.lane.b32.xlu0 %v9138, 120
      %v9708 = vpop.permute.xlu0 %9707
      %9709 = vrot.lane.b32.xlu0 %v8942, 120
      %v9710 = vpop.permute.xlu0 %9709
      %9711 = vrot.lane.b32.xlu0 %v9041, 120
      %v9712 = vpop.permute.xlu0 %9711
      %9713 = vrot.lane.b32.xlu0 %v9140, 120
      %v9714 = vpop.permute.xlu0 %9713
      %9715 = vrot.lane.b32.xlu0 %v8945, 120
      %v9716 = vpop.permute.xlu0 %9715
      %9717 = vrot.lane.b32.xlu0 %v9044, 120
      %v9718 = vpop.permute.xlu0 %9717
      %9719 = vrot.lane.b32.xlu0 %v9143, 120
      %v9720 = vpop.permute.xlu0 %9719
      %9721 = vrot.lane.b32.xlu0 %v8947, 120
      %v9722 = vpop.permute.xlu0 %9721
      %9723 = vrot.lane.b32.xlu0 %v9046, 120
      %v9724 = vpop.permute.xlu0 %9723
      %9725 = vrot.lane.b32.xlu0 %v9145, 120
      %v9726 = vpop.permute.xlu0 %9725
      %v9727 = vsel %vm1692, %v9704, %v9706
      %v9728 = vsel %vm1692, %v9706, %v9708
      %v9729 = vsel %vm1692, %v9710, %v9712
      %v9730 = vsel %vm1692, %v9712, %v9714
      %v9731 = vsel %vm1692, %v9716, %v9718
      %v9732 = vsel %vm1692, %v9718, %v9720
      %v9733 = vsel %vm1692, %v9722, %v9724
      %v9734 = vsel %vm1692, %v9724, %v9726
      %v9751 = vsel %vm1692, %v9708, %v9704
      %v9752 = vsel %vm1692, %v9714, %v9710
      %v9753 = vsel %vm1692, %v9720, %v9716
      %v9754 = vsel %vm1692, %v9726, %v9722
      %v9755 = vadd.f32 %v9679, %v9727
      %v9756 = vadd.f32 %v9680, %v9728
      %v9757 = vadd.f32 %v9681, %v9751
      %v9758 = vadd.f32 %v9682, %v9729
      %v9759 = vadd.f32 %v9683, %v9730
      %v9760 = vadd.f32 %v9684, %v9752
      %v9761 = vadd.f32 %v9685, %v9731
      %v9762 = vadd.f32 %v9686, %v9732
      %v9763 = vadd.f32 %v9687, %v9753
      %v9764 = vadd.f32 %v9688, %v9733
      %v9765 = vadd.f32 %v9689, %v9734
      %v9766 = vadd.f32 %v9690, %v9754
      %s9767 = scalar_lea.vmem %s345, 84
      %v9768 = vld [vmem:[%s9767] sm:$0xf]
      %v9769 = vld [vmem:[%s9767 + $0x4] sm:$0xf]
      %v9770 = vld [vmem:[%s9767 + $0x8] sm:$0xf]
      %v9771 = vld [vmem:[%s9767 + $0xc] sm:$0xf]
      %v9772 = vld [vmem:[%s9767 + $0x10] sm:$0xf]
      %v9773 = vld [vmem:[%s9767 + $0x14] sm:$0xf]
      %v9774 = vld [vmem:[%s9767 + $0x18] sm:$0xf]
      %v9775 = vld [vmem:[%s9767 + $0x1c] sm:$0xf]
      %v9776 = vld [vmem:[%s9767 + $0x20] sm:$0xf]
      %v9777 = vld [vmem:[%s9767 + $0x24] sm:$0xf]
      %v9778 = vld [vmem:[%s9767 + $0x28] sm:$0xf]
      %v9779 = vld [vmem:[%s9767 + $0x2c] sm:$0xf]
      %v9780 = vld [vmem:[%s9767 + $0x30] sm:$0xf]
      %v9781 = vld [vmem:[%s9767 + $0x34] sm:$0xf]
      %v9782 = vld [vmem:[%s9767 + $0x38] sm:$0xf]
      %v9783 = vld [vmem:[%s9767 + $0x3c] sm:$0xf]
      %v9784 = vld [vmem:[%s9767 + $0x40] sm:$0xf]
      %v9785 = vld [vmem:[%s9767 + $0x44] sm:$0xf]
      %v9786 = vld [vmem:[%s9767 + $0x48] sm:$0xf]
      %v9787 = vld [vmem:[%s9767 + $0x4c] sm:$0xf]
      %v9788 = vld [vmem:[%s9767 + $0x50] sm:$0xf]
      %v9789 = vld [vmem:[%s9767 + $0x54] sm:$0xf]
      %v9790 = vld [vmem:[%s9767 + $0x58] sm:$0xf]
      %v9791 = vld [vmem:[%s9767 + $0x5c] sm:$0xf]
      %v9792 = vld [vmem:[%s9767 + $0x60] sm:$0xf]
      %v9793 = vld [vmem:[%s9767 + $0x64] sm:$0xf]
      %v9794 = vld [vmem:[%s9767 + $0x68] sm:$0xf]
      %v9795 = vld [vmem:[%s9767 + $0x6c] sm:$0xf]
      %v9796 = vld [vmem:[%s9767 + $0x70] sm:$0xf]
      %v9797 = vld [vmem:[%s9767 + $0x74] sm:$0xf]
      %v9798 = vld [vmem:[%s9767 + $0x78] sm:$0xf]
      %v9799 = vld [vmem:[%s9767 + $0x7c] sm:$0xf]
      %v9800 = vld [vmem:[%s9767 + $0x80] sm:$0xf]
      %v9801 = vld [vmem:[%s9767 + $0x84] sm:$0xf]
      %v9802 = vld [vmem:[%s9767 + $0x88] sm:$0xf]
      %v9803 = vld [vmem:[%s9767 + $0x8c] sm:$0xf]
      %v9804 = vld [vmem:[%s9767 + $0x90] sm:$0xf]
      %v9805 = vld [vmem:[%s9767 + $0x94] sm:$0xf]
      %v9806 = vld [vmem:[%s9767 + $0x98] sm:$0xf]
      %v9807 = vld [vmem:[%s9767 + $0x9c] sm:$0xf]
      %v9808 = vld [vmem:[%s9767 + $0xa0] sm:$0xf]
      %v9809 = vld [vmem:[%s9767 + $0xa4] sm:$0xf]
      %v9810 = vld [vmem:[%s9767 + $0xa8] sm:$0xf]
      %v9811 = vld [vmem:[%s9767 + $0xac] sm:$0xf]
      %v9812 = vld [vmem:[%s9767 + $0xb0] sm:$0xf]
      %v9813 = vld [vmem:[%s9767 + $0xb4] sm:$0xf]
      %v9814 = vld [vmem:[%s9767 + $0xb8] sm:$0xf]
      %v9815 = vld [vmem:[%s9767 + $0xbc] sm:$0xf]
      %s9816 = scalar_lea.vmem %s350, 1008
      %v9817 = vld [vmem:[%s9816] sm:$0xf]
      %v9818 = vld [vmem:[%s9816 + $0x4] sm:$0xf]
      %v9819 = vld [vmem:[%s9816 + $0x8] sm:$0xf]
      %v9820 = vld [vmem:[%s9816 + $0xc] sm:$0xf]
      %v9821 = vld [vmem:[%s9816 + $0x10] sm:$0xf]
      %v9822 = vld [vmem:[%s9816 + $0x14] sm:$0xf]
      %v9823 = vld [vmem:[%s9816 + $0x18] sm:$0xf]
      %v9824 = vld [vmem:[%s9816 + $0x1c] sm:$0xf]
      %v9825 = vld [vmem:[%s9816 + $0x20] sm:$0xf]
      %v9826 = vld [vmem:[%s9816 + $0x24] sm:$0xf]
      %v9827 = vld [vmem:[%s9816 + $0x28] sm:$0xf]
      %v9828 = vld [vmem:[%s9816 + $0x2c] sm:$0xf]
      %v9829 = vld [vmem:[%s9816 + $0x30] sm:$0xf]
      %v9830 = vld [vmem:[%s9816 + $0x34] sm:$0xf]
      %v9831 = vld [vmem:[%s9816 + $0x38] sm:$0xf]
      %v9832 = vld [vmem:[%s9816 + $0x3c] sm:$0xf]
      %v9833 = vld [vmem:[%s9816 + $0x40] sm:$0xf]
      %v9834 = vld [vmem:[%s9816 + $0x44] sm:$0xf]
      %v9835 = vld [vmem:[%s9816 + $0x48] sm:$0xf]
      %v9836 = vld [vmem:[%s9816 + $0x4c] sm:$0xf]
      %v9837 = vld [vmem:[%s9816 + $0x50] sm:$0xf]
      %v9838 = vld [vmem:[%s9816 + $0x54] sm:$0xf]
      %v9839 = vld [vmem:[%s9816 + $0x58] sm:$0xf]
      %v9840 = vld [vmem:[%s9816 + $0x5c] sm:$0xf]
      %v9841 = vld [vmem:[%s9816 + $0x60] sm:$0xf]
      %v9842 = vld [vmem:[%s9816 + $0x64] sm:$0xf]
      %v9843 = vld [vmem:[%s9816 + $0x68] sm:$0xf]
      %v9844 = vld [vmem:[%s9816 + $0x6c] sm:$0xf]
      %v9845 = vld [vmem:[%s9816 + $0x70] sm:$0xf]
      %v9846 = vld [vmem:[%s9816 + $0x74] sm:$0xf]
      %v9847 = vld [vmem:[%s9816 + $0x78] sm:$0xf]
      %v9848 = vld [vmem:[%s9816 + $0x7c] sm:$0xf]
      %v9849 = vld [vmem:[%s9816 + $0x80] sm:$0xf]
      %v9850 = vld [vmem:[%s9816 + $0x84] sm:$0xf]
      %v9851 = vld [vmem:[%s9816 + $0x88] sm:$0xf]
      %v9852 = vld [vmem:[%s9816 + $0x8c] sm:$0xf]
      %v9889 = vunpack.c.l.b16 %v9817
      %v9890 = vunpack.c.l.b16 %v9818
      %v9891 = vunpack.c.l.b16 %v9819
      %v9892 = vunpack.c.l.b16 %v9820
      %v9893 = vunpack.c.l.b16 %v9821
      %v9894 = vunpack.c.l.b16 %v9822
      %v9895 = vunpack.c.l.b16 %v9823
      %v9896 = vunpack.c.l.b16 %v9824
      %v9897 = vunpack.c.l.b16 %v9825
      %v9898 = vunpack.c.l.b16 %v9826
      %v9899 = vunpack.c.l.b16 %v9827
      %v9900 = vunpack.c.l.b16 %v9828
      %v9901 = vunpack.c.l.b16 %v9829
      %v9902 = vunpack.c.l.b16 %v9830
      %v9903 = vunpack.c.l.b16 %v9831
      %v9904 = vunpack.c.l.b16 %v9832
      %v9905 = vunpack.c.l.b16 %v9833
      %v9906 = vunpack.c.l.b16 %v9834
      %v9907 = vunpack.c.l.b16 %v9835
      %v9908 = vunpack.c.l.b16 %v9836
      %v9909 = vunpack.c.l.b16 %v9837
      %v9910 = vunpack.c.l.b16 %v9838
      %v9911 = vunpack.c.l.b16 %v9839
      %v9912 = vunpack.c.l.b16 %v9840
      %v9913 = vunpack.c.l.b16 %v9841
      %v9914 = vunpack.c.l.b16 %v9842
      %v9915 = vunpack.c.l.b16 %v9843
      %v9916 = vunpack.c.l.b16 %v9844
      %v9917 = vunpack.c.l.b16 %v9845
      %v9918 = vunpack.c.l.b16 %v9846
      %v9919 = vunpack.c.l.b16 %v9847
      %v9920 = vunpack.c.l.b16 %v9848
      %v9921 = vunpack.c.l.b16 %v9849
      %v9922 = vunpack.c.l.b16 %v9850
      %v9923 = vunpack.c.l.b16 %v9851
      %v9924 = vunpack.c.l.b16 %v9852
      %v9925 = vpack.c.b16 %v9890, %v9889
      %v9926 = vpack.c.b16 %v9892, %v9891
      %v9927 = vpack.c.b16 %v9894, %v9893
      %v9928 = vpack.c.b16 %v9896, %v9895
      %v9929 = vpack.c.b16 %v9898, %v9897
      %v9930 = vpack.c.b16 %v9900, %v9899
      %v9931 = vpack.c.b16 %v9902, %v9901
      %v9932 = vpack.c.b16 %v9904, %v9903
      %v9933 = vpack.c.b16 %v9906, %v9905
      %v9934 = vpack.c.b16 %v9908, %v9907
      %v9935 = vpack.c.b16 %v9910, %v9909
      %v9936 = vpack.c.b16 %v9912, %v9911
      %v9937 = vpack.c.b16 %v9914, %v9913
      %v9938 = vpack.c.b16 %v9916, %v9915
      %v9939 = vpack.c.b16 %v9918, %v9917
      %v9940 = vpack.c.b16 %v9920, %v9919
      %v9941 = vpack.c.b16 %v9922, %v9921
      %v9942 = vpack.c.b16 %v9924, %v9923
      %v9991 = vunpack.c.l.b16 %v9768
      %v9992 = vunpack.c.l.b16 %v9769
      %v9993 = vunpack.c.l.b16 %v9770
      %v9994 = vunpack.c.l.b16 %v9771
      %v9995 = vunpack.c.l.b16 %v9772
      %v9996 = vunpack.c.l.b16 %v9773
      %v9997 = vunpack.c.l.b16 %v9774
      %v9998 = vunpack.c.l.b16 %v9775
      %v9999 = vunpack.c.l.b16 %v9776
      %v10000 = vunpack.c.l.b16 %v9777
      %v10001 = vunpack.c.l.b16 %v9778
      %v10002 = vunpack.c.l.b16 %v9779
      %v10003 = vunpack.c.l.b16 %v9780
      %v10004 = vunpack.c.l.b16 %v9781
      %v10005 = vunpack.c.l.b16 %v9782
      %v10006 = vunpack.c.l.b16 %v9783
      %v10007 = vunpack.c.l.b16 %v9784
      %v10008 = vunpack.c.l.b16 %v9785
      %v10009 = vunpack.c.l.b16 %v9786
      %v10010 = vunpack.c.l.b16 %v9787
      %v10011 = vunpack.c.l.b16 %v9788
      %v10012 = vunpack.c.l.b16 %v9789
      %v10013 = vunpack.c.l.b16 %v9790
      %v10014 = vunpack.c.l.b16 %v9791
      %v10015 = vunpack.c.l.b16 %v9792
      %v10016 = vunpack.c.l.b16 %v9793
      %v10017 = vunpack.c.l.b16 %v9794
      %v10018 = vunpack.c.l.b16 %v9795
      %v10019 = vunpack.c.l.b16 %v9796
      %v10020 = vunpack.c.l.b16 %v9797
      %v10021 = vunpack.c.l.b16 %v9798
      %v10022 = vunpack.c.l.b16 %v9799
      %v10023 = vunpack.c.l.b16 %v9800
      %v10024 = vunpack.c.l.b16 %v9801
      %v10025 = vunpack.c.l.b16 %v9802
      %v10026 = vunpack.c.l.b16 %v9803
      %v10027 = vunpack.c.l.b16 %v9804
      %v10028 = vunpack.c.l.b16 %v9805
      %v10029 = vunpack.c.l.b16 %v9806
      %v10030 = vunpack.c.l.b16 %v9807
      %v10031 = vunpack.c.l.b16 %v9808
      %v10032 = vunpack.c.l.b16 %v9809
      %v10033 = vunpack.c.l.b16 %v9810
      %v10034 = vunpack.c.l.b16 %v9811
      %v10035 = vunpack.c.l.b16 %v9812
      %v10036 = vunpack.c.l.b16 %v9813
      %v10037 = vunpack.c.l.b16 %v9814
      %v10038 = vunpack.c.l.b16 %v9815
      %v10039 = vpack.c.b16 %v9992, %v9991
      %v10040 = vpack.c.b16 %v9994, %v9993
      %v10041 = vpack.c.b16 %v9996, %v9995
      %v10042 = vpack.c.b16 %v9998, %v9997
      %v10043 = vpack.c.b16 %v10000, %v9999
      %v10044 = vpack.c.b16 %v10002, %v10001
      %v10045 = vpack.c.b16 %v10004, %v10003
      %v10046 = vpack.c.b16 %v10006, %v10005
      %v10047 = vpack.c.b16 %v10008, %v10007
      %v10048 = vpack.c.b16 %v10010, %v10009
      %v10049 = vpack.c.b16 %v10012, %v10011
      %v10050 = vpack.c.b16 %v10014, %v10013
      %v10051 = vpack.c.b16 %v10016, %v10015
      %v10052 = vpack.c.b16 %v10018, %v10017
      %v10053 = vpack.c.b16 %v10020, %v10019
      %v10054 = vpack.c.b16 %v10022, %v10021
      %v10055 = vpack.c.b16 %v10024, %v10023
      %v10056 = vpack.c.b16 %v10026, %v10025
      %v10057 = vpack.c.b16 %v10028, %v10027
      %v10058 = vpack.c.b16 %v10030, %v10029
      %v10059 = vpack.c.b16 %v10032, %v10031
      %v10060 = vpack.c.b16 %v10034, %v10033
      %v10061 = vpack.c.b16 %v10036, %v10035
      %v10062 = vpack.c.b16 %v10038, %v10037
      %v10064 = vsel %vm681, %v9925, 0
      %v10067 = vsel %vm681, %v9926, 0
      %v10070 = vsel %vm681, %v9927, 0
      %v10073 = vsel %vm681, %v9928, 0
      %v10076 = vsel %vm681, %v9929, 0
      %v10079 = vsel %vm681, %v9930, 0
      %v10082 = vsel %vm681, %v9931, 0
      %v10085 = vsel %vm681, %v9932, 0
      %v10088 = vsel %vm681, %v9933, 0
      %v10091 = vsel %vm681, %v9934, 0
      %v10094 = vsel %vm681, %v9935, 0
      %v10097 = vsel %vm681, %v9936, 0
      %v10100 = vsel %vm681, %v9937, 0
      %v10103 = vsel %vm681, %v9938, 0
      %v10106 = vsel %vm681, %v9939, 0
      %v10109 = vsel %vm681, %v9940, 0
      %v10112 = vsel %vm681, %v9941, 0
      %v10115 = vsel %vm681, %v9942, 0
      %v10118 = vsel %vm681, %v10039, 0
      %v10121 = vsel %vm681, %v10040, 0
      %v10124 = vsel %vm681, %v10041, 0
      %v10127 = vsel %vm681, %v10042, 0
      %v10130 = vsel %vm681, %v10043, 0
      %v10133 = vsel %vm681, %v10044, 0
      %v10136 = vsel %vm681, %v10045, 0
      %v10139 = vsel %vm681, %v10046, 0
      %v10142 = vsel %vm681, %v10047, 0
      %v10145 = vsel %vm681, %v10048, 0
      %v10148 = vsel %vm681, %v10049, 0
      %v10151 = vsel %vm681, %v10050, 0
      %v10154 = vsel %vm681, %v10051, 0
      %v10157 = vsel %vm681, %v10052, 0
      %v10160 = vsel %vm681, %v10053, 0
      %v10163 = vsel %vm681, %v10054, 0
      %v10166 = vsel %vm681, %v10055, 0
      %v10169 = vsel %vm681, %v10056, 0
      %v10172 = vsel %vm681, %v10057, 0
      %v10175 = vsel %vm681, %v10058, 0
      %v10178 = vsel %vm681, %v10059, 0
      %v10181 = vsel %vm681, %v10060, 0
      %v10184 = vsel %vm681, %v10061, 0
      %v10187 = vsel %vm681, %v10062, 0
      %10189 = vmatpush.bf16.xpose.msra.mxu0 %v10139
      %10190 = vmatpush.bf16.xpose.msra.mxu0 %v10136
      %10191 = vmatpush.bf16.xpose.msra.mxu0 %v10133
      %10192 = vmatpush.bf16.xpose.msra.mxu0 %v10130
      %10193 = vmatpush.bf16.xpose.msra.mxu0 %v10127
      %10194 = vmatpush.bf16.xpose.msra.mxu0 %v10124
      %10195 = vmatpush.bf16.xpose.msra.mxu0 %v10121
      %10196 = vmatpush.bf16.xpose.msra.mxu0 %v10118
      %10197 = vmatmul.bf16.gmra.mxu0 %v10064
      %v10198 = vpop.f32.mrf.mxu0
      %v10199 = vadd.f32 0.0, %v10198
      %v10200 = vpop.f32.mrf.mxu0
      %v10201 = vadd.f32 0.0, %v10200
      %10202 = vmatmul.bf16.gmra.mxu0 %v10067
      %v10203 = vpop.f32.mrf.mxu0
      %v10204 = vadd.f32 0.0, %v10203
      %v10205 = vpop.f32.mrf.mxu0
      %v10206 = vadd.f32 0.0, %v10205
      %10207 = vmatmul.bf16.gmra.mxu0 %v10070
      %v10208 = vpop.f32.mrf.mxu0
      %v10209 = vadd.f32 0.0, %v10208
      %v10210 = vpop.f32.mrf.mxu0
      %v10211 = vadd.f32 0.0, %v10210
      %10212 = vmatmul.bf16.gmra.mxu0 %v10073
      %v10213 = vpop.f32.mrf.mxu0
      %v10214 = vadd.f32 0.0, %v10213
      %v10215 = vpop.f32.mrf.mxu0
      %v10216 = vadd.f32 0.0, %v10215
      %10217 = vmatmul.bf16.gmra.mxu0 %v10076
      %v10218 = vpop.f32.mrf.mxu0
      %v10219 = vadd.f32 0.0, %v10218
      %v10220 = vpop.f32.mrf.mxu0
      %v10221 = vadd.f32 0.0, %v10220
      %10222 = vmatmul.bf16.gmra.mxu0 %v10079
      %v10223 = vpop.f32.mrf.mxu0
      %v10224 = vadd.f32 0.0, %v10223
      %v10225 = vpop.f32.mrf.mxu0
      %v10226 = vadd.f32 0.0, %v10225
      %10227 = vmatmul.bf16.gmra.mxu0 %v10082
      %v10228 = vpop.f32.mrf.mxu0
      %v10229 = vadd.f32 0.0, %v10228
      %v10230 = vpop.f32.mrf.mxu0
      %v10231 = vadd.f32 0.0, %v10230
      %10232 = vmatmul.bf16.gmra.mxu0 %v10085
      %v10233 = vpop.f32.mrf.mxu0
      %v10234 = vadd.f32 0.0, %v10233
      %v10235 = vpop.f32.mrf.mxu0
      %v10236 = vadd.f32 0.0, %v10235
      %10237 = vmatmul.bf16.gmra.mxu0 %v10088
      %v10238 = vpop.f32.mrf.mxu0
      %v10239 = vadd.f32 0.0, %v10238
      %v10240 = vpop.f32.mrf.mxu0
      %v10241 = vadd.f32 0.0, %v10240
      %10242 = vmatmul.bf16.gmra.mxu0 %v10091
      %v10243 = vpop.f32.mrf.mxu0
      %v10244 = vadd.f32 0.0, %v10243
      %v10245 = vpop.f32.mrf.mxu0
      %v10246 = vadd.f32 0.0, %v10245
      %10247 = vmatmul.bf16.gmra.mxu0 %v10094
      %v10248 = vpop.f32.mrf.mxu0
      %v10249 = vadd.f32 0.0, %v10248
      %v10250 = vpop.f32.mrf.mxu0
      %v10251 = vadd.f32 0.0, %v10250
      %10252 = vmatmul.bf16.gmra.mxu0 %v10097
      %v10253 = vpop.f32.mrf.mxu0
      %v10254 = vadd.f32 0.0, %v10253
      %v10255 = vpop.f32.mrf.mxu0
      %v10256 = vadd.f32 0.0, %v10255
      %10257 = vmatmul.bf16.gmra.mxu0 %v10100
      %v10258 = vpop.f32.mrf.mxu0
      %v10259 = vadd.f32 0.0, %v10258
      %v10260 = vpop.f32.mrf.mxu0
      %v10261 = vadd.f32 0.0, %v10260
      %10262 = vmatmul.bf16.gmra.mxu0 %v10103
      %v10263 = vpop.f32.mrf.mxu0
      %v10264 = vadd.f32 0.0, %v10263
      %v10265 = vpop.f32.mrf.mxu0
      %v10266 = vadd.f32 0.0, %v10265
      %10267 = vmatmul.bf16.gmra.mxu0 %v10106
      %v10268 = vpop.f32.mrf.mxu0
      %v10269 = vadd.f32 0.0, %v10268
      %v10270 = vpop.f32.mrf.mxu0
      %v10271 = vadd.f32 0.0, %v10270
      %10272 = vmatmul.bf16.gmra.mxu0 %v10109
      %v10273 = vpop.f32.mrf.mxu0
      %v10274 = vadd.f32 0.0, %v10273
      %v10275 = vpop.f32.mrf.mxu0
      %v10276 = vadd.f32 0.0, %v10275
      %10277 = vmatmul.bf16.gmra.mxu0 %v10112
      %v10278 = vpop.f32.mrf.mxu0
      %v10279 = vadd.f32 0.0, %v10278
      %v10280 = vpop.f32.mrf.mxu0
      %v10281 = vadd.f32 0.0, %v10280
      %10282 = vmatmul.bf16.gmra.mxu0 %v10115
      %v10283 = vpop.f32.mrf.mxu0
      %v10284 = vadd.f32 0.0, %v10283
      %v10285 = vpop.f32.mrf.mxu0
      %v10286 = vadd.f32 0.0, %v10285
      %10287 = vdwg.mxu0
      %10288 = vmatpush.bf16.xpose.msra.mxu0 %v10163
      %10289 = vmatpush.bf16.xpose.msra.mxu0 %v10160
      %10290 = vmatpush.bf16.xpose.msra.mxu0 %v10157
      %10291 = vmatpush.bf16.xpose.msra.mxu0 %v10154
      %10292 = vmatpush.bf16.xpose.msra.mxu0 %v10151
      %10293 = vmatpush.bf16.xpose.msra.mxu0 %v10148
      %10294 = vmatpush.bf16.xpose.msra.mxu0 %v10145
      %10295 = vmatpush.bf16.xpose.msra.mxu0 %v10142
      %10296 = vmatmul.bf16.gmra.mxu0 %v10064
      %v10297 = vpop.f32.mrf.mxu0
      %v10298 = vadd.f32 0.0, %v10297
      %v10299 = vpop.f32.mrf.mxu0
      %v10300 = vadd.f32 0.0, %v10299
      %10301 = vmatmul.bf16.gmra.mxu0 %v10067
      %v10302 = vpop.f32.mrf.mxu0
      %v10303 = vadd.f32 0.0, %v10302
      %v10304 = vpop.f32.mrf.mxu0
      %v10305 = vadd.f32 0.0, %v10304
      %10306 = vmatmul.bf16.gmra.mxu0 %v10070
      %v10307 = vpop.f32.mrf.mxu0
      %v10308 = vadd.f32 0.0, %v10307
      %v10309 = vpop.f32.mrf.mxu0
      %v10310 = vadd.f32 0.0, %v10309
      %10311 = vmatmul.bf16.gmra.mxu0 %v10073
      %v10312 = vpop.f32.mrf.mxu0
      %v10313 = vadd.f32 0.0, %v10312
      %v10314 = vpop.f32.mrf.mxu0
      %v10315 = vadd.f32 0.0, %v10314
      %10316 = vmatmul.bf16.gmra.mxu0 %v10076
      %v10317 = vpop.f32.mrf.mxu0
      %v10318 = vadd.f32 0.0, %v10317
      %v10319 = vpop.f32.mrf.mxu0
      %v10320 = vadd.f32 0.0, %v10319
      %10321 = vmatmul.bf16.gmra.mxu0 %v10079
      %v10322 = vpop.f32.mrf.mxu0
      %v10323 = vadd.f32 0.0, %v10322
      %v10324 = vpop.f32.mrf.mxu0
      %v10325 = vadd.f32 0.0, %v10324
      %10326 = vmatmul.bf16.gmra.mxu0 %v10082
      %v10327 = vpop.f32.mrf.mxu0
      %v10328 = vadd.f32 0.0, %v10327
      %v10329 = vpop.f32.mrf.mxu0
      %v10330 = vadd.f32 0.0, %v10329
      %10331 = vmatmul.bf16.gmra.mxu0 %v10085
      %v10332 = vpop.f32.mrf.mxu0
      %v10333 = vadd.f32 0.0, %v10332
      %v10334 = vpop.f32.mrf.mxu0
      %v10335 = vadd.f32 0.0, %v10334
      %10336 = vmatmul.bf16.gmra.mxu0 %v10088
      %v10337 = vpop.f32.mrf.mxu0
      %v10338 = vadd.f32 0.0, %v10337
      %v10339 = vpop.f32.mrf.mxu0
      %v10340 = vadd.f32 0.0, %v10339
      %10341 = vmatmul.bf16.gmra.mxu0 %v10091
      %v10342 = vpop.f32.mrf.mxu0
      %v10343 = vadd.f32 0.0, %v10342
      %v10344 = vpop.f32.mrf.mxu0
      %v10345 = vadd.f32 0.0, %v10344
      %10346 = vmatmul.bf16.gmra.mxu0 %v10094
      %v10347 = vpop.f32.mrf.mxu0
      %v10348 = vadd.f32 0.0, %v10347
      %v10349 = vpop.f32.mrf.mxu0
      %v10350 = vadd.f32 0.0, %v10349
      %10351 = vmatmul.bf16.gmra.mxu0 %v10097
      %v10352 = vpop.f32.mrf.mxu0
      %v10353 = vadd.f32 0.0, %v10352
      %v10354 = vpop.f32.mrf.mxu0
      %v10355 = vadd.f32 0.0, %v10354
      %10356 = vmatmul.bf16.gmra.mxu0 %v10100
      %v10357 = vpop.f32.mrf.mxu0
      %v10358 = vadd.f32 0.0, %v10357
      %v10359 = vpop.f32.mrf.mxu0
      %v10360 = vadd.f32 0.0, %v10359
      %10361 = vmatmul.bf16.gmra.mxu0 %v10103
      %v10362 = vpop.f32.mrf.mxu0
      %v10363 = vadd.f32 0.0, %v10362
      %v10364 = vpop.f32.mrf.mxu0
      %v10365 = vadd.f32 0.0, %v10364
      %10366 = vmatmul.bf16.gmra.mxu0 %v10106
      %v10367 = vpop.f32.mrf.mxu0
      %v10368 = vadd.f32 0.0, %v10367
      %v10369 = vpop.f32.mrf.mxu0
      %v10370 = vadd.f32 0.0, %v10369
      %10371 = vmatmul.bf16.gmra.mxu0 %v10109
      %v10372 = vpop.f32.mrf.mxu0
      %v10373 = vadd.f32 0.0, %v10372
      %v10374 = vpop.f32.mrf.mxu0
      %v10375 = vadd.f32 0.0, %v10374
      %10376 = vmatmul.bf16.gmra.mxu0 %v10112
      %v10377 = vpop.f32.mrf.mxu0
      %v10378 = vadd.f32 0.0, %v10377
      %v10379 = vpop.f32.mrf.mxu0
      %v10380 = vadd.f32 0.0, %v10379
      %10381 = vmatmul.bf16.gmra.mxu0 %v10115
      %v10382 = vpop.f32.mrf.mxu0
      %v10383 = vadd.f32 0.0, %v10382
      %v10384 = vpop.f32.mrf.mxu0
      %v10385 = vadd.f32 0.0, %v10384
      %10386 = vdwg.mxu0
      %10387 = vmatpush.bf16.xpose.msra.mxu0 %v10187
      %10388 = vmatpush.bf16.xpose.msra.mxu0 %v10184
      %10389 = vmatpush.bf16.xpose.msra.mxu0 %v10181
      %10390 = vmatpush.bf16.xpose.msra.mxu0 %v10178
      %10391 = vmatpush.bf16.xpose.msra.mxu0 %v10175
      %10392 = vmatpush.bf16.xpose.msra.mxu0 %v10172
      %10393 = vmatpush.bf16.xpose.msra.mxu0 %v10169
      %10394 = vmatpush.bf16.xpose.msra.mxu0 %v10166
      %10395 = vmatmul.bf16.gmra.mxu0 %v10064
      %v10396 = vpop.f32.mrf.mxu0
      %v10397 = vadd.f32 0.0, %v10396
      %v10398 = vpop.f32.mrf.mxu0
      %v10399 = vadd.f32 0.0, %v10398
      %10400 = vmatmul.bf16.gmra.mxu0 %v10067
      %v10401 = vpop.f32.mrf.mxu0
      %v10402 = vadd.f32 0.0, %v10401
      %v10403 = vpop.f32.mrf.mxu0
      %v10404 = vadd.f32 0.0, %v10403
      %10405 = vmatmul.bf16.gmra.mxu0 %v10070
      %v10406 = vpop.f32.mrf.mxu0
      %v10407 = vadd.f32 0.0, %v10406
      %v10408 = vpop.f32.mrf.mxu0
      %v10409 = vadd.f32 0.0, %v10408
      %10410 = vmatmul.bf16.gmra.mxu0 %v10073
      %v10411 = vpop.f32.mrf.mxu0
      %v10412 = vadd.f32 0.0, %v10411
      %v10413 = vpop.f32.mrf.mxu0
      %v10414 = vadd.f32 0.0, %v10413
      %10415 = vmatmul.bf16.gmra.mxu0 %v10076
      %v10416 = vpop.f32.mrf.mxu0
      %v10417 = vadd.f32 0.0, %v10416
      %v10418 = vpop.f32.mrf.mxu0
      %v10419 = vadd.f32 0.0, %v10418
      %10420 = vmatmul.bf16.gmra.mxu0 %v10079
      %v10421 = vpop.f32.mrf.mxu0
      %v10422 = vadd.f32 0.0, %v10421
      %v10423 = vpop.f32.mrf.mxu0
      %v10424 = vadd.f32 0.0, %v10423
      %10425 = vmatmul.bf16.gmra.mxu0 %v10082
      %v10426 = vpop.f32.mrf.mxu0
      %v10427 = vadd.f32 0.0, %v10426
      %v10428 = vpop.f32.mrf.mxu0
      %v10429 = vadd.f32 0.0, %v10428
      %10430 = vmatmul.bf16.gmra.mxu0 %v10085
      %v10431 = vpop.f32.mrf.mxu0
      %v10432 = vadd.f32 0.0, %v10431
      %v10433 = vpop.f32.mrf.mxu0
      %v10434 = vadd.f32 0.0, %v10433
      %10435 = vmatmul.bf16.gmra.mxu0 %v10088
      %v10436 = vpop.f32.mrf.mxu0
      %v10437 = vadd.f32 0.0, %v10436
      %v10438 = vpop.f32.mrf.mxu0
      %v10439 = vadd.f32 0.0, %v10438
      %10440 = vmatmul.bf16.gmra.mxu0 %v10091
      %v10441 = vpop.f32.mrf.mxu0
      %v10442 = vadd.f32 0.0, %v10441
      %v10443 = vpop.f32.mrf.mxu0
      %v10444 = vadd.f32 0.0, %v10443
      %10445 = vmatmul.bf16.gmra.mxu0 %v10094
      %v10446 = vpop.f32.mrf.mxu0
      %v10447 = vadd.f32 0.0, %v10446
      %v10448 = vpop.f32.mrf.mxu0
      %v10449 = vadd.f32 0.0, %v10448
      %10450 = vmatmul.bf16.gmra.mxu0 %v10097
      %v10451 = vpop.f32.mrf.mxu0
      %v10452 = vadd.f32 0.0, %v10451
      %v10453 = vpop.f32.mrf.mxu0
      %v10454 = vadd.f32 0.0, %v10453
      %10455 = vmatmul.bf16.gmra.mxu0 %v10100
      %v10456 = vpop.f32.mrf.mxu0
      %v10457 = vadd.f32 0.0, %v10456
      %v10458 = vpop.f32.mrf.mxu0
      %v10459 = vadd.f32 0.0, %v10458
      %10460 = vmatmul.bf16.gmra.mxu0 %v10103
      %v10461 = vpop.f32.mrf.mxu0
      %v10462 = vadd.f32 0.0, %v10461
      %v10463 = vpop.f32.mrf.mxu0
      %v10464 = vadd.f32 0.0, %v10463
      %10465 = vmatmul.bf16.gmra.mxu0 %v10106
      %v10466 = vpop.f32.mrf.mxu0
      %v10467 = vadd.f32 0.0, %v10466
      %v10468 = vpop.f32.mrf.mxu0
      %v10469 = vadd.f32 0.0, %v10468
      %10470 = vmatmul.bf16.gmra.mxu0 %v10109
      %v10471 = vpop.f32.mrf.mxu0
      %v10472 = vadd.f32 0.0, %v10471
      %v10473 = vpop.f32.mrf.mxu0
      %v10474 = vadd.f32 0.0, %v10473
      %10475 = vmatmul.bf16.gmra.mxu0 %v10112
      %v10476 = vpop.f32.mrf.mxu0
      %v10477 = vadd.f32 0.0, %v10476
      %v10478 = vpop.f32.mrf.mxu0
      %v10479 = vadd.f32 0.0, %v10478
      %10480 = vmatmul.bf16.gmra.mxu0 %v10115
      %v10481 = vpop.f32.mrf.mxu0
      %v10482 = vadd.f32 0.0, %v10481
      %v10483 = vpop.f32.mrf.mxu0
      %v10484 = vadd.f32 0.0, %v10483
      %10485 = vdwg.mxu0
      %v10486 = vadd.f32 %v9755, %v10199
      %v10487 = vadd.f32 %v9756, %v10298
      %v10488 = vadd.f32 %v9757, %v10397
      %v10489 = vadd.f32 %v9758, %v10201
      %v10490 = vadd.f32 %v9759, %v10300
      %v10491 = vadd.f32 %v9760, %v10399
      %v10492 = vadd.f32 %v9761, %v10204
      %v10493 = vadd.f32 %v9762, %v10303
      %v10494 = vadd.f32 %v9763, %v10402
      %v10495 = vadd.f32 %v9764, %v10206
      %v10496 = vadd.f32 %v9765, %v10305
      %v10497 = vadd.f32 %v9766, %v10404
      %10510 = vrot.lane.b32.xlu0 %v10209, 127
      %v10511 = vpop.permute.xlu0 %10510
      %10512 = vrot.lane.b32.xlu0 %v10308, 127
      %v10513 = vpop.permute.xlu0 %10512
      %10514 = vrot.lane.b32.xlu0 %v10407, 127
      %v10515 = vpop.permute.xlu0 %10514
      %10516 = vrot.lane.b32.xlu0 %v10211, 127
      %v10517 = vpop.permute.xlu0 %10516
      %10518 = vrot.lane.b32.xlu0 %v10310, 127
      %v10519 = vpop.permute.xlu0 %10518
      %10520 = vrot.lane.b32.xlu0 %v10409, 127
      %v10521 = vpop.permute.xlu0 %10520
      %10522 = vrot.lane.b32.xlu0 %v10214, 127
      %v10523 = vpop.permute.xlu0 %10522
      %10524 = vrot.lane.b32.xlu0 %v10313, 127
      %v10525 = vpop.permute.xlu0 %10524
      %10526 = vrot.lane.b32.xlu0 %v10412, 127
      %v10527 = vpop.permute.xlu0 %10526
      %10528 = vrot.lane.b32.xlu0 %v10216, 127
      %v10529 = vpop.permute.xlu0 %10528
      %10530 = vrot.lane.b32.xlu0 %v10315, 127
      %v10531 = vpop.permute.xlu0 %10530
      %10532 = vrot.lane.b32.xlu0 %v10414, 127
      %v10533 = vpop.permute.xlu0 %10532
      %v10534 = vsel %vm1153, %v10511, %v10513
      %v10535 = vsel %vm1153, %v10513, %v10515
      %v10536 = vsel %vm1153, %v10517, %v10519
      %v10537 = vsel %vm1153, %v10519, %v10521
      %v10538 = vsel %vm1153, %v10523, %v10525
      %v10539 = vsel %vm1153, %v10525, %v10527
      %v10540 = vsel %vm1153, %v10529, %v10531
      %v10541 = vsel %vm1153, %v10531, %v10533
      %v10558 = vsel %vm1153, %v10515, %v10511
      %v10559 = vsel %vm1153, %v10521, %v10517
      %v10560 = vsel %vm1153, %v10527, %v10523
      %v10561 = vsel %vm1153, %v10533, %v10529
      %v10562 = vadd.f32 %v10486, %v10534
      %v10563 = vadd.f32 %v10487, %v10535
      %v10564 = vadd.f32 %v10488, %v10558
      %v10565 = vadd.f32 %v10489, %v10536
      %v10566 = vadd.f32 %v10490, %v10537
      %v10567 = vadd.f32 %v10491, %v10559
      %v10568 = vadd.f32 %v10492, %v10538
      %v10569 = vadd.f32 %v10493, %v10539
      %v10570 = vadd.f32 %v10494, %v10560
      %v10571 = vadd.f32 %v10495, %v10540
      %v10572 = vadd.f32 %v10496, %v10541
      %v10573 = vadd.f32 %v10497, %v10561
      %10586 = vrot.lane.b32.xlu0 %v10219, 126
      %v10587 = vpop.permute.xlu0 %10586
      %10588 = vrot.lane.b32.xlu0 %v10318, 126
      %v10589 = vpop.permute.xlu0 %10588
      %10590 = vrot.lane.b32.xlu0 %v10417, 126
      %v10591 = vpop.permute.xlu0 %10590
      %10592 = vrot.lane.b32.xlu0 %v10221, 126
      %v10593 = vpop.permute.xlu0 %10592
      %10594 = vrot.lane.b32.xlu0 %v10320, 126
      %v10595 = vpop.permute.xlu0 %10594
      %10596 = vrot.lane.b32.xlu0 %v10419, 126
      %v10597 = vpop.permute.xlu0 %10596
      %10598 = vrot.lane.b32.xlu0 %v10224, 126
      %v10599 = vpop.permute.xlu0 %10598
      %10600 = vrot.lane.b32.xlu0 %v10323, 126
      %v10601 = vpop.permute.xlu0 %10600
      %10602 = vrot.lane.b32.xlu0 %v10422, 126
      %v10603 = vpop.permute.xlu0 %10602
      %10604 = vrot.lane.b32.xlu0 %v10226, 126
      %v10605 = vpop.permute.xlu0 %10604
      %10606 = vrot.lane.b32.xlu0 %v10325, 126
      %v10607 = vpop.permute.xlu0 %10606
      %10608 = vrot.lane.b32.xlu0 %v10424, 126
      %v10609 = vpop.permute.xlu0 %10608
      %v10610 = vsel %vm1230, %v10587, %v10589
      %v10611 = vsel %vm1230, %v10589, %v10591
      %v10612 = vsel %vm1230, %v10593, %v10595
      %v10613 = vsel %vm1230, %v10595, %v10597
      %v10614 = vsel %vm1230, %v10599, %v10601
      %v10615 = vsel %vm1230, %v10601, %v10603
      %v10616 = vsel %vm1230, %v10605, %v10607
      %v10617 = vsel %vm1230, %v10607, %v10609
      %v10634 = vsel %vm1230, %v10591, %v10587
      %v10635 = vsel %vm1230, %v10597, %v10593
      %v10636 = vsel %vm1230, %v10603, %v10599
      %v10637 = vsel %vm1230, %v10609, %v10605
      %v10638 = vadd.f32 %v10562, %v10610
      %v10639 = vadd.f32 %v10563, %v10611
      %v10640 = vadd.f32 %v10564, %v10634
      %v10641 = vadd.f32 %v10565, %v10612
      %v10642 = vadd.f32 %v10566, %v10613
      %v10643 = vadd.f32 %v10567, %v10635
      %v10644 = vadd.f32 %v10568, %v10614
      %v10645 = vadd.f32 %v10569, %v10615
      %v10646 = vadd.f32 %v10570, %v10636
      %v10647 = vadd.f32 %v10571, %v10616
      %v10648 = vadd.f32 %v10572, %v10617
      %v10649 = vadd.f32 %v10573, %v10637
      %10662 = vrot.lane.b32.xlu0 %v10229, 125
      %v10663 = vpop.permute.xlu0 %10662
      %10664 = vrot.lane.b32.xlu0 %v10328, 125
      %v10665 = vpop.permute.xlu0 %10664
      %10666 = vrot.lane.b32.xlu0 %v10427, 125
      %v10667 = vpop.permute.xlu0 %10666
      %10668 = vrot.lane.b32.xlu0 %v10231, 125
      %v10669 = vpop.permute.xlu0 %10668
      %10670 = vrot.lane.b32.xlu0 %v10330, 125
      %v10671 = vpop.permute.xlu0 %10670
      %10672 = vrot.lane.b32.xlu0 %v10429, 125
      %v10673 = vpop.permute.xlu0 %10672
      %10674 = vrot.lane.b32.xlu0 %v10234, 125
      %v10675 = vpop.permute.xlu0 %10674
      %10676 = vrot.lane.b32.xlu0 %v10333, 125
      %v10677 = vpop.permute.xlu0 %10676
      %10678 = vrot.lane.b32.xlu0 %v10432, 125
      %v10679 = vpop.permute.xlu0 %10678
      %10680 = vrot.lane.b32.xlu0 %v10236, 125
      %v10681 = vpop.permute.xlu0 %10680
      %10682 = vrot.lane.b32.xlu0 %v10335, 125
      %v10683 = vpop.permute.xlu0 %10682
      %10684 = vrot.lane.b32.xlu0 %v10434, 125
      %v10685 = vpop.permute.xlu0 %10684
      %v10686 = vsel %vm1307, %v10663, %v10665
      %v10687 = vsel %vm1307, %v10665, %v10667
      %v10688 = vsel %vm1307, %v10669, %v10671
      %v10689 = vsel %vm1307, %v10671, %v10673
      %v10690 = vsel %vm1307, %v10675, %v10677
      %v10691 = vsel %vm1307, %v10677, %v10679
      %v10692 = vsel %vm1307, %v10681, %v10683
      %v10693 = vsel %vm1307, %v10683, %v10685
      %v10710 = vsel %vm1307, %v10667, %v10663
      %v10711 = vsel %vm1307, %v10673, %v10669
      %v10712 = vsel %vm1307, %v10679, %v10675
      %v10713 = vsel %vm1307, %v10685, %v10681
      %v10714 = vadd.f32 %v10638, %v10686
      %v10715 = vadd.f32 %v10639, %v10687
      %v10716 = vadd.f32 %v10640, %v10710
      %v10717 = vadd.f32 %v10641, %v10688
      %v10718 = vadd.f32 %v10642, %v10689
      %v10719 = vadd.f32 %v10643, %v10711
      %v10720 = vadd.f32 %v10644, %v10690
      %v10721 = vadd.f32 %v10645, %v10691
      %v10722 = vadd.f32 %v10646, %v10712
      %v10723 = vadd.f32 %v10647, %v10692
      %v10724 = vadd.f32 %v10648, %v10693
      %v10725 = vadd.f32 %v10649, %v10713
      %10738 = vrot.lane.b32.xlu0 %v10239, 124
      %v10739 = vpop.permute.xlu0 %10738
      %10740 = vrot.lane.b32.xlu0 %v10338, 124
      %v10741 = vpop.permute.xlu0 %10740
      %10742 = vrot.lane.b32.xlu0 %v10437, 124
      %v10743 = vpop.permute.xlu0 %10742
      %10744 = vrot.lane.b32.xlu0 %v10241, 124
      %v10745 = vpop.permute.xlu0 %10744
      %10746 = vrot.lane.b32.xlu0 %v10340, 124
      %v10747 = vpop.permute.xlu0 %10746
      %10748 = vrot.lane.b32.xlu0 %v10439, 124
      %v10749 = vpop.permute.xlu0 %10748
      %10750 = vrot.lane.b32.xlu0 %v10244, 124
      %v10751 = vpop.permute.xlu0 %10750
      %10752 = vrot.lane.b32.xlu0 %v10343, 124
      %v10753 = vpop.permute.xlu0 %10752
      %10754 = vrot.lane.b32.xlu0 %v10442, 124
      %v10755 = vpop.permute.xlu0 %10754
      %10756 = vrot.lane.b32.xlu0 %v10246, 124
      %v10757 = vpop.permute.xlu0 %10756
      %10758 = vrot.lane.b32.xlu0 %v10345, 124
      %v10759 = vpop.permute.xlu0 %10758
      %10760 = vrot.lane.b32.xlu0 %v10444, 124
      %v10761 = vpop.permute.xlu0 %10760
      %v10762 = vsel %vm1384, %v10739, %v10741
      %v10763 = vsel %vm1384, %v10741, %v10743
      %v10764 = vsel %vm1384, %v10745, %v10747
      %v10765 = vsel %vm1384, %v10747, %v10749
      %v10766 = vsel %vm1384, %v10751, %v10753
      %v10767 = vsel %vm1384, %v10753, %v10755
      %v10768 = vsel %vm1384, %v10757, %v10759
      %v10769 = vsel %vm1384, %v10759, %v10761
      %v10786 = vsel %vm1384, %v10743, %v10739
      %v10787 = vsel %vm1384, %v10749, %v10745
      %v10788 = vsel %vm1384, %v10755, %v10751
      %v10789 = vsel %vm1384, %v10761, %v10757
      %v10790 = vadd.f32 %v10714, %v10762
      %v10791 = vadd.f32 %v10715, %v10763
      %v10792 = vadd.f32 %v10716, %v10786
      %v10793 = vadd.f32 %v10717, %v10764
      %v10794 = vadd.f32 %v10718, %v10765
      %v10795 = vadd.f32 %v10719, %v10787
      %v10796 = vadd.f32 %v10720, %v10766
      %v10797 = vadd.f32 %v10721, %v10767
      %v10798 = vadd.f32 %v10722, %v10788
      %v10799 = vadd.f32 %v10723, %v10768
      %v10800 = vadd.f32 %v10724, %v10769
      %v10801 = vadd.f32 %v10725, %v10789
      %10814 = vrot.lane.b32.xlu0 %v10249, 123
      %v10815 = vpop.permute.xlu0 %10814
      %10816 = vrot.lane.b32.xlu0 %v10348, 123
      %v10817 = vpop.permute.xlu0 %10816
      %10818 = vrot.lane.b32.xlu0 %v10447, 123
      %v10819 = vpop.permute.xlu0 %10818
      %10820 = vrot.lane.b32.xlu0 %v10251, 123
      %v10821 = vpop.permute.xlu0 %10820
      %10822 = vrot.lane.b32.xlu0 %v10350, 123
      %v10823 = vpop.permute.xlu0 %10822
      %10824 = vrot.lane.b32.xlu0 %v10449, 123
      %v10825 = vpop.permute.xlu0 %10824
      %10826 = vrot.lane.b32.xlu0 %v10254, 123
      %v10827 = vpop.permute.xlu0 %10826
      %10828 = vrot.lane.b32.xlu0 %v10353, 123
      %v10829 = vpop.permute.xlu0 %10828
      %10830 = vrot.lane.b32.xlu0 %v10452, 123
      %v10831 = vpop.permute.xlu0 %10830
      %10832 = vrot.lane.b32.xlu0 %v10256, 123
      %v10833 = vpop.permute.xlu0 %10832
      %10834 = vrot.lane.b32.xlu0 %v10355, 123
      %v10835 = vpop.permute.xlu0 %10834
      %10836 = vrot.lane.b32.xlu0 %v10454, 123
      %v10837 = vpop.permute.xlu0 %10836
      %v10838 = vsel %vm1461, %v10815, %v10817
      %v10839 = vsel %vm1461, %v10817, %v10819
      %v10840 = vsel %vm1461, %v10821, %v10823
      %v10841 = vsel %vm1461, %v10823, %v10825
      %v10842 = vsel %vm1461, %v10827, %v10829
      %v10843 = vsel %vm1461, %v10829, %v10831
      %v10844 = vsel %vm1461, %v10833, %v10835
      %v10845 = vsel %vm1461, %v10835, %v10837
      %v10862 = vsel %vm1461, %v10819, %v10815
      %v10863 = vsel %vm1461, %v10825, %v10821
      %v10864 = vsel %vm1461, %v10831, %v10827
      %v10865 = vsel %vm1461, %v10837, %v10833
      %v10866 = vadd.f32 %v10790, %v10838
      %v10867 = vadd.f32 %v10791, %v10839
      %v10868 = vadd.f32 %v10792, %v10862
      %v10869 = vadd.f32 %v10793, %v10840
      %v10870 = vadd.f32 %v10794, %v10841
      %v10871 = vadd.f32 %v10795, %v10863
      %v10872 = vadd.f32 %v10796, %v10842
      %v10873 = vadd.f32 %v10797, %v10843
      %v10874 = vadd.f32 %v10798, %v10864
      %v10875 = vadd.f32 %v10799, %v10844
      %v10876 = vadd.f32 %v10800, %v10845
      %v10877 = vadd.f32 %v10801, %v10865
      %10890 = vrot.lane.b32.xlu0 %v10259, 122
      %v10891 = vpop.permute.xlu0 %10890
      %10892 = vrot.lane.b32.xlu0 %v10358, 122
      %v10893 = vpop.permute.xlu0 %10892
      %10894 = vrot.lane.b32.xlu0 %v10457, 122
      %v10895 = vpop.permute.xlu0 %10894
      %10896 = vrot.lane.b32.xlu0 %v10261, 122
      %v10897 = vpop.permute.xlu0 %10896
      %10898 = vrot.lane.b32.xlu0 %v10360, 122
      %v10899 = vpop.permute.xlu0 %10898
      %10900 = vrot.lane.b32.xlu0 %v10459, 122
      %v10901 = vpop.permute.xlu0 %10900
      %10902 = vrot.lane.b32.xlu0 %v10264, 122
      %v10903 = vpop.permute.xlu0 %10902
      %10904 = vrot.lane.b32.xlu0 %v10363, 122
      %v10905 = vpop.permute.xlu0 %10904
      %10906 = vrot.lane.b32.xlu0 %v10462, 122
      %v10907 = vpop.permute.xlu0 %10906
      %10908 = vrot.lane.b32.xlu0 %v10266, 122
      %v10909 = vpop.permute.xlu0 %10908
      %10910 = vrot.lane.b32.xlu0 %v10365, 122
      %v10911 = vpop.permute.xlu0 %10910
      %10912 = vrot.lane.b32.xlu0 %v10464, 122
      %v10913 = vpop.permute.xlu0 %10912
      %v10914 = vsel %vm1538, %v10891, %v10893
      %v10915 = vsel %vm1538, %v10893, %v10895
      %v10916 = vsel %vm1538, %v10897, %v10899
      %v10917 = vsel %vm1538, %v10899, %v10901
      %v10918 = vsel %vm1538, %v10903, %v10905
      %v10919 = vsel %vm1538, %v10905, %v10907
      %v10920 = vsel %vm1538, %v10909, %v10911
      %v10921 = vsel %vm1538, %v10911, %v10913
      %v10938 = vsel %vm1538, %v10895, %v10891
      %v10939 = vsel %vm1538, %v10901, %v10897
      %v10940 = vsel %vm1538, %v10907, %v10903
      %v10941 = vsel %vm1538, %v10913, %v10909
      %v10942 = vadd.f32 %v10866, %v10914
      %v10943 = vadd.f32 %v10867, %v10915
      %v10944 = vadd.f32 %v10868, %v10938
      %v10945 = vadd.f32 %v10869, %v10916
      %v10946 = vadd.f32 %v10870, %v10917
      %v10947 = vadd.f32 %v10871, %v10939
      %v10948 = vadd.f32 %v10872, %v10918
      %v10949 = vadd.f32 %v10873, %v10919
      %v10950 = vadd.f32 %v10874, %v10940
      %v10951 = vadd.f32 %v10875, %v10920
      %v10952 = vadd.f32 %v10876, %v10921
      %v10953 = vadd.f32 %v10877, %v10941
      %10966 = vrot.lane.b32.xlu0 %v10269, 121
      %v10967 = vpop.permute.xlu0 %10966
      %10968 = vrot.lane.b32.xlu0 %v10368, 121
      %v10969 = vpop.permute.xlu0 %10968
      %10970 = vrot.lane.b32.xlu0 %v10467, 121
      %v10971 = vpop.permute.xlu0 %10970
      %10972 = vrot.lane.b32.xlu0 %v10271, 121
      %v10973 = vpop.permute.xlu0 %10972
      %10974 = vrot.lane.b32.xlu0 %v10370, 121
      %v10975 = vpop.permute.xlu0 %10974
      %10976 = vrot.lane.b32.xlu0 %v10469, 121
      %v10977 = vpop.permute.xlu0 %10976
      %10978 = vrot.lane.b32.xlu0 %v10274, 121
      %v10979 = vpop.permute.xlu0 %10978
      %10980 = vrot.lane.b32.xlu0 %v10373, 121
      %v10981 = vpop.permute.xlu0 %10980
      %10982 = vrot.lane.b32.xlu0 %v10472, 121
      %v10983 = vpop.permute.xlu0 %10982
      %10984 = vrot.lane.b32.xlu0 %v10276, 121
      %v10985 = vpop.permute.xlu0 %10984
      %10986 = vrot.lane.b32.xlu0 %v10375, 121
      %v10987 = vpop.permute.xlu0 %10986
      %10988 = vrot.lane.b32.xlu0 %v10474, 121
      %v10989 = vpop.permute.xlu0 %10988
      %v10990 = vsel %vm1615, %v10967, %v10969
      %v10991 = vsel %vm1615, %v10969, %v10971
      %v10992 = vsel %vm1615, %v10973, %v10975
      %v10993 = vsel %vm1615, %v10975, %v10977
      %v10994 = vsel %vm1615, %v10979, %v10981
      %v10995 = vsel %vm1615, %v10981, %v10983
      %v10996 = vsel %vm1615, %v10985, %v10987
      %v10997 = vsel %vm1615, %v10987, %v10989
      %v11014 = vsel %vm1615, %v10971, %v10967
      %v11015 = vsel %vm1615, %v10977, %v10973
      %v11016 = vsel %vm1615, %v10983, %v10979
      %v11017 = vsel %vm1615, %v10989, %v10985
      %v11018 = vadd.f32 %v10942, %v10990
      %v11019 = vadd.f32 %v10943, %v10991
      %v11020 = vadd.f32 %v10944, %v11014
      %v11021 = vadd.f32 %v10945, %v10992
      %v11022 = vadd.f32 %v10946, %v10993
      %v11023 = vadd.f32 %v10947, %v11015
      %v11024 = vadd.f32 %v10948, %v10994
      %v11025 = vadd.f32 %v10949, %v10995
      %v11026 = vadd.f32 %v10950, %v11016
      %v11027 = vadd.f32 %v10951, %v10996
      %v11028 = vadd.f32 %v10952, %v10997
      %v11029 = vadd.f32 %v10953, %v11017
      %11042 = vrot.lane.b32.xlu0 %v10279, 120
      %v11043 = vpop.permute.xlu0 %11042
      %11044 = vrot.lane.b32.xlu0 %v10378, 120
      %v11045 = vpop.permute.xlu0 %11044
      %11046 = vrot.lane.b32.xlu0 %v10477, 120
      %v11047 = vpop.permute.xlu0 %11046
      %11048 = vrot.lane.b32.xlu0 %v10281, 120
      %v11049 = vpop.permute.xlu0 %11048
      %11050 = vrot.lane.b32.xlu0 %v10380, 120
      %v11051 = vpop.permute.xlu0 %11050
      %11052 = vrot.lane.b32.xlu0 %v10479, 120
      %v11053 = vpop.permute.xlu0 %11052
      %11054 = vrot.lane.b32.xlu0 %v10284, 120
      %v11055 = vpop.permute.xlu0 %11054
      %11056 = vrot.lane.b32.xlu0 %v10383, 120
      %v11057 = vpop.permute.xlu0 %11056
      %11058 = vrot.lane.b32.xlu0 %v10482, 120
      %v11059 = vpop.permute.xlu0 %11058
      %11060 = vrot.lane.b32.xlu0 %v10286, 120
      %v11061 = vpop.permute.xlu0 %11060
      %11062 = vrot.lane.b32.xlu0 %v10385, 120
      %v11063 = vpop.permute.xlu0 %11062
      %11064 = vrot.lane.b32.xlu0 %v10484, 120
      %v11065 = vpop.permute.xlu0 %11064
      %v11066 = vsel %vm1692, %v11043, %v11045
      %v11067 = vsel %vm1692, %v11045, %v11047
      %v11068 = vsel %vm1692, %v11049, %v11051
      %v11069 = vsel %vm1692, %v11051, %v11053
      %v11070 = vsel %vm1692, %v11055, %v11057
      %v11071 = vsel %vm1692, %v11057, %v11059
      %v11072 = vsel %vm1692, %v11061, %v11063
      %v11073 = vsel %vm1692, %v11063, %v11065
      %v11090 = vsel %vm1692, %v11047, %v11043
      %v11091 = vsel %vm1692, %v11053, %v11049
      %v11092 = vsel %vm1692, %v11059, %v11055
      %v11093 = vsel %vm1692, %v11065, %v11061
      %v11094 = vadd.f32 %v11018, %v11066
      %v11095 = vadd.f32 %v11019, %v11067
      %v11096 = vadd.f32 %v11020, %v11090
      %v11097 = vadd.f32 %v11021, %v11068
      %v11098 = vadd.f32 %v11022, %v11069
      %v11099 = vadd.f32 %v11023, %v11091
      %v11100 = vadd.f32 %v11024, %v11070
      %v11101 = vadd.f32 %v11025, %v11071
      %v11102 = vadd.f32 %v11026, %v11092
      %v11103 = vadd.f32 %v11027, %v11072
      %v11104 = vadd.f32 %v11028, %v11073
      %v11105 = vadd.f32 %v11029, %v11093
      %s11106 = scalar_lea.vmem %s345, 96
      %v11107 = vld [vmem:[%s11106] sm:$0xf]
      %v11108 = vld [vmem:[%s11106 + $0x4] sm:$0xf]
      %v11109 = vld [vmem:[%s11106 + $0x8] sm:$0xf]
      %v11110 = vld [vmem:[%s11106 + $0xc] sm:$0xf]
      %v11111 = vld [vmem:[%s11106 + $0x10] sm:$0xf]
      %v11112 = vld [vmem:[%s11106 + $0x14] sm:$0xf]
      %v11113 = vld [vmem:[%s11106 + $0x18] sm:$0xf]
      %v11114 = vld [vmem:[%s11106 + $0x1c] sm:$0xf]
      %v11115 = vld [vmem:[%s11106 + $0x20] sm:$0xf]
      %v11116 = vld [vmem:[%s11106 + $0x24] sm:$0xf]
      %v11117 = vld [vmem:[%s11106 + $0x28] sm:$0xf]
      %v11118 = vld [vmem:[%s11106 + $0x2c] sm:$0xf]
      %v11119 = vld [vmem:[%s11106 + $0x30] sm:$0xf]
      %v11120 = vld [vmem:[%s11106 + $0x34] sm:$0xf]
      %v11121 = vld [vmem:[%s11106 + $0x38] sm:$0xf]
      %v11122 = vld [vmem:[%s11106 + $0x3c] sm:$0xf]
      %v11123 = vld [vmem:[%s11106 + $0x40] sm:$0xf]
      %v11124 = vld [vmem:[%s11106 + $0x44] sm:$0xf]
      %v11125 = vld [vmem:[%s11106 + $0x48] sm:$0xf]
      %v11126 = vld [vmem:[%s11106 + $0x4c] sm:$0xf]
      %v11127 = vld [vmem:[%s11106 + $0x50] sm:$0xf]
      %v11128 = vld [vmem:[%s11106 + $0x54] sm:$0xf]
      %v11129 = vld [vmem:[%s11106 + $0x58] sm:$0xf]
      %v11130 = vld [vmem:[%s11106 + $0x5c] sm:$0xf]
      %v11131 = vld [vmem:[%s11106 + $0x60] sm:$0xf]
      %v11132 = vld [vmem:[%s11106 + $0x64] sm:$0xf]
      %v11133 = vld [vmem:[%s11106 + $0x68] sm:$0xf]
      %v11134 = vld [vmem:[%s11106 + $0x6c] sm:$0xf]
      %v11135 = vld [vmem:[%s11106 + $0x70] sm:$0xf]
      %v11136 = vld [vmem:[%s11106 + $0x74] sm:$0xf]
      %v11137 = vld [vmem:[%s11106 + $0x78] sm:$0xf]
      %v11138 = vld [vmem:[%s11106 + $0x7c] sm:$0xf]
      %v11139 = vld [vmem:[%s11106 + $0x80] sm:$0xf]
      %v11140 = vld [vmem:[%s11106 + $0x84] sm:$0xf]
      %v11141 = vld [vmem:[%s11106 + $0x88] sm:$0xf]
      %v11142 = vld [vmem:[%s11106 + $0x8c] sm:$0xf]
      %v11143 = vld [vmem:[%s11106 + $0x90] sm:$0xf]
      %v11144 = vld [vmem:[%s11106 + $0x94] sm:$0xf]
      %v11145 = vld [vmem:[%s11106 + $0x98] sm:$0xf]
      %v11146 = vld [vmem:[%s11106 + $0x9c] sm:$0xf]
      %v11147 = vld [vmem:[%s11106 + $0xa0] sm:$0xf]
      %v11148 = vld [vmem:[%s11106 + $0xa4] sm:$0xf]
      %v11149 = vld [vmem:[%s11106 + $0xa8] sm:$0xf]
      %v11150 = vld [vmem:[%s11106 + $0xac] sm:$0xf]
      %v11151 = vld [vmem:[%s11106 + $0xb0] sm:$0xf]
      %v11152 = vld [vmem:[%s11106 + $0xb4] sm:$0xf]
      %v11153 = vld [vmem:[%s11106 + $0xb8] sm:$0xf]
      %v11154 = vld [vmem:[%s11106 + $0xbc] sm:$0xf]
      %s11155 = scalar_lea.vmem %s350, 1152
      %v11156 = vld [vmem:[%s11155] sm:$0xf]
      %v11157 = vld [vmem:[%s11155 + $0x4] sm:$0xf]
      %v11158 = vld [vmem:[%s11155 + $0x8] sm:$0xf]
      %v11159 = vld [vmem:[%s11155 + $0xc] sm:$0xf]
      %v11160 = vld [vmem:[%s11155 + $0x10] sm:$0xf]
      %v11161 = vld [vmem:[%s11155 + $0x14] sm:$0xf]
      %v11162 = vld [vmem:[%s11155 + $0x18] sm:$0xf]
      %v11163 = vld [vmem:[%s11155 + $0x1c] sm:$0xf]
      %v11164 = vld [vmem:[%s11155 + $0x20] sm:$0xf]
      %v11165 = vld [vmem:[%s11155 + $0x24] sm:$0xf]
      %v11166 = vld [vmem:[%s11155 + $0x28] sm:$0xf]
      %v11167 = vld [vmem:[%s11155 + $0x2c] sm:$0xf]
      %v11168 = vld [vmem:[%s11155 + $0x30] sm:$0xf]
      %v11169 = vld [vmem:[%s11155 + $0x34] sm:$0xf]
      %v11170 = vld [vmem:[%s11155 + $0x38] sm:$0xf]
      %v11171 = vld [vmem:[%s11155 + $0x3c] sm:$0xf]
      %v11172 = vld [vmem:[%s11155 + $0x40] sm:$0xf]
      %v11173 = vld [vmem:[%s11155 + $0x44] sm:$0xf]
      %v11174 = vld [vmem:[%s11155 + $0x48] sm:$0xf]
      %v11175 = vld [vmem:[%s11155 + $0x4c] sm:$0xf]
      %v11176 = vld [vmem:[%s11155 + $0x50] sm:$0xf]
      %v11177 = vld [vmem:[%s11155 + $0x54] sm:$0xf]
      %v11178 = vld [vmem:[%s11155 + $0x58] sm:$0xf]
      %v11179 = vld [vmem:[%s11155 + $0x5c] sm:$0xf]
      %v11180 = vld [vmem:[%s11155 + $0x60] sm:$0xf]
      %v11181 = vld [vmem:[%s11155 + $0x64] sm:$0xf]
      %v11182 = vld [vmem:[%s11155 + $0x68] sm:$0xf]
      %v11183 = vld [vmem:[%s11155 + $0x6c] sm:$0xf]
      %v11184 = vld [vmem:[%s11155 + $0x70] sm:$0xf]
      %v11185 = vld [vmem:[%s11155 + $0x74] sm:$0xf]
      %v11186 = vld [vmem:[%s11155 + $0x78] sm:$0xf]
      %v11187 = vld [vmem:[%s11155 + $0x7c] sm:$0xf]
      %v11188 = vld [vmem:[%s11155 + $0x80] sm:$0xf]
      %v11189 = vld [vmem:[%s11155 + $0x84] sm:$0xf]
      %v11190 = vld [vmem:[%s11155 + $0x88] sm:$0xf]
      %v11191 = vld [vmem:[%s11155 + $0x8c] sm:$0xf]
      %v11228 = vunpack.c.l.b16 %v11156
      %v11229 = vunpack.c.l.b16 %v11157
      %v11230 = vunpack.c.l.b16 %v11158
      %v11231 = vunpack.c.l.b16 %v11159
      %v11232 = vunpack.c.l.b16 %v11160
      %v11233 = vunpack.c.l.b16 %v11161
      %v11234 = vunpack.c.l.b16 %v11162
      %v11235 = vunpack.c.l.b16 %v11163
      %v11236 = vunpack.c.l.b16 %v11164
      %v11237 = vunpack.c.l.b16 %v11165
      %v11238 = vunpack.c.l.b16 %v11166
      %v11239 = vunpack.c.l.b16 %v11167
      %v11240 = vunpack.c.l.b16 %v11168
      %v11241 = vunpack.c.l.b16 %v11169
      %v11242 = vunpack.c.l.b16 %v11170
      %v11243 = vunpack.c.l.b16 %v11171
      %v11244 = vunpack.c.l.b16 %v11172
      %v11245 = vunpack.c.l.b16 %v11173
      %v11246 = vunpack.c.l.b16 %v11174
      %v11247 = vunpack.c.l.b16 %v11175
      %v11248 = vunpack.c.l.b16 %v11176
      %v11249 = vunpack.c.l.b16 %v11177
      %v11250 = vunpack.c.l.b16 %v11178
      %v11251 = vunpack.c.l.b16 %v11179
      %v11252 = vunpack.c.l.b16 %v11180
      %v11253 = vunpack.c.l.b16 %v11181
      %v11254 = vunpack.c.l.b16 %v11182
      %v11255 = vunpack.c.l.b16 %v11183
      %v11256 = vunpack.c.l.b16 %v11184
      %v11257 = vunpack.c.l.b16 %v11185
      %v11258 = vunpack.c.l.b16 %v11186
      %v11259 = vunpack.c.l.b16 %v11187
      %v11260 = vunpack.c.l.b16 %v11188
      %v11261 = vunpack.c.l.b16 %v11189
      %v11262 = vunpack.c.l.b16 %v11190
      %v11263 = vunpack.c.l.b16 %v11191
      %v11264 = vpack.c.b16 %v11229, %v11228
      %v11265 = vpack.c.b16 %v11231, %v11230
      %v11266 = vpack.c.b16 %v11233, %v11232
      %v11267 = vpack.c.b16 %v11235, %v11234
      %v11268 = vpack.c.b16 %v11237, %v11236
      %v11269 = vpack.c.b16 %v11239, %v11238
      %v11270 = vpack.c.b16 %v11241, %v11240
      %v11271 = vpack.c.b16 %v11243, %v11242
      %v11272 = vpack.c.b16 %v11245, %v11244
      %v11273 = vpack.c.b16 %v11247, %v11246
      %v11274 = vpack.c.b16 %v11249, %v11248
      %v11275 = vpack.c.b16 %v11251, %v11250
      %v11276 = vpack.c.b16 %v11253, %v11252
      %v11277 = vpack.c.b16 %v11255, %v11254
      %v11278 = vpack.c.b16 %v11257, %v11256
      %v11279 = vpack.c.b16 %v11259, %v11258
      %v11280 = vpack.c.b16 %v11261, %v11260
      %v11281 = vpack.c.b16 %v11263, %v11262
      %v11330 = vunpack.c.l.b16 %v11107
      %v11331 = vunpack.c.l.b16 %v11108
      %v11332 = vunpack.c.l.b16 %v11109
      %v11333 = vunpack.c.l.b16 %v11110
      %v11334 = vunpack.c.l.b16 %v11111
      %v11335 = vunpack.c.l.b16 %v11112
      %v11336 = vunpack.c.l.b16 %v11113
      %v11337 = vunpack.c.l.b16 %v11114
      %v11338 = vunpack.c.l.b16 %v11115
      %v11339 = vunpack.c.l.b16 %v11116
      %v11340 = vunpack.c.l.b16 %v11117
      %v11341 = vunpack.c.l.b16 %v11118
      %v11342 = vunpack.c.l.b16 %v11119
      %v11343 = vunpack.c.l.b16 %v11120
      %v11344 = vunpack.c.l.b16 %v11121
      %v11345 = vunpack.c.l.b16 %v11122
      %v11346 = vunpack.c.l.b16 %v11123
      %v11347 = vunpack.c.l.b16 %v11124
      %v11348 = vunpack.c.l.b16 %v11125
      %v11349 = vunpack.c.l.b16 %v11126
      %v11350 = vunpack.c.l.b16 %v11127
      %v11351 = vunpack.c.l.b16 %v11128
      %v11352 = vunpack.c.l.b16 %v11129
      %v11353 = vunpack.c.l.b16 %v11130
      %v11354 = vunpack.c.l.b16 %v11131
      %v11355 = vunpack.c.l.b16 %v11132
      %v11356 = vunpack.c.l.b16 %v11133
      %v11357 = vunpack.c.l.b16 %v11134
      %v11358 = vunpack.c.l.b16 %v11135
      %v11359 = vunpack.c.l.b16 %v11136
      %v11360 = vunpack.c.l.b16 %v11137
      %v11361 = vunpack.c.l.b16 %v11138
      %v11362 = vunpack.c.l.b16 %v11139
      %v11363 = vunpack.c.l.b16 %v11140
      %v11364 = vunpack.c.l.b16 %v11141
      %v11365 = vunpack.c.l.b16 %v11142
      %v11366 = vunpack.c.l.b16 %v11143
      %v11367 = vunpack.c.l.b16 %v11144
      %v11368 = vunpack.c.l.b16 %v11145
      %v11369 = vunpack.c.l.b16 %v11146
      %v11370 = vunpack.c.l.b16 %v11147
      %v11371 = vunpack.c.l.b16 %v11148
      %v11372 = vunpack.c.l.b16 %v11149
      %v11373 = vunpack.c.l.b16 %v11150
      %v11374 = vunpack.c.l.b16 %v11151
      %v11375 = vunpack.c.l.b16 %v11152
      %v11376 = vunpack.c.l.b16 %v11153
      %v11377 = vunpack.c.l.b16 %v11154
      %v11378 = vpack.c.b16 %v11331, %v11330
      %v11379 = vpack.c.b16 %v11333, %v11332
      %v11380 = vpack.c.b16 %v11335, %v11334
      %v11381 = vpack.c.b16 %v11337, %v11336
      %v11382 = vpack.c.b16 %v11339, %v11338
      %v11383 = vpack.c.b16 %v11341, %v11340
      %v11384 = vpack.c.b16 %v11343, %v11342
      %v11385 = vpack.c.b16 %v11345, %v11344
      %v11386 = vpack.c.b16 %v11347, %v11346
      %v11387 = vpack.c.b16 %v11349, %v11348
      %v11388 = vpack.c.b16 %v11351, %v11350
      %v11389 = vpack.c.b16 %v11353, %v11352
      %v11390 = vpack.c.b16 %v11355, %v11354
      %v11391 = vpack.c.b16 %v11357, %v11356
      %v11392 = vpack.c.b16 %v11359, %v11358
      %v11393 = vpack.c.b16 %v11361, %v11360
      %v11394 = vpack.c.b16 %v11363, %v11362
      %v11395 = vpack.c.b16 %v11365, %v11364
      %v11396 = vpack.c.b16 %v11367, %v11366
      %v11397 = vpack.c.b16 %v11369, %v11368
      %v11398 = vpack.c.b16 %v11371, %v11370
      %v11399 = vpack.c.b16 %v11373, %v11372
      %v11400 = vpack.c.b16 %v11375, %v11374
      %v11401 = vpack.c.b16 %v11377, %v11376
      %v11403 = vsel %vm681, %v11264, 0
      %v11406 = vsel %vm681, %v11265, 0
      %v11409 = vsel %vm681, %v11266, 0
      %v11412 = vsel %vm681, %v11267, 0
      %v11415 = vsel %vm681, %v11268, 0
      %v11418 = vsel %vm681, %v11269, 0
      %v11421 = vsel %vm681, %v11270, 0
      %v11424 = vsel %vm681, %v11271, 0
      %v11427 = vsel %vm681, %v11272, 0
      %v11430 = vsel %vm681, %v11273, 0
      %v11433 = vsel %vm681, %v11274, 0
      %v11436 = vsel %vm681, %v11275, 0
      %v11439 = vsel %vm681, %v11276, 0
      %v11442 = vsel %vm681, %v11277, 0
      %v11445 = vsel %vm681, %v11278, 0
      %v11448 = vsel %vm681, %v11279, 0
      %v11451 = vsel %vm681, %v11280, 0
      %v11454 = vsel %vm681, %v11281, 0
      %v11457 = vsel %vm681, %v11378, 0
      %v11460 = vsel %vm681, %v11379, 0
      %v11463 = vsel %vm681, %v11380, 0
      %v11466 = vsel %vm681, %v11381, 0
      %v11469 = vsel %vm681, %v11382, 0
      %v11472 = vsel %vm681, %v11383, 0
      %v11475 = vsel %vm681, %v11384, 0
      %v11478 = vsel %vm681, %v11385, 0
      %v11481 = vsel %vm681, %v11386, 0
      %v11484 = vsel %vm681, %v11387, 0
      %v11487 = vsel %vm681, %v11388, 0
      %v11490 = vsel %vm681, %v11389, 0
      %v11493 = vsel %vm681, %v11390, 0
      %v11496 = vsel %vm681, %v11391, 0
      %v11499 = vsel %vm681, %v11392, 0
      %v11502 = vsel %vm681, %v11393, 0
      %v11505 = vsel %vm681, %v11394, 0
      %v11508 = vsel %vm681, %v11395, 0
      %v11511 = vsel %vm681, %v11396, 0
      %v11514 = vsel %vm681, %v11397, 0
      %v11517 = vsel %vm681, %v11398, 0
      %v11520 = vsel %vm681, %v11399, 0
      %v11523 = vsel %vm681, %v11400, 0
      %v11526 = vsel %vm681, %v11401, 0
      %11528 = vmatpush.bf16.xpose.msra.mxu0 %v11478
      %11529 = vmatpush.bf16.xpose.msra.mxu0 %v11475
      %11530 = vmatpush.bf16.xpose.msra.mxu0 %v11472
      %11531 = vmatpush.bf16.xpose.msra.mxu0 %v11469
      %11532 = vmatpush.bf16.xpose.msra.mxu0 %v11466
      %11533 = vmatpush.bf16.xpose.msra.mxu0 %v11463
      %11534 = vmatpush.bf16.xpose.msra.mxu0 %v11460
      %11535 = vmatpush.bf16.xpose.msra.mxu0 %v11457
      %11536 = vmatmul.bf16.gmra.mxu0 %v11403
      %v11537 = vpop.f32.mrf.mxu0
      %v11538 = vadd.f32 0.0, %v11537
      %v11539 = vpop.f32.mrf.mxu0
      %v11540 = vadd.f32 0.0, %v11539
      %11541 = vmatmul.bf16.gmra.mxu0 %v11406
      %v11542 = vpop.f32.mrf.mxu0
      %v11543 = vadd.f32 0.0, %v11542
      %v11544 = vpop.f32.mrf.mxu0
      %v11545 = vadd.f32 0.0, %v11544
      %11546 = vmatmul.bf16.gmra.mxu0 %v11409
      %v11547 = vpop.f32.mrf.mxu0
      %v11548 = vadd.f32 0.0, %v11547
      %v11549 = vpop.f32.mrf.mxu0
      %v11550 = vadd.f32 0.0, %v11549
      %11551 = vmatmul.bf16.gmra.mxu0 %v11412
      %v11552 = vpop.f32.mrf.mxu0
      %v11553 = vadd.f32 0.0, %v11552
      %v11554 = vpop.f32.mrf.mxu0
      %v11555 = vadd.f32 0.0, %v11554
      %11556 = vmatmul.bf16.gmra.mxu0 %v11415
      %v11557 = vpop.f32.mrf.mxu0
      %v11558 = vadd.f32 0.0, %v11557
      %v11559 = vpop.f32.mrf.mxu0
      %v11560 = vadd.f32 0.0, %v11559
      %11561 = vmatmul.bf16.gmra.mxu0 %v11418
      %v11562 = vpop.f32.mrf.mxu0
      %v11563 = vadd.f32 0.0, %v11562
      %v11564 = vpop.f32.mrf.mxu0
      %v11565 = vadd.f32 0.0, %v11564
      %11566 = vmatmul.bf16.gmra.mxu0 %v11421
      %v11567 = vpop.f32.mrf.mxu0
      %v11568 = vadd.f32 0.0, %v11567
      %v11569 = vpop.f32.mrf.mxu0
      %v11570 = vadd.f32 0.0, %v11569
      %11571 = vmatmul.bf16.gmra.mxu0 %v11424
      %v11572 = vpop.f32.mrf.mxu0
      %v11573 = vadd.f32 0.0, %v11572
      %v11574 = vpop.f32.mrf.mxu0
      %v11575 = vadd.f32 0.0, %v11574
      %11576 = vmatmul.bf16.gmra.mxu0 %v11427
      %v11577 = vpop.f32.mrf.mxu0
      %v11578 = vadd.f32 0.0, %v11577
      %v11579 = vpop.f32.mrf.mxu0
      %v11580 = vadd.f32 0.0, %v11579
      %11581 = vmatmul.bf16.gmra.mxu0 %v11430
      %v11582 = vpop.f32.mrf.mxu0
      %v11583 = vadd.f32 0.0, %v11582
      %v11584 = vpop.f32.mrf.mxu0
      %v11585 = vadd.f32 0.0, %v11584
      %11586 = vmatmul.bf16.gmra.mxu0 %v11433
      %v11587 = vpop.f32.mrf.mxu0
      %v11588 = vadd.f32 0.0, %v11587
      %v11589 = vpop.f32.mrf.mxu0
      %v11590 = vadd.f32 0.0, %v11589
      %11591 = vmatmul.bf16.gmra.mxu0 %v11436
      %v11592 = vpop.f32.mrf.mxu0
      %v11593 = vadd.f32 0.0, %v11592
      %v11594 = vpop.f32.mrf.mxu0
      %v11595 = vadd.f32 0.0, %v11594
      %11596 = vmatmul.bf16.gmra.mxu0 %v11439
      %v11597 = vpop.f32.mrf.mxu0
      %v11598 = vadd.f32 0.0, %v11597
      %v11599 = vpop.f32.mrf.mxu0
      %v11600 = vadd.f32 0.0, %v11599
      %11601 = vmatmul.bf16.gmra.mxu0 %v11442
      %v11602 = vpop.f32.mrf.mxu0
      %v11603 = vadd.f32 0.0, %v11602
      %v11604 = vpop.f32.mrf.mxu0
      %v11605 = vadd.f32 0.0, %v11604
      %11606 = vmatmul.bf16.gmra.mxu0 %v11445
      %v11607 = vpop.f32.mrf.mxu0
      %v11608 = vadd.f32 0.0, %v11607
      %v11609 = vpop.f32.mrf.mxu0
      %v11610 = vadd.f32 0.0, %v11609
      %11611 = vmatmul.bf16.gmra.mxu0 %v11448
      %v11612 = vpop.f32.mrf.mxu0
      %v11613 = vadd.f32 0.0, %v11612
      %v11614 = vpop.f32.mrf.mxu0
      %v11615 = vadd.f32 0.0, %v11614
      %11616 = vmatmul.bf16.gmra.mxu0 %v11451
      %v11617 = vpop.f32.mrf.mxu0
      %v11618 = vadd.f32 0.0, %v11617
      %v11619 = vpop.f32.mrf.mxu0
      %v11620 = vadd.f32 0.0, %v11619
      %11621 = vmatmul.bf16.gmra.mxu0 %v11454
      %v11622 = vpop.f32.mrf.mxu0
      %v11623 = vadd.f32 0.0, %v11622
      %v11624 = vpop.f32.mrf.mxu0
      %v11625 = vadd.f32 0.0, %v11624
      %11626 = vdwg.mxu0
      %11627 = vmatpush.bf16.xpose.msra.mxu0 %v11502
      %11628 = vmatpush.bf16.xpose.msra.mxu0 %v11499
      %11629 = vmatpush.bf16.xpose.msra.mxu0 %v11496
      %11630 = vmatpush.bf16.xpose.msra.mxu0 %v11493
      %11631 = vmatpush.bf16.xpose.msra.mxu0 %v11490
      %11632 = vmatpush.bf16.xpose.msra.mxu0 %v11487
      %11633 = vmatpush.bf16.xpose.msra.mxu0 %v11484
      %11634 = vmatpush.bf16.xpose.msra.mxu0 %v11481
      %11635 = vmatmul.bf16.gmra.mxu0 %v11403
      %v11636 = vpop.f32.mrf.mxu0
      %v11637 = vadd.f32 0.0, %v11636
      %v11638 = vpop.f32.mrf.mxu0
      %v11639 = vadd.f32 0.0, %v11638
      %11640 = vmatmul.bf16.gmra.mxu0 %v11406
      %v11641 = vpop.f32.mrf.mxu0
      %v11642 = vadd.f32 0.0, %v11641
      %v11643 = vpop.f32.mrf.mxu0
      %v11644 = vadd.f32 0.0, %v11643
      %11645 = vmatmul.bf16.gmra.mxu0 %v11409
      %v11646 = vpop.f32.mrf.mxu0
      %v11647 = vadd.f32 0.0, %v11646
      %v11648 = vpop.f32.mrf.mxu0
      %v11649 = vadd.f32 0.0, %v11648
      %11650 = vmatmul.bf16.gmra.mxu0 %v11412
      %v11651 = vpop.f32.mrf.mxu0
      %v11652 = vadd.f32 0.0, %v11651
      %v11653 = vpop.f32.mrf.mxu0
      %v11654 = vadd.f32 0.0, %v11653
      %11655 = vmatmul.bf16.gmra.mxu0 %v11415
      %v11656 = vpop.f32.mrf.mxu0
      %v11657 = vadd.f32 0.0, %v11656
      %v11658 = vpop.f32.mrf.mxu0
      %v11659 = vadd.f32 0.0, %v11658
      %11660 = vmatmul.bf16.gmra.mxu0 %v11418
      %v11661 = vpop.f32.mrf.mxu0
      %v11662 = vadd.f32 0.0, %v11661
      %v11663 = vpop.f32.mrf.mxu0
      %v11664 = vadd.f32 0.0, %v11663
      %11665 = vmatmul.bf16.gmra.mxu0 %v11421
      %v11666 = vpop.f32.mrf.mxu0
      %v11667 = vadd.f32 0.0, %v11666
      %v11668 = vpop.f32.mrf.mxu0
      %v11669 = vadd.f32 0.0, %v11668
      %11670 = vmatmul.bf16.gmra.mxu0 %v11424
      %v11671 = vpop.f32.mrf.mxu0
      %v11672 = vadd.f32 0.0, %v11671
      %v11673 = vpop.f32.mrf.mxu0
      %v11674 = vadd.f32 0.0, %v11673
      %11675 = vmatmul.bf16.gmra.mxu0 %v11427
      %v11676 = vpop.f32.mrf.mxu0
      %v11677 = vadd.f32 0.0, %v11676
      %v11678 = vpop.f32.mrf.mxu0
      %v11679 = vadd.f32 0.0, %v11678
      %11680 = vmatmul.bf16.gmra.mxu0 %v11430
      %v11681 = vpop.f32.mrf.mxu0
      %v11682 = vadd.f32 0.0, %v11681
      %v11683 = vpop.f32.mrf.mxu0
      %v11684 = vadd.f32 0.0, %v11683
      %11685 = vmatmul.bf16.gmra.mxu0 %v11433
      %v11686 = vpop.f32.mrf.mxu0
      %v11687 = vadd.f32 0.0, %v11686
      %v11688 = vpop.f32.mrf.mxu0
      %v11689 = vadd.f32 0.0, %v11688
      %11690 = vmatmul.bf16.gmra.mxu0 %v11436
      %v11691 = vpop.f32.mrf.mxu0
      %v11692 = vadd.f32 0.0, %v11691
      %v11693 = vpop.f32.mrf.mxu0
      %v11694 = vadd.f32 0.0, %v11693
      %11695 = vmatmul.bf16.gmra.mxu0 %v11439
      %v11696 = vpop.f32.mrf.mxu0
      %v11697 = vadd.f32 0.0, %v11696
      %v11698 = vpop.f32.mrf.mxu0
      %v11699 = vadd.f32 0.0, %v11698
      %11700 = vmatmul.bf16.gmra.mxu0 %v11442
      %v11701 = vpop.f32.mrf.mxu0
      %v11702 = vadd.f32 0.0, %v11701
      %v11703 = vpop.f32.mrf.mxu0
      %v11704 = vadd.f32 0.0, %v11703
      %11705 = vmatmul.bf16.gmra.mxu0 %v11445
      %v11706 = vpop.f32.mrf.mxu0
      %v11707 = vadd.f32 0.0, %v11706
      %v11708 = vpop.f32.mrf.mxu0
      %v11709 = vadd.f32 0.0, %v11708
      %11710 = vmatmul.bf16.gmra.mxu0 %v11448
      %v11711 = vpop.f32.mrf.mxu0
      %v11712 = vadd.f32 0.0, %v11711
      %v11713 = vpop.f32.mrf.mxu0
      %v11714 = vadd.f32 0.0, %v11713
      %11715 = vmatmul.bf16.gmra.mxu0 %v11451
      %v11716 = vpop.f32.mrf.mxu0
      %v11717 = vadd.f32 0.0, %v11716
      %v11718 = vpop.f32.mrf.mxu0
      %v11719 = vadd.f32 0.0, %v11718
      %11720 = vmatmul.bf16.gmra.mxu0 %v11454
      %v11721 = vpop.f32.mrf.mxu0
      %v11722 = vadd.f32 0.0, %v11721
      %v11723 = vpop.f32.mrf.mxu0
      %v11724 = vadd.f32 0.0, %v11723
      %11725 = vdwg.mxu0
      %11726 = vmatpush.bf16.xpose.msra.mxu0 %v11526
      %11727 = vmatpush.bf16.xpose.msra.mxu0 %v11523
      %11728 = vmatpush.bf16.xpose.msra.mxu0 %v11520
      %11729 = vmatpush.bf16.xpose.msra.mxu0 %v11517
      %11730 = vmatpush.bf16.xpose.msra.mxu0 %v11514
      %11731 = vmatpush.bf16.xpose.msra.mxu0 %v11511
      %11732 = vmatpush.bf16.xpose.msra.mxu0 %v11508
      %11733 = vmatpush.bf16.xpose.msra.mxu0 %v11505
      %11734 = vmatmul.bf16.gmra.mxu0 %v11403
      %v11735 = vpop.f32.mrf.mxu0
      %v11736 = vadd.f32 0.0, %v11735
      %v11737 = vpop.f32.mrf.mxu0
      %v11738 = vadd.f32 0.0, %v11737
      %11739 = vmatmul.bf16.gmra.mxu0 %v11406
      %v11740 = vpop.f32.mrf.mxu0
      %v11741 = vadd.f32 0.0, %v11740
      %v11742 = vpop.f32.mrf.mxu0
      %v11743 = vadd.f32 0.0, %v11742
      %11744 = vmatmul.bf16.gmra.mxu0 %v11409
      %v11745 = vpop.f32.mrf.mxu0
      %v11746 = vadd.f32 0.0, %v11745
      %v11747 = vpop.f32.mrf.mxu0
      %v11748 = vadd.f32 0.0, %v11747
      %11749 = vmatmul.bf16.gmra.mxu0 %v11412
      %v11750 = vpop.f32.mrf.mxu0
      %v11751 = vadd.f32 0.0, %v11750
      %v11752 = vpop.f32.mrf.mxu0
      %v11753 = vadd.f32 0.0, %v11752
      %11754 = vmatmul.bf16.gmra.mxu0 %v11415
      %v11755 = vpop.f32.mrf.mxu0
      %v11756 = vadd.f32 0.0, %v11755
      %v11757 = vpop.f32.mrf.mxu0
      %v11758 = vadd.f32 0.0, %v11757
      %11759 = vmatmul.bf16.gmra.mxu0 %v11418
      %v11760 = vpop.f32.mrf.mxu0
      %v11761 = vadd.f32 0.0, %v11760
      %v11762 = vpop.f32.mrf.mxu0
      %v11763 = vadd.f32 0.0, %v11762
      %11764 = vmatmul.bf16.gmra.mxu0 %v11421
      %v11765 = vpop.f32.mrf.mxu0
      %v11766 = vadd.f32 0.0, %v11765
      %v11767 = vpop.f32.mrf.mxu0
      %v11768 = vadd.f32 0.0, %v11767
      %11769 = vmatmul.bf16.gmra.mxu0 %v11424
      %v11770 = vpop.f32.mrf.mxu0
      %v11771 = vadd.f32 0.0, %v11770
      %v11772 = vpop.f32.mrf.mxu0
      %v11773 = vadd.f32 0.0, %v11772
      %11774 = vmatmul.bf16.gmra.mxu0 %v11427
      %v11775 = vpop.f32.mrf.mxu0
      %v11776 = vadd.f32 0.0, %v11775
      %v11777 = vpop.f32.mrf.mxu0
      %v11778 = vadd.f32 0.0, %v11777
      %11779 = vmatmul.bf16.gmra.mxu0 %v11430
      %v11780 = vpop.f32.mrf.mxu0
      %v11781 = vadd.f32 0.0, %v11780
      %v11782 = vpop.f32.mrf.mxu0
      %v11783 = vadd.f32 0.0, %v11782
      %11784 = vmatmul.bf16.gmra.mxu0 %v11433
      %v11785 = vpop.f32.mrf.mxu0
      %v11786 = vadd.f32 0.0, %v11785
      %v11787 = vpop.f32.mrf.mxu0
      %v11788 = vadd.f32 0.0, %v11787
      %11789 = vmatmul.bf16.gmra.mxu0 %v11436
      %v11790 = vpop.f32.mrf.mxu0
      %v11791 = vadd.f32 0.0, %v11790
      %v11792 = vpop.f32.mrf.mxu0
      %v11793 = vadd.f32 0.0, %v11792
      %11794 = vmatmul.bf16.gmra.mxu0 %v11439
      %v11795 = vpop.f32.mrf.mxu0
      %v11796 = vadd.f32 0.0, %v11795
      %v11797 = vpop.f32.mrf.mxu0
      %v11798 = vadd.f32 0.0, %v11797
      %11799 = vmatmul.bf16.gmra.mxu0 %v11442
      %v11800 = vpop.f32.mrf.mxu0
      %v11801 = vadd.f32 0.0, %v11800
      %v11802 = vpop.f32.mrf.mxu0
      %v11803 = vadd.f32 0.0, %v11802
      %11804 = vmatmul.bf16.gmra.mxu0 %v11445
      %v11805 = vpop.f32.mrf.mxu0
      %v11806 = vadd.f32 0.0, %v11805
      %v11807 = vpop.f32.mrf.mxu0
      %v11808 = vadd.f32 0.0, %v11807
      %11809 = vmatmul.bf16.gmra.mxu0 %v11448
      %v11810 = vpop.f32.mrf.mxu0
      %v11811 = vadd.f32 0.0, %v11810
      %v11812 = vpop.f32.mrf.mxu0
      %v11813 = vadd.f32 0.0, %v11812
      %11814 = vmatmul.bf16.gmra.mxu0 %v11451
      %v11815 = vpop.f32.mrf.mxu0
      %v11816 = vadd.f32 0.0, %v11815
      %v11817 = vpop.f32.mrf.mxu0
      %v11818 = vadd.f32 0.0, %v11817
      %11819 = vmatmul.bf16.gmra.mxu0 %v11454
      %v11820 = vpop.f32.mrf.mxu0
      %v11821 = vadd.f32 0.0, %v11820
      %v11822 = vpop.f32.mrf.mxu0
      %v11823 = vadd.f32 0.0, %v11822
      %11824 = vdwg.mxu0
      %v11825 = vadd.f32 %v11094, %v11538
      %v11826 = vadd.f32 %v11095, %v11637
      %v11827 = vadd.f32 %v11096, %v11736
      %v11828 = vadd.f32 %v11097, %v11540
      %v11829 = vadd.f32 %v11098, %v11639
      %v11830 = vadd.f32 %v11099, %v11738
      %v11831 = vadd.f32 %v11100, %v11543
      %v11832 = vadd.f32 %v11101, %v11642
      %v11833 = vadd.f32 %v11102, %v11741
      %v11834 = vadd.f32 %v11103, %v11545
      %v11835 = vadd.f32 %v11104, %v11644
      %v11836 = vadd.f32 %v11105, %v11743
      %11849 = vrot.lane.b32.xlu0 %v11548, 127
      %v11850 = vpop.permute.xlu0 %11849
      %11851 = vrot.lane.b32.xlu0 %v11647, 127
      %v11852 = vpop.permute.xlu0 %11851
      %11853 = vrot.lane.b32.xlu0 %v11746, 127
      %v11854 = vpop.permute.xlu0 %11853
      %11855 = vrot.lane.b32.xlu0 %v11550, 127
      %v11856 = vpop.permute.xlu0 %11855
      %11857 = vrot.lane.b32.xlu0 %v11649, 127
      %v11858 = vpop.permute.xlu0 %11857
      %11859 = vrot.lane.b32.xlu0 %v11748, 127
      %v11860 = vpop.permute.xlu0 %11859
      %11861 = vrot.lane.b32.xlu0 %v11553, 127
      %v11862 = vpop.permute.xlu0 %11861
      %11863 = vrot.lane.b32.xlu0 %v11652, 127
      %v11864 = vpop.permute.xlu0 %11863
      %11865 = vrot.lane.b32.xlu0 %v11751, 127
      %v11866 = vpop.permute.xlu0 %11865
      %11867 = vrot.lane.b32.xlu0 %v11555, 127
      %v11868 = vpop.permute.xlu0 %11867
      %11869 = vrot.lane.b32.xlu0 %v11654, 127
      %v11870 = vpop.permute.xlu0 %11869
      %11871 = vrot.lane.b32.xlu0 %v11753, 127
      %v11872 = vpop.permute.xlu0 %11871
      %v11873 = vsel %vm1153, %v11850, %v11852
      %v11874 = vsel %vm1153, %v11852, %v11854
      %v11875 = vsel %vm1153, %v11856, %v11858
      %v11876 = vsel %vm1153, %v11858, %v11860
      %v11877 = vsel %vm1153, %v11862, %v11864
      %v11878 = vsel %vm1153, %v11864, %v11866
      %v11879 = vsel %vm1153, %v11868, %v11870
      %v11880 = vsel %vm1153, %v11870, %v11872
      %v11897 = vsel %vm1153, %v11854, %v11850
      %v11898 = vsel %vm1153, %v11860, %v11856
      %v11899 = vsel %vm1153, %v11866, %v11862
      %v11900 = vsel %vm1153, %v11872, %v11868
      %v11901 = vadd.f32 %v11825, %v11873
      %v11902 = vadd.f32 %v11826, %v11874
      %v11903 = vadd.f32 %v11827, %v11897
      %v11904 = vadd.f32 %v11828, %v11875
      %v11905 = vadd.f32 %v11829, %v11876
      %v11906 = vadd.f32 %v11830, %v11898
      %v11907 = vadd.f32 %v11831, %v11877
      %v11908 = vadd.f32 %v11832, %v11878
      %v11909 = vadd.f32 %v11833, %v11899
      %v11910 = vadd.f32 %v11834, %v11879
      %v11911 = vadd.f32 %v11835, %v11880
      %v11912 = vadd.f32 %v11836, %v11900
      %11925 = vrot.lane.b32.xlu0 %v11558, 126
      %v11926 = vpop.permute.xlu0 %11925
      %11927 = vrot.lane.b32.xlu0 %v11657, 126
      %v11928 = vpop.permute.xlu0 %11927
      %11929 = vrot.lane.b32.xlu0 %v11756, 126
      %v11930 = vpop.permute.xlu0 %11929
      %11931 = vrot.lane.b32.xlu0 %v11560, 126
      %v11932 = vpop.permute.xlu0 %11931
      %11933 = vrot.lane.b32.xlu0 %v11659, 126
      %v11934 = vpop.permute.xlu0 %11933
      %11935 = vrot.lane.b32.xlu0 %v11758, 126
      %v11936 = vpop.permute.xlu0 %11935
      %11937 = vrot.lane.b32.xlu0 %v11563, 126
      %v11938 = vpop.permute.xlu0 %11937
      %11939 = vrot.lane.b32.xlu0 %v11662, 126
      %v11940 = vpop.permute.xlu0 %11939
      %11941 = vrot.lane.b32.xlu0 %v11761, 126
      %v11942 = vpop.permute.xlu0 %11941
      %11943 = vrot.lane.b32.xlu0 %v11565, 126
      %v11944 = vpop.permute.xlu0 %11943
      %11945 = vrot.lane.b32.xlu0 %v11664, 126
      %v11946 = vpop.permute.xlu0 %11945
      %11947 = vrot.lane.b32.xlu0 %v11763, 126
      %v11948 = vpop.permute.xlu0 %11947
      %v11949 = vsel %vm1230, %v11926, %v11928
      %v11950 = vsel %vm1230, %v11928, %v11930
      %v11951 = vsel %vm1230, %v11932, %v11934
      %v11952 = vsel %vm1230, %v11934, %v11936
      %v11953 = vsel %vm1230, %v11938, %v11940
      %v11954 = vsel %vm1230, %v11940, %v11942
      %v11955 = vsel %vm1230, %v11944, %v11946
      %v11956 = vsel %vm1230, %v11946, %v11948
      %v11973 = vsel %vm1230, %v11930, %v11926
      %v11974 = vsel %vm1230, %v11936, %v11932
      %v11975 = vsel %vm1230, %v11942, %v11938
      %v11976 = vsel %vm1230, %v11948, %v11944
      %v11977 = vadd.f32 %v11901, %v11949
      %v11978 = vadd.f32 %v11902, %v11950
      %v11979 = vadd.f32 %v11903, %v11973
      %v11980 = vadd.f32 %v11904, %v11951
      %v11981 = vadd.f32 %v11905, %v11952
      %v11982 = vadd.f32 %v11906, %v11974
      %v11983 = vadd.f32 %v11907, %v11953
      %v11984 = vadd.f32 %v11908, %v11954
      %v11985 = vadd.f32 %v11909, %v11975
      %v11986 = vadd.f32 %v11910, %v11955
      %v11987 = vadd.f32 %v11911, %v11956
      %v11988 = vadd.f32 %v11912, %v11976
      %12001 = vrot.lane.b32.xlu0 %v11568, 125
      %v12002 = vpop.permute.xlu0 %12001
      %12003 = vrot.lane.b32.xlu0 %v11667, 125
      %v12004 = vpop.permute.xlu0 %12003
      %12005 = vrot.lane.b32.xlu0 %v11766, 125
      %v12006 = vpop.permute.xlu0 %12005
      %12007 = vrot.lane.b32.xlu0 %v11570, 125
      %v12008 = vpop.permute.xlu0 %12007
      %12009 = vrot.lane.b32.xlu0 %v11669, 125
      %v12010 = vpop.permute.xlu0 %12009
      %12011 = vrot.lane.b32.xlu0 %v11768, 125
      %v12012 = vpop.permute.xlu0 %12011
      %12013 = vrot.lane.b32.xlu0 %v11573, 125
      %v12014 = vpop.permute.xlu0 %12013
      %12015 = vrot.lane.b32.xlu0 %v11672, 125
      %v12016 = vpop.permute.xlu0 %12015
      %12017 = vrot.lane.b32.xlu0 %v11771, 125
      %v12018 = vpop.permute.xlu0 %12017
      %12019 = vrot.lane.b32.xlu0 %v11575, 125
      %v12020 = vpop.permute.xlu0 %12019
      %12021 = vrot.lane.b32.xlu0 %v11674, 125
      %v12022 = vpop.permute.xlu0 %12021
      %12023 = vrot.lane.b32.xlu0 %v11773, 125
      %v12024 = vpop.permute.xlu0 %12023
      %v12025 = vsel %vm1307, %v12002, %v12004
      %v12026 = vsel %vm1307, %v12004, %v12006
      %v12027 = vsel %vm1307, %v12008, %v12010
      %v12028 = vsel %vm1307, %v12010, %v12012
      %v12029 = vsel %vm1307, %v12014, %v12016
      %v12030 = vsel %vm1307, %v12016, %v12018
      %v12031 = vsel %vm1307, %v12020, %v12022
      %v12032 = vsel %vm1307, %v12022, %v12024
      %v12049 = vsel %vm1307, %v12006, %v12002
      %v12050 = vsel %vm1307, %v12012, %v12008
      %v12051 = vsel %vm1307, %v12018, %v12014
      %v12052 = vsel %vm1307, %v12024, %v12020
      %v12053 = vadd.f32 %v11977, %v12025
      %v12054 = vadd.f32 %v11978, %v12026
      %v12055 = vadd.f32 %v11979, %v12049
      %v12056 = vadd.f32 %v11980, %v12027
      %v12057 = vadd.f32 %v11981, %v12028
      %v12058 = vadd.f32 %v11982, %v12050
      %v12059 = vadd.f32 %v11983, %v12029
      %v12060 = vadd.f32 %v11984, %v12030
      %v12061 = vadd.f32 %v11985, %v12051
      %v12062 = vadd.f32 %v11986, %v12031
      %v12063 = vadd.f32 %v11987, %v12032
      %v12064 = vadd.f32 %v11988, %v12052
      %12077 = vrot.lane.b32.xlu0 %v11578, 124
      %v12078 = vpop.permute.xlu0 %12077
      %12079 = vrot.lane.b32.xlu0 %v11677, 124
      %v12080 = vpop.permute.xlu0 %12079
      %12081 = vrot.lane.b32.xlu0 %v11776, 124
      %v12082 = vpop.permute.xlu0 %12081
      %12083 = vrot.lane.b32.xlu0 %v11580, 124
      %v12084 = vpop.permute.xlu0 %12083
      %12085 = vrot.lane.b32.xlu0 %v11679, 124
      %v12086 = vpop.permute.xlu0 %12085
      %12087 = vrot.lane.b32.xlu0 %v11778, 124
      %v12088 = vpop.permute.xlu0 %12087
      %12089 = vrot.lane.b32.xlu0 %v11583, 124
      %v12090 = vpop.permute.xlu0 %12089
      %12091 = vrot.lane.b32.xlu0 %v11682, 124
      %v12092 = vpop.permute.xlu0 %12091
      %12093 = vrot.lane.b32.xlu0 %v11781, 124
      %v12094 = vpop.permute.xlu0 %12093
      %12095 = vrot.lane.b32.xlu0 %v11585, 124
      %v12096 = vpop.permute.xlu0 %12095
      %12097 = vrot.lane.b32.xlu0 %v11684, 124
      %v12098 = vpop.permute.xlu0 %12097
      %12099 = vrot.lane.b32.xlu0 %v11783, 124
      %v12100 = vpop.permute.xlu0 %12099
      %v12101 = vsel %vm1384, %v12078, %v12080
      %v12102 = vsel %vm1384, %v12080, %v12082
      %v12103 = vsel %vm1384, %v12084, %v12086
      %v12104 = vsel %vm1384, %v12086, %v12088
      %v12105 = vsel %vm1384, %v12090, %v12092
      %v12106 = vsel %vm1384, %v12092, %v12094
      %v12107 = vsel %vm1384, %v12096, %v12098
      %v12108 = vsel %vm1384, %v12098, %v12100
      %v12125 = vsel %vm1384, %v12082, %v12078
      %v12126 = vsel %vm1384, %v12088, %v12084
      %v12127 = vsel %vm1384, %v12094, %v12090
      %v12128 = vsel %vm1384, %v12100, %v12096
      %v12129 = vadd.f32 %v12053, %v12101
      %v12130 = vadd.f32 %v12054, %v12102
      %v12131 = vadd.f32 %v12055, %v12125
      %v12132 = vadd.f32 %v12056, %v12103
      %v12133 = vadd.f32 %v12057, %v12104
      %v12134 = vadd.f32 %v12058, %v12126
      %v12135 = vadd.f32 %v12059, %v12105
      %v12136 = vadd.f32 %v12060, %v12106
      %v12137 = vadd.f32 %v12061, %v12127
      %v12138 = vadd.f32 %v12062, %v12107
      %v12139 = vadd.f32 %v12063, %v12108
      %v12140 = vadd.f32 %v12064, %v12128
      %12153 = vrot.lane.b32.xlu0 %v11588, 123
      %v12154 = vpop.permute.xlu0 %12153
      %12155 = vrot.lane.b32.xlu0 %v11687, 123
      %v12156 = vpop.permute.xlu0 %12155
      %12157 = vrot.lane.b32.xlu0 %v11786, 123
      %v12158 = vpop.permute.xlu0 %12157
      %12159 = vrot.lane.b32.xlu0 %v11590, 123
      %v12160 = vpop.permute.xlu0 %12159
      %12161 = vrot.lane.b32.xlu0 %v11689, 123
      %v12162 = vpop.permute.xlu0 %12161
      %12163 = vrot.lane.b32.xlu0 %v11788, 123
      %v12164 = vpop.permute.xlu0 %12163
      %12165 = vrot.lane.b32.xlu0 %v11593, 123
      %v12166 = vpop.permute.xlu0 %12165
      %12167 = vrot.lane.b32.xlu0 %v11692, 123
      %v12168 = vpop.permute.xlu0 %12167
      %12169 = vrot.lane.b32.xlu0 %v11791, 123
      %v12170 = vpop.permute.xlu0 %12169
      %12171 = vrot.lane.b32.xlu0 %v11595, 123
      %v12172 = vpop.permute.xlu0 %12171
      %12173 = vrot.lane.b32.xlu0 %v11694, 123
      %v12174 = vpop.permute.xlu0 %12173
      %12175 = vrot.lane.b32.xlu0 %v11793, 123
      %v12176 = vpop.permute.xlu0 %12175
      %v12177 = vsel %vm1461, %v12154, %v12156
      %v12178 = vsel %vm1461, %v12156, %v12158
      %v12179 = vsel %vm1461, %v12160, %v12162
      %v12180 = vsel %vm1461, %v12162, %v12164
      %v12181 = vsel %vm1461, %v12166, %v12168
      %v12182 = vsel %vm1461, %v12168, %v12170
      %v12183 = vsel %vm1461, %v12172, %v12174
      %v12184 = vsel %vm1461, %v12174, %v12176
      %v12201 = vsel %vm1461, %v12158, %v12154
      %v12202 = vsel %vm1461, %v12164, %v12160
      %v12203 = vsel %vm1461, %v12170, %v12166
      %v12204 = vsel %vm1461, %v12176, %v12172
      %v12205 = vadd.f32 %v12129, %v12177
      %v12206 = vadd.f32 %v12130, %v12178
      %v12207 = vadd.f32 %v12131, %v12201
      %v12208 = vadd.f32 %v12132, %v12179
      %v12209 = vadd.f32 %v12133, %v12180
      %v12210 = vadd.f32 %v12134, %v12202
      %v12211 = vadd.f32 %v12135, %v12181
      %v12212 = vadd.f32 %v12136, %v12182
      %v12213 = vadd.f32 %v12137, %v12203
      %v12214 = vadd.f32 %v12138, %v12183
      %v12215 = vadd.f32 %v12139, %v12184
      %v12216 = vadd.f32 %v12140, %v12204
      %12229 = vrot.lane.b32.xlu0 %v11598, 122
      %v12230 = vpop.permute.xlu0 %12229
      %12231 = vrot.lane.b32.xlu0 %v11697, 122
      %v12232 = vpop.permute.xlu0 %12231
      %12233 = vrot.lane.b32.xlu0 %v11796, 122
      %v12234 = vpop.permute.xlu0 %12233
      %12235 = vrot.lane.b32.xlu0 %v11600, 122
      %v12236 = vpop.permute.xlu0 %12235
      %12237 = vrot.lane.b32.xlu0 %v11699, 122
      %v12238 = vpop.permute.xlu0 %12237
      %12239 = vrot.lane.b32.xlu0 %v11798, 122
      %v12240 = vpop.permute.xlu0 %12239
      %12241 = vrot.lane.b32.xlu0 %v11603, 122
      %v12242 = vpop.permute.xlu0 %12241
      %12243 = vrot.lane.b32.xlu0 %v11702, 122
      %v12244 = vpop.permute.xlu0 %12243
      %12245 = vrot.lane.b32.xlu0 %v11801, 122
      %v12246 = vpop.permute.xlu0 %12245
      %12247 = vrot.lane.b32.xlu0 %v11605, 122
      %v12248 = vpop.permute.xlu0 %12247
      %12249 = vrot.lane.b32.xlu0 %v11704, 122
      %v12250 = vpop.permute.xlu0 %12249
      %12251 = vrot.lane.b32.xlu0 %v11803, 122
      %v12252 = vpop.permute.xlu0 %12251
      %v12253 = vsel %vm1538, %v12230, %v12232
      %v12254 = vsel %vm1538, %v12232, %v12234
      %v12255 = vsel %vm1538, %v12236, %v12238
      %v12256 = vsel %vm1538, %v12238, %v12240
      %v12257 = vsel %vm1538, %v12242, %v12244
      %v12258 = vsel %vm1538, %v12244, %v12246
      %v12259 = vsel %vm1538, %v12248, %v12250
      %v12260 = vsel %vm1538, %v12250, %v12252
      %v12277 = vsel %vm1538, %v12234, %v12230
      %v12278 = vsel %vm1538, %v12240, %v12236
      %v12279 = vsel %vm1538, %v12246, %v12242
      %v12280 = vsel %vm1538, %v12252, %v12248
      %v12281 = vadd.f32 %v12205, %v12253
      %v12282 = vadd.f32 %v12206, %v12254
      %v12283 = vadd.f32 %v12207, %v12277
      %v12284 = vadd.f32 %v12208, %v12255
      %v12285 = vadd.f32 %v12209, %v12256
      %v12286 = vadd.f32 %v12210, %v12278
      %v12287 = vadd.f32 %v12211, %v12257
      %v12288 = vadd.f32 %v12212, %v12258
      %v12289 = vadd.f32 %v12213, %v12279
      %v12290 = vadd.f32 %v12214, %v12259
      %v12291 = vadd.f32 %v12215, %v12260
      %v12292 = vadd.f32 %v12216, %v12280
      %12305 = vrot.lane.b32.xlu0 %v11608, 121
      %v12306 = vpop.permute.xlu0 %12305
      %12307 = vrot.lane.b32.xlu0 %v11707, 121
      %v12308 = vpop.permute.xlu0 %12307
      %12309 = vrot.lane.b32.xlu0 %v11806, 121
      %v12310 = vpop.permute.xlu0 %12309
      %12311 = vrot.lane.b32.xlu0 %v11610, 121
      %v12312 = vpop.permute.xlu0 %12311
      %12313 = vrot.lane.b32.xlu0 %v11709, 121
      %v12314 = vpop.permute.xlu0 %12313
      %12315 = vrot.lane.b32.xlu0 %v11808, 121
      %v12316 = vpop.permute.xlu0 %12315
      %12317 = vrot.lane.b32.xlu0 %v11613, 121
      %v12318 = vpop.permute.xlu0 %12317
      %12319 = vrot.lane.b32.xlu0 %v11712, 121
      %v12320 = vpop.permute.xlu0 %12319
      %12321 = vrot.lane.b32.xlu0 %v11811, 121
      %v12322 = vpop.permute.xlu0 %12321
      %12323 = vrot.lane.b32.xlu0 %v11615, 121
      %v12324 = vpop.permute.xlu0 %12323
      %12325 = vrot.lane.b32.xlu0 %v11714, 121
      %v12326 = vpop.permute.xlu0 %12325
      %12327 = vrot.lane.b32.xlu0 %v11813, 121
      %v12328 = vpop.permute.xlu0 %12327
      %v12329 = vsel %vm1615, %v12306, %v12308
      %v12330 = vsel %vm1615, %v12308, %v12310
      %v12331 = vsel %vm1615, %v12312, %v12314
      %v12332 = vsel %vm1615, %v12314, %v12316
      %v12333 = vsel %vm1615, %v12318, %v12320
      %v12334 = vsel %vm1615, %v12320, %v12322
      %v12335 = vsel %vm1615, %v12324, %v12326
      %v12336 = vsel %vm1615, %v12326, %v12328
      %v12353 = vsel %vm1615, %v12310, %v12306
      %v12354 = vsel %vm1615, %v12316, %v12312
      %v12355 = vsel %vm1615, %v12322, %v12318
      %v12356 = vsel %vm1615, %v12328, %v12324
      %v12357 = vadd.f32 %v12281, %v12329
      %v12358 = vadd.f32 %v12282, %v12330
      %v12359 = vadd.f32 %v12283, %v12353
      %v12360 = vadd.f32 %v12284, %v12331
      %v12361 = vadd.f32 %v12285, %v12332
      %v12362 = vadd.f32 %v12286, %v12354
      %v12363 = vadd.f32 %v12287, %v12333
      %v12364 = vadd.f32 %v12288, %v12334
      %v12365 = vadd.f32 %v12289, %v12355
      %v12366 = vadd.f32 %v12290, %v12335
      %v12367 = vadd.f32 %v12291, %v12336
      %v12368 = vadd.f32 %v12292, %v12356
      %12381 = vrot.lane.b32.xlu0 %v11618, 120
      %v12382 = vpop.permute.xlu0 %12381
      %12383 = vrot.lane.b32.xlu0 %v11717, 120
      %v12384 = vpop.permute.xlu0 %12383
      %12385 = vrot.lane.b32.xlu0 %v11816, 120
      %v12386 = vpop.permute.xlu0 %12385
      %12387 = vrot.lane.b32.xlu0 %v11620, 120
      %v12388 = vpop.permute.xlu0 %12387
      %12389 = vrot.lane.b32.xlu0 %v11719, 120
      %v12390 = vpop.permute.xlu0 %12389
      %12391 = vrot.lane.b32.xlu0 %v11818, 120
      %v12392 = vpop.permute.xlu0 %12391
      %12393 = vrot.lane.b32.xlu0 %v11623, 120
      %v12394 = vpop.permute.xlu0 %12393
      %12395 = vrot.lane.b32.xlu0 %v11722, 120
      %v12396 = vpop.permute.xlu0 %12395
      %12397 = vrot.lane.b32.xlu0 %v11821, 120
      %v12398 = vpop.permute.xlu0 %12397
      %12399 = vrot.lane.b32.xlu0 %v11625, 120
      %v12400 = vpop.permute.xlu0 %12399
      %12401 = vrot.lane.b32.xlu0 %v11724, 120
      %v12402 = vpop.permute.xlu0 %12401
      %12403 = vrot.lane.b32.xlu0 %v11823, 120
      %v12404 = vpop.permute.xlu0 %12403
      %v12405 = vsel %vm1692, %v12382, %v12384
      %v12406 = vsel %vm1692, %v12384, %v12386
      %v12407 = vsel %vm1692, %v12388, %v12390
      %v12408 = vsel %vm1692, %v12390, %v12392
      %v12409 = vsel %vm1692, %v12394, %v12396
      %v12410 = vsel %vm1692, %v12396, %v12398
      %v12411 = vsel %vm1692, %v12400, %v12402
      %v12412 = vsel %vm1692, %v12402, %v12404
      %v12429 = vsel %vm1692, %v12386, %v12382
      %v12430 = vsel %vm1692, %v12392, %v12388
      %v12431 = vsel %vm1692, %v12398, %v12394
      %v12432 = vsel %vm1692, %v12404, %v12400
      %v12433 = vadd.f32 %v12357, %v12405
      %v12434 = vadd.f32 %v12358, %v12406
      %v12435 = vadd.f32 %v12359, %v12429
      %v12436 = vadd.f32 %v12360, %v12407
      %v12437 = vadd.f32 %v12361, %v12408
      %v12438 = vadd.f32 %v12362, %v12430
      %v12439 = vadd.f32 %v12363, %v12409
      %v12440 = vadd.f32 %v12364, %v12410
      %v12441 = vadd.f32 %v12365, %v12431
      %v12442 = vadd.f32 %v12366, %v12411
      %v12443 = vadd.f32 %v12367, %v12412
      %v12444 = vadd.f32 %v12368, %v12432
      %12449 = vrot.lane.b32.xlu0 %v12433, 104
      %v12450 = vpop.permute.xlu0 %12449
      %12451 = vrot.lane.b32.xlu0 %v12436, 104
      %v12452 = vpop.permute.xlu0 %12451
      %12453 = vrot.lane.b32.xlu0 %v12439, 104
      %v12454 = vpop.permute.xlu0 %12453
      %12455 = vrot.lane.b32.xlu0 %v12442, 104
      %v12456 = vpop.permute.xlu0 %12455
      %12461 = vrot.lane.b32.xlu0 %v12433, 80
      %v12462 = vpop.permute.xlu0 %12461
      %12463 = vrot.lane.b32.xlu0 %v12436, 80
      %v12464 = vpop.permute.xlu0 %12463
      %12465 = vrot.lane.b32.xlu0 %v12439, 80
      %v12466 = vpop.permute.xlu0 %12465
      %12467 = vrot.lane.b32.xlu0 %v12442, 80
      %v12468 = vpop.permute.xlu0 %12467
      %12473 = vrot.lane.b32.xlu0 %v12433, 56
      %v12474 = vpop.permute.xlu0 %12473
      %12475 = vrot.lane.b32.xlu0 %v12436, 56
      %v12476 = vpop.permute.xlu0 %12475
      %12477 = vrot.lane.b32.xlu0 %v12439, 56
      %v12478 = vpop.permute.xlu0 %12477
      %12479 = vrot.lane.b32.xlu0 %v12442, 56
      %v12480 = vpop.permute.xlu0 %12479
      %12485 = vrot.lane.b32.xlu0 %v12433, 32
      %v12486 = vpop.permute.xlu0 %12485
      %12487 = vrot.lane.b32.xlu0 %v12436, 32
      %v12488 = vpop.permute.xlu0 %12487
      %12489 = vrot.lane.b32.xlu0 %v12439, 32
      %v12490 = vpop.permute.xlu0 %12489
      %12491 = vrot.lane.b32.xlu0 %v12442, 32
      %v12492 = vpop.permute.xlu0 %12491
      %12501 = vrot.lane.b32.xlu0 %v12433, 8
      %v12502 = vpop.permute.xlu0 %12501
      %12503 = vrot.lane.b32.xlu0 %v12434, 8
      %v12504 = vpop.permute.xlu0 %12503
      %12505 = vrot.lane.b32.xlu0 %v12436, 8
      %v12506 = vpop.permute.xlu0 %12505
      %12507 = vrot.lane.b32.xlu0 %v12437, 8
      %v12508 = vpop.permute.xlu0 %12507
      %12509 = vrot.lane.b32.xlu0 %v12439, 8
      %v12510 = vpop.permute.xlu0 %12509
      %12511 = vrot.lane.b32.xlu0 %v12440, 8
      %v12512 = vpop.permute.xlu0 %12511
      %12513 = vrot.lane.b32.xlu0 %v12442, 8
      %v12514 = vpop.permute.xlu0 %12513
      %12515 = vrot.lane.b32.xlu0 %v12443, 8
      %v12516 = vpop.permute.xlu0 %12515
      %vm12517 = vcmask 64512
      %v12518 = vsel %vm12517, %v12502, %v12504
      %v12519 = vsel %vm12517, %v12506, %v12508
      %v12520 = vsel %vm12517, %v12510, %v12512
      %v12521 = vsel %vm12517, %v12514, %v12516
      %12526 = vrot.lane.b32.xlu0 %v12434, 112
      %v12527 = vpop.permute.xlu0 %12526
      %12528 = vrot.lane.b32.xlu0 %v12437, 112
      %v12529 = vpop.permute.xlu0 %12528
      %12530 = vrot.lane.b32.xlu0 %v12440, 112
      %v12531 = vpop.permute.xlu0 %12530
      %12532 = vrot.lane.b32.xlu0 %v12443, 112
      %v12533 = vpop.permute.xlu0 %12532
      %12538 = vrot.lane.b32.xlu0 %v12434, 88
      %v12539 = vpop.permute.xlu0 %12538
      %12540 = vrot.lane.b32.xlu0 %v12437, 88
      %v12541 = vpop.permute.xlu0 %12540
      %12542 = vrot.lane.b32.xlu0 %v12440, 88
      %v12543 = vpop.permute.xlu0 %12542
      %12544 = vrot.lane.b32.xlu0 %v12443, 88
      %v12545 = vpop.permute.xlu0 %12544
      %12550 = vrot.lane.b32.xlu0 %v12434, 64
      %v12551 = vpop.permute.xlu0 %12550
      %12552 = vrot.lane.b32.xlu0 %v12437, 64
      %v12553 = vpop.permute.xlu0 %12552
      %12554 = vrot.lane.b32.xlu0 %v12440, 64
      %v12555 = vpop.permute.xlu0 %12554
      %12556 = vrot.lane.b32.xlu0 %v12443, 64
      %v12557 = vpop.permute.xlu0 %12556
      %12562 = vrot.lane.b32.xlu0 %v12434, 40
      %v12563 = vpop.permute.xlu0 %12562
      %12564 = vrot.lane.b32.xlu0 %v12437, 40
      %v12565 = vpop.permute.xlu0 %12564
      %12566 = vrot.lane.b32.xlu0 %v12440, 40
      %v12567 = vpop.permute.xlu0 %12566
      %12568 = vrot.lane.b32.xlu0 %v12443, 40
      %v12569 = vpop.permute.xlu0 %12568
      %12578 = vrot.lane.b32.xlu0 %v12434, 16
      %v12579 = vpop.permute.xlu0 %12578
      %12580 = vrot.lane.b32.xlu0 %v12435, 16
      %v12581 = vpop.permute.xlu0 %12580
      %12582 = vrot.lane.b32.xlu0 %v12437, 16
      %v12583 = vpop.permute.xlu0 %12582
      %12584 = vrot.lane.b32.xlu0 %v12438, 16
      %v12585 = vpop.permute.xlu0 %12584
      %12586 = vrot.lane.b32.xlu0 %v12440, 16
      %v12587 = vpop.permute.xlu0 %12586
      %12588 = vrot.lane.b32.xlu0 %v12441, 16
      %v12589 = vpop.permute.xlu0 %12588
      %12590 = vrot.lane.b32.xlu0 %v12443, 16
      %v12591 = vpop.permute.xlu0 %12590
      %12592 = vrot.lane.b32.xlu0 %v12444, 16
      %v12593 = vpop.permute.xlu0 %12592
      %vm12594 = vcmask 130048
      %v12595 = vsel %vm12594, %v12579, %v12581
      %v12596 = vsel %vm12594, %v12583, %v12585
      %v12597 = vsel %vm12594, %v12587, %v12589
      %v12598 = vsel %vm12594, %v12591, %v12593
      %12603 = vrot.lane.b32.xlu0 %v12435, 120
      %v12604 = vpop.permute.xlu0 %12603
      %12605 = vrot.lane.b32.xlu0 %v12438, 120
      %v12606 = vpop.permute.xlu0 %12605
      %12607 = vrot.lane.b32.xlu0 %v12441, 120
      %v12608 = vpop.permute.xlu0 %12607
      %12609 = vrot.lane.b32.xlu0 %v12444, 120
      %v12610 = vpop.permute.xlu0 %12609
      %12615 = vrot.lane.b32.xlu0 %v12435, 96
      %v12616 = vpop.permute.xlu0 %12615
      %12617 = vrot.lane.b32.xlu0 %v12438, 96
      %v12618 = vpop.permute.xlu0 %12617
      %12619 = vrot.lane.b32.xlu0 %v12441, 96
      %v12620 = vpop.permute.xlu0 %12619
      %12621 = vrot.lane.b32.xlu0 %v12444, 96
      %v12622 = vpop.permute.xlu0 %12621
      %12627 = vrot.lane.b32.xlu0 %v12435, 72
      %v12628 = vpop.permute.xlu0 %12627
      %12629 = vrot.lane.b32.xlu0 %v12438, 72
      %v12630 = vpop.permute.xlu0 %12629
      %12631 = vrot.lane.b32.xlu0 %v12441, 72
      %v12632 = vpop.permute.xlu0 %12631
      %12633 = vrot.lane.b32.xlu0 %v12444, 72
      %v12634 = vpop.permute.xlu0 %12633
      %12639 = vrot.lane.b32.xlu0 %v12435, 48
      %v12640 = vpop.permute.xlu0 %12639
      %12641 = vrot.lane.b32.xlu0 %v12438, 48
      %v12642 = vpop.permute.xlu0 %12641
      %12643 = vrot.lane.b32.xlu0 %v12441, 48
      %v12644 = vpop.permute.xlu0 %12643
      %12645 = vrot.lane.b32.xlu0 %v12444, 48
      %v12646 = vpop.permute.xlu0 %12645
      %12651 = vrot.lane.b32.xlu0 %v12435, 24
      %v12652 = vpop.permute.xlu0 %12651
      %12653 = vrot.lane.b32.xlu0 %v12438, 24
      %v12654 = vpop.permute.xlu0 %12653
      %12655 = vrot.lane.b32.xlu0 %v12441, 24
      %v12656 = vpop.permute.xlu0 %12655
      %12657 = vrot.lane.b32.xlu0 %v12444, 24
      %v12658 = vpop.permute.xlu0 %12657
      %v12663 = vrot.slane %v12462, 4
      %vm12664 = vcmask 1047556
      %v12665 = vsel %vm12664, %v12663, %v12433
      %v12666 = vrot.slane %v12433, 4
      %v12667 = vsel %vm12664, %v12462, %v12666
      %v12669 = vunpack.c.l.s4 1983009808
      %v12670 = vunpack.c.0.s8 %v12669
      %v12671 = vperm.slane %v12665, %v12670
      %v12673 = vunpack.c.l.s4 1983009808
      %v12674 = vunpack.c.0.s8 %v12673
      %v12675 = vperm.slane %v12667, %v12674
      %v12676 = vrot.slane %v12474, 4
      %v12677 = vsel %vm12664, %v12676, %v12450
      %v12678 = vrot.slane %v12450, 4
      %v12679 = vsel %vm12664, %v12474, %v12678
      %v12681 = vunpack.c.l.s4 1983009808
      %v12682 = vunpack.c.0.s8 %v12681
      %v12683 = vperm.slane %v12677, %v12682
      %v12685 = vunpack.c.l.s4 1983009808
      %v12686 = vunpack.c.0.s8 %v12685
      %v12687 = vperm.slane %v12679, %v12686
      %v12688 = vrot.slane %v12527, 4
      %v12689 = vsel %vm12664, %v12688, %v12486
      %v12690 = vrot.slane %v12486, 4
      %v12691 = vsel %vm12664, %v12527, %v12690
      %v12693 = vunpack.c.l.s4 1983009808
      %v12694 = vunpack.c.0.s8 %v12693
      %v12695 = vperm.slane %v12689, %v12694
      %v12697 = vunpack.c.l.s4 1983009808
      %v12698 = vunpack.c.0.s8 %v12697
      %v12699 = vperm.slane %v12691, %v12698
      %v12700 = vrot.slane %v12539, 4
      %v12701 = vsel %vm12664, %v12700, %v12518
      %v12702 = vrot.slane %v12518, 4
      %v12703 = vsel %vm12664, %v12539, %v12702
      %v12705 = vunpack.c.l.s4 1983009808
      %v12706 = vunpack.c.0.s8 %v12705
      %v12707 = vperm.slane %v12701, %v12706
      %v12709 = vunpack.c.l.s4 1983009808
      %v12710 = vunpack.c.0.s8 %v12709
      %v12711 = vperm.slane %v12703, %v12710
      %v12712 = vrot.slane %v12683, 4
      %v12713 = vsel %vm12664, %v12712, %v12671
      %v12714 = vrot.slane %v12671, 4
      %v12715 = vsel %vm12664, %v12683, %v12714
      %v12717 = vunpack.c.l.s4 1934713408
      %v12718 = vunpack.c.0.s8 %v12717
      %v12719 = vperm.slane %v12713, %v12718
      %v12721 = vunpack.c.l.s4 1934713408
      %v12722 = vunpack.c.0.s8 %v12721
      %v12723 = vperm.slane %v12715, %v12722
      %v12724 = vrot.slane %v12687, 4
      %v12725 = vsel %vm12664, %v12724, %v12675
      %v12726 = vrot.slane %v12675, 4
      %v12727 = vsel %vm12664, %v12687, %v12726
      %v12729 = vunpack.c.l.s4 1934713408
      %v12730 = vunpack.c.0.s8 %v12729
      %v12731 = vperm.slane %v12725, %v12730
      %v12733 = vunpack.c.l.s4 1934713408
      %v12734 = vunpack.c.0.s8 %v12733
      %v12735 = vperm.slane %v12727, %v12734
      %v12736 = vrot.slane %v12707, 4
      %v12737 = vsel %vm12664, %v12736, %v12695
      %v12738 = vrot.slane %v12695, 4
      %v12739 = vsel %vm12664, %v12707, %v12738
      %v12741 = vunpack.c.l.s4 1934713408
      %v12742 = vunpack.c.0.s8 %v12741
      %v12743 = vperm.slane %v12737, %v12742
      %v12745 = vunpack.c.l.s4 1934713408
      %v12746 = vunpack.c.0.s8 %v12745
      %v12747 = vperm.slane %v12739, %v12746
      %v12748 = vrot.slane %v12711, 4
      %v12749 = vsel %vm12664, %v12748, %v12699
      %v12750 = vrot.slane %v12699, 4
      %v12751 = vsel %vm12664, %v12711, %v12750
      %v12753 = vunpack.c.l.s4 1934713408
      %v12754 = vunpack.c.0.s8 %v12753
      %v12755 = vperm.slane %v12749, %v12754
      %v12757 = vunpack.c.l.s4 1934713408
      %v12758 = vunpack.c.0.s8 %v12757
      %v12759 = vperm.slane %v12751, %v12758
      %v12760 = vrot.slane %v12743, 4
      %v12761 = vsel %vm12664, %v12760, %v12719
      %v12762 = vrot.slane %v12719, 4
      %v12763 = vsel %vm12664, %v12743, %v12762
      %v12764 = vrot.slane %v12747, 4
      %v12765 = vsel %vm12664, %v12764, %v12723
      %v12766 = vrot.slane %v12723, 4
      %v12767 = vsel %vm12664, %v12747, %v12766
      %v12768 = vrot.slane %v12755, 4
      %v12769 = vsel %vm12664, %v12768, %v12731
      %v12770 = vrot.slane %v12731, 4
      %v12771 = vsel %vm12664, %v12755, %v12770
      %v12772 = vrot.slane %v12759, 4
      %v12773 = vsel %vm12664, %v12772, %v12735
      %v12774 = vrot.slane %v12735, 4
      %v12775 = vsel %vm12664, %v12759, %v12774
      %v12776 = vrot.slane %v12595, 4
      %v12777 = vsel %vm12664, %v12776, %v12551
      %v12778 = vrot.slane %v12551, 4
      %v12779 = vsel %vm12664, %v12595, %v12778
      %v12781 = vunpack.c.l.s4 1983009808
      %v12782 = vunpack.c.0.s8 %v12781
      %v12783 = vperm.slane %v12777, %v12782
      %v12785 = vunpack.c.l.s4 1983009808
      %v12786 = vunpack.c.0.s8 %v12785
      %v12787 = vperm.slane %v12779, %v12786
      %v12788 = vrot.slane %v12604, 4
      %v12789 = vsel %vm12664, %v12788, %v12563
      %v12790 = vrot.slane %v12563, 4
      %v12791 = vsel %vm12664, %v12604, %v12790
      %v12793 = vunpack.c.l.s4 1983009808
      %v12794 = vunpack.c.0.s8 %v12793
      %v12795 = vperm.slane %v12789, %v12794
      %v12797 = vunpack.c.l.s4 1983009808
      %v12798 = vunpack.c.0.s8 %v12797
      %v12799 = vperm.slane %v12791, %v12798
      %v12800 = vrot.slane %v12640, 4
      %v12801 = vsel %vm12664, %v12800, %v12616
      %v12802 = vrot.slane %v12616, 4
      %v12803 = vsel %vm12664, %v12640, %v12802
      %v12805 = vunpack.c.l.s4 1983009808
      %v12806 = vunpack.c.0.s8 %v12805
      %v12807 = vperm.slane %v12801, %v12806
      %v12809 = vunpack.c.l.s4 1983009808
      %v12810 = vunpack.c.0.s8 %v12809
      %v12811 = vperm.slane %v12803, %v12810
      %v12812 = vrot.slane %v12652, 4
      %v12813 = vsel %vm12664, %v12812, %v12628
      %v12814 = vrot.slane %v12628, 4
      %v12815 = vsel %vm12664, %v12652, %v12814
      %v12817 = vunpack.c.l.s4 1983009808
      %v12818 = vunpack.c.0.s8 %v12817
      %v12819 = vperm.slane %v12813, %v12818
      %v12821 = vunpack.c.l.s4 1983009808
      %v12822 = vunpack.c.0.s8 %v12821
      %v12823 = vperm.slane %v12815, %v12822
      %v12824 = vrot.slane %v12795, 4
      %v12825 = vsel %vm12664, %v12824, %v12783
      %v12826 = vrot.slane %v12783, 4
      %v12827 = vsel %vm12664, %v12795, %v12826
      %v12829 = vunpack.c.l.s4 1934713408
      %v12830 = vunpack.c.0.s8 %v12829
      %v12831 = vperm.slane %v12825, %v12830
      %v12833 = vunpack.c.l.s4 1934713408
      %v12834 = vunpack.c.0.s8 %v12833
      %v12835 = vperm.slane %v12827, %v12834
      %v12836 = vrot.slane %v12799, 4
      %v12837 = vsel %vm12664, %v12836, %v12787
      %v12838 = vrot.slane %v12787, 4
      %v12839 = vsel %vm12664, %v12799, %v12838
      %v12841 = vunpack.c.l.s4 1934713408
      %v12842 = vunpack.c.0.s8 %v12841
      %v12843 = vperm.slane %v12837, %v12842
      %v12845 = vunpack.c.l.s4 1934713408
      %v12846 = vunpack.c.0.s8 %v12845
      %v12847 = vperm.slane %v12839, %v12846
      %v12848 = vrot.slane %v12819, 4
      %v12849 = vsel %vm12664, %v12848, %v12807
      %v12850 = vrot.slane %v12807, 4
      %v12851 = vsel %vm12664, %v12819, %v12850
      %v12853 = vunpack.c.l.s4 1934713408
      %v12854 = vunpack.c.0.s8 %v12853
      %v12855 = vperm.slane %v12849, %v12854
      %v12857 = vunpack.c.l.s4 1934713408
      %v12858 = vunpack.c.0.s8 %v12857
      %v12859 = vperm.slane %v12851, %v12858
      %v12860 = vrot.slane %v12823, 4
      %v12861 = vsel %vm12664, %v12860, %v12811
      %v12862 = vrot.slane %v12811, 4
      %v12863 = vsel %vm12664, %v12823, %v12862
      %v12865 = vunpack.c.l.s4 1934713408
      %v12866 = vunpack.c.0.s8 %v12865
      %v12867 = vperm.slane %v12861, %v12866
      %v12869 = vunpack.c.l.s4 1934713408
      %v12870 = vunpack.c.0.s8 %v12869
      %v12871 = vperm.slane %v12863, %v12870
      %v12872 = vrot.slane %v12855, 4
      %v12873 = vsel %vm12664, %v12872, %v12831
      %v12874 = vrot.slane %v12831, 4
      %v12875 = vsel %vm12664, %v12855, %v12874
      %v12876 = vrot.slane %v12859, 4
      %v12877 = vsel %vm12664, %v12876, %v12835
      %v12878 = vrot.slane %v12835, 4
      %v12879 = vsel %vm12664, %v12859, %v12878
      %v12880 = vrot.slane %v12867, 4
      %v12881 = vsel %vm12664, %v12880, %v12843
      %v12882 = vrot.slane %v12843, 4
      %v12883 = vsel %vm12664, %v12867, %v12882
      %v12884 = vrot.slane %v12871, 4
      %v12885 = vsel %vm12664, %v12884, %v12847
      %v12886 = vrot.slane %v12847, 4
      %v12887 = vsel %vm12664, %v12871, %v12886
      %v12888 = vrot.slane %v12464, 4
      %v12889 = vsel %vm12664, %v12888, %v12436
      %v12890 = vrot.slane %v12436, 4
      %v12891 = vsel %vm12664, %v12464, %v12890
      %v12893 = vunpack.c.l.s4 1983009808
      %v12894 = vunpack.c.0.s8 %v12893
      %v12895 = vperm.slane %v12889, %v12894
      %v12897 = vunpack.c.l.s4 1983009808
      %v12898 = vunpack.c.0.s8 %v12897
      %v12899 = vperm.slane %v12891, %v12898
      %v12900 = vrot.slane %v12476, 4
      %v12901 = vsel %vm12664, %v12900, %v12452
      %v12902 = vrot.slane %v12452, 4
      %v12903 = vsel %vm12664, %v12476, %v12902
      %v12905 = vunpack.c.l.s4 1983009808
      %v12906 = vunpack.c.0.s8 %v12905
      %v12907 = vperm.slane %v12901, %v12906
      %v12909 = vunpack.c.l.s4 1983009808
      %v12910 = vunpack.c.0.s8 %v12909
      %v12911 = vperm.slane %v12903, %v12910
      %v12912 = vrot.slane %v12529, 4
      %v12913 = vsel %vm12664, %v12912, %v12488
      %v12914 = vrot.slane %v12488, 4
      %v12915 = vsel %vm12664, %v12529, %v12914
      %v12917 = vunpack.c.l.s4 1983009808
      %v12918 = vunpack.c.0.s8 %v12917
      %v12919 = vperm.slane %v12913, %v12918
      %v12921 = vunpack.c.l.s4 1983009808
      %v12922 = vunpack.c.0.s8 %v12921
      %v12923 = vperm.slane %v12915, %v12922
      %v12924 = vrot.slane %v12541, 4
      %v12925 = vsel %vm12664, %v12924, %v12519
      %v12926 = vrot.slane %v12519, 4
      %v12927 = vsel %vm12664, %v12541, %v12926
      %v12929 = vunpack.c.l.s4 1983009808
      %v12930 = vunpack.c.0.s8 %v12929
      %v12931 = vperm.slane %v12925, %v12930
      %v12933 = vunpack.c.l.s4 1983009808
      %v12934 = vunpack.c.0.s8 %v12933
      %v12935 = vperm.slane %v12927, %v12934
      %v12936 = vrot.slane %v12907, 4
      %v12937 = vsel %vm12664, %v12936, %v12895
      %v12938 = vrot.slane %v12895, 4
      %v12939 = vsel %vm12664, %v12907, %v12938
      %v12941 = vunpack.c.l.s4 1934713408
      %v12942 = vunpack.c.0.s8 %v12941
      %v12943 = vperm.slane %v12937, %v12942
      %v12945 = vunpack.c.l.s4 1934713408
      %v12946 = vunpack.c.0.s8 %v12945
      %v12947 = vperm.slane %v12939, %v12946
      %v12948 = vrot.slane %v12911, 4
      %v12949 = vsel %vm12664, %v12948, %v12899
      %v12950 = vrot.slane %v12899, 4
      %v12951 = vsel %vm12664, %v12911, %v12950
      %v12953 = vunpack.c.l.s4 1934713408
      %v12954 = vunpack.c.0.s8 %v12953
      %v12955 = vperm.slane %v12949, %v12954
      %v12957 = vunpack.c.l.s4 1934713408
      %v12958 = vunpack.c.0.s8 %v12957
      %v12959 = vperm.slane %v12951, %v12958
      %v12960 = vrot.slane %v12931, 4
      %v12961 = vsel %vm12664, %v12960, %v12919
      %v12962 = vrot.slane %v12919, 4
      %v12963 = vsel %vm12664, %v12931, %v12962
      %v12965 = vunpack.c.l.s4 1934713408
      %v12966 = vunpack.c.0.s8 %v12965
      %v12967 = vperm.slane %v12961, %v12966
      %v12969 = vunpack.c.l.s4 1934713408
      %v12970 = vunpack.c.0.s8 %v12969
      %v12971 = vperm.slane %v12963, %v12970
      %v12972 = vrot.slane %v12935, 4
      %v12973 = vsel %vm12664, %v12972, %v12923
      %v12974 = vrot.slane %v12923, 4
      %v12975 = vsel %vm12664, %v12935, %v12974
      %v12977 = vunpack.c.l.s4 1934713408
      %v12978 = vunpack.c.0.s8 %v12977
      %v12979 = vperm.slane %v12973, %v12978
      %v12981 = vunpack.c.l.s4 1934713408
      %v12982 = vunpack.c.0.s8 %v12981
      %v12983 = vperm.slane %v12975, %v12982
      %v12984 = vrot.slane %v12967, 4
      %v12985 = vsel %vm12664, %v12984, %v12943
      %v12986 = vrot.slane %v12943, 4
      %v12987 = vsel %vm12664, %v12967, %v12986
      %v12988 = vrot.slane %v12971, 4
      %v12989 = vsel %vm12664, %v12988, %v12947
      %v12990 = vrot.slane %v12947, 4
      %v12991 = vsel %vm12664, %v12971, %v12990
      %v12992 = vrot.slane %v12979, 4
      %v12993 = vsel %vm12664, %v12992, %v12955
      %v12994 = vrot.slane %v12955, 4
      %v12995 = vsel %vm12664, %v12979, %v12994
      %v12996 = vrot.slane %v12983, 4
      %v12997 = vsel %vm12664, %v12996, %v12959
      %v12998 = vrot.slane %v12959, 4
      %v12999 = vsel %vm12664, %v12983, %v12998
      %v13000 = vrot.slane %v12596, 4
      %v13001 = vsel %vm12664, %v13000, %v12553
      %v13002 = vrot.slane %v12553, 4
      %v13003 = vsel %vm12664, %v12596, %v13002
      %v13005 = vunpack.c.l.s4 1983009808
      %v13006 = vunpack.c.0.s8 %v13005
      %v13007 = vperm.slane %v13001, %v13006
      %v13009 = vunpack.c.l.s4 1983009808
      %v13010 = vunpack.c.0.s8 %v13009
      %v13011 = vperm.slane %v13003, %v13010
      %v13012 = vrot.slane %v12606, 4
      %v13013 = vsel %vm12664, %v13012, %v12565
      %v13014 = vrot.slane %v12565, 4
      %v13015 = vsel %vm12664, %v12606, %v13014
      %v13017 = vunpack.c.l.s4 1983009808
      %v13018 = vunpack.c.0.s8 %v13017
      %v13019 = vperm.slane %v13013, %v13018
      %v13021 = vunpack.c.l.s4 1983009808
      %v13022 = vunpack.c.0.s8 %v13021
      %v13023 = vperm.slane %v13015, %v13022
      %v13024 = vrot.slane %v12642, 4
      %v13025 = vsel %vm12664, %v13024, %v12618
      %v13026 = vrot.slane %v12618, 4
      %v13027 = vsel %vm12664, %v12642, %v13026
      %v13029 = vunpack.c.l.s4 1983009808
      %v13030 = vunpack.c.0.s8 %v13029
      %v13031 = vperm.slane %v13025, %v13030
      %v13033 = vunpack.c.l.s4 1983009808
      %v13034 = vunpack.c.0.s8 %v13033
      %v13035 = vperm.slane %v13027, %v13034
      %v13036 = vrot.slane %v12654, 4
      %v13037 = vsel %vm12664, %v13036, %v12630
      %v13038 = vrot.slane %v12630, 4
      %v13039 = vsel %vm12664, %v12654, %v13038
      %v13041 = vunpack.c.l.s4 1983009808
      %v13042 = vunpack.c.0.s8 %v13041
      %v13043 = vperm.slane %v13037, %v13042
      %v13045 = vunpack.c.l.s4 1983009808
      %v13046 = vunpack.c.0.s8 %v13045
      %v13047 = vperm.slane %v13039, %v13046
      %v13048 = vrot.slane %v13019, 4
      %v13049 = vsel %vm12664, %v13048, %v13007
      %v13050 = vrot.slane %v13007, 4
      %v13051 = vsel %vm12664, %v13019, %v13050
      %v13053 = vunpack.c.l.s4 1934713408
      %v13054 = vunpack.c.0.s8 %v13053
      %v13055 = vperm.slane %v13049, %v13054
      %v13057 = vunpack.c.l.s4 1934713408
      %v13058 = vunpack.c.0.s8 %v13057
      %v13059 = vperm.slane %v13051, %v13058
      %v13060 = vrot.slane %v13023, 4
      %v13061 = vsel %vm12664, %v13060, %v13011
      %v13062 = vrot.slane %v13011, 4
      %v13063 = vsel %vm12664, %v13023, %v13062
      %v13065 = vunpack.c.l.s4 1934713408
      %v13066 = vunpack.c.0.s8 %v13065
      %v13067 = vperm.slane %v13061, %v13066
      %v13069 = vunpack.c.l.s4 1934713408
      %v13070 = vunpack.c.0.s8 %v13069
      %v13071 = vperm.slane %v13063, %v13070
      %v13072 = vrot.slane %v13043, 4
      %v13073 = vsel %vm12664, %v13072, %v13031
      %v13074 = vrot.slane %v13031, 4
      %v13075 = vsel %vm12664, %v13043, %v13074
      %v13077 = vunpack.c.l.s4 1934713408
      %v13078 = vunpack.c.0.s8 %v13077
      %v13079 = vperm.slane %v13073, %v13078
      %v13081 = vunpack.c.l.s4 1934713408
      %v13082 = vunpack.c.0.s8 %v13081
      %v13083 = vperm.slane %v13075, %v13082
      %v13084 = vrot.slane %v13047, 4
      %v13085 = vsel %vm12664, %v13084, %v13035
      %v13086 = vrot.slane %v13035, 4
      %v13087 = vsel %vm12664, %v13047, %v13086
      %v13089 = vunpack.c.l.s4 1934713408
      %v13090 = vunpack.c.0.s8 %v13089
      %v13091 = vperm.slane %v13085, %v13090
      %v13093 = vunpack.c.l.s4 1934713408
      %v13094 = vunpack.c.0.s8 %v13093
      %v13095 = vperm.slane %v13087, %v13094
      %v13096 = vrot.slane %v13079, 4
      %v13097 = vsel %vm12664, %v13096, %v13055
      %v13098 = vrot.slane %v13055, 4
      %v13099 = vsel %vm12664, %v13079, %v13098
      %v13100 = vrot.slane %v13083, 4
      %v13101 = vsel %vm12664, %v13100, %v13059
      %v13102 = vrot.slane %v13059, 4
      %v13103 = vsel %vm12664, %v13083, %v13102
      %v13104 = vrot.slane %v13091, 4
      %v13105 = vsel %vm12664, %v13104, %v13067
      %v13106 = vrot.slane %v13067, 4
      %v13107 = vsel %vm12664, %v13091, %v13106
      %v13108 = vrot.slane %v13095, 4
      %v13109 = vsel %vm12664, %v13108, %v13071
      %v13110 = vrot.slane %v13071, 4
      %v13111 = vsel %vm12664, %v13095, %v13110
      %v13112 = vrot.slane %v12466, 4
      %v13113 = vsel %vm12664, %v13112, %v12439
      %v13114 = vrot.slane %v12439, 4
      %v13115 = vsel %vm12664, %v12466, %v13114
      %v13117 = vunpack.c.l.s4 1983009808
      %v13118 = vunpack.c.0.s8 %v13117
      %v13119 = vperm.slane %v13113, %v13118
      %v13121 = vunpack.c.l.s4 1983009808
      %v13122 = vunpack.c.0.s8 %v13121
      %v13123 = vperm.slane %v13115, %v13122
      %v13124 = vrot.slane %v12478, 4
      %v13125 = vsel %vm12664, %v13124, %v12454
      %v13126 = vrot.slane %v12454, 4
      %v13127 = vsel %vm12664, %v12478, %v13126
      %v13129 = vunpack.c.l.s4 1983009808
      %v13130 = vunpack.c.0.s8 %v13129
      %v13131 = vperm.slane %v13125, %v13130
      %v13133 = vunpack.c.l.s4 1983009808
      %v13134 = vunpack.c.0.s8 %v13133
      %v13135 = vperm.slane %v13127, %v13134
      %v13136 = vrot.slane %v12531, 4
      %v13137 = vsel %vm12664, %v13136, %v12490
      %v13138 = vrot.slane %v12490, 4
      %v13139 = vsel %vm12664, %v12531, %v13138
      %v13141 = vunpack.c.l.s4 1983009808
      %v13142 = vunpack.c.0.s8 %v13141
      %v13143 = vperm.slane %v13137, %v13142
      %v13145 = vunpack.c.l.s4 1983009808
      %v13146 = vunpack.c.0.s8 %v13145
      %v13147 = vperm.slane %v13139, %v13146
      %v13148 = vrot.slane %v12543, 4
      %v13149 = vsel %vm12664, %v13148, %v12520
      %v13150 = vrot.slane %v12520, 4
      %v13151 = vsel %vm12664, %v12543, %v13150
      %v13153 = vunpack.c.l.s4 1983009808
      %v13154 = vunpack.c.0.s8 %v13153
      %v13155 = vperm.slane %v13149, %v13154
      %v13157 = vunpack.c.l.s4 1983009808
      %v13158 = vunpack.c.0.s8 %v13157
      %v13159 = vperm.slane %v13151, %v13158
      %v13160 = vrot.slane %v13131, 4
      %v13161 = vsel %vm12664, %v13160, %v13119
      %v13162 = vrot.slane %v13119, 4
      %v13163 = vsel %vm12664, %v13131, %v13162
      %v13165 = vunpack.c.l.s4 1934713408
      %v13166 = vunpack.c.0.s8 %v13165
      %v13167 = vperm.slane %v13161, %v13166
      %v13169 = vunpack.c.l.s4 1934713408
      %v13170 = vunpack.c.0.s8 %v13169
      %v13171 = vperm.slane %v13163, %v13170
      %v13172 = vrot.slane %v13135, 4
      %v13173 = vsel %vm12664, %v13172, %v13123
      %v13174 = vrot.slane %v13123, 4
      %v13175 = vsel %vm12664, %v13135, %v13174
      %v13177 = vunpack.c.l.s4 1934713408
      %v13178 = vunpack.c.0.s8 %v13177
      %v13179 = vperm.slane %v13173, %v13178
      %v13181 = vunpack.c.l.s4 1934713408
      %v13182 = vunpack.c.0.s8 %v13181
      %v13183 = vperm.slane %v13175, %v13182
      %v13184 = vrot.slane %v13155, 4
      %v13185 = vsel %vm12664, %v13184, %v13143
      %v13186 = vrot.slane %v13143, 4
      %v13187 = vsel %vm12664, %v13155, %v13186
      %v13189 = vunpack.c.l.s4 1934713408
      %v13190 = vunpack.c.0.s8 %v13189
      %v13191 = vperm.slane %v13185, %v13190
      %v13193 = vunpack.c.l.s4 1934713408
      %v13194 = vunpack.c.0.s8 %v13193
      %v13195 = vperm.slane %v13187, %v13194
      %v13196 = vrot.slane %v13159, 4
      %v13197 = vsel %vm12664, %v13196, %v13147
      %v13198 = vrot.slane %v13147, 4
      %v13199 = vsel %vm12664, %v13159, %v13198
      %v13201 = vunpack.c.l.s4 1934713408
      %v13202 = vunpack.c.0.s8 %v13201
      %v13203 = vperm.slane %v13197, %v13202
      %v13205 = vunpack.c.l.s4 1934713408
      %v13206 = vunpack.c.0.s8 %v13205
      %v13207 = vperm.slane %v13199, %v13206
      %v13208 = vrot.slane %v13191, 4
      %v13209 = vsel %vm12664, %v13208, %v13167
      %v13210 = vrot.slane %v13167, 4
      %v13211 = vsel %vm12664, %v13191, %v13210
      %v13212 = vrot.slane %v13195, 4
      %v13213 = vsel %vm12664, %v13212, %v13171
      %v13214 = vrot.slane %v13171, 4
      %v13215 = vsel %vm12664, %v13195, %v13214
      %v13216 = vrot.slane %v13203, 4
      %v13217 = vsel %vm12664, %v13216, %v13179
      %v13218 = vrot.slane %v13179, 4
      %v13219 = vsel %vm12664, %v13203, %v13218
      %v13220 = vrot.slane %v13207, 4
      %v13221 = vsel %vm12664, %v13220, %v13183
      %v13222 = vrot.slane %v13183, 4
      %v13223 = vsel %vm12664, %v13207, %v13222
      %v13224 = vrot.slane %v12597, 4
      %v13225 = vsel %vm12664, %v13224, %v12555
      %v13226 = vrot.slane %v12555, 4
      %v13227 = vsel %vm12664, %v12597, %v13226
      %v13229 = vunpack.c.l.s4 1983009808
      %v13230 = vunpack.c.0.s8 %v13229
      %v13231 = vperm.slane %v13225, %v13230
      %v13233 = vunpack.c.l.s4 1983009808
      %v13234 = vunpack.c.0.s8 %v13233
      %v13235 = vperm.slane %v13227, %v13234
      %v13236 = vrot.slane %v12608, 4
      %v13237 = vsel %vm12664, %v13236, %v12567
      %v13238 = vrot.slane %v12567, 4
      %v13239 = vsel %vm12664, %v12608, %v13238
      %v13241 = vunpack.c.l.s4 1983009808
      %v13242 = vunpack.c.0.s8 %v13241
      %v13243 = vperm.slane %v13237, %v13242
      %v13245 = vunpack.c.l.s4 1983009808
      %v13246 = vunpack.c.0.s8 %v13245
      %v13247 = vperm.slane %v13239, %v13246
      %v13248 = vrot.slane %v12644, 4
      %v13249 = vsel %vm12664, %v13248, %v12620
      %v13250 = vrot.slane %v12620, 4
      %v13251 = vsel %vm12664, %v12644, %v13250
      %v13253 = vunpack.c.l.s4 1983009808
      %v13254 = vunpack.c.0.s8 %v13253
      %v13255 = vperm.slane %v13249, %v13254
      %v13257 = vunpack.c.l.s4 1983009808
      %v13258 = vunpack.c.0.s8 %v13257
      %v13259 = vperm.slane %v13251, %v13258
      %v13260 = vrot.slane %v12656, 4
      %v13261 = vsel %vm12664, %v13260, %v12632
      %v13262 = vrot.slane %v12632, 4
      %v13263 = vsel %vm12664, %v12656, %v13262
      %v13265 = vunpack.c.l.s4 1983009808
      %v13266 = vunpack.c.0.s8 %v13265
      %v13267 = vperm.slane %v13261, %v13266
      %v13269 = vunpack.c.l.s4 1983009808
      %v13270 = vunpack.c.0.s8 %v13269
      %v13271 = vperm.slane %v13263, %v13270
      %v13272 = vrot.slane %v13243, 4
      %v13273 = vsel %vm12664, %v13272, %v13231
      %v13274 = vrot.slane %v13231, 4
      %v13275 = vsel %vm12664, %v13243, %v13274
      %v13277 = vunpack.c.l.s4 1934713408
      %v13278 = vunpack.c.0.s8 %v13277
      %v13279 = vperm.slane %v13273, %v13278
      %v13281 = vunpack.c.l.s4 1934713408
      %v13282 = vunpack.c.0.s8 %v13281
      %v13283 = vperm.slane %v13275, %v13282
      %v13284 = vrot.slane %v13247, 4
      %v13285 = vsel %vm12664, %v13284, %v13235
      %v13286 = vrot.slane %v13235, 4
      %v13287 = vsel %vm12664, %v13247, %v13286
      %v13289 = vunpack.c.l.s4 1934713408
      %v13290 = vunpack.c.0.s8 %v13289
      %v13291 = vperm.slane %v13285, %v13290
      %v13293 = vunpack.c.l.s4 1934713408
      %v13294 = vunpack.c.0.s8 %v13293
      %v13295 = vperm.slane %v13287, %v13294
      %v13296 = vrot.slane %v13267, 4
      %v13297 = vsel %vm12664, %v13296, %v13255
      %v13298 = vrot.slane %v13255, 4
      %v13299 = vsel %vm12664, %v13267, %v13298
      %v13301 = vunpack.c.l.s4 1934713408
      %v13302 = vunpack.c.0.s8 %v13301
      %v13303 = vperm.slane %v13297, %v13302
      %v13305 = vunpack.c.l.s4 1934713408
      %v13306 = vunpack.c.0.s8 %v13305
      %v13307 = vperm.slane %v13299, %v13306
      %v13308 = vrot.slane %v13271, 4
      %v13309 = vsel %vm12664, %v13308, %v13259
      %v13310 = vrot.slane %v13259, 4
      %v13311 = vsel %vm12664, %v13271, %v13310
      %v13313 = vunpack.c.l.s4 1934713408
      %v13314 = vunpack.c.0.s8 %v13313
      %v13315 = vperm.slane %v13309, %v13314
      %v13317 = vunpack.c.l.s4 1934713408
      %v13318 = vunpack.c.0.s8 %v13317
      %v13319 = vperm.slane %v13311, %v13318
      %v13320 = vrot.slane %v13303, 4
      %v13321 = vsel %vm12664, %v13320, %v13279
      %v13322 = vrot.slane %v13279, 4
      %v13323 = vsel %vm12664, %v13303, %v13322
      %v13324 = vrot.slane %v13307, 4
      %v13325 = vsel %vm12664, %v13324, %v13283
      %v13326 = vrot.slane %v13283, 4
      %v13327 = vsel %vm12664, %v13307, %v13326
      %v13328 = vrot.slane %v13315, 4
      %v13329 = vsel %vm12664, %v13328, %v13291
      %v13330 = vrot.slane %v13291, 4
      %v13331 = vsel %vm12664, %v13315, %v13330
      %v13332 = vrot.slane %v13319, 4
      %v13333 = vsel %vm12664, %v13332, %v13295
      %v13334 = vrot.slane %v13295, 4
      %v13335 = vsel %vm12664, %v13319, %v13334
      %v13336 = vrot.slane %v12468, 4
      %v13337 = vsel %vm12664, %v13336, %v12442
      %v13338 = vrot.slane %v12442, 4
      %v13339 = vsel %vm12664, %v12468, %v13338
      %v13341 = vunpack.c.l.s4 1983009808
      %v13342 = vunpack.c.0.s8 %v13341
      %v13343 = vperm.slane %v13337, %v13342
      %v13345 = vunpack.c.l.s4 1983009808
      %v13346 = vunpack.c.0.s8 %v13345
      %v13347 = vperm.slane %v13339, %v13346
      %v13348 = vrot.slane %v12480, 4
      %v13349 = vsel %vm12664, %v13348, %v12456
      %v13350 = vrot.slane %v12456, 4
      %v13351 = vsel %vm12664, %v12480, %v13350
      %v13353 = vunpack.c.l.s4 1983009808
      %v13354 = vunpack.c.0.s8 %v13353
      %v13355 = vperm.slane %v13349, %v13354
      %v13357 = vunpack.c.l.s4 1983009808
      %v13358 = vunpack.c.0.s8 %v13357
      %v13359 = vperm.slane %v13351, %v13358
      %v13360 = vrot.slane %v12533, 4
      %v13361 = vsel %vm12664, %v13360, %v12492
      %v13362 = vrot.slane %v12492, 4
      %v13363 = vsel %vm12664, %v12533, %v13362
      %v13365 = vunpack.c.l.s4 1983009808
      %v13366 = vunpack.c.0.s8 %v13365
      %v13367 = vperm.slane %v13361, %v13366
      %v13369 = vunpack.c.l.s4 1983009808
      %v13370 = vunpack.c.0.s8 %v13369
      %v13371 = vperm.slane %v13363, %v13370
      %v13372 = vrot.slane %v12545, 4
      %v13373 = vsel %vm12664, %v13372, %v12521
      %v13374 = vrot.slane %v12521, 4
      %v13375 = vsel %vm12664, %v12545, %v13374
      %v13377 = vunpack.c.l.s4 1983009808
      %v13378 = vunpack.c.0.s8 %v13377
      %v13379 = vperm.slane %v13373, %v13378
      %v13381 = vunpack.c.l.s4 1983009808
      %v13382 = vunpack.c.0.s8 %v13381
      %v13383 = vperm.slane %v13375, %v13382
      %v13384 = vrot.slane %v13355, 4
      %v13385 = vsel %vm12664, %v13384, %v13343
      %v13386 = vrot.slane %v13343, 4
      %v13387 = vsel %vm12664, %v13355, %v13386
      %v13389 = vunpack.c.l.s4 1934713408
      %v13390 = vunpack.c.0.s8 %v13389
      %v13391 = vperm.slane %v13385, %v13390
      %v13393 = vunpack.c.l.s4 1934713408
      %v13394 = vunpack.c.0.s8 %v13393
      %v13395 = vperm.slane %v13387, %v13394
      %v13396 = vrot.slane %v13359, 4
      %v13397 = vsel %vm12664, %v13396, %v13347
      %v13398 = vrot.slane %v13347, 4
      %v13399 = vsel %vm12664, %v13359, %v13398
      %v13401 = vunpack.c.l.s4 1934713408
      %v13402 = vunpack.c.0.s8 %v13401
      %v13403 = vperm.slane %v13397, %v13402
      %v13405 = vunpack.c.l.s4 1934713408
      %v13406 = vunpack.c.0.s8 %v13405
      %v13407 = vperm.slane %v13399, %v13406
      %v13408 = vrot.slane %v13379, 4
      %v13409 = vsel %vm12664, %v13408, %v13367
      %v13410 = vrot.slane %v13367, 4
      %v13411 = vsel %vm12664, %v13379, %v13410
      %v13413 = vunpack.c.l.s4 1934713408
      %v13414 = vunpack.c.0.s8 %v13413
      %v13415 = vperm.slane %v13409, %v13414
      %v13417 = vunpack.c.l.s4 1934713408
      %v13418 = vunpack.c.0.s8 %v13417
      %v13419 = vperm.slane %v13411, %v13418
      %v13420 = vrot.slane %v13383, 4
      %v13421 = vsel %vm12664, %v13420, %v13371
      %v13422 = vrot.slane %v13371, 4
      %v13423 = vsel %vm12664, %v13383, %v13422
      %v13425 = vunpack.c.l.s4 1934713408
      %v13426 = vunpack.c.0.s8 %v13425
      %v13427 = vperm.slane %v13421, %v13426
      %v13429 = vunpack.c.l.s4 1934713408
      %v13430 = vunpack.c.0.s8 %v13429
      %v13431 = vperm.slane %v13423, %v13430
      %v13432 = vrot.slane %v13415, 4
      %v13433 = vsel %vm12664, %v13432, %v13391
      %v13434 = vrot.slane %v13391, 4
      %v13435 = vsel %vm12664, %v13415, %v13434
      %v13436 = vrot.slane %v13419, 4
      %v13437 = vsel %vm12664, %v13436, %v13395
      %v13438 = vrot.slane %v13395, 4
      %v13439 = vsel %vm12664, %v13419, %v13438
      %v13440 = vrot.slane %v13427, 4
      %v13441 = vsel %vm12664, %v13440, %v13403
      %v13442 = vrot.slane %v13403, 4
      %v13443 = vsel %vm12664, %v13427, %v13442
      %v13444 = vrot.slane %v13431, 4
      %v13445 = vsel %vm12664, %v13444, %v13407
      %v13446 = vrot.slane %v13407, 4
      %v13447 = vsel %vm12664, %v13431, %v13446
      %v13448 = vrot.slane %v12598, 4
      %v13449 = vsel %vm12664, %v13448, %v12557
      %v13450 = vrot.slane %v12557, 4
      %v13451 = vsel %vm12664, %v12598, %v13450
      %v13453 = vunpack.c.l.s4 1983009808
      %v13454 = vunpack.c.0.s8 %v13453
      %v13455 = vperm.slane %v13449, %v13454
      %v13457 = vunpack.c.l.s4 1983009808
      %v13458 = vunpack.c.0.s8 %v13457
      %v13459 = vperm.slane %v13451, %v13458
      %v13460 = vrot.slane %v12610, 4
      %v13461 = vsel %vm12664, %v13460, %v12569
      %v13462 = vrot.slane %v12569, 4
      %v13463 = vsel %vm12664, %v12610, %v13462
      %v13465 = vunpack.c.l.s4 1983009808
      %v13466 = vunpack.c.0.s8 %v13465
      %v13467 = vperm.slane %v13461, %v13466
      %v13469 = vunpack.c.l.s4 1983009808
      %v13470 = vunpack.c.0.s8 %v13469
      %v13471 = vperm.slane %v13463, %v13470
      %v13472 = vrot.slane %v12646, 4
      %v13473 = vsel %vm12664, %v13472, %v12622
      %v13474 = vrot.slane %v12622, 4
      %v13475 = vsel %vm12664, %v12646, %v13474
      %v13477 = vunpack.c.l.s4 1983009808
      %v13478 = vunpack.c.0.s8 %v13477
      %v13479 = vperm.slane %v13473, %v13478
      %v13481 = vunpack.c.l.s4 1983009808
      %v13482 = vunpack.c.0.s8 %v13481
      %v13483 = vperm.slane %v13475, %v13482
      %v13484 = vrot.slane %v12658, 4
      %v13485 = vsel %vm12664, %v13484, %v12634
      %v13486 = vrot.slane %v12634, 4
      %v13487 = vsel %vm12664, %v12658, %v13486
      %v13489 = vunpack.c.l.s4 1983009808
      %v13490 = vunpack.c.0.s8 %v13489
      %v13491 = vperm.slane %v13485, %v13490
      %v13493 = vunpack.c.l.s4 1983009808
      %v13494 = vunpack.c.0.s8 %v13493
      %v13495 = vperm.slane %v13487, %v13494
      %v13496 = vrot.slane %v13467, 4
      %v13497 = vsel %vm12664, %v13496, %v13455
      %v13498 = vrot.slane %v13455, 4
      %v13499 = vsel %vm12664, %v13467, %v13498
      %v13501 = vunpack.c.l.s4 1934713408
      %v13502 = vunpack.c.0.s8 %v13501
      %v13503 = vperm.slane %v13497, %v13502
      %v13505 = vunpack.c.l.s4 1934713408
      %v13506 = vunpack.c.0.s8 %v13505
      %v13507 = vperm.slane %v13499, %v13506
      %v13508 = vrot.slane %v13471, 4
      %v13509 = vsel %vm12664, %v13508, %v13459
      %v13510 = vrot.slane %v13459, 4
      %v13511 = vsel %vm12664, %v13471, %v13510
      %v13513 = vunpack.c.l.s4 1934713408
      %v13514 = vunpack.c.0.s8 %v13513
      %v13515 = vperm.slane %v13509, %v13514
      %v13517 = vunpack.c.l.s4 1934713408
      %v13518 = vunpack.c.0.s8 %v13517
      %v13519 = vperm.slane %v13511, %v13518
      %v13520 = vrot.slane %v13491, 4
      %v13521 = vsel %vm12664, %v13520, %v13479
      %v13522 = vrot.slane %v13479, 4
      %v13523 = vsel %vm12664, %v13491, %v13522
      %v13525 = vunpack.c.l.s4 1934713408
      %v13526 = vunpack.c.0.s8 %v13525
      %v13527 = vperm.slane %v13521, %v13526
      %v13529 = vunpack.c.l.s4 1934713408
      %v13530 = vunpack.c.0.s8 %v13529
      %v13531 = vperm.slane %v13523, %v13530
      %v13532 = vrot.slane %v13495, 4
      %v13533 = vsel %vm12664, %v13532, %v13483
      %v13534 = vrot.slane %v13483, 4
      %v13535 = vsel %vm12664, %v13495, %v13534
      %v13537 = vunpack.c.l.s4 1934713408
      %v13538 = vunpack.c.0.s8 %v13537
      %v13539 = vperm.slane %v13533, %v13538
      %v13541 = vunpack.c.l.s4 1934713408
      %v13542 = vunpack.c.0.s8 %v13541
      %v13543 = vperm.slane %v13535, %v13542
      %v13544 = vrot.slane %v13527, 4
      %v13545 = vsel %vm12664, %v13544, %v13503
      %v13546 = vrot.slane %v13503, 4
      %v13547 = vsel %vm12664, %v13527, %v13546
      %v13548 = vrot.slane %v13531, 4
      %v13549 = vsel %vm12664, %v13548, %v13507
      %v13550 = vrot.slane %v13507, 4
      %v13551 = vsel %vm12664, %v13531, %v13550
      %v13552 = vrot.slane %v13539, 4
      %v13553 = vsel %vm12664, %v13552, %v13515
      %v13554 = vrot.slane %v13515, 4
      %v13555 = vsel %vm12664, %v13539, %v13554
      %v13556 = vrot.slane %v13543, 4
      %v13557 = vsel %vm12664, %v13556, %v13519
      %v13558 = vrot.slane %v13519, 4
      %v13559 = vsel %vm12664, %v13543, %v13558
      %v13560 = vld [vmem:[%s356] sm:$0xff]
      %v13561 = vld [vmem:[%s356 + $0x8] sm:$0xff]
      %v13562 = vld [vmem:[%s356 + $0x10] sm:$0xff]
      %v13563 = vld [vmem:[%s356 + $0x18] sm:$0xff]
      %v13568 = vrot.slane %v13560, 1
      %v13569 = vrot.slane %v13560, 2
      %v13570 = vrot.slane %v13560, 3
      %v13571 = vrot.slane %v13560, 4
      %v13572 = vrot.slane %v13560, 5
      %v13573 = vrot.slane %v13560, 6
      %v13574 = vrot.slane %v13560, 7
      %v13575 = vrot.slane %v13561, 1
      %v13576 = vrot.slane %v13561, 2
      %v13577 = vrot.slane %v13561, 3
      %v13578 = vrot.slane %v13561, 4
      %v13579 = vrot.slane %v13561, 5
      %v13580 = vrot.slane %v13561, 6
      %v13581 = vrot.slane %v13561, 7
      %v13582 = vrot.slane %v13562, 1
      %v13583 = vrot.slane %v13562, 2
      %v13584 = vrot.slane %v13562, 3
      %v13585 = vrot.slane %v13562, 4
      %v13586 = vrot.slane %v13562, 5
      %v13587 = vrot.slane %v13562, 6
      %v13588 = vrot.slane %v13562, 7
      %v13589 = vrot.slane %v13563, 1
      %v13590 = vrot.slane %v13563, 2
      %v13591 = vrot.slane %v13563, 3
      %v13592 = vrot.slane %v13563, 4
      %v13593 = vrot.slane %v13563, 5
      %v13594 = vrot.slane %v13563, 6
      %v13595 = vrot.slane %v13563, 7
      %v13596 = vperm.slane %v13560, 0
      %v13597 = vperm.slane %v13568, 0
      %v13598 = vperm.slane %v13569, 0
      %v13599 = vperm.slane %v13570, 0
      %v13600 = vperm.slane %v13571, 0
      %v13601 = vperm.slane %v13572, 0
      %v13602 = vperm.slane %v13573, 0
      %v13603 = vperm.slane %v13574, 0
      %v13604 = vperm.slane %v13561, 0
      %v13605 = vperm.slane %v13575, 0
      %v13606 = vperm.slane %v13576, 0
      %v13607 = vperm.slane %v13577, 0
      %v13608 = vperm.slane %v13578, 0
      %v13609 = vperm.slane %v13579, 0
      %v13610 = vperm.slane %v13580, 0
      %v13611 = vperm.slane %v13581, 0
      %v13612 = vperm.slane %v13562, 0
      %v13613 = vperm.slane %v13582, 0
      %v13614 = vperm.slane %v13583, 0
      %v13615 = vperm.slane %v13584, 0
      %v13616 = vperm.slane %v13585, 0
      %v13617 = vperm.slane %v13586, 0
      %v13618 = vperm.slane %v13587, 0
      %v13619 = vperm.slane %v13588, 0
      %v13620 = vperm.slane %v13563, 0
      %v13621 = vperm.slane %v13589, 0
      %v13622 = vperm.slane %v13590, 0
      %v13623 = vperm.slane %v13591, 0
      %v13624 = vperm.slane %v13592, 0
      %v13625 = vperm.slane %v13593, 0
      %v13626 = vperm.slane %v13594, 0
      %v13627 = vperm.slane %v13595, 0
      %13628 = vset.pattern.permute.xlu0 0
      %13629 = vperm.xlu0 %13628, %v13596
      %v13630 = vpop.permute.xlu0 %13629
      %13632 = vset.pattern.permute.xlu0 0
      %13633 = vperm.xlu0 %13632, %v13597
      %v13634 = vpop.permute.xlu0 %13633
      %13636 = vset.pattern.permute.xlu0 0
      %13637 = vperm.xlu0 %13636, %v13598
      %v13638 = vpop.permute.xlu0 %13637
      %13640 = vset.pattern.permute.xlu0 0
      %13641 = vperm.xlu0 %13640, %v13599
      %v13642 = vpop.permute.xlu0 %13641
      %13644 = vset.pattern.permute.xlu0 0
      %13645 = vperm.xlu0 %13644, %v13600
      %v13646 = vpop.permute.xlu0 %13645
      %13648 = vset.pattern.permute.xlu0 0
      %13649 = vperm.xlu0 %13648, %v13601
      %v13650 = vpop.permute.xlu0 %13649
      %13652 = vset.pattern.permute.xlu0 0
      %13653 = vperm.xlu0 %13652, %v13602
      %v13654 = vpop.permute.xlu0 %13653
      %13656 = vset.pattern.permute.xlu0 0
      %13657 = vperm.xlu0 %13656, %v13603
      %v13658 = vpop.permute.xlu0 %13657
      %13660 = vset.pattern.permute.xlu0 0
      %13661 = vperm.xlu0 %13660, %v13604
      %v13662 = vpop.permute.xlu0 %13661
      %13664 = vset.pattern.permute.xlu0 0
      %13665 = vperm.xlu0 %13664, %v13605
      %v13666 = vpop.permute.xlu0 %13665
      %13668 = vset.pattern.permute.xlu0 0
      %13669 = vperm.xlu0 %13668, %v13606
      %v13670 = vpop.permute.xlu0 %13669
      %13672 = vset.pattern.permute.xlu0 0
      %13673 = vperm.xlu0 %13672, %v13607
      %v13674 = vpop.permute.xlu0 %13673
      %13676 = vset.pattern.permute.xlu0 0
      %13677 = vperm.xlu0 %13676, %v13608
      %v13678 = vpop.permute.xlu0 %13677
      %13680 = vset.pattern.permute.xlu0 0
      %13681 = vperm.xlu0 %13680, %v13609
      %v13682 = vpop.permute.xlu0 %13681
      %13684 = vset.pattern.permute.xlu0 0
      %13685 = vperm.xlu0 %13684, %v13610
      %v13686 = vpop.permute.xlu0 %13685
      %13688 = vset.pattern.permute.xlu0 0
      %13689 = vperm.xlu0 %13688, %v13611
      %v13690 = vpop.permute.xlu0 %13689
      %13692 = vset.pattern.permute.xlu0 0
      %13693 = vperm.xlu0 %13692, %v13612
      %v13694 = vpop.permute.xlu0 %13693
      %13696 = vset.pattern.permute.xlu0 0
      %13697 = vperm.xlu0 %13696, %v13613
      %v13698 = vpop.permute.xlu0 %13697
      %13700 = vset.pattern.permute.xlu0 0
      %13701 = vperm.xlu0 %13700, %v13614
      %v13702 = vpop.permute.xlu0 %13701
      %13704 = vset.pattern.permute.xlu0 0
      %13705 = vperm.xlu0 %13704, %v13615
      %v13706 = vpop.permute.xlu0 %13705
      %13708 = vset.pattern.permute.xlu0 0
      %13709 = vperm.xlu0 %13708, %v13616
      %v13710 = vpop.permute.xlu0 %13709
      %13712 = vset.pattern.permute.xlu0 0
      %13713 = vperm.xlu0 %13712, %v13617
      %v13714 = vpop.permute.xlu0 %13713
      %13716 = vset.pattern.permute.xlu0 0
      %13717 = vperm.xlu0 %13716, %v13618
      %v13718 = vpop.permute.xlu0 %13717
      %13720 = vset.pattern.permute.xlu0 0
      %13721 = vperm.xlu0 %13720, %v13619
      %v13722 = vpop.permute.xlu0 %13721
      %13724 = vset.pattern.permute.xlu0 0
      %13725 = vperm.xlu0 %13724, %v13620
      %v13726 = vpop.permute.xlu0 %13725
      %13728 = vset.pattern.permute.xlu0 0
      %13729 = vperm.xlu0 %13728, %v13621
      %v13730 = vpop.permute.xlu0 %13729
      %13732 = vset.pattern.permute.xlu0 0
      %13733 = vperm.xlu0 %13732, %v13622
      %v13734 = vpop.permute.xlu0 %13733
      %13736 = vset.pattern.permute.xlu0 0
      %13737 = vperm.xlu0 %13736, %v13623
      %v13738 = vpop.permute.xlu0 %13737
      %13740 = vset.pattern.permute.xlu0 0
      %13741 = vperm.xlu0 %13740, %v13624
      %v13742 = vpop.permute.xlu0 %13741
      %13744 = vset.pattern.permute.xlu0 0
      %13745 = vperm.xlu0 %13744, %v13625
      %v13746 = vpop.permute.xlu0 %13745
      %13748 = vset.pattern.permute.xlu0 0
      %13749 = vperm.xlu0 %13748, %v13626
      %v13750 = vpop.permute.xlu0 %13749
      %13752 = vset.pattern.permute.xlu0 0
      %13753 = vperm.xlu0 %13752, %v13627
      %v13754 = vpop.permute.xlu0 %13753
      %v13756 = vadd.f32 %v12761, %v13630
      %v13757 = vadd.f32 %v12873, %v13630
      %v13758 = vadd.f32 %v12763, %v13634
      %v13759 = vadd.f32 %v12875, %v13634
      %v13760 = vadd.f32 %v12765, %v13638
      %v13761 = vadd.f32 %v12877, %v13638
      %v13762 = vadd.f32 %v12767, %v13642
      %v13763 = vadd.f32 %v12879, %v13642
      %v13764 = vadd.f32 %v12769, %v13646
      %v13765 = vadd.f32 %v12881, %v13646
      %v13766 = vadd.f32 %v12771, %v13650
      %v13767 = vadd.f32 %v12883, %v13650
      %v13768 = vadd.f32 %v12773, %v13654
      %v13769 = vadd.f32 %v12885, %v13654
      %v13770 = vadd.f32 %v12775, %v13658
      %v13771 = vadd.f32 %v12887, %v13658
      %v13772 = vadd.f32 %v12985, %v13662
      %v13773 = vadd.f32 %v13097, %v13662
      %v13774 = vadd.f32 %v12987, %v13666
      %v13775 = vadd.f32 %v13099, %v13666
      %v13776 = vadd.f32 %v12989, %v13670
      %v13777 = vadd.f32 %v13101, %v13670
      %v13778 = vadd.f32 %v12991, %v13674
      %v13779 = vadd.f32 %v13103, %v13674
      %v13780 = vadd.f32 %v12993, %v13678
      %v13781 = vadd.f32 %v13105, %v13678
      %v13782 = vadd.f32 %v12995, %v13682
      %v13783 = vadd.f32 %v13107, %v13682
      %v13784 = vadd.f32 %v12997, %v13686
      %v13785 = vadd.f32 %v13109, %v13686
      %v13786 = vadd.f32 %v12999, %v13690
      %v13787 = vadd.f32 %v13111, %v13690
      %v13788 = vadd.f32 %v13209, %v13694
      %v13789 = vadd.f32 %v13321, %v13694
      %v13790 = vadd.f32 %v13211, %v13698
      %v13791 = vadd.f32 %v13323, %v13698
      %v13792 = vadd.f32 %v13213, %v13702
      %v13793 = vadd.f32 %v13325, %v13702
      %v13794 = vadd.f32 %v13215, %v13706
      %v13795 = vadd.f32 %v13327, %v13706
      %v13796 = vadd.f32 %v13217, %v13710
      %v13797 = vadd.f32 %v13329, %v13710
      %v13798 = vadd.f32 %v13219, %v13714
      %v13799 = vadd.f32 %v13331, %v13714
      %v13800 = vadd.f32 %v13221, %v13718
      %v13801 = vadd.f32 %v13333, %v13718
      %v13802 = vadd.f32 %v13223, %v13722
      %v13803 = vadd.f32 %v13335, %v13722
      %v13804 = vadd.f32 %v13433, %v13726
      %v13805 = vadd.f32 %v13545, %v13726
      %v13806 = vadd.f32 %v13435, %v13730
      %v13807 = vadd.f32 %v13547, %v13730
      %v13808 = vadd.f32 %v13437, %v13734
      %v13809 = vadd.f32 %v13549, %v13734
      %v13810 = vadd.f32 %v13439, %v13738
      %v13811 = vadd.f32 %v13551, %v13738
      %v13812 = vadd.f32 %v13441, %v13742
      %v13813 = vadd.f32 %v13553, %v13742
      %v13814 = vadd.f32 %v13443, %v13746
      %v13815 = vadd.f32 %v13555, %v13746
      %v13816 = vadd.f32 %v13445, %v13750
      %v13817 = vadd.f32 %v13557, %v13750
      %v13818 = vadd.f32 %v13447, %v13754
      %v13819 = vadd.f32 %v13559, %v13754
      %13820 = vst.msk [vmem:[%s385] sm:$0xff] %vm12594, %v13756
      %13821 = vst.msk [vmem:[%s385 + $0x8] sm:$0xff] %vm12594, %v13757
      %13822 = vst.msk [vmem:[%s385 + $0x10] sm:$0xff] %vm12594, %v13758
      %13823 = vst.msk [vmem:[%s385 + $0x18] sm:$0xff] %vm12594, %v13759
      %13824 = vst.msk [vmem:[%s385 + $0x20] sm:$0xff] %vm12594, %v13760
      %13825 = vst.msk [vmem:[%s385 + $0x28] sm:$0xff] %vm12594, %v13761
      %13826 = vst.msk [vmem:[%s385 + $0x30] sm:$0xff] %vm12594, %v13762
      %13827 = vst.msk [vmem:[%s385 + $0x38] sm:$0xff] %vm12594, %v13763
      %13828 = vst.msk [vmem:[%s385 + $0x40] sm:$0xff] %vm12594, %v13764
      %13829 = vst.msk [vmem:[%s385 + $0x48] sm:$0xff] %vm12594, %v13765
      %13830 = vst.msk [vmem:[%s385 + $0x50] sm:$0xff] %vm12594, %v13766
      %13831 = vst.msk [vmem:[%s385 + $0x58] sm:$0xff] %vm12594, %v13767
      %13832 = vst.msk [vmem:[%s385 + $0x60] sm:$0xff] %vm12594, %v13768
      %13833 = vst.msk [vmem:[%s385 + $0x68] sm:$0xff] %vm12594, %v13769
      %13834 = vst.msk [vmem:[%s385 + $0x70] sm:$0xff] %vm12594, %v13770
      %13835 = vst.msk [vmem:[%s385 + $0x78] sm:$0xff] %vm12594, %v13771
      %13836 = vst.msk [vmem:[%s385 + $0x80] sm:$0xff] %vm12594, %v13772
      %13837 = vst.msk [vmem:[%s385 + $0x88] sm:$0xff] %vm12594, %v13773
      %13838 = vst.msk [vmem:[%s385 + $0x90] sm:$0xff] %vm12594, %v13774
      %13839 = vst.msk [vmem:[%s385 + $0x98] sm:$0xff] %vm12594, %v13775
      %13840 = vst.msk [vmem:[%s385 + $0xa0] sm:$0xff] %vm12594, %v13776
      %13841 = vst.msk [vmem:[%s385 + $0xa8] sm:$0xff] %vm12594, %v13777
      %13842 = vst.msk [vmem:[%s385 + $0xb0] sm:$0xff] %vm12594, %v13778
      %13843 = vst.msk [vmem:[%s385 + $0xb8] sm:$0xff] %vm12594, %v13779
      %13844 = vst.msk [vmem:[%s385 + $0xc0] sm:$0xff] %vm12594, %v13780
      %13845 = vst.msk [vmem:[%s385 + $0xc8] sm:$0xff] %vm12594, %v13781
      %13846 = vst.msk [vmem:[%s385 + $0xd0] sm:$0xff] %vm12594, %v13782
      %13847 = vst.msk [vmem:[%s385 + $0xd8] sm:$0xff] %vm12594, %v13783
      %13848 = vst.msk [vmem:[%s385 + $0xe0] sm:$0xff] %vm12594, %v13784
      %13849 = vst.msk [vmem:[%s385 + $0xe8] sm:$0xff] %vm12594, %v13785
      %13850 = vst.msk [vmem:[%s385 + $0xf0] sm:$0xff] %vm12594, %v13786
      %13851 = vst.msk [vmem:[%s385 + $0xf8] sm:$0xff] %vm12594, %v13787
      %13852 = vst.msk [vmem:[%s385 + $0x100] sm:$0xff] %vm12594, %v13788
      %13853 = vst.msk [vmem:[%s385 + $0x108] sm:$0xff] %vm12594, %v13789
      %13854 = vst.msk [vmem:[%s385 + $0x110] sm:$0xff] %vm12594, %v13790
      %13855 = vst.msk [vmem:[%s385 + $0x118] sm:$0xff] %vm12594, %v13791
      %13856 = vst.msk [vmem:[%s385 + $0x120] sm:$0xff] %vm12594, %v13792
      %13857 = vst.msk [vmem:[%s385 + $0x128] sm:$0xff] %vm12594, %v13793
      %13858 = vst.msk [vmem:[%s385 + $0x130] sm:$0xff] %vm12594, %v13794
      %13859 = vst.msk [vmem:[%s385 + $0x138] sm:$0xff] %vm12594, %v13795
      %13860 = vst.msk [vmem:[%s385 + $0x140] sm:$0xff] %vm12594, %v13796
      %13861 = vst.msk [vmem:[%s385 + $0x148] sm:$0xff] %vm12594, %v13797
      %13862 = vst.msk [vmem:[%s385 + $0x150] sm:$0xff] %vm12594, %v13798
      %13863 = vst.msk [vmem:[%s385 + $0x158] sm:$0xff] %vm12594, %v13799
      %13864 = vst.msk [vmem:[%s385 + $0x160] sm:$0xff] %vm12594, %v13800
      %13865 = vst.msk [vmem:[%s385 + $0x168] sm:$0xff] %vm12594, %v13801
      %13866 = vst.msk [vmem:[%s385 + $0x170] sm:$0xff] %vm12594, %v13802
      %13867 = vst.msk [vmem:[%s385 + $0x178] sm:$0xff] %vm12594, %v13803
      %13868 = vst.msk [vmem:[%s385 + $0x180] sm:$0xff] %vm12594, %v13804
      %13869 = vst.msk [vmem:[%s385 + $0x188] sm:$0xff] %vm12594, %v13805
      %13870 = vst.msk [vmem:[%s385 + $0x190] sm:$0xff] %vm12594, %v13806
      %13871 = vst.msk [vmem:[%s385 + $0x198] sm:$0xff] %vm12594, %v13807
      %13872 = vst.msk [vmem:[%s385 + $0x1a0] sm:$0xff] %vm12594, %v13808
      %13873 = vst.msk [vmem:[%s385 + $0x1a8] sm:$0xff] %vm12594, %v13809
      %13874 = vst.msk [vmem:[%s385 + $0x1b0] sm:$0xff] %vm12594, %v13810
      %13875 = vst.msk [vmem:[%s385 + $0x1b8] sm:$0xff] %vm12594, %v13811
      %13876 = vst.msk [vmem:[%s385 + $0x1c0] sm:$0xff] %vm12594, %v13812
      %13877 = vst.msk [vmem:[%s385 + $0x1c8] sm:$0xff] %vm12594, %v13813
      %13878 = vst.msk [vmem:[%s385 + $0x1d0] sm:$0xff] %vm12594, %v13814
      %13879 = vst.msk [vmem:[%s385 + $0x1d8] sm:$0xff] %vm12594, %v13815
      %13880 = vst.msk [vmem:[%s385 + $0x1e0] sm:$0xff] %vm12594, %v13816
      %13881 = vst.msk [vmem:[%s385 + $0x1e8] sm:$0xff] %vm12594, %v13817
      %13882 = vst.msk [vmem:[%s385 + $0x1f0] sm:$0xff] %vm12594, %v13818
      %13883 = vst.msk [vmem:[%s385 + $0x1f8] sm:$0xff] %vm12594, %v13819
      %s13884 = smul.u32 32, %s22
      %p13885 = scmp.lt.s32.totalorder %s21, 1
      %s13886 = scalar_select %p13885, %s21, 1
      %p13887 = scmp.lt.s32.totalorder %s13884, 31
      %s13888 = scalar_select %p13887, %s13884, 31
      %s13889 = smul.addr %s13888, 2
      %s13890 = smul.addr %s13886, 64
      %s13891 = sadd.s32 %s13889, %s13890
      %s13892 = smul.addr %s13891, 8
      %s13893 = scalar_lea.vmem %s6, %s13892
      // Predicated region
      $region45: #{tpu_custom_call.1} parent=43 // pred_check
        %p13894 = pneg %p205
      $region46: #{tpu_custom_call.1} parent=43 // pred_check_branch
        %13896 = sbr.rel (%p13894) target = $region48
      $region47: #{tpu_custom_call.1} parent=43 // pred_region
        %s13897 = smul.u32 32, %s22
      $region48: #{tpu_custom_call.1} parent=43 // pred_fallthru
        _
    $region44: #{tpu_custom_call.1} parent=5 // pred_fallthru
      _
    %p13898 = scmp.le.s32.totalorder 2, %s12
    // Predicated region
    $region49: #{tpu_custom_call.1} parent=5 // pred_check
      %p13899 = pneg %p13898
    $region50: #{tpu_custom_call.1} parent=5 // pred_check_branch
      %13901 = sbr.rel (%p13899) target = $region52
    $region51: #{tpu_custom_call.1} parent=5 // pred_region
      %s13902 = ssub.s32 %s12, 2
      // Predicated region
      $region53: #{tpu_custom_call.1} parent=51 // pred_check
        %p13903 = pneg %p211
      $region54: #{tpu_custom_call.1} parent=51 // pred_check_branch
        %13905 = sbr.rel (%p13903) target = $region56
      $region55: #{tpu_custom_call.1} parent=51 // pred_region
        %s13906 = smul.u32 32, %s24
        %p13907 = scmp.lt.s32.totalorder %s23, 1
        %s13908 = scalar_select %p13907, %s23, 1
        %p13909 = scmp.lt.s32.totalorder %s13906, 31
        %s13910 = scalar_select %p13909, %s13906, 31
        %s13911 = smul.addr %s13910, 2
        %s13912 = smul.addr %s13908, 64
        %s13913 = sadd.s32 %s13911, %s13912
        %s13914 = smul.addr %s13913, 8
        %s13915 = scalar_lea.vmem %s6, %s13914
      $region56: #{tpu_custom_call.1} parent=51 // pred_fallthru
        _
    $region52: #{tpu_custom_call.1} parent=5 // pred_fallthru
      _
  $region6: #{tpu_custom_call.1} parent=0 // loop_footer
    %s16 = sadd.s32 1, %s12
  $region7: #{tpu_custom_call.1} parent=0 // loop_footer_branch
    %11 = sbr.rel target = $region3
  $region8: #{tpu_custom_call.1} parent=0 // loop_exit
    _

</llo_original>
